<compile_context>
chip_gen: v7x
topology: tpu7x:2x2x1
jax: 0.10.0
libtpu: 0.0.40
codegen_flags: <defaults>
</compile_context>

<pallas_src>
import functools

import jax
import jax.numpy as jnp
from jax.experimental import pallas as pl
from jax.experimental.pallas import tpu as pltpu

# ----------------------- model hyper-parameters -----------------------------
HIDDEN = 32
N_HEADS = 4
HEAD_DIM = HIDDEN // N_HEADS
FFN = 64
N_LAYERS = 2
VOCAB_DEC = 128                      # original vocab (decoder / lm_head)
NUM_COMPRESS_TOKEN = 2
VOCAB_ENC = VOCAB_DEC + NUM_COMPRESS_TOKEN   # encoder vocab after resize
PAD_TOKEN_ID = 0
EMBED_TOKEN_IDS = [VOCAB_ENC - NUM_COMPRESS_TOKEN + i
                   for i in range(NUM_COMPRESS_TOKEN)]


# ------------------------------ in-kernel helpers ----------------------------
def _rms(v, g):
    # v: (N, H) f32, g: (1, H) f32 — elementwise math stays in f32 (v5e VPU/EUP).
    var = jnp.mean(v * v, axis=-1, keepdims=True)
    return v * jax.lax.rsqrt(var + 1e-6) * g


def _tower(x, bias, ln1_ref, wqkv_ref, wo_ref, ln2_ref, wgu_ref, wd_ref,
           lnf_ref, *, n_layers, n_heads, head_dim):
    """One transformer tower over the flattened (B*S, H) residual stream.

    `bias` is a (B*S, B*S) block-diagonal causal + key-padding additive bias,
    so the batch never has to be un-folded inside the tower.
    """
    N, H = x.shape
    F2 = wgu_ref.shape[2]          # 2F (== 128, one full lane group)
    F = F2 // 2
    scale = 1.0 / (head_dim ** 0.5)
    bias3 = bias[None, :, :]       # broadcast over the head batch dim

    for l in range(n_layers):
        # ---------------- attention ----------------
        hn = _rms(x, ln1_ref[l]).astype(jnp.bfloat16)
        qkv = jnp.dot(hn, wqkv_ref[l],
                      preferred_element_type=jnp.float32)          # (N, 3H)

        # Head split: stack lane slices onto a leading head dim (no reshape of
        # the lane axis, no per-head matmuls).
        q = jnp.stack([qkv[:, h * head_dim:(h + 1) * head_dim]
                       for h in range(n_heads)], axis=0)            # (NH, N, Dh)
        k = jnp.stack([qkv[:, H + h * head_dim:H + (h + 1) * head_dim]
                       for h in range(n_heads)], axis=0)
        v = jnp.stack([qkv[:, 2 * H + h * head_dim:2 * H + (h + 1) * head_dim]
                       for h in range(n_heads)], axis=0)

        # All heads at once: heads are the batch dim of the dot_generals.
        s = jnp.einsum('hqd,hkd->hqk', q.astype(jnp.bfloat16),
                       k.astype(jnp.bfloat16),
                       preferred_element_type=jnp.float32)           # (NH, N, N)
        s = s * scale + bias3                                        # f32 bias add
        mx = jnp.max(s, axis=-1, keepdims=True)
        p = jnp.exp(s - mx)
        inv = pl.reciprocal(jnp.sum(p, axis=-1, keepdims=True), approx=True)
        p = (p * inv).astype(jnp.bfloat16)
        ctx = jnp.einsum('hqk,hkd->hqd', p, v.astype(jnp.bfloat16),
                         preferred_element_type=jnp.float32)         # (NH, N, Dh)

        # Out-projection: head-batched matmul + sum over heads — head outputs
        # never get re-packed back onto the lane axis.
        proj = jnp.einsum('hnd,hdk->hnk', ctx.astype(jnp.bfloat16), wo_ref[l],
                          preferred_element_type=jnp.float32)        # (NH, N, H)
        x = x + jnp.sum(proj, axis=0)

        # ---------------- SwiGLU MLP ----------------
        hn2 = _rms(x, ln2_ref[l]).astype(jnp.bfloat16)
        gu = jnp.dot(hn2, wgu_ref[l],
                     preferred_element_type=jnp.float32)             # (N, 2F)
        # silu(g) * u lives in the first F lanes of (silu(gu) * roll(gu, F));
        # 2F == 128 so the shift-by-half roll is direction-agnostic.  The bottom
        # F rows of wd are zero, so the garbage second half contributes nothing.
        ff = (gu * jax.nn.sigmoid(gu)) * pltpu.roll(gu, shift=F, axis=1)
        x = x + jnp.dot(ff.astype(jnp.bfloat16), wd_ref[l],
                        preferred_element_type=jnp.float32)

    return _rms(x, lnf_ref[...])


# ------------------------------ fused forward kernel -------------------------
def _fused_forward_kernel(enc_bias_ref, enc_x_ref, gidx_ref, dec_bias_ref,
                          tgt_ref, labels_ref,
                          e_ln1, e_wqkv, e_wo, e_ln2, e_wgu, e_wd, e_lnf,
                          d_ln1, d_wqkv, d_wo, d_ln2, d_wgu, d_wd, d_lnf,
                          lm_ref,
                          logits_ref, loss_ref,
                          *, B, S_enc, T, num_compress,
                          n_layers, n_heads, head_dim):
    C = num_compress

    # ---------------- encoder tower ----------------
    x_enc = enc_x_ref[...].astype(jnp.float32)                       # (B*S_enc, H)
    h_enc = _tower(x_enc, enc_bias_ref[...],
                   e_ln1, e_wqkv, e_wo, e_ln2, e_wgu, e_wd, e_lnf,
                   n_layers=n_layers, n_heads=n_heads, head_dim=head_dim)

    # ---------------- compress-token gather (one-hot matmul, exact) ----------
    cols = jax.lax.broadcasted_iota(jnp.int32, (B * C, B * S_enc), 1)
    sel = (cols == gidx_ref[...]).astype(jnp.float32)                # (B*C, B*S_enc)
    comp = jnp.dot(sel, h_enc, preferred_element_type=jnp.float32)   # (B*C, H)

    # ---------------- decoder input: [compress ; target] per batch -----------
    tgt = tgt_ref[...].astype(jnp.float32)                           # (B*T, H)
    pieces = []
    for b in range(B):
        pieces.append(comp[b * C:(b + 1) * C])
        pieces.append(tgt[b * T:(b + 1) * T])
    x_dec = jnp.concatenate(pieces, axis=0)                          # (B*(C+T), H)

    # ---------------- decoder tower + LM head ----------------
    h_dec = _tower(x_dec, dec_bias_ref[...],
                   d_ln1, d_wqkv, d_wo, d_ln2, d_wgu, d_wd, d_lnf,
                   n_layers=n_layers, n_heads=n_heads, head_dim=head_dim)
    logits = jnp.dot(h_dec.astype(jnp.bfloat16), lm_ref[...],
                     preferred_element_type=jnp.float32)             # (B*S_dec, V)
    logits_ref[...] = logits

    # ---------------- fused shifted cross-entropy (ignore_index = -100) ------
    labels = labels_ref[...]                                         # (B*S_dec, 1)
    mx = jnp.max(logits, axis=-1, keepdims=True)
    lse = jnp.log(jnp.sum(jnp.exp(logits - mx), axis=-1, keepdims=True)) + mx
    vocab_col = jax.lax.broadcasted_iota(jnp.int32, logits.shape, 1)
    picked = jnp.sum(jnp.where(vocab_col == labels, logits, 0.0),
                     axis=-1, keepdims=True)
    valid = (labels != -100).astype(jnp.float32)
    total = jnp.sum((lse - picked) * valid)
    count = jnp.maximum(jnp.sum(valid), 1.0)
    loss_ref[0, 0] = total / count


def fused_forward_call(params, enc_bias, enc_x_flat, gather_idx, dec_bias,
                       tgt_emb_flat, flat_labels, *, B, S_enc, T):
    enc, dec = params["encoder"], params["decoder"]
    S_dec = NUM_COMPRESS_TOKEN + T
    V = dec["lm_head"].shape[1]

    kern = functools.partial(
        _fused_forward_kernel, B=B, S_enc=S_enc, T=T,
        num_compress=NUM_COMPRESS_TOKEN, n_layers=N_LAYERS,
        n_heads=N_HEADS, head_dim=HEAD_DIM)

    n_inputs = 21
    in_specs = [pl.BlockSpec(memory_space=pltpu.MemorySpace.VMEM)
                for _ in range(n_inputs)]

    return pl.pallas_call(
        kern,
        out_shape=(jax.ShapeDtypeStruct((B * S_dec, V), jnp.float32),
                   jax.ShapeDtypeStruct((1, 1), jnp.float32)),
        in_specs=in_specs,
        out_specs=(pl.BlockSpec(memory_space=pltpu.MemorySpace.VMEM),
                   pl.BlockSpec(memory_space=pltpu.MemorySpace.SMEM)),
    )(enc_bias, enc_x_flat, gather_idx, dec_bias, tgt_emb_flat, flat_labels,
      enc["ln1"], enc["wqkv"], enc["wo"], enc["ln2"], enc["wgu"], enc["wd"],
      enc["ln_f"],
      dec["ln1"], dec["wqkv"], dec["wo"], dec["ln2"], dec["wgu"], dec["wd"],
      dec["ln_f"], dec["lm_head"])


# ----------------------------- parameter init --------------------------------
def init_params(seed=0):
    key = jax.random.PRNGKey(seed)

    def dense(k, shape, scale=0.05):
        return scale * jax.random.normal(k, shape, jnp.float32)

    def make_tower(k, vocab, lm_head_vocab=None):
        keys = iter(jax.random.split(k, 7 * N_LAYERS + 2))
        wqkv, wo, wgu, wd = [], [], [], []
        for _ in range(N_LAYERS):
            wq = dense(next(keys), (HIDDEN, HIDDEN))
            wk = dense(next(keys), (HIDDEN, HIDDEN))
            wv = dense(next(keys), (HIDDEN, HIDDEN))
            wqkv.append(jnp.concatenate([wq, wk, wv], axis=1))        # (H, 3H)
            # out-proj stored head-major: (NH, Dh, H)
            wo.append(dense(next(keys), (HIDDEN, HIDDEN))
                      .reshape(N_HEADS, HEAD_DIM, HIDDEN))
            wg = dense(next(keys), (HIDDEN, FFN))
            wu = dense(next(keys), (HIDDEN, FFN))
            wgu.append(jnp.concatenate([wg, wu], axis=1))             # (H, 2F)
            # down-proj zero-padded to (2F, H) for the roll-based SwiGLU
            wd_l = dense(next(keys), (FFN, HIDDEN))
            wd.append(jnp.concatenate(
                [wd_l, jnp.zeros((FFN, HIDDEN), jnp.float32)], axis=0))
        tower = dict(
            embed=dense(next(keys), (vocab, HIDDEN), scale=0.02)
                  .astype(jnp.bfloat16),
            ln1=jnp.ones((N_LAYERS, 1, HIDDEN), jnp.float32),
            wqkv=jnp.stack(wqkv).astype(jnp.bfloat16),
            wo=jnp.stack(wo).astype(jnp.bfloat16),                    # (L, NH, Dh, H)
            ln2=jnp.ones((N_LAYERS, 1, HIDDEN), jnp.float32),
            wgu=jnp.stack(wgu).astype(jnp.bfloat16),
            wd=jnp.stack(wd).astype(jnp.bfloat16),                    # (L, 2F, H)
            ln_f=jnp.ones((1, HIDDEN), jnp.float32),
        )
        if lm_head_vocab is not None:
            tower["lm_head"] = dense(next(keys),
                                     (HIDDEN, lm_head_vocab)).astype(jnp.bfloat16)
        return tower

    k_enc, k_dec = jax.random.split(key)
    return dict(
        encoder=make_tower(k_enc, VOCAB_ENC),
        decoder=make_tower(k_dec, VOCAB_DEC, lm_head_vocab=VOCAB_DEC),
    )


# --------------------------- module forward ----------------------------------
def _make_block_bias(mask2d, B, S):
    """Block-diagonal causal + key-padding additive bias over flattened B*S."""
    N = B * S
    flat_mask = mask2d.reshape(1, N)
    idx = jnp.arange(N, dtype=jnp.int32)
    q = idx[:, None]
    k = idx[None, :]
    allowed = ((q // S) == (k // S)) & (k <= q) & (flat_mask > 0)
    return jnp.where(allowed, 0.0, -1e9).astype(jnp.float32)


def compress_with_diff_token_forward(params, input_ids, attention_mask,
                                     target_ids, target_attention_mask,
                                     labels=None):
    B, S_in = input_ids.shape
    C = NUM_COMPRESS_TOKEN
    S_enc = S_in + C
    T = target_ids.shape[1]
    S_dec = C + T

    # ---- _compress: insert <EMBEDi> tokens right after the real tokens ----
    lengths = jnp.sum(attention_mask.astype(jnp.int32), axis=1)          # (B,)
    embedding_ids = jnp.concatenate(
        [input_ids, jnp.full((B, C), PAD_TOKEN_ID, input_ids.dtype)], axis=1)
    embedding_mask = jnp.concatenate(
        [attention_mask.astype(jnp.int32), jnp.zeros((B, C), jnp.int32)], axis=1)
    pos = jnp.arange(S_enc)[None, :]
    for c in range(C):
        hit = pos == (lengths[:, None] + c)
        embedding_ids = jnp.where(hit, EMBED_TOKEN_IDS[c], embedding_ids)
        embedding_mask = jnp.where(hit, 1, embedding_mask)

    enc_in = jnp.take(params["encoder"]["embed"], embedding_ids, axis=0)  # bf16
    enc_in_flat = enc_in.reshape(B * S_enc, HIDDEN)

    # Flat row indices of the compress tokens inside the (B*S_enc, H) stream.
    gather_idx = (jnp.arange(B, dtype=jnp.int32)[:, None] * S_enc
                  + lengths[:, None] + jnp.arange(C, dtype=jnp.int32)[None, :]
                  ).reshape(B * C, 1).astype(jnp.int32)

    dec_mask = jnp.concatenate(
        [jnp.ones((B, C), jnp.int32), target_attention_mask.astype(jnp.int32)],
        axis=1)                                                          # (B, S_dec)

    enc_bias = _make_block_bias(embedding_mask, B, S_enc)
    dec_bias = _make_block_bias(dec_mask, B, S_dec)

    tgt_emb = jnp.take(params["decoder"]["embed"], target_ids,
                       axis=0).reshape(B * T, HIDDEN)                    # bf16

    if labels is None:
        flat_labels = jnp.full((B * S_dec, 1), -100, jnp.int32)
    else:
        shifted = jnp.concatenate(
            [labels[:, 1:], jnp.full((B, 1), -100, labels.dtype)], axis=1)
        flat_labels = shifted.reshape(B * S_dec, 1).astype(jnp.int32)

    logits_flat, loss_arr = fused_forward_call(
        params, enc_bias, enc_in_flat, gather_idx, dec_bias, tgt_emb,
        flat_labels, B=B, S_enc=S_enc, T=T)

    logits = logits_flat.reshape(B, S_dec, VOCAB_DEC)
    loss = loss_arr[0, 0] if labels is not None else None
    return loss, logits


# --------------------------------- main ---------------------------------------
if __name__ == "__main__":
    params = init_params(seed=0)

    key = jax.random.PRNGKey(0)
    k1, k2 = jax.random.split(key)
    B, S_in, T = 2, 8, 8

    input_ids = jax.random.randint(k1, (B, S_in), 1, VOCAB_DEC, jnp.int32)
    attention_mask = (jnp.arange(S_in)[None, :]
                      < jnp.array([[8], [6]])).astype(jnp.int32)       # lengths 8, 6

    target_ids = jax.random.randint(k2, (B, T), 1, VOCAB_DEC, jnp.int32)
    target_attention_mask = (jnp.arange(T)[None, :]
                             < jnp.array([[8], [5]])).astype(jnp.int32)

    labels = jnp.concatenate(
        [jnp.full((B, NUM_COMPRESS_TOKEN), -100, jnp.int32),
         jnp.where(target_attention_mask == 1, target_ids, -100)], axis=1)

    fwd = jax.jit(compress_with_diff_token_forward)
    loss, logits = fwd(params, input_ids, attention_mask, target_ids,
                       target_attention_mask, labels)

    jax.block_until_ready((loss, logits))
    assert logits.shape == (B, NUM_COMPRESS_TOKEN + T, VOCAB_DEC)
    assert jnp.isfinite(loss)
    print("KERNEL_OK")
</pallas_src>

<mosaic_0001>
module attributes {stable_mosaic.version = 11 : i64} {
  func.func @_fused_forward_kernel(%arg0: memref<20x20xf32, #tpu.memory_space<vmem>>, %arg1: memref<20x32xbf16, #tpu.memory_space<vmem>>, %arg2: memref<4x1xi32, #tpu.memory_space<vmem>>, %arg3: memref<20x20xf32, #tpu.memory_space<vmem>>, %arg4: memref<16x32xbf16, #tpu.memory_space<vmem>>, %arg5: memref<20x1xi32, #tpu.memory_space<vmem>>, %arg6: memref<2x1x32xf32, #tpu.memory_space<vmem>>, %arg7: memref<2x32x96xbf16, #tpu.memory_space<vmem>>, %arg8: memref<2x4x8x32xbf16, #tpu.memory_space<vmem>>, %arg9: memref<2x1x32xf32, #tpu.memory_space<vmem>>, %arg10: memref<2x32x128xbf16, #tpu.memory_space<vmem>>, %arg11: memref<2x128x32xbf16, #tpu.memory_space<vmem>>, %arg12: memref<1x32xf32, #tpu.memory_space<vmem>>, %arg13: memref<2x1x32xf32, #tpu.memory_space<vmem>>, %arg14: memref<2x32x96xbf16, #tpu.memory_space<vmem>>, %arg15: memref<2x4x8x32xbf16, #tpu.memory_space<vmem>>, %arg16: memref<2x1x32xf32, #tpu.memory_space<vmem>>, %arg17: memref<2x32x128xbf16, #tpu.memory_space<vmem>>, %arg18: memref<2x128x32xbf16, #tpu.memory_space<vmem>>, %arg19: memref<1x32xf32, #tpu.memory_space<vmem>>, %arg20: memref<32x128xbf16, #tpu.memory_space<vmem>>, %arg21: memref<20x128xf32, #tpu.memory_space<vmem>>, %arg22: memref<1x1xf32, #tpu.memory_space<smem>>) attributes {dimension_semantics = [], scalar_prefetch = 0 : i64, scratch_operands = 0 : i64, tpu.core_type = #tpu.core_type<tc>} {
    %c0 = arith.constant 0 : index
    %c0_0 = arith.constant 0 : index
    %0 = vector.load %arg1[%c0, %c0_0] : memref<20x32xbf16, #tpu.memory_space<vmem>>, vector<20x32xbf16>
    %1 = arith.extf %0 : vector<20x32xbf16> to vector<20x32xf32>
    %c0_1 = arith.constant 0 : index
    %c0_2 = arith.constant 0 : index
    %2 = vector.load %arg0[%c0_1, %c0_2] : memref<20x20xf32, #tpu.memory_space<vmem>>, vector<20x20xf32>
    %3 = vector.shape_cast %2 : vector<20x20xf32> to vector<1x20x20xf32>
    %c0_3 = arith.constant 0 : index
    %c0_4 = arith.constant 0 : index
    %c0_5 = arith.constant 0 : index
    %4 = vector.load %arg6[%c0_3, %c0_4, %c0_5] : memref<2x1x32xf32, #tpu.memory_space<vmem>>, vector<1x1x32xf32>
    %5 = vector.shape_cast %4 : vector<1x1x32xf32> to vector<1x32xf32>
    %6 = arith.mulf %1, %1 : vector<20x32xf32>
    %cst = arith.constant dense<0.000000e+00> : vector<20xf32>
    %7 = vector.multi_reduction <add>, %6, %cst [1] : vector<20x32xf32> to vector<20xf32>
    %8 = vector.shape_cast %7 : vector<20xf32> to vector<20x1xf32>
    %cst_6 = arith.constant 3.200000e+01 : f32
    %9 = vector.broadcast %cst_6 : f32 to vector<20x1xf32>
    %10 = arith.divf %8, %9 : vector<20x1xf32>
    %cst_7 = arith.constant 9.99999997E-7 : f32
    %11 = vector.broadcast %cst_7 : f32 to vector<20x1xf32>
    %12 = arith.addf %10, %11 : vector<20x1xf32>
    %13 = math.rsqrt %12 : vector<20x1xf32>
    %14 = vector.broadcast %13 : vector<20x1xf32> to vector<20x32xf32>
    %15 = arith.mulf %1, %14 : vector<20x32xf32>
    %16 = vector.broadcast %5 : vector<1x32xf32> to vector<20x32xf32>
    %17 = arith.mulf %15, %16 : vector<20x32xf32>
    %18 = arith.truncf %17 : vector<20x32xf32> to vector<20x32xbf16>
    %c0_8 = arith.constant 0 : index
    %c0_9 = arith.constant 0 : index
    %c0_10 = arith.constant 0 : index
    %19 = vector.load %arg7[%c0_8, %c0_9, %c0_10] : memref<2x32x96xbf16, #tpu.memory_space<vmem>>, vector<1x32x96xbf16>
    %20 = vector.shape_cast %19 : vector<1x32x96xbf16> to vector<32x96xbf16>
    %cst_11 = arith.constant dense<0.000000e+00> : vector<20x96xf32>
    %21 = tpu.matmul %18, %20, %cst_11 {dimension_numbers = #tpu.dot_dimension_numbers<[1], [0], [0], [1], [0, 0, 1, 1], [], []>} : vector<20x32xbf16>, vector<32x96xbf16>, vector<20x96xf32> -> vector<20x96xf32>
    %22 = vector.extract_strided_slice %21 {offsets = [0, 0], sizes = [20, 8], strides = [1, 1]} : vector<20x96xf32> to vector<20x8xf32>
    %23 = vector.extract_strided_slice %21 {offsets = [0, 8], sizes = [20, 8], strides = [1, 1]} : vector<20x96xf32> to vector<20x8xf32>
    %24 = vector.extract_strided_slice %21 {offsets = [0, 16], sizes = [20, 8], strides = [1, 1]} : vector<20x96xf32> to vector<20x8xf32>
    %25 = vector.extract_strided_slice %21 {offsets = [0, 24], sizes = [20, 8], strides = [1, 1]} : vector<20x96xf32> to vector<20x8xf32>
    %26 = vector.shape_cast %22 : vector<20x8xf32> to vector<1x20x8xf32>
    %27 = vector.shape_cast %23 : vector<20x8xf32> to vector<1x20x8xf32>
    %28 = vector.shape_cast %24 : vector<20x8xf32> to vector<1x20x8xf32>
    %29 = vector.shape_cast %25 : vector<20x8xf32> to vector<1x20x8xf32>
    %30 = tpu.concatenate %26, %27, %28, %29 in 0 : vector<1x20x8xf32>, vector<1x20x8xf32>, vector<1x20x8xf32>, vector<1x20x8xf32> -> vector<4x20x8xf32>
    %31 = vector.extract_strided_slice %21 {offsets = [0, 32], sizes = [20, 8], strides = [1, 1]} : vector<20x96xf32> to vector<20x8xf32>
    %32 = vector.extract_strided_slice %21 {offsets = [0, 40], sizes = [20, 8], strides = [1, 1]} : vector<20x96xf32> to vector<20x8xf32>
    %33 = vector.extract_strided_slice %21 {offsets = [0, 48], sizes = [20, 8], strides = [1, 1]} : vector<20x96xf32> to vector<20x8xf32>
    %34 = vector.extract_strided_slice %21 {offsets = [0, 56], sizes = [20, 8], strides = [1, 1]} : vector<20x96xf32> to vector<20x8xf32>
    %35 = vector.shape_cast %31 : vector<20x8xf32> to vector<1x20x8xf32>
    %36 = vector.shape_cast %32 : vector<20x8xf32> to vector<1x20x8xf32>
    %37 = vector.shape_cast %33 : vector<20x8xf32> to vector<1x20x8xf32>
    %38 = vector.shape_cast %34 : vector<20x8xf32> to vector<1x20x8xf32>
    %39 = tpu.concatenate %35, %36, %37, %38 in 0 : vector<1x20x8xf32>, vector<1x20x8xf32>, vector<1x20x8xf32>, vector<1x20x8xf32> -> vector<4x20x8xf32>
    %40 = vector.extract_strided_slice %21 {offsets = [0, 64], sizes = [20, 8], strides = [1, 1]} : vector<20x96xf32> to vector<20x8xf32>
    %41 = vector.extract_strided_slice %21 {offsets = [0, 72], sizes = [20, 8], strides = [1, 1]} : vector<20x96xf32> to vector<20x8xf32>
    %42 = vector.extract_strided_slice %21 {offsets = [0, 80], sizes = [20, 8], strides = [1, 1]} : vector<20x96xf32> to vector<20x8xf32>
    %43 = vector.extract_strided_slice %21 {offsets = [0, 88], sizes = [20, 8], strides = [1, 1]} : vector<20x96xf32> to vector<20x8xf32>
    %44 = vector.shape_cast %40 : vector<20x8xf32> to vector<1x20x8xf32>
    %45 = vector.shape_cast %41 : vector<20x8xf32> to vector<1x20x8xf32>
    %46 = vector.shape_cast %42 : vector<20x8xf32> to vector<1x20x8xf32>
    %47 = vector.shape_cast %43 : vector<20x8xf32> to vector<1x20x8xf32>
    %48 = tpu.concatenate %44, %45, %46, %47 in 0 : vector<1x20x8xf32>, vector<1x20x8xf32>, vector<1x20x8xf32>, vector<1x20x8xf32> -> vector<4x20x8xf32>
    %49 = arith.truncf %30 : vector<4x20x8xf32> to vector<4x20x8xbf16>
    %50 = arith.truncf %39 : vector<4x20x8xf32> to vector<4x20x8xbf16>
    "tpu.trace_start"() <{level = 10 : i32, message = "hqd,hkd->hqk"}> : () -> ()
    %cst_12 = arith.constant dense<0.000000e+00> : vector<4x20x20xf32>
    %51 = tpu.matmul %49, %50, %cst_12 {dimension_numbers = #tpu.dot_dimension_numbers<[2], [2], [1], [1], [0, 0, 0, 1, 1, 1], [0], [0]>} : vector<4x20x8xbf16>, vector<4x20x8xbf16>, vector<4x20x20xf32> -> vector<4x20x20xf32>
    "tpu.trace_stop"() : () -> ()
    %cst_13 = arith.constant 0.353553385 : f32
    %52 = vector.broadcast %cst_13 : f32 to vector<4x20x20xf32>
    %53 = arith.mulf %51, %52 : vector<4x20x20xf32>
    %54 = vector.broadcast %3 : vector<1x20x20xf32> to vector<4x20x20xf32>
    %55 = arith.addf %53, %54 : vector<4x20x20xf32>
    %cst_14 = arith.constant dense<0xFF800000> : vector<4x20xf32>
    %56 = vector.multi_reduction <maximumf>, %55, %cst_14 [2] : vector<4x20x20xf32> to vector<4x20xf32>
    %57 = vector.shape_cast %56 : vector<4x20xf32> to vector<4x20x1xf32>
    %58 = vector.broadcast %57 : vector<4x20x1xf32> to vector<4x20x20xf32>
    %59 = arith.subf %55, %58 : vector<4x20x20xf32>
    %60 = math.exp %59 : vector<4x20x20xf32>
    %cst_15 = arith.constant dense<0.000000e+00> : vector<4x20xf32>
    %61 = vector.multi_reduction <add>, %60, %cst_15 [2] : vector<4x20x20xf32> to vector<4x20xf32>
    %62 = vector.shape_cast %61 : vector<4x20xf32> to vector<4x20x1xf32>
    %63 = tpu.reciprocal %62 {approx = true} : vector<4x20x1xf32> -> vector<4x20x1xf32>
    %64 = vector.broadcast %63 : vector<4x20x1xf32> to vector<4x20x20xf32>
    %65 = arith.mulf %60, %64 : vector<4x20x20xf32>
    %66 = arith.truncf %65 : vector<4x20x20xf32> to vector<4x20x20xbf16>
    %67 = arith.truncf %48 : vector<4x20x8xf32> to vector<4x20x8xbf16>
    "tpu.trace_start"() <{level = 10 : i32, message = "hqk,hkd->hqd"}> : () -> ()
    %cst_16 = arith.constant dense<0.000000e+00> : vector<4x20x8xf32>
    %68 = tpu.matmul %66, %67, %cst_16 {dimension_numbers = #tpu.dot_dimension_numbers<[2], [1], [1], [2], [0, 0, 0, 1, 1, 2], [0], [0]>} : vector<4x20x20xbf16>, vector<4x20x8xbf16>, vector<4x20x8xf32> -> vector<4x20x8xf32>
    "tpu.trace_stop"() : () -> ()
    %69 = arith.truncf %68 : vector<4x20x8xf32> to vector<4x20x8xbf16>
    %c0_17 = arith.constant 0 : index
    %c0_18 = arith.constant 0 : index
    %c0_19 = arith.constant 0 : index
    %c0_20 = arith.constant 0 : index
    %70 = vector.load %arg8[%c0_17, %c0_18, %c0_19, %c0_20] : memref<2x4x8x32xbf16, #tpu.memory_space<vmem>>, vector<1x4x8x32xbf16>
    %71 = vector.shape_cast %70 : vector<1x4x8x32xbf16> to vector<4x8x32xbf16>
    "tpu.trace_start"() <{level = 10 : i32, message = "hnd,hdk->hnk"}> : () -> ()
    %cst_21 = arith.constant dense<0.000000e+00> : vector<4x20x32xf32>
    %72 = tpu.matmul %69, %71, %cst_21 {dimension_numbers = #tpu.dot_dimension_numbers<[2], [1], [1], [2], [0, 0, 0, 1, 1, 2], [0], [0]>} : vector<4x20x8xbf16>, vector<4x8x32xbf16>, vector<4x20x32xf32> -> vector<4x20x32xf32>
    "tpu.trace_stop"() : () -> ()
    %cst_22 = arith.constant dense<0.000000e+00> : vector<20x32xf32>
    %73 = vector.multi_reduction <add>, %72, %cst_22 [0] : vector<4x20x32xf32> to vector<20x32xf32>
    %74 = arith.addf %1, %73 : vector<20x32xf32>
    %c0_23 = arith.constant 0 : index
    %c0_24 = arith.constant 0 : index
    %c0_25 = arith.constant 0 : index
    %75 = vector.load %arg9[%c0_23, %c0_24, %c0_25] : memref<2x1x32xf32, #tpu.memory_space<vmem>>, vector<1x1x32xf32>
    %76 = vector.shape_cast %75 : vector<1x1x32xf32> to vector<1x32xf32>
    %77 = arith.mulf %74, %74 : vector<20x32xf32>
    %cst_26 = arith.constant dense<0.000000e+00> : vector<20xf32>
    %78 = vector.multi_reduction <add>, %77, %cst_26 [1] : vector<20x32xf32> to vector<20xf32>
    %79 = vector.shape_cast %78 : vector<20xf32> to vector<20x1xf32>
    %cst_27 = arith.constant 3.200000e+01 : f32
    %80 = vector.broadcast %cst_27 : f32 to vector<20x1xf32>
    %81 = arith.divf %79, %80 : vector<20x1xf32>
    %cst_28 = arith.constant 9.99999997E-7 : f32
    %82 = vector.broadcast %cst_28 : f32 to vector<20x1xf32>
    %83 = arith.addf %81, %82 : vector<20x1xf32>
    %84 = math.rsqrt %83 : vector<20x1xf32>
    %85 = vector.broadcast %84 : vector<20x1xf32> to vector<20x32xf32>
    %86 = arith.mulf %74, %85 : vector<20x32xf32>
    %87 = vector.broadcast %76 : vector<1x32xf32> to vector<20x32xf32>
    %88 = arith.mulf %86, %87 : vector<20x32xf32>
    %89 = arith.truncf %88 : vector<20x32xf32> to vector<20x32xbf16>
    %c0_29 = arith.constant 0 : index
    %c0_30 = arith.constant 0 : index
    %c0_31 = arith.constant 0 : index
    %90 = vector.load %arg10[%c0_29, %c0_30, %c0_31] : memref<2x32x128xbf16, #tpu.memory_space<vmem>>, vector<1x32x128xbf16>
    %91 = vector.shape_cast %90 : vector<1x32x128xbf16> to vector<32x128xbf16>
    %cst_32 = arith.constant dense<0.000000e+00> : vector<20x128xf32>
    %92 = tpu.matmul %89, %91, %cst_32 {dimension_numbers = #tpu.dot_dimension_numbers<[1], [0], [0], [1], [0, 0, 1, 1], [], []>} : vector<20x32xbf16>, vector<32x128xbf16>, vector<20x128xf32> -> vector<20x128xf32>
    %93 = arith.negf %92 : vector<20x128xf32>
    %94 = math.exp %93 : vector<20x128xf32>
    %cst_33 = arith.constant 1.000000e+00 : f32
    %95 = vector.broadcast %cst_33 : f32 to vector<20x128xf32>
    %96 = arith.addf %95, %94 : vector<20x128xf32>
    %97 = arith.divf %95, %96 : vector<20x128xf32>
    %98 = arith.mulf %92, %97 : vector<20x128xf32>
    %c64_i32 = arith.constant 64 : i32
    %99 = tpu.dynamic_rotate %92 by %c64_i32 dim 1 : vector<20x128xf32>, i32 -> vector<20x128xf32>
    %100 = arith.mulf %98, %99 : vector<20x128xf32>
    %101 = arith.truncf %100 : vector<20x128xf32> to vector<20x128xbf16>
    %c0_34 = arith.constant 0 : index
    %c0_35 = arith.constant 0 : index
    %c0_36 = arith.constant 0 : index
    %102 = vector.load %arg11[%c0_34, %c0_35, %c0_36] : memref<2x128x32xbf16, #tpu.memory_space<vmem>>, vector<1x128x32xbf16>
    %103 = vector.shape_cast %102 : vector<1x128x32xbf16> to vector<128x32xbf16>
    %cst_37 = arith.constant dense<0.000000e+00> : vector<20x32xf32>
    %104 = tpu.matmul %101, %103, %cst_37 {dimension_numbers = #tpu.dot_dimension_numbers<[1], [0], [0], [1], [0, 0, 1, 1], [], []>} : vector<20x128xbf16>, vector<128x32xbf16>, vector<20x32xf32> -> vector<20x32xf32>
    %105 = arith.addf %74, %104 : vector<20x32xf32>
    %c1 = arith.constant 1 : index
    %c0_38 = arith.constant 0 : index
    %c0_39 = arith.constant 0 : index
    %106 = vector.load %arg6[%c1, %c0_38, %c0_39] : memref<2x1x32xf32, #tpu.memory_space<vmem>>, vector<1x1x32xf32>
    %107 = vector.shape_cast %106 : vector<1x1x32xf32> to vector<1x32xf32>
    %108 = arith.mulf %105, %105 : vector<20x32xf32>
    %cst_40 = arith.constant dense<0.000000e+00> : vector<20xf32>
    %109 = vector.multi_reduction <add>, %108, %cst_40 [1] : vector<20x32xf32> to vector<20xf32>
    %110 = vector.shape_cast %109 : vector<20xf32> to vector<20x1xf32>
    %cst_41 = arith.constant 3.200000e+01 : f32
    %111 = vector.broadcast %cst_41 : f32 to vector<20x1xf32>
    %112 = arith.divf %110, %111 : vector<20x1xf32>
    %cst_42 = arith.constant 9.99999997E-7 : f32
    %113 = vector.broadcast %cst_42 : f32 to vector<20x1xf32>
    %114 = arith.addf %112, %113 : vector<20x1xf32>
    %115 = math.rsqrt %114 : vector<20x1xf32>
    %116 = vector.broadcast %115 : vector<20x1xf32> to vector<20x32xf32>
    %117 = arith.mulf %105, %116 : vector<20x32xf32>
    %118 = vector.broadcast %107 : vector<1x32xf32> to vector<20x32xf32>
    %119 = arith.mulf %117, %118 : vector<20x32xf32>
    %120 = arith.truncf %119 : vector<20x32xf32> to vector<20x32xbf16>
    %c1_43 = arith.constant 1 : index
    %c0_44 = arith.constant 0 : index
    %c0_45 = arith.constant 0 : index
    %121 = vector.load %arg7[%c1_43, %c0_44, %c0_45] : memref<2x32x96xbf16, #tpu.memory_space<vmem>>, vector<1x32x96xbf16>
    %122 = vector.shape_cast %121 : vector<1x32x96xbf16> to vector<32x96xbf16>
    %cst_46 = arith.constant dense<0.000000e+00> : vector<20x96xf32>
    %123 = tpu.matmul %120, %122, %cst_46 {dimension_numbers = #tpu.dot_dimension_numbers<[1], [0], [0], [1], [0, 0, 1, 1], [], []>} : vector<20x32xbf16>, vector<32x96xbf16>, vector<20x96xf32> -> vector<20x96xf32>
    %124 = vector.extract_strided_slice %123 {offsets = [0, 0], sizes = [20, 8], strides = [1, 1]} : vector<20x96xf32> to vector<20x8xf32>
    %125 = vector.extract_strided_slice %123 {offsets = [0, 8], sizes = [20, 8], strides = [1, 1]} : vector<20x96xf32> to vector<20x8xf32>
    %126 = vector.extract_strided_slice %123 {offsets = [0, 16], sizes = [20, 8], strides = [1, 1]} : vector<20x96xf32> to vector<20x8xf32>
    %127 = vector.extract_strided_slice %123 {offsets = [0, 24], sizes = [20, 8], strides = [1, 1]} : vector<20x96xf32> to vector<20x8xf32>
    %128 = vector.shape_cast %124 : vector<20x8xf32> to vector<1x20x8xf32>
    %129 = vector.shape_cast %125 : vector<20x8xf32> to vector<1x20x8xf32>
    %130 = vector.shape_cast %126 : vector<20x8xf32> to vector<1x20x8xf32>
    %131 = vector.shape_cast %127 : vector<20x8xf32> to vector<1x20x8xf32>
    %132 = tpu.concatenate %128, %129, %130, %131 in 0 : vector<1x20x8xf32>, vector<1x20x8xf32>, vector<1x20x8xf32>, vector<1x20x8xf32> -> vector<4x20x8xf32>
    %133 = vector.extract_strided_slice %123 {offsets = [0, 32], sizes = [20, 8], strides = [1, 1]} : vector<20x96xf32> to vector<20x8xf32>
    %134 = vector.extract_strided_slice %123 {offsets = [0, 40], sizes = [20, 8], strides = [1, 1]} : vector<20x96xf32> to vector<20x8xf32>
    %135 = vector.extract_strided_slice %123 {offsets = [0, 48], sizes = [20, 8], strides = [1, 1]} : vector<20x96xf32> to vector<20x8xf32>
    %136 = vector.extract_strided_slice %123 {offsets = [0, 56], sizes = [20, 8], strides = [1, 1]} : vector<20x96xf32> to vector<20x8xf32>
    %137 = vector.shape_cast %133 : vector<20x8xf32> to vector<1x20x8xf32>
    %138 = vector.shape_cast %134 : vector<20x8xf32> to vector<1x20x8xf32>
    %139 = vector.shape_cast %135 : vector<20x8xf32> to vector<1x20x8xf32>
    %140 = vector.shape_cast %136 : vector<20x8xf32> to vector<1x20x8xf32>
    %141 = tpu.concatenate %137, %138, %139, %140 in 0 : vector<1x20x8xf32>, vector<1x20x8xf32>, vector<1x20x8xf32>, vector<1x20x8xf32> -> vector<4x20x8xf32>
    %142 = vector.extract_strided_slice %123 {offsets = [0, 64], sizes = [20, 8], strides = [1, 1]} : vector<20x96xf32> to vector<20x8xf32>
    %143 = vector.extract_strided_slice %123 {offsets = [0, 72], sizes = [20, 8], strides = [1, 1]} : vector<20x96xf32> to vector<20x8xf32>
    %144 = vector.extract_strided_slice %123 {offsets = [0, 80], sizes = [20, 8], strides = [1, 1]} : vector<20x96xf32> to vector<20x8xf32>
    %145 = vector.extract_strided_slice %123 {offsets = [0, 88], sizes = [20, 8], strides = [1, 1]} : vector<20x96xf32> to vector<20x8xf32>
    %146 = vector.shape_cast %142 : vector<20x8xf32> to vector<1x20x8xf32>
    %147 = vector.shape_cast %143 : vector<20x8xf32> to vector<1x20x8xf32>
    %148 = vector.shape_cast %144 : vector<20x8xf32> to vector<1x20x8xf32>
    %149 = vector.shape_cast %145 : vector<20x8xf32> to vector<1x20x8xf32>
    %150 = tpu.concatenate %146, %147, %148, %149 in 0 : vector<1x20x8xf32>, vector<1x20x8xf32>, vector<1x20x8xf32>, vector<1x20x8xf32> -> vector<4x20x8xf32>
    %151 = arith.truncf %132 : vector<4x20x8xf32> to vector<4x20x8xbf16>
    %152 = arith.truncf %141 : vector<4x20x8xf32> to vector<4x20x8xbf16>
    "tpu.trace_start"() <{level = 10 : i32, message = "hqd,hkd->hqk"}> : () -> ()
    %cst_47 = arith.constant dense<0.000000e+00> : vector<4x20x20xf32>
    %153 = tpu.matmul %151, %152, %cst_47 {dimension_numbers = #tpu.dot_dimension_numbers<[2], [2], [1], [1], [0, 0, 0, 1, 1, 1], [0], [0]>} : vector<4x20x8xbf16>, vector<4x20x8xbf16>, vector<4x20x20xf32> -> vector<4x20x20xf32>
    "tpu.trace_stop"() : () -> ()
    %cst_48 = arith.constant 0.353553385 : f32
    %154 = vector.broadcast %cst_48 : f32 to vector<4x20x20xf32>
    %155 = arith.mulf %153, %154 : vector<4x20x20xf32>
    %156 = vector.broadcast %3 : vector<1x20x20xf32> to vector<4x20x20xf32>
    %157 = arith.addf %155, %156 : vector<4x20x20xf32>
    %cst_49 = arith.constant dense<0xFF800000> : vector<4x20xf32>
    %158 = vector.multi_reduction <maximumf>, %157, %cst_49 [2] : vector<4x20x20xf32> to vector<4x20xf32>
    %159 = vector.shape_cast %158 : vector<4x20xf32> to vector<4x20x1xf32>
    %160 = vector.broadcast %159 : vector<4x20x1xf32> to vector<4x20x20xf32>
    %161 = arith.subf %157, %160 : vector<4x20x20xf32>
    %162 = math.exp %161 : vector<4x20x20xf32>
    %cst_50 = arith.constant dense<0.000000e+00> : vector<4x20xf32>
    %163 = vector.multi_reduction <add>, %162, %cst_50 [2] : vector<4x20x20xf32> to vector<4x20xf32>
    %164 = vector.shape_cast %163 : vector<4x20xf32> to vector<4x20x1xf32>
    %165 = tpu.reciprocal %164 {approx = true} : vector<4x20x1xf32> -> vector<4x20x1xf32>
    %166 = vector.broadcast %165 : vector<4x20x1xf32> to vector<4x20x20xf32>
    %167 = arith.mulf %162, %166 : vector<4x20x20xf32>
    %168 = arith.truncf %167 : vector<4x20x20xf32> to vector<4x20x20xbf16>
    %169 = arith.truncf %150 : vector<4x20x8xf32> to vector<4x20x8xbf16>
    "tpu.trace_start"() <{level = 10 : i32, message = "hqk,hkd->hqd"}> : () -> ()
    %cst_51 = arith.constant dense<0.000000e+00> : vector<4x20x8xf32>
    %170 = tpu.matmul %168, %169, %cst_51 {dimension_numbers = #tpu.dot_dimension_numbers<[2], [1], [1], [2], [0, 0, 0, 1, 1, 2], [0], [0]>} : vector<4x20x20xbf16>, vector<4x20x8xbf16>, vector<4x20x8xf32> -> vector<4x20x8xf32>
    "tpu.trace_stop"() : () -> ()
    %171 = arith.truncf %170 : vector<4x20x8xf32> to vector<4x20x8xbf16>
    %c1_52 = arith.constant 1 : index
    %c0_53 = arith.constant 0 : index
    %c0_54 = arith.constant 0 : index
    %c0_55 = arith.constant 0 : index
    %172 = vector.load %arg8[%c1_52, %c0_53, %c0_54, %c0_55] : memref<2x4x8x32xbf16, #tpu.memory_space<vmem>>, vector<1x4x8x32xbf16>
    %173 = vector.shape_cast %172 : vector<1x4x8x32xbf16> to vector<4x8x32xbf16>
    "tpu.trace_start"() <{level = 10 : i32, message = "hnd,hdk->hnk"}> : () -> ()
    %cst_56 = arith.constant dense<0.000000e+00> : vector<4x20x32xf32>
    %174 = tpu.matmul %171, %173, %cst_56 {dimension_numbers = #tpu.dot_dimension_numbers<[2], [1], [1], [2], [0, 0, 0, 1, 1, 2], [0], [0]>} : vector<4x20x8xbf16>, vector<4x8x32xbf16>, vector<4x20x32xf32> -> vector<4x20x32xf32>
    "tpu.trace_stop"() : () -> ()
    %cst_57 = arith.constant dense<0.000000e+00> : vector<20x32xf32>
    %175 = vector.multi_reduction <add>, %174, %cst_57 [0] : vector<4x20x32xf32> to vector<20x32xf32>
    %176 = arith.addf %105, %175 : vector<20x32xf32>
    %c1_58 = arith.constant 1 : index
    %c0_59 = arith.constant 0 : index
    %c0_60 = arith.constant 0 : index
    %177 = vector.load %arg9[%c1_58, %c0_59, %c0_60] : memref<2x1x32xf32, #tpu.memory_space<vmem>>, vector<1x1x32xf32>
    %178 = vector.shape_cast %177 : vector<1x1x32xf32> to vector<1x32xf32>
    %179 = arith.mulf %176, %176 : vector<20x32xf32>
    %cst_61 = arith.constant dense<0.000000e+00> : vector<20xf32>
    %180 = vector.multi_reduction <add>, %179, %cst_61 [1] : vector<20x32xf32> to vector<20xf32>
    %181 = vector.shape_cast %180 : vector<20xf32> to vector<20x1xf32>
    %cst_62 = arith.constant 3.200000e+01 : f32
    %182 = vector.broadcast %cst_62 : f32 to vector<20x1xf32>
    %183 = arith.divf %181, %182 : vector<20x1xf32>
    %cst_63 = arith.constant 9.99999997E-7 : f32
    %184 = vector.broadcast %cst_63 : f32 to vector<20x1xf32>
    %185 = arith.addf %183, %184 : vector<20x1xf32>
    %186 = math.rsqrt %185 : vector<20x1xf32>
    %187 = vector.broadcast %186 : vector<20x1xf32> to vector<20x32xf32>
    %188 = arith.mulf %176, %187 : vector<20x32xf32>
    %189 = vector.broadcast %178 : vector<1x32xf32> to vector<20x32xf32>
    %190 = arith.mulf %188, %189 : vector<20x32xf32>
    %191 = arith.truncf %190 : vector<20x32xf32> to vector<20x32xbf16>
    %c1_64 = arith.constant 1 : index
    %c0_65 = arith.constant 0 : index
    %c0_66 = arith.constant 0 : index
    %192 = vector.load %arg10[%c1_64, %c0_65, %c0_66] : memref<2x32x128xbf16, #tpu.memory_space<vmem>>, vector<1x32x128xbf16>
    %193 = vector.shape_cast %192 : vector<1x32x128xbf16> to vector<32x128xbf16>
    %cst_67 = arith.constant dense<0.000000e+00> : vector<20x128xf32>
    %194 = tpu.matmul %191, %193, %cst_67 {dimension_numbers = #tpu.dot_dimension_numbers<[1], [0], [0], [1], [0, 0, 1, 1], [], []>} : vector<20x32xbf16>, vector<32x128xbf16>, vector<20x128xf32> -> vector<20x128xf32>
    %195 = arith.negf %194 : vector<20x128xf32>
    %196 = math.exp %195 : vector<20x128xf32>
    %cst_68 = arith.constant 1.000000e+00 : f32
    %197 = vector.broadcast %cst_68 : f32 to vector<20x128xf32>
    %198 = arith.addf %197, %196 : vector<20x128xf32>
    %199 = arith.divf %197, %198 : vector<20x128xf32>
    %200 = arith.mulf %194, %199 : vector<20x128xf32>
    %c64_i32_69 = arith.constant 64 : i32
    %201 = tpu.dynamic_rotate %194 by %c64_i32_69 dim 1 : vector<20x128xf32>, i32 -> vector<20x128xf32>
    %202 = arith.mulf %200, %201 : vector<20x128xf32>
    %203 = arith.truncf %202 : vector<20x128xf32> to vector<20x128xbf16>
    %c1_70 = arith.constant 1 : index
    %c0_71 = arith.constant 0 : index
    %c0_72 = arith.constant 0 : index
    %204 = vector.load %arg11[%c1_70, %c0_71, %c0_72] : memref<2x128x32xbf16, #tpu.memory_space<vmem>>, vector<1x128x32xbf16>
    %205 = vector.shape_cast %204 : vector<1x128x32xbf16> to vector<128x32xbf16>
    %cst_73 = arith.constant dense<0.000000e+00> : vector<20x32xf32>
    %206 = tpu.matmul %203, %205, %cst_73 {dimension_numbers = #tpu.dot_dimension_numbers<[1], [0], [0], [1], [0, 0, 1, 1], [], []>} : vector<20x128xbf16>, vector<128x32xbf16>, vector<20x32xf32> -> vector<20x32xf32>
    %207 = arith.addf %176, %206 : vector<20x32xf32>
    %c0_74 = arith.constant 0 : index
    %c0_75 = arith.constant 0 : index
    %208 = vector.load %arg12[%c0_74, %c0_75] : memref<1x32xf32, #tpu.memory_space<vmem>>, vector<1x32xf32>
    %209 = arith.mulf %207, %207 : vector<20x32xf32>
    %cst_76 = arith.constant dense<0.000000e+00> : vector<20xf32>
    %210 = vector.multi_reduction <add>, %209, %cst_76 [1] : vector<20x32xf32> to vector<20xf32>
    %211 = vector.shape_cast %210 : vector<20xf32> to vector<20x1xf32>
    %cst_77 = arith.constant 3.200000e+01 : f32
    %212 = vector.broadcast %cst_77 : f32 to vector<20x1xf32>
    %213 = arith.divf %211, %212 : vector<20x1xf32>
    %cst_78 = arith.constant 9.99999997E-7 : f32
    %214 = vector.broadcast %cst_78 : f32 to vector<20x1xf32>
    %215 = arith.addf %213, %214 : vector<20x1xf32>
    %216 = math.rsqrt %215 : vector<20x1xf32>
    %217 = vector.broadcast %216 : vector<20x1xf32> to vector<20x32xf32>
    %218 = arith.mulf %207, %217 : vector<20x32xf32>
    %219 = vector.broadcast %208 : vector<1x32xf32> to vector<20x32xf32>
    %220 = arith.mulf %218, %219 : vector<20x32xf32>
    %221 = tpu.iota {dimensions = array<i32: 1>} : vector<4x20xi32>
    %c0_79 = arith.constant 0 : index
    %c0_80 = arith.constant 0 : index
    %222 = vector.load %arg2[%c0_79, %c0_80] : memref<4x1xi32, #tpu.memory_space<vmem>>, vector<4x1xi32>
    %223 = vector.broadcast %222 : vector<4x1xi32> to vector<4x20xi32>
    %224 = arith.cmpi eq, %221, %223 : vector<4x20xi32>
    %225 = arith.extui %224 : vector<4x20xi1> to vector<4x20xi32>
    %226 = arith.sitofp %225 : vector<4x20xi32> to vector<4x20xf32>
    %cst_81 = arith.constant dense<0.000000e+00> : vector<4x32xf32>
    %227 = tpu.matmul %226, %220, %cst_81 {dimension_numbers = #tpu.dot_dimension_numbers<[1], [0], [0], [1], [0, 0, 1, 1], [], []>} : vector<4x20xf32>, vector<20x32xf32>, vector<4x32xf32> -> vector<4x32xf32>
    %c0_82 = arith.constant 0 : index
    %c0_83 = arith.constant 0 : index
    %228 = vector.load %arg4[%c0_82, %c0_83] : memref<16x32xbf16, #tpu.memory_space<vmem>>, vector<16x32xbf16>
    %229 = arith.extf %228 : vector<16x32xbf16> to vector<16x32xf32>
    %230 = vector.extract_strided_slice %227 {offsets = [0, 0], sizes = [2, 32], strides = [1, 1]} : vector<4x32xf32> to vector<2x32xf32>
    %231 = vector.extract_strided_slice %229 {offsets = [0, 0], sizes = [8, 32], strides = [1, 1]} : vector<16x32xf32> to vector<8x32xf32>
    %232 = vector.extract_strided_slice %227 {offsets = [2, 0], sizes = [2, 32], strides = [1, 1]} : vector<4x32xf32> to vector<2x32xf32>
    %233 = vector.extract_strided_slice %229 {offsets = [8, 0], sizes = [8, 32], strides = [1, 1]} : vector<16x32xf32> to vector<8x32xf32>
    %234 = tpu.concatenate %230, %231, %232, %233 in 0 : vector<2x32xf32>, vector<8x32xf32>, vector<2x32xf32>, vector<8x32xf32> -> vector<20x32xf32>
    %c0_84 = arith.constant 0 : index
    %c0_85 = arith.constant 0 : index
    %235 = vector.load %arg3[%c0_84, %c0_85] : memref<20x20xf32, #tpu.memory_space<vmem>>, vector<20x20xf32>
    %236 = vector.shape_cast %235 : vector<20x20xf32> to vector<1x20x20xf32>
    %c0_86 = arith.constant 0 : index
    %c0_87 = arith.constant 0 : index
    %c0_88 = arith.constant 0 : index
    %237 = vector.load %arg13[%c0_86, %c0_87, %c0_88] : memref<2x1x32xf32, #tpu.memory_space<vmem>>, vector<1x1x32xf32>
    %238 = vector.shape_cast %237 : vector<1x1x32xf32> to vector<1x32xf32>
    %239 = arith.mulf %234, %234 : vector<20x32xf32>
    %cst_89 = arith.constant dense<0.000000e+00> : vector<20xf32>
    %240 = vector.multi_reduction <add>, %239, %cst_89 [1] : vector<20x32xf32> to vector<20xf32>
    %241 = vector.shape_cast %240 : vector<20xf32> to vector<20x1xf32>
    %cst_90 = arith.constant 3.200000e+01 : f32
    %242 = vector.broadcast %cst_90 : f32 to vector<20x1xf32>
    %243 = arith.divf %241, %242 : vector<20x1xf32>
    %cst_91 = arith.constant 9.99999997E-7 : f32
    %244 = vector.broadcast %cst_91 : f32 to vector<20x1xf32>
    %245 = arith.addf %243, %244 : vector<20x1xf32>
    %246 = math.rsqrt %245 : vector<20x1xf32>
    %247 = vector.broadcast %246 : vector<20x1xf32> to vector<20x32xf32>
    %248 = arith.mulf %234, %247 : vector<20x32xf32>
    %249 = vector.broadcast %238 : vector<1x32xf32> to vector<20x32xf32>
    %250 = arith.mulf %248, %249 : vector<20x32xf32>
    %251 = arith.truncf %250 : vector<20x32xf32> to vector<20x32xbf16>
    %c0_92 = arith.constant 0 : index
    %c0_93 = arith.constant 0 : index
    %c0_94 = arith.constant 0 : index
    %252 = vector.load %arg14[%c0_92, %c0_93, %c0_94] : memref<2x32x96xbf16, #tpu.memory_space<vmem>>, vector<1x32x96xbf16>
    %253 = vector.shape_cast %252 : vector<1x32x96xbf16> to vector<32x96xbf16>
    %cst_95 = arith.constant dense<0.000000e+00> : vector<20x96xf32>
    %254 = tpu.matmul %251, %253, %cst_95 {dimension_numbers = #tpu.dot_dimension_numbers<[1], [0], [0], [1], [0, 0, 1, 1], [], []>} : vector<20x32xbf16>, vector<32x96xbf16>, vector<20x96xf32> -> vector<20x96xf32>
    %255 = vector.extract_strided_slice %254 {offsets = [0, 0], sizes = [20, 8], strides = [1, 1]} : vector<20x96xf32> to vector<20x8xf32>
    %256 = vector.extract_strided_slice %254 {offsets = [0, 8], sizes = [20, 8], strides = [1, 1]} : vector<20x96xf32> to vector<20x8xf32>
    %257 = vector.extract_strided_slice %254 {offsets = [0, 16], sizes = [20, 8], strides = [1, 1]} : vector<20x96xf32> to vector<20x8xf32>
    %258 = vector.extract_strided_slice %254 {offsets = [0, 24], sizes = [20, 8], strides = [1, 1]} : vector<20x96xf32> to vector<20x8xf32>
    %259 = vector.shape_cast %255 : vector<20x8xf32> to vector<1x20x8xf32>
    %260 = vector.shape_cast %256 : vector<20x8xf32> to vector<1x20x8xf32>
    %261 = vector.shape_cast %257 : vector<20x8xf32> to vector<1x20x8xf32>
    %262 = vector.shape_cast %258 : vector<20x8xf32> to vector<1x20x8xf32>
    %263 = tpu.concatenate %259, %260, %261, %262 in 0 : vector<1x20x8xf32>, vector<1x20x8xf32>, vector<1x20x8xf32>, vector<1x20x8xf32> -> vector<4x20x8xf32>
    %264 = vector.extract_strided_slice %254 {offsets = [0, 32], sizes = [20, 8], strides = [1, 1]} : vector<20x96xf32> to vector<20x8xf32>
    %265 = vector.extract_strided_slice %254 {offsets = [0, 40], sizes = [20, 8], strides = [1, 1]} : vector<20x96xf32> to vector<20x8xf32>
    %266 = vector.extract_strided_slice %254 {offsets = [0, 48], sizes = [20, 8], strides = [1, 1]} : vector<20x96xf32> to vector<20x8xf32>
    %267 = vector.extract_strided_slice %254 {offsets = [0, 56], sizes = [20, 8], strides = [1, 1]} : vector<20x96xf32> to vector<20x8xf32>
    %268 = vector.shape_cast %264 : vector<20x8xf32> to vector<1x20x8xf32>
    %269 = vector.shape_cast %265 : vector<20x8xf32> to vector<1x20x8xf32>
    %270 = vector.shape_cast %266 : vector<20x8xf32> to vector<1x20x8xf32>
    %271 = vector.shape_cast %267 : vector<20x8xf32> to vector<1x20x8xf32>
    %272 = tpu.concatenate %268, %269, %270, %271 in 0 : vector<1x20x8xf32>, vector<1x20x8xf32>, vector<1x20x8xf32>, vector<1x20x8xf32> -> vector<4x20x8xf32>
    %273 = vector.extract_strided_slice %254 {offsets = [0, 64], sizes = [20, 8], strides = [1, 1]} : vector<20x96xf32> to vector<20x8xf32>
    %274 = vector.extract_strided_slice %254 {offsets = [0, 72], sizes = [20, 8], strides = [1, 1]} : vector<20x96xf32> to vector<20x8xf32>
    %275 = vector.extract_strided_slice %254 {offsets = [0, 80], sizes = [20, 8], strides = [1, 1]} : vector<20x96xf32> to vector<20x8xf32>
    %276 = vector.extract_strided_slice %254 {offsets = [0, 88], sizes = [20, 8], strides = [1, 1]} : vector<20x96xf32> to vector<20x8xf32>
    %277 = vector.shape_cast %273 : vector<20x8xf32> to vector<1x20x8xf32>
    %278 = vector.shape_cast %274 : vector<20x8xf32> to vector<1x20x8xf32>
    %279 = vector.shape_cast %275 : vector<20x8xf32> to vector<1x20x8xf32>
    %280 = vector.shape_cast %276 : vector<20x8xf32> to vector<1x20x8xf32>
    %281 = tpu.concatenate %277, %278, %279, %280 in 0 : vector<1x20x8xf32>, vector<1x20x8xf32>, vector<1x20x8xf32>, vector<1x20x8xf32> -> vector<4x20x8xf32>
    %282 = arith.truncf %263 : vector<4x20x8xf32> to vector<4x20x8xbf16>
    %283 = arith.truncf %272 : vector<4x20x8xf32> to vector<4x20x8xbf16>
    "tpu.trace_start"() <{level = 10 : i32, message = "hqd,hkd->hqk"}> : () -> ()
    %cst_96 = arith.constant dense<0.000000e+00> : vector<4x20x20xf32>
    %284 = tpu.matmul %282, %283, %cst_96 {dimension_numbers = #tpu.dot_dimension_numbers<[2], [2], [1], [1], [0, 0, 0, 1, 1, 1], [0], [0]>} : vector<4x20x8xbf16>, vector<4x20x8xbf16>, vector<4x20x20xf32> -> vector<4x20x20xf32>
    "tpu.trace_stop"() : () -> ()
    %cst_97 = arith.constant 0.353553385 : f32
    %285 = vector.broadcast %cst_97 : f32 to vector<4x20x20xf32>
    %286 = arith.mulf %284, %285 : vector<4x20x20xf32>
    %287 = vector.broadcast %236 : vector<1x20x20xf32> to vector<4x20x20xf32>
    %288 = arith.addf %286, %287 : vector<4x20x20xf32>
    %cst_98 = arith.constant dense<0xFF800000> : vector<4x20xf32>
    %289 = vector.multi_reduction <maximumf>, %288, %cst_98 [2] : vector<4x20x20xf32> to vector<4x20xf32>
    %290 = vector.shape_cast %289 : vector<4x20xf32> to vector<4x20x1xf32>
    %291 = vector.broadcast %290 : vector<4x20x1xf32> to vector<4x20x20xf32>
    %292 = arith.subf %288, %291 : vector<4x20x20xf32>
    %293 = math.exp %292 : vector<4x20x20xf32>
    %cst_99 = arith.constant dense<0.000000e+00> : vector<4x20xf32>
    %294 = vector.multi_reduction <add>, %293, %cst_99 [2] : vector<4x20x20xf32> to vector<4x20xf32>
    %295 = vector.shape_cast %294 : vector<4x20xf32> to vector<4x20x1xf32>
    %296 = tpu.reciprocal %295 {approx = true} : vector<4x20x1xf32> -> vector<4x20x1xf32>
    %297 = vector.broadcast %296 : vector<4x20x1xf32> to vector<4x20x20xf32>
    %298 = arith.mulf %293, %297 : vector<4x20x20xf32>
    %299 = arith.truncf %298 : vector<4x20x20xf32> to vector<4x20x20xbf16>
    %300 = arith.truncf %281 : vector<4x20x8xf32> to vector<4x20x8xbf16>
    "tpu.trace_start"() <{level = 10 : i32, message = "hqk,hkd->hqd"}> : () -> ()
    %cst_100 = arith.constant dense<0.000000e+00> : vector<4x20x8xf32>
    %301 = tpu.matmul %299, %300, %cst_100 {dimension_numbers = #tpu.dot_dimension_numbers<[2], [1], [1], [2], [0, 0, 0, 1, 1, 2], [0], [0]>} : vector<4x20x20xbf16>, vector<4x20x8xbf16>, vector<4x20x8xf32> -> vector<4x20x8xf32>
    "tpu.trace_stop"() : () -> ()
    %302 = arith.truncf %301 : vector<4x20x8xf32> to vector<4x20x8xbf16>
    %c0_101 = arith.constant 0 : index
    %c0_102 = arith.constant 0 : index
    %c0_103 = arith.constant 0 : index
    %c0_104 = arith.constant 0 : index
    %303 = vector.load %arg15[%c0_101, %c0_102, %c0_103, %c0_104] : memref<2x4x8x32xbf16, #tpu.memory_space<vmem>>, vector<1x4x8x32xbf16>
    %304 = vector.shape_cast %303 : vector<1x4x8x32xbf16> to vector<4x8x32xbf16>
    "tpu.trace_start"() <{level = 10 : i32, message = "hnd,hdk->hnk"}> : () -> ()
    %cst_105 = arith.constant dense<0.000000e+00> : vector<4x20x32xf32>
    %305 = tpu.matmul %302, %304, %cst_105 {dimension_numbers = #tpu.dot_dimension_numbers<[2], [1], [1], [2], [0, 0, 0, 1, 1, 2], [0], [0]>} : vector<4x20x8xbf16>, vector<4x8x32xbf16>, vector<4x20x32xf32> -> vector<4x20x32xf32>
    "tpu.trace_stop"() : () -> ()
    %cst_106 = arith.constant dense<0.000000e+00> : vector<20x32xf32>
    %306 = vector.multi_reduction <add>, %305, %cst_106 [0] : vector<4x20x32xf32> to vector<20x32xf32>
    %307 = arith.addf %234, %306 : vector<20x32xf32>
    %c0_107 = arith.constant 0 : index
    %c0_108 = arith.constant 0 : index
    %c0_109 = arith.constant 0 : index
    %308 = vector.load %arg16[%c0_107, %c0_108, %c0_109] : memref<2x1x32xf32, #tpu.memory_space<vmem>>, vector<1x1x32xf32>
    %309 = vector.shape_cast %308 : vector<1x1x32xf32> to vector<1x32xf32>
    %310 = arith.mulf %307, %307 : vector<20x32xf32>
    %cst_110 = arith.constant dense<0.000000e+00> : vector<20xf32>
    %311 = vector.multi_reduction <add>, %310, %cst_110 [1] : vector<20x32xf32> to vector<20xf32>
    %312 = vector.shape_cast %311 : vector<20xf32> to vector<20x1xf32>
    %cst_111 = arith.constant 3.200000e+01 : f32
    %313 = vector.broadcast %cst_111 : f32 to vector<20x1xf32>
    %314 = arith.divf %312, %313 : vector<20x1xf32>
    %cst_112 = arith.constant 9.99999997E-7 : f32
    %315 = vector.broadcast %cst_112 : f32 to vector<20x1xf32>
    %316 = arith.addf %314, %315 : vector<20x1xf32>
    %317 = math.rsqrt %316 : vector<20x1xf32>
    %318 = vector.broadcast %317 : vector<20x1xf32> to vector<20x32xf32>
    %319 = arith.mulf %307, %318 : vector<20x32xf32>
    %320 = vector.broadcast %309 : vector<1x32xf32> to vector<20x32xf32>
    %321 = arith.mulf %319, %320 : vector<20x32xf32>
    %322 = arith.truncf %321 : vector<20x32xf32> to vector<20x32xbf16>
    %c0_113 = arith.constant 0 : index
    %c0_114 = arith.constant 0 : index
    %c0_115 = arith.constant 0 : index
    %323 = vector.load %arg17[%c0_113, %c0_114, %c0_115] : memref<2x32x128xbf16, #tpu.memory_space<vmem>>, vector<1x32x128xbf16>
    %324 = vector.shape_cast %323 : vector<1x32x128xbf16> to vector<32x128xbf16>
    %cst_116 = arith.constant dense<0.000000e+00> : vector<20x128xf32>
    %325 = tpu.matmul %322, %324, %cst_116 {dimension_numbers = #tpu.dot_dimension_numbers<[1], [0], [0], [1], [0, 0, 1, 1], [], []>} : vector<20x32xbf16>, vector<32x128xbf16>, vector<20x128xf32> -> vector<20x128xf32>
    %326 = arith.negf %325 : vector<20x128xf32>
    %327 = math.exp %326 : vector<20x128xf32>
    %cst_117 = arith.constant 1.000000e+00 : f32
    %328 = vector.broadcast %cst_117 : f32 to vector<20x128xf32>
    %329 = arith.addf %328, %327 : vector<20x128xf32>
    %330 = arith.divf %328, %329 : vector<20x128xf32>
    %331 = arith.mulf %325, %330 : vector<20x128xf32>
    %c64_i32_118 = arith.constant 64 : i32
    %332 = tpu.dynamic_rotate %325 by %c64_i32_118 dim 1 : vector<20x128xf32>, i32 -> vector<20x128xf32>
    %333 = arith.mulf %331, %332 : vector<20x128xf32>
    %334 = arith.truncf %333 : vector<20x128xf32> to vector<20x128xbf16>
    %c0_119 = arith.constant 0 : index
    %c0_120 = arith.constant 0 : index
    %c0_121 = arith.constant 0 : index
    %335 = vector.load %arg18[%c0_119, %c0_120, %c0_121] : memref<2x128x32xbf16, #tpu.memory_space<vmem>>, vector<1x128x32xbf16>
    %336 = vector.shape_cast %335 : vector<1x128x32xbf16> to vector<128x32xbf16>
    %cst_122 = arith.constant dense<0.000000e+00> : vector<20x32xf32>
    %337 = tpu.matmul %334, %336, %cst_122 {dimension_numbers = #tpu.dot_dimension_numbers<[1], [0], [0], [1], [0, 0, 1, 1], [], []>} : vector<20x128xbf16>, vector<128x32xbf16>, vector<20x32xf32> -> vector<20x32xf32>
    %338 = arith.addf %307, %337 : vector<20x32xf32>
    %c1_123 = arith.constant 1 : index
    %c0_124 = arith.constant 0 : index
    %c0_125 = arith.constant 0 : index
    %339 = vector.load %arg13[%c1_123, %c0_124, %c0_125] : memref<2x1x32xf32, #tpu.memory_space<vmem>>, vector<1x1x32xf32>
    %340 = vector.shape_cast %339 : vector<1x1x32xf32> to vector<1x32xf32>
    %341 = arith.mulf %338, %338 : vector<20x32xf32>
    %cst_126 = arith.constant dense<0.000000e+00> : vector<20xf32>
    %342 = vector.multi_reduction <add>, %341, %cst_126 [1] : vector<20x32xf32> to vector<20xf32>
    %343 = vector.shape_cast %342 : vector<20xf32> to vector<20x1xf32>
    %cst_127 = arith.constant 3.200000e+01 : f32
    %344 = vector.broadcast %cst_127 : f32 to vector<20x1xf32>
    %345 = arith.divf %343, %344 : vector<20x1xf32>
    %cst_128 = arith.constant 9.99999997E-7 : f32
    %346 = vector.broadcast %cst_128 : f32 to vector<20x1xf32>
    %347 = arith.addf %345, %346 : vector<20x1xf32>
    %348 = math.rsqrt %347 : vector<20x1xf32>
    %349 = vector.broadcast %348 : vector<20x1xf32> to vector<20x32xf32>
    %350 = arith.mulf %338, %349 : vector<20x32xf32>
    %351 = vector.broadcast %340 : vector<1x32xf32> to vector<20x32xf32>
    %352 = arith.mulf %350, %351 : vector<20x32xf32>
    %353 = arith.truncf %352 : vector<20x32xf32> to vector<20x32xbf16>
    %c1_129 = arith.constant 1 : index
    %c0_130 = arith.constant 0 : index
    %c0_131 = arith.constant 0 : index
    %354 = vector.load %arg14[%c1_129, %c0_130, %c0_131] : memref<2x32x96xbf16, #tpu.memory_space<vmem>>, vector<1x32x96xbf16>
    %355 = vector.shape_cast %354 : vector<1x32x96xbf16> to vector<32x96xbf16>
    %cst_132 = arith.constant dense<0.000000e+00> : vector<20x96xf32>
    %356 = tpu.matmul %353, %355, %cst_132 {dimension_numbers = #tpu.dot_dimension_numbers<[1], [0], [0], [1], [0, 0, 1, 1], [], []>} : vector<20x32xbf16>, vector<32x96xbf16>, vector<20x96xf32> -> vector<20x96xf32>
    %357 = vector.extract_strided_slice %356 {offsets = [0, 0], sizes = [20, 8], strides = [1, 1]} : vector<20x96xf32> to vector<20x8xf32>
    %358 = vector.extract_strided_slice %356 {offsets = [0, 8], sizes = [20, 8], strides = [1, 1]} : vector<20x96xf32> to vector<20x8xf32>
    %359 = vector.extract_strided_slice %356 {offsets = [0, 16], sizes = [20, 8], strides = [1, 1]} : vector<20x96xf32> to vector<20x8xf32>
    %360 = vector.extract_strided_slice %356 {offsets = [0, 24], sizes = [20, 8], strides = [1, 1]} : vector<20x96xf32> to vector<20x8xf32>
    %361 = vector.shape_cast %357 : vector<20x8xf32> to vector<1x20x8xf32>
    %362 = vector.shape_cast %358 : vector<20x8xf32> to vector<1x20x8xf32>
    %363 = vector.shape_cast %359 : vector<20x8xf32> to vector<1x20x8xf32>
    %364 = vector.shape_cast %360 : vector<20x8xf32> to vector<1x20x8xf32>
    %365 = tpu.concatenate %361, %362, %363, %364 in 0 : vector<1x20x8xf32>, vector<1x20x8xf32>, vector<1x20x8xf32>, vector<1x20x8xf32> -> vector<4x20x8xf32>
    %366 = vector.extract_strided_slice %356 {offsets = [0, 32], sizes = [20, 8], strides = [1, 1]} : vector<20x96xf32> to vector<20x8xf32>
    %367 = vector.extract_strided_slice %356 {offsets = [0, 40], sizes = [20, 8], strides = [1, 1]} : vector<20x96xf32> to vector<20x8xf32>
    %368 = vector.extract_strided_slice %356 {offsets = [0, 48], sizes = [20, 8], strides = [1, 1]} : vector<20x96xf32> to vector<20x8xf32>
    %369 = vector.extract_strided_slice %356 {offsets = [0, 56], sizes = [20, 8], strides = [1, 1]} : vector<20x96xf32> to vector<20x8xf32>
    %370 = vector.shape_cast %366 : vector<20x8xf32> to vector<1x20x8xf32>
    %371 = vector.shape_cast %367 : vector<20x8xf32> to vector<1x20x8xf32>
    %372 = vector.shape_cast %368 : vector<20x8xf32> to vector<1x20x8xf32>
    %373 = vector.shape_cast %369 : vector<20x8xf32> to vector<1x20x8xf32>
    %374 = tpu.concatenate %370, %371, %372, %373 in 0 : vector<1x20x8xf32>, vector<1x20x8xf32>, vector<1x20x8xf32>, vector<1x20x8xf32> -> vector<4x20x8xf32>
    %375 = vector.extract_strided_slice %356 {offsets = [0, 64], sizes = [20, 8], strides = [1, 1]} : vector<20x96xf32> to vector<20x8xf32>
    %376 = vector.extract_strided_slice %356 {offsets = [0, 72], sizes = [20, 8], strides = [1, 1]} : vector<20x96xf32> to vector<20x8xf32>
    %377 = vector.extract_strided_slice %356 {offsets = [0, 80], sizes = [20, 8], strides = [1, 1]} : vector<20x96xf32> to vector<20x8xf32>
    %378 = vector.extract_strided_slice %356 {offsets = [0, 88], sizes = [20, 8], strides = [1, 1]} : vector<20x96xf32> to vector<20x8xf32>
    %379 = vector.shape_cast %375 : vector<20x8xf32> to vector<1x20x8xf32>
    %380 = vector.shape_cast %376 : vector<20x8xf32> to vector<1x20x8xf32>
    %381 = vector.shape_cast %377 : vector<20x8xf32> to vector<1x20x8xf32>
    %382 = vector.shape_cast %378 : vector<20x8xf32> to vector<1x20x8xf32>
    %383 = tpu.concatenate %379, %380, %381, %382 in 0 : vector<1x20x8xf32>, vector<1x20x8xf32>, vector<1x20x8xf32>, vector<1x20x8xf32> -> vector<4x20x8xf32>
    %384 = arith.truncf %365 : vector<4x20x8xf32> to vector<4x20x8xbf16>
    %385 = arith.truncf %374 : vector<4x20x8xf32> to vector<4x20x8xbf16>
    "tpu.trace_start"() <{level = 10 : i32, message = "hqd,hkd->hqk"}> : () -> ()
    %cst_133 = arith.constant dense<0.000000e+00> : vector<4x20x20xf32>
    %386 = tpu.matmul %384, %385, %cst_133 {dimension_numbers = #tpu.dot_dimension_numbers<[2], [2], [1], [1], [0, 0, 0, 1, 1, 1], [0], [0]>} : vector<4x20x8xbf16>, vector<4x20x8xbf16>, vector<4x20x20xf32> -> vector<4x20x20xf32>
    "tpu.trace_stop"() : () -> ()
    %cst_134 = arith.constant 0.353553385 : f32
    %387 = vector.broadcast %cst_134 : f32 to vector<4x20x20xf32>
    %388 = arith.mulf %386, %387 : vector<4x20x20xf32>
    %389 = vector.broadcast %236 : vector<1x20x20xf32> to vector<4x20x20xf32>
    %390 = arith.addf %388, %389 : vector<4x20x20xf32>
    %cst_135 = arith.constant dense<0xFF800000> : vector<4x20xf32>
    %391 = vector.multi_reduction <maximumf>, %390, %cst_135 [2] : vector<4x20x20xf32> to vector<4x20xf32>
    %392 = vector.shape_cast %391 : vector<4x20xf32> to vector<4x20x1xf32>
    %393 = vector.broadcast %392 : vector<4x20x1xf32> to vector<4x20x20xf32>
    %394 = arith.subf %390, %393 : vector<4x20x20xf32>
    %395 = math.exp %394 : vector<4x20x20xf32>
    %cst_136 = arith.constant dense<0.000000e+00> : vector<4x20xf32>
    %396 = vector.multi_reduction <add>, %395, %cst_136 [2] : vector<4x20x20xf32> to vector<4x20xf32>
    %397 = vector.shape_cast %396 : vector<4x20xf32> to vector<4x20x1xf32>
    %398 = tpu.reciprocal %397 {approx = true} : vector<4x20x1xf32> -> vector<4x20x1xf32>
    %399 = vector.broadcast %398 : vector<4x20x1xf32> to vector<4x20x20xf32>
    %400 = arith.mulf %395, %399 : vector<4x20x20xf32>
    %401 = arith.truncf %400 : vector<4x20x20xf32> to vector<4x20x20xbf16>
    %402 = arith.truncf %383 : vector<4x20x8xf32> to vector<4x20x8xbf16>
    "tpu.trace_start"() <{level = 10 : i32, message = "hqk,hkd->hqd"}> : () -> ()
    %cst_137 = arith.constant dense<0.000000e+00> : vector<4x20x8xf32>
    %403 = tpu.matmul %401, %402, %cst_137 {dimension_numbers = #tpu.dot_dimension_numbers<[2], [1], [1], [2], [0, 0, 0, 1, 1, 2], [0], [0]>} : vector<4x20x20xbf16>, vector<4x20x8xbf16>, vector<4x20x8xf32> -> vector<4x20x8xf32>
    "tpu.trace_stop"() : () -> ()
    %404 = arith.truncf %403 : vector<4x20x8xf32> to vector<4x20x8xbf16>
    %c1_138 = arith.constant 1 : index
    %c0_139 = arith.constant 0 : index
    %c0_140 = arith.constant 0 : index
    %c0_141 = arith.constant 0 : index
    %405 = vector.load %arg15[%c1_138, %c0_139, %c0_140, %c0_141] : memref<2x4x8x32xbf16, #tpu.memory_space<vmem>>, vector<1x4x8x32xbf16>
    %406 = vector.shape_cast %405 : vector<1x4x8x32xbf16> to vector<4x8x32xbf16>
    "tpu.trace_start"() <{level = 10 : i32, message = "hnd,hdk->hnk"}> : () -> ()
    %cst_142 = arith.constant dense<0.000000e+00> : vector<4x20x32xf32>
    %407 = tpu.matmul %404, %406, %cst_142 {dimension_numbers = #tpu.dot_dimension_numbers<[2], [1], [1], [2], [0, 0, 0, 1, 1, 2], [0], [0]>} : vector<4x20x8xbf16>, vector<4x8x32xbf16>, vector<4x20x32xf32> -> vector<4x20x32xf32>
    "tpu.trace_stop"() : () -> ()
    %cst_143 = arith.constant dense<0.000000e+00> : vector<20x32xf32>
    %408 = vector.multi_reduction <add>, %407, %cst_143 [0] : vector<4x20x32xf32> to vector<20x32xf32>
    %409 = arith.addf %338, %408 : vector<20x32xf32>
    %c1_144 = arith.constant 1 : index
    %c0_145 = arith.constant 0 : index
    %c0_146 = arith.constant 0 : index
    %410 = vector.load %arg16[%c1_144, %c0_145, %c0_146] : memref<2x1x32xf32, #tpu.memory_space<vmem>>, vector<1x1x32xf32>
    %411 = vector.shape_cast %410 : vector<1x1x32xf32> to vector<1x32xf32>
    %412 = arith.mulf %409, %409 : vector<20x32xf32>
    %cst_147 = arith.constant dense<0.000000e+00> : vector<20xf32>
    %413 = vector.multi_reduction <add>, %412, %cst_147 [1] : vector<20x32xf32> to vector<20xf32>
    %414 = vector.shape_cast %413 : vector<20xf32> to vector<20x1xf32>
    %cst_148 = arith.constant 3.200000e+01 : f32
    %415 = vector.broadcast %cst_148 : f32 to vector<20x1xf32>
    %416 = arith.divf %414, %415 : vector<20x1xf32>
    %cst_149 = arith.constant 9.99999997E-7 : f32
    %417 = vector.broadcast %cst_149 : f32 to vector<20x1xf32>
    %418 = arith.addf %416, %417 : vector<20x1xf32>
    %419 = math.rsqrt %418 : vector<20x1xf32>
    %420 = vector.broadcast %419 : vector<20x1xf32> to vector<20x32xf32>
    %421 = arith.mulf %409, %420 : vector<20x32xf32>
    %422 = vector.broadcast %411 : vector<1x32xf32> to vector<20x32xf32>
    %423 = arith.mulf %421, %422 : vector<20x32xf32>
    %424 = arith.truncf %423 : vector<20x32xf32> to vector<20x32xbf16>
    %c1_150 = arith.constant 1 : index
    %c0_151 = arith.constant 0 : index
    %c0_152 = arith.constant 0 : index
    %425 = vector.load %arg17[%c1_150, %c0_151, %c0_152] : memref<2x32x128xbf16, #tpu.memory_space<vmem>>, vector<1x32x128xbf16>
    %426 = vector.shape_cast %425 : vector<1x32x128xbf16> to vector<32x128xbf16>
    %cst_153 = arith.constant dense<0.000000e+00> : vector<20x128xf32>
    %427 = tpu.matmul %424, %426, %cst_153 {dimension_numbers = #tpu.dot_dimension_numbers<[1], [0], [0], [1], [0, 0, 1, 1], [], []>} : vector<20x32xbf16>, vector<32x128xbf16>, vector<20x128xf32> -> vector<20x128xf32>
    %428 = arith.negf %427 : vector<20x128xf32>
    %429 = math.exp %428 : vector<20x128xf32>
    %cst_154 = arith.constant 1.000000e+00 : f32
    %430 = vector.broadcast %cst_154 : f32 to vector<20x128xf32>
    %431 = arith.addf %430, %429 : vector<20x128xf32>
    %432 = arith.divf %430, %431 : vector<20x128xf32>
    %433 = arith.mulf %427, %432 : vector<20x128xf32>
    %c64_i32_155 = arith.constant 64 : i32
    %434 = tpu.dynamic_rotate %427 by %c64_i32_155 dim 1 : vector<20x128xf32>, i32 -> vector<20x128xf32>
    %435 = arith.mulf %433, %434 : vector<20x128xf32>
    %436 = arith.truncf %435 : vector<20x128xf32> to vector<20x128xbf16>
    %c1_156 = arith.constant 1 : index
    %c0_157 = arith.constant 0 : index
    %c0_158 = arith.constant 0 : index
    %437 = vector.load %arg18[%c1_156, %c0_157, %c0_158] : memref<2x128x32xbf16, #tpu.memory_space<vmem>>, vector<1x128x32xbf16>
    %438 = vector.shape_cast %437 : vector<1x128x32xbf16> to vector<128x32xbf16>
    %cst_159 = arith.constant dense<0.000000e+00> : vector<20x32xf32>
    %439 = tpu.matmul %436, %438, %cst_159 {dimension_numbers = #tpu.dot_dimension_numbers<[1], [0], [0], [1], [0, 0, 1, 1], [], []>} : vector<20x128xbf16>, vector<128x32xbf16>, vector<20x32xf32> -> vector<20x32xf32>
    %440 = arith.addf %409, %439 : vector<20x32xf32>
    %c0_160 = arith.constant 0 : index
    %c0_161 = arith.constant 0 : index
    %441 = vector.load %arg19[%c0_160, %c0_161] : memref<1x32xf32, #tpu.memory_space<vmem>>, vector<1x32xf32>
    %442 = arith.mulf %440, %440 : vector<20x32xf32>
    %cst_162 = arith.constant dense<0.000000e+00> : vector<20xf32>
    %443 = vector.multi_reduction <add>, %442, %cst_162 [1] : vector<20x32xf32> to vector<20xf32>
    %444 = vector.shape_cast %443 : vector<20xf32> to vector<20x1xf32>
    %cst_163 = arith.constant 3.200000e+01 : f32
    %445 = vector.broadcast %cst_163 : f32 to vector<20x1xf32>
    %446 = arith.divf %444, %445 : vector<20x1xf32>
    %cst_164 = arith.constant 9.99999997E-7 : f32
    %447 = vector.broadcast %cst_164 : f32 to vector<20x1xf32>
    %448 = arith.addf %446, %447 : vector<20x1xf32>
    %449 = math.rsqrt %448 : vector<20x1xf32>
    %450 = vector.broadcast %449 : vector<20x1xf32> to vector<20x32xf32>
    %451 = arith.mulf %440, %450 : vector<20x32xf32>
    %452 = vector.broadcast %441 : vector<1x32xf32> to vector<20x32xf32>
    %453 = arith.mulf %451, %452 : vector<20x32xf32>
    %454 = arith.truncf %453 : vector<20x32xf32> to vector<20x32xbf16>
    %c0_165 = arith.constant 0 : index
    %c0_166 = arith.constant 0 : index
    %455 = vector.load %arg20[%c0_165, %c0_166] : memref<32x128xbf16, #tpu.memory_space<vmem>>, vector<32x128xbf16>
    %cst_167 = arith.constant dense<0.000000e+00> : vector<20x128xf32>
    %456 = tpu.matmul %454, %455, %cst_167 {dimension_numbers = #tpu.dot_dimension_numbers<[1], [0], [0], [1], [0, 0, 1, 1], [], []>} : vector<20x32xbf16>, vector<32x128xbf16>, vector<20x128xf32> -> vector<20x128xf32>
    %c0_168 = arith.constant 0 : index
    %c0_169 = arith.constant 0 : index
    %457 = vector.load %arg21[%c0_168, %c0_169] : memref<20x128xf32, #tpu.memory_space<vmem>>, vector<20x128xf32>
    tpu.vector_store %arg21[%c0_168, %c0_169], %456 {strides = array<i32>} : memref<20x128xf32, #tpu.memory_space<vmem>>, vector<20x128xf32>,
    %c0_170 = arith.constant 0 : index
    %c0_171 = arith.constant 0 : index
    %458 = vector.load %arg5[%c0_170, %c0_171] : memref<20x1xi32, #tpu.memory_space<vmem>>, vector<20x1xi32>
    %cst_172 = arith.constant dense<0xFF800000> : vector<20xf32>
    %459 = vector.multi_reduction <maximumf>, %456, %cst_172 [1] : vector<20x128xf32> to vector<20xf32>
    %460 = vector.shape_cast %459 : vector<20xf32> to vector<20x1xf32>
    %461 = vector.broadcast %460 : vector<20x1xf32> to vector<20x128xf32>
    %462 = arith.subf %456, %461 : vector<20x128xf32>
    %463 = math.exp %462 : vector<20x128xf32>
    %cst_173 = arith.constant dense<0.000000e+00> : vector<20xf32>
    %464 = vector.multi_reduction <add>, %463, %cst_173 [1] : vector<20x128xf32> to vector<20xf32>
    %465 = vector.shape_cast %464 : vector<20xf32> to vector<20x1xf32>
    %466 = math.log %465 : vector<20x1xf32>
    %467 = arith.addf %466, %460 : vector<20x1xf32>
    %468 = tpu.iota {dimensions = array<i32: 1>} : vector<20x128xi32>
    %469 = vector.broadcast %458 : vector<20x1xi32> to vector<20x128xi32>
    %470 = arith.cmpi eq, %468, %469 : vector<20x128xi32>
    %cst_174 = arith.constant 0.000000e+00 : f32
    %471 = vector.broadcast %cst_174 : f32 to vector<20x128xf32>
    %472 = arith.select %470, %456, %471 : vector<20x128xi1>, vector<20x128xf32>
    %cst_175 = arith.constant dense<0.000000e+00> : vector<20xf32>
    %473 = vector.multi_reduction <add>, %472, %cst_175 [1] : vector<20x128xf32> to vector<20xf32>
    %474 = vector.shape_cast %473 : vector<20xf32> to vector<20x1xf32>
    %c-100_i32 = arith.constant -100 : i32
    %475 = vector.broadcast %c-100_i32 : i32 to vector<20x1xi32>
    %476 = arith.cmpi ne, %458, %475 : vector<20x1xi32>
    %477 = arith.extui %476 : vector<20x1xi1> to vector<20x1xi32>
    %478 = arith.sitofp %477 : vector<20x1xi32> to vector<20x1xf32>
    %479 = arith.subf %467, %474 : vector<20x1xf32>
    %480 = arith.mulf %479, %478 : vector<20x1xf32>
    %481 = vector.shape_cast %480 : vector<20x1xf32> to vector<1x20x1xf32>
    %cst_176 = arith.constant dense<0.000000e+00> : vector<1xf32>
    %482 = vector.multi_reduction <add>, %481, %cst_176 [1, 2] : vector<1x20x1xf32> to vector<1xf32>
    %483 = vector.shape_cast %482 : vector<1xf32> to vector<1x1x1xf32>
    %484 = vector.extract %483[0, 0, 0] : f32 from vector<1x1x1xf32>
    %485 = vector.shape_cast %478 : vector<20x1xf32> to vector<1x20x1xf32>
    %cst_177 = arith.constant dense<0.000000e+00> : vector<1xf32>
    %486 = vector.multi_reduction <add>, %485, %cst_177 [1, 2] : vector<1x20x1xf32> to vector<1xf32>
    %487 = vector.shape_cast %486 : vector<1xf32> to vector<1x1x1xf32>
    %488 = vector.extract %487[0, 0, 0] : f32 from vector<1x1x1xf32>
    %cst_178 = arith.constant 1.000000e+00 : f32
    %489 = arith.maximumf %488, %cst_178 : f32
    %490 = arith.divf %484, %489 : f32
    %c0_179 = arith.constant 0 : index
    %c0_180 = arith.constant 0 : index
    %491 = memref.load %arg22[%c0_179, %c0_180] : memref<1x1xf32, #tpu.memory_space<smem>>
    memref.store %490, %arg22[%c0_179, %c0_180] : memref<1x1xf32, #tpu.memory_space<smem>>
    return
  }
}

</mosaic_0001>

<llo_original>
// kernel: compress_with_diff_token_forward.1
$region0: #{compress_with_diff_token_forward.1}
  #allocation0 [shape = 'u32[]', space=smem, size = 0x4, offset = 0x4, fixed_abs, tag = 'smem constant byte address 0x4 - core index']
  #allocation1 [shape = 'u32[144,128]{1,0:T(1,128)}', space=vmem, size = 0x12000, scoped, tag = 'internal scratch']
  %s0 = inlined_call_operand.vmem [shape: f32[20,20], index: 0, kind: input, shape index: {}]
  %s1 = inlined_call_operand.vmem [shape: bf16[20,32], index: 1, kind: input, shape index: {}]
  %s2 = inlined_call_operand.vmem [shape: s32[4,1], index: 2, kind: input, shape index: {}]
  %s3 = inlined_call_operand.vmem [shape: f32[20,20], index: 3, kind: input, shape index: {}]
  %s4 = inlined_call_operand.vmem [shape: bf16[16,32], index: 4, kind: input, shape index: {}]
  %s5 = inlined_call_operand.vmem [shape: s32[20,1], index: 5, kind: input, shape index: {}]
  %s6 = inlined_call_operand.vmem [shape: f32[2,1,32], index: 6, kind: input, shape index: {}]
  %s7 = inlined_call_operand.vmem [shape: bf16[2,32,96], index: 7, kind: input, shape index: {}]
  %s8 = inlined_call_operand.vmem [shape: bf16[2,4,8,32], index: 8, kind: input, shape index: {}]
  %s9 = inlined_call_operand.vmem [shape: f32[2,1,32], index: 9, kind: input, shape index: {}]
  %s10 = inlined_call_operand.vmem [shape: bf16[2,32,128], index: 10, kind: input, shape index: {}]
  %s11 = inlined_call_operand.vmem [shape: bf16[2,128,32], index: 11, kind: input, shape index: {}]
  %s12 = inlined_call_operand.vmem [shape: f32[1,32], index: 12, kind: input, shape index: {}]
  %s13 = inlined_call_operand.vmem [shape: f32[2,1,32], index: 13, kind: input, shape index: {}]
  %s14 = inlined_call_operand.vmem [shape: bf16[2,32,96], index: 14, kind: input, shape index: {}]
  %s15 = inlined_call_operand.vmem [shape: bf16[2,4,8,32], index: 15, kind: input, shape index: {}]
  %s16 = inlined_call_operand.vmem [shape: f32[2,1,32], index: 16, kind: input, shape index: {}]
  %s17 = inlined_call_operand.vmem [shape: bf16[2,32,128], index: 17, kind: input, shape index: {}]
  %s18 = inlined_call_operand.vmem [shape: bf16[2,128,32], index: 18, kind: input, shape index: {}]
  %s19 = inlined_call_operand.vmem [shape: f32[1,32], index: 19, kind: input, shape index: {}]
  %s20 = inlined_call_operand.vmem [shape: bf16[32,128], index: 20, kind: input, shape index: {}]
  %s21 = inlined_call_operand.vmem [shape: f32[20,128], index: 21, kind: output, shape index: {0}]
  %s22 = inlined_call_operand.hbm [shape: f32[1,1], index: 22, kind: output, shape index: {1}]
  %23 = xla_tuple %s21, %s22
  %s24 = sld [smem:[#allocation0]]
  $region102: #{compress_with_diff_token_forward.1} parent=0
    _
  %s26 = ssub.s32 1, %s24
  %s27 = scalar_select 0, %s26, %s24
  $region1: #{compress_with_diff_token_forward.1} parent=0
    #allocation2 [shape = 'u8[512]{0}', space=smem, size = 0x200, scoped, tag = 'output window, operand 1, single buffered']
    #allocation3 [shape = 's32[1]{0}', space=sflag, size = 0x4, scoped, tag = 'scoped memory for compress_with_diff_token_forward.1']
    %28 = vsyncpa [#allocation3], 0
    // Predicated region
    $region2: #{compress_with_diff_token_forward.1} parent=1 // pred_check
      _
    $region3: #{compress_with_diff_token_forward.1} parent=1 // pred_check_branch
      %30 = sbr.rel (0) target = $region5
    $region4: #{compress_with_diff_token_forward.1} parent=1 // pred_region
      _
    $region5: #{compress_with_diff_token_forward.1} parent=1 // pred_fallthru
      _
    // Predicated region
    $region6: #{compress_with_diff_token_forward.1} parent=1 // pred_check
      _
    $region7: #{compress_with_diff_token_forward.1} parent=1 // pred_check_branch
      %32 = sbr.rel (0) target = $region9
    $region8: #{compress_with_diff_token_forward.1} parent=1 // pred_region
      _
    $region9: #{compress_with_diff_token_forward.1} parent=1 // pred_fallthru
      _
    // Predicated region
    $region10: #{compress_with_diff_token_forward.1} parent=1 // pred_check
      _
    $region11: #{compress_with_diff_token_forward.1} parent=1 // pred_check_branch
      %34 = sbr.rel (0) target = $region13
    $region12: #{compress_with_diff_token_forward.1} parent=1 // pred_region
      _
    $region13: #{compress_with_diff_token_forward.1} parent=1 // pred_fallthru
      _
    // Predicated region
    $region14: #{compress_with_diff_token_forward.1} parent=1 // pred_check
      _
    $region15: #{compress_with_diff_token_forward.1} parent=1 // pred_check_branch
      %36 = sbr.rel (0) target = $region17
    $region16: #{compress_with_diff_token_forward.1} parent=1 // pred_region
      _
    $region17: #{compress_with_diff_token_forward.1} parent=1 // pred_fallthru
      _
    // Predicated region
    $region18: #{compress_with_diff_token_forward.1} parent=1 // pred_check
      _
    $region19: #{compress_with_diff_token_forward.1} parent=1 // pred_check_branch
      %38 = sbr.rel (0) target = $region21
    $region20: #{compress_with_diff_token_forward.1} parent=1 // pred_region
      _
    $region21: #{compress_with_diff_token_forward.1} parent=1 // pred_fallthru
      _
    // Predicated region
    $region22: #{compress_with_diff_token_forward.1} parent=1 // pred_check
      _
    $region23: #{compress_with_diff_token_forward.1} parent=1 // pred_check_branch
      %40 = sbr.rel (0) target = $region25
    $region24: #{compress_with_diff_token_forward.1} parent=1 // pred_region
      _
    $region25: #{compress_with_diff_token_forward.1} parent=1 // pred_fallthru
      _
    // Predicated region
    $region26: #{compress_with_diff_token_forward.1} parent=1 // pred_check
      _
    $region27: #{compress_with_diff_token_forward.1} parent=1 // pred_check_branch
      %42 = sbr.rel (0) target = $region29
    $region28: #{compress_with_diff_token_forward.1} parent=1 // pred_region
      _
    $region29: #{compress_with_diff_token_forward.1} parent=1 // pred_fallthru
      _
    // Predicated region
    $region30: #{compress_with_diff_token_forward.1} parent=1 // pred_check
      _
    $region31: #{compress_with_diff_token_forward.1} parent=1 // pred_check_branch
      %44 = sbr.rel (0) target = $region33
    $region32: #{compress_with_diff_token_forward.1} parent=1 // pred_region
      _
    $region33: #{compress_with_diff_token_forward.1} parent=1 // pred_fallthru
      _
    // Predicated region
    $region34: #{compress_with_diff_token_forward.1} parent=1 // pred_check
      _
    $region35: #{compress_with_diff_token_forward.1} parent=1 // pred_check_branch
      %46 = sbr.rel (0) target = $region37
    $region36: #{compress_with_diff_token_forward.1} parent=1 // pred_region
      _
    $region37: #{compress_with_diff_token_forward.1} parent=1 // pred_fallthru
      _
    // Predicated region
    $region38: #{compress_with_diff_token_forward.1} parent=1 // pred_check
      _
    $region39: #{compress_with_diff_token_forward.1} parent=1 // pred_check_branch
      %48 = sbr.rel (0) target = $region41
    $region40: #{compress_with_diff_token_forward.1} parent=1 // pred_region
      _
    $region41: #{compress_with_diff_token_forward.1} parent=1 // pred_fallthru
      _
    // Predicated region
    $region42: #{compress_with_diff_token_forward.1} parent=1 // pred_check
      _
    $region43: #{compress_with_diff_token_forward.1} parent=1 // pred_check_branch
      %50 = sbr.rel (0) target = $region45
    $region44: #{compress_with_diff_token_forward.1} parent=1 // pred_region
      _
    $region45: #{compress_with_diff_token_forward.1} parent=1 // pred_fallthru
      _
    // Predicated region
    $region46: #{compress_with_diff_token_forward.1} parent=1 // pred_check
      _
    $region47: #{compress_with_diff_token_forward.1} parent=1 // pred_check_branch
      %52 = sbr.rel (0) target = $region49
    $region48: #{compress_with_diff_token_forward.1} parent=1 // pred_region
      _
    $region49: #{compress_with_diff_token_forward.1} parent=1 // pred_fallthru
      _
    // Predicated region
    $region50: #{compress_with_diff_token_forward.1} parent=1 // pred_check
      _
    $region51: #{compress_with_diff_token_forward.1} parent=1 // pred_check_branch
      %54 = sbr.rel (0) target = $region53
    $region52: #{compress_with_diff_token_forward.1} parent=1 // pred_region
      _
    $region53: #{compress_with_diff_token_forward.1} parent=1 // pred_fallthru
      _
    // Predicated region
    $region54: #{compress_with_diff_token_forward.1} parent=1 // pred_check
      _
    $region55: #{compress_with_diff_token_forward.1} parent=1 // pred_check_branch
      %56 = sbr.rel (0) target = $region57
    $region56: #{compress_with_diff_token_forward.1} parent=1 // pred_region
      _
    $region57: #{compress_with_diff_token_forward.1} parent=1 // pred_fallthru
      _
    // Predicated region
    $region58: #{compress_with_diff_token_forward.1} parent=1 // pred_check
      _
    $region59: #{compress_with_diff_token_forward.1} parent=1 // pred_check_branch
      %58 = sbr.rel (0) target = $region61
    $region60: #{compress_with_diff_token_forward.1} parent=1 // pred_region
      _
    $region61: #{compress_with_diff_token_forward.1} parent=1 // pred_fallthru
      _
    // Predicated region
    $region62: #{compress_with_diff_token_forward.1} parent=1 // pred_check
      _
    $region63: #{compress_with_diff_token_forward.1} parent=1 // pred_check_branch
      %60 = sbr.rel (0) target = $region65
    $region64: #{compress_with_diff_token_forward.1} parent=1 // pred_region
      _
    $region65: #{compress_with_diff_token_forward.1} parent=1 // pred_fallthru
      _
    // Predicated region
    $region66: #{compress_with_diff_token_forward.1} parent=1 // pred_check
      _
    $region67: #{compress_with_diff_token_forward.1} parent=1 // pred_check_branch
      %62 = sbr.rel (0) target = $region69
    $region68: #{compress_with_diff_token_forward.1} parent=1 // pred_region
      _
    $region69: #{compress_with_diff_token_forward.1} parent=1 // pred_fallthru
      _
    // Predicated region
    $region70: #{compress_with_diff_token_forward.1} parent=1 // pred_check
      _
    $region71: #{compress_with_diff_token_forward.1} parent=1 // pred_check_branch
      %64 = sbr.rel (0) target = $region73
    $region72: #{compress_with_diff_token_forward.1} parent=1 // pred_region
      _
    $region73: #{compress_with_diff_token_forward.1} parent=1 // pred_fallthru
      _
    // Predicated region
    $region74: #{compress_with_diff_token_forward.1} parent=1 // pred_check
      _
    $region75: #{compress_with_diff_token_forward.1} parent=1 // pred_check_branch
      %66 = sbr.rel (0) target = $region77
    $region76: #{compress_with_diff_token_forward.1} parent=1 // pred_region
      _
    $region77: #{compress_with_diff_token_forward.1} parent=1 // pred_fallthru
      _
    // Predicated region
    $region78: #{compress_with_diff_token_forward.1} parent=1 // pred_check
      _
    $region79: #{compress_with_diff_token_forward.1} parent=1 // pred_check_branch
      %68 = sbr.rel (0) target = $region81
    $region80: #{compress_with_diff_token_forward.1} parent=1 // pred_region
      _
    $region81: #{compress_with_diff_token_forward.1} parent=1 // pred_fallthru
      _
    // Predicated region
    $region82: #{compress_with_diff_token_forward.1} parent=1 // pred_check
      _
    $region83: #{compress_with_diff_token_forward.1} parent=1 // pred_check_branch
      %70 = sbr.rel (0) target = $region85
    $region84: #{compress_with_diff_token_forward.1} parent=1 // pred_region
      _
    $region85: #{compress_with_diff_token_forward.1} parent=1 // pred_fallthru
      _
    %v72 = vld [vmem:[%s1] sm:$0xf]
    %v73 = vld [vmem:[%s1 + $0x4] sm:$0xf]
    %v74 = vld [vmem:[%s1 + $0x8] sm:$0x3]
    %v75 = vunpack.c.l.bf16 %v72
    %v76 = vunpack.c.l.bf16 %v73
    %v77 = vunpack.c.l.bf16 %v74
    %v78 = vld [vmem:[%s0] sm:$0xff]
    %v79 = vld [vmem:[%s0 + $0x8] sm:$0xff]
    %v80 = vld [vmem:[%s0 + $0x10] sm:$0xf]
    %v81 = vld [vmem:[%s6] sm:$0x1]
    %v82 = vmul.f32 %v75, %v75
    %v83 = vmul.f32 %v76, %v76
    %v84 = vmul.f32 %v77, %v77
    %vm85 = vcmask 261120
    %v86 = vsel %vm85, %v82, 0.0
    %87 = vadd.xlane.f32.xlu0 %v86
    %v88 = vpop.xlane.xlu0 %87
    %v89 = vsel %vm85, %v83, 0.0
    %90 = vadd.xlane.f32.xlu0 %v89
    %v91 = vpop.xlane.xlu0 %90
    %vm92 = vcmask 257024
    %v93 = vsel %vm92, %v84, 0.0
    %94 = vadd.xlane.f32.xlu0 %v93
    %v95 = vpop.xlane.xlu0 %94
    %v96 = vrcp.pop 32.0
    %v97 = vmul.f32 %v88, %v96
    %v98 = vmul.f32 %v91, %v96
    %v99 = vmul.f32 %v95, %v96
    %v100 = vadd.f32 %v97, 1e-06
    %v101 = vadd.f32 %v98, 1e-06
    %v102 = vadd.f32 %v99, 1e-06
    %v103 = vrsqrt.pop %v100
    %v104 = vrsqrt.pop %v101
    %v105 = vrsqrt.pop %v102
    %v106 = vmul.f32 %v75, %v103
    %v107 = vmul.f32 %v76, %v104
    %v108 = vmul.f32 %v77, %v105
    %v110 = vlaneseq
    %v111 = vshrl.u32 %v110, 7
    %v112 = vsub.s32 0, %v111
    %v113 = vrot.slane %v81, %v112
    %v115 = vmul.f32 %v106, %v113
    %v116 = vmul.f32 %v107, %v113
    %v117 = vmul.f32 %v108, %v113
    %v118 = vpack.c.bf16 %v116, %v115
    %v119 = vpack.c.bf16 %v117, %v117
    %v120 = vld [vmem:[%s7] sm:$0xf]
    %v121 = vld [vmem:[%s7 + $0x4] sm:$0xf]
    %v122 = vld [vmem:[%s7 + $0x8] sm:$0xf]
    %v123 = vld [vmem:[%s7 + $0xc] sm:$0xf]
    %v128 = vunpack.c.l.b16 %v120
    %v129 = vunpack.c.l.b16 %v121
    %v130 = vunpack.c.l.b16 %v122
    %v131 = vunpack.c.l.b16 %v123
    %v132 = vpack.c.b16 %v129, %v128
    %v133 = vpack.c.b16 %v131, %v130
    %v137 = vsel %vm85, %v118, 0
    %v140 = vsel %vm85, %v119, 0
    %142 = vmatprep.subr.bf16.mxu0 0
    %143 = vmatpush1.bf16.msra.mxu0 %v132
    %144 = vmatprep.subr.bf16.mxu0 0
    %145 = vmatpush1.bf16.msra.mxu0 %v133
    %146 = vmatprep.subr.bf16.mxu0 0
    %147 = vmatpush1.bf16.msra.mxu0 0
    %148 = vmatprep.subr.bf16.mxu0 0
    %149 = vmatpush1.bf16.msra.mxu0 0
    %150 = vmatprep.subr.bf16.mxu0 0
    %151 = vmatpush1.bf16.msra.mxu0 0
    %152 = vmatprep.subr.bf16.mxu0 0
    %153 = vmatpush1.bf16.msra.mxu0 0
    %154 = vmatprep.subr.bf16.mxu0 0
    %155 = vmatpush1.bf16.msra.mxu0 0
    %156 = vmatprep.subr.bf16.mxu0 0
    %157 = vmatpush1.bf16.msra.mxu0 0
    %158 = vmatprep.subr.bf16.mxu0 0
    %159 = vmatpush1.bf16.msra.mxu0 0
    %160 = vmatprep.subr.bf16.mxu0 0
    %161 = vmatpush1.bf16.msra.mxu0 0
    %162 = vmatprep.subr.bf16.mxu0 0
    %163 = vmatpush1.bf16.msra.mxu0 0
    %164 = vmatprep.subr.bf16.mxu0 0
    %165 = vmatpush1.bf16.msra.mxu0 0
    %166 = vmatprep.subr.bf16.mxu0 0
    %167 = vmatpush1.bf16.msra.mxu0 0
    %168 = vmatprep.subr.bf16.mxu0 0
    %169 = vmatpush1.bf16.msra.mxu0 0
    %170 = vmatprep.subr.bf16.mxu0 0
    %171 = vmatpush1.bf16.msra.mxu0 0
    %172 = vmatprep.subr.bf16.mxu0 0
    %173 = vmatpush1.bf16.msra.mxu0 0
    %174 = vmatprep.mubr.bf16.mxu0 0
    %175 = vmatmul.mubr.bf16.gmra.mrb[0].mxu0 %v137
    %v176 = vpop.f32.mrb[0].mxu0
    %v177 = vadd.f32 0.0, %v176
    %v178 = vpop.f32.mrb[0].mxu0
    %v179 = vpop.f32.mrb[0].mxu0
    %v180 = vadd.f32 0.0, %v179
    %v181 = vpop.f32.mrb[0].mxu0
    %182 = vmatprep.mubr.bf16.mxu0 0
    %183 = vmatmul.mubr.bf16.gmra.mrb[0].mxu0 %v140
    %v184 = vpop.f32.mrb[0].mxu0
    %v185 = vadd.f32 0.0, %v184
    %v186 = vpop.f32.mrb[0].mxu0
    %v187 = vpop.f32.mrb[0].mxu0
    %v188 = vpop.f32.mrb[0].mxu0
    %189 = vdwg.mxu0
    %193 = vrot.lane.b32.xlu0 %v177, 120
    %v194 = vpop.permute.xlu0 %193
    %195 = vrot.lane.b32.xlu0 %v180, 120
    %v196 = vpop.permute.xlu0 %195
    %197 = vrot.lane.b32.xlu0 %v185, 120
    %v198 = vpop.permute.xlu0 %197
    %202 = vrot.lane.b32.xlu0 %v177, 112
    %v203 = vpop.permute.xlu0 %202
    %204 = vrot.lane.b32.xlu0 %v180, 112
    %v205 = vpop.permute.xlu0 %204
    %206 = vrot.lane.b32.xlu0 %v185, 112
    %v207 = vpop.permute.xlu0 %206
    %211 = vrot.lane.b32.xlu0 %v177, 104
    %v212 = vpop.permute.xlu0 %211
    %213 = vrot.lane.b32.xlu0 %v180, 104
    %v214 = vpop.permute.xlu0 %213
    %215 = vrot.lane.b32.xlu0 %v185, 104
    %v216 = vpop.permute.xlu0 %215
    %v220 = vpack.c.bf16 %v180, %v177
    %v221 = vpack.c.bf16 %v185, %v185
    %v222 = vpack.c.bf16 %v196, %v194
    %v223 = vpack.c.bf16 %v198, %v198
    %v224 = vpack.c.bf16 %v205, %v203
    %v225 = vpack.c.bf16 %v207, %v207
    %v226 = vpack.c.bf16 %v214, %v212
    %v227 = vpack.c.bf16 %v216, %v216
    %230 = vrot.lane.b32.xlu0 %v220, 96
    %v231 = vpop.permute.xlu0 %230
    %232 = vrot.lane.b32.xlu0 %v221, 96
    %v233 = vpop.permute.xlu0 %232
    %vm234 = vcmask 64512
    %v236 = vsel %vm234, %v220, 0
    %v239 = vsel %vm234, %v221, 0
    %v242 = vsel %vm234, %v231, 0
    %v245 = vsel %vm234, %v233, 0
    %247 = vmatprep.subr.bf16.mxu0 0
    %248 = vmatpush1.bf16.xpose.msra.mxu0 %v242
    %249 = vmatprep.subr.bf16.mxu0 0
    %250 = vmatpush1.bf16.xpose.msra.mxu0 %v245
    %251 = vmatprep.subr.bf16.mxu0 0
    %252 = vmatpush1.bf16.xpose.msra.mxu0 0
    %253 = vmatprep.subr.bf16.mxu0 0
    %254 = vmatpush1.bf16.xpose.msra.mxu0 0
    %255 = vmatprep.subr.bf16.mxu0 0
    %256 = vmatpush1.bf16.xpose.msra.mxu0 0
    %257 = vmatprep.subr.bf16.mxu0 0
    %258 = vmatpush1.bf16.xpose.msra.mxu0 0
    %259 = vmatprep.subr.bf16.mxu0 0
    %260 = vmatpush1.bf16.xpose.msra.mxu0 0
    %261 = vmatprep.subr.bf16.mxu0 0
    %262 = vmatpush1.bf16.xpose.msra.mxu0 0
    %263 = vmatprep.subr.bf16.mxu0 0
    %264 = vmatpush1.bf16.xpose.msra.mxu0 0
    %265 = vmatprep.subr.bf16.mxu0 0
    %266 = vmatpush1.bf16.xpose.msra.mxu0 0
    %267 = vmatprep.subr.bf16.mxu0 0
    %268 = vmatpush1.bf16.xpose.msra.mxu0 0
    %269 = vmatprep.subr.bf16.mxu0 0
    %270 = vmatpush1.bf16.xpose.msra.mxu0 0
    %271 = vmatprep.subr.bf16.mxu0 0
    %272 = vmatpush1.bf16.xpose.msra.mxu0 0
    %273 = vmatprep.subr.bf16.mxu0 0
    %274 = vmatpush1.bf16.xpose.msra.mxu0 0
    %275 = vmatprep.subr.bf16.mxu0 0
    %276 = vmatpush1.bf16.xpose.msra.mxu0 0
    %277 = vmatprep.subr.bf16.mxu0 0
    %278 = vmatpush1.bf16.xpose.msra.mxu0 0
    %279 = vmatprep.mubr.bf16.mxu0 0
    %280 = vmatmul.mubr.bf16.gmra.mrb[0].mxu0 %v236
    %v281 = vpop.f32.mrb[0].mxu0
    %v282 = vadd.f32 0.0, %v281
    %v283 = vpop.f32.mrb[0].mxu0
    %v284 = vpop.f32.mrb[0].mxu0
    %v285 = vadd.f32 0.0, %v284
    %v286 = vpop.f32.mrb[0].mxu0
    %287 = vmatprep.mubr.bf16.mxu0 0
    %288 = vmatmul.mubr.bf16.gmra.mrb[0].mxu0 %v239
    %v289 = vpop.f32.mrb[0].mxu0
    %v290 = vadd.f32 0.0, %v289
    %v291 = vpop.f32.mrb[0].mxu0
    %v292 = vpop.f32.mrb[0].mxu0
    %v293 = vpop.f32.mrb[0].mxu0
    %294 = vdwg.mxu0
    %297 = vrot.lane.b32.xlu0 %v222, 96
    %v298 = vpop.permute.xlu0 %297
    %299 = vrot.lane.b32.xlu0 %v223, 96
    %v300 = vpop.permute.xlu0 %299
    %v302 = vsel %vm234, %v222, 0
    %v305 = vsel %vm234, %v223, 0
    %v308 = vsel %vm234, %v298, 0
    %v311 = vsel %vm234, %v300, 0
    %313 = vmatprep.subr.bf16.mxu0 0
    %314 = vmatpush1.bf16.xpose.msra.mxu0 %v308
    %315 = vmatprep.subr.bf16.mxu0 0
    %316 = vmatpush1.bf16.xpose.msra.mxu0 %v311
    %317 = vmatprep.subr.bf16.mxu0 0
    %318 = vmatpush1.bf16.xpose.msra.mxu0 0
    %319 = vmatprep.subr.bf16.mxu0 0
    %320 = vmatpush1.bf16.xpose.msra.mxu0 0
    %321 = vmatprep.subr.bf16.mxu0 0
    %322 = vmatpush1.bf16.xpose.msra.mxu0 0
    %323 = vmatprep.subr.bf16.mxu0 0
    %324 = vmatpush1.bf16.xpose.msra.mxu0 0
    %325 = vmatprep.subr.bf16.mxu0 0
    %326 = vmatpush1.bf16.xpose.msra.mxu0 0
    %327 = vmatprep.subr.bf16.mxu0 0
    %328 = vmatpush1.bf16.xpose.msra.mxu0 0
    %329 = vmatprep.subr.bf16.mxu0 0
    %330 = vmatpush1.bf16.xpose.msra.mxu0 0
    %331 = vmatprep.subr.bf16.mxu0 0
    %332 = vmatpush1.bf16.xpose.msra.mxu0 0
    %333 = vmatprep.subr.bf16.mxu0 0
    %334 = vmatpush1.bf16.xpose.msra.mxu0 0
    %335 = vmatprep.subr.bf16.mxu0 0
    %336 = vmatpush1.bf16.xpose.msra.mxu0 0
    %337 = vmatprep.subr.bf16.mxu0 0
    %338 = vmatpush1.bf16.xpose.msra.mxu0 0
    %339 = vmatprep.subr.bf16.mxu0 0
    %340 = vmatpush1.bf16.xpose.msra.mxu0 0
    %341 = vmatprep.subr.bf16.mxu0 0
    %342 = vmatpush1.bf16.xpose.msra.mxu0 0
    %343 = vmatprep.subr.bf16.mxu0 0
    %344 = vmatpush1.bf16.xpose.msra.mxu0 0
    %345 = vmatprep.mubr.bf16.mxu0 0
    %346 = vmatmul.mubr.bf16.gmra.mrb[0].mxu0 %v302
    %v347 = vpop.f32.mrb[0].mxu0
    %v348 = vadd.f32 0.0, %v347
    %v349 = vpop.f32.mrb[0].mxu0
    %v350 = vpop.f32.mrb[0].mxu0
    %v351 = vadd.f32 0.0, %v350
    %v352 = vpop.f32.mrb[0].mxu0
    %353 = vmatprep.mubr.bf16.mxu0 0
    %354 = vmatmul.mubr.bf16.gmra.mrb[0].mxu0 %v305
    %v355 = vpop.f32.mrb[0].mxu0
    %v356 = vadd.f32 0.0, %v355
    %v357 = vpop.f32.mrb[0].mxu0
    %v358 = vpop.f32.mrb[0].mxu0
    %v359 = vpop.f32.mrb[0].mxu0
    %360 = vdwg.mxu0
    %363 = vrot.lane.b32.xlu0 %v224, 96
    %v364 = vpop.permute.xlu0 %363
    %365 = vrot.lane.b32.xlu0 %v225, 96
    %v366 = vpop.permute.xlu0 %365
    %v368 = vsel %vm234, %v224, 0
    %v371 = vsel %vm234, %v225, 0
    %v374 = vsel %vm234, %v364, 0
    %v377 = vsel %vm234, %v366, 0
    %379 = vmatprep.subr.bf16.mxu0 0
    %380 = vmatpush1.bf16.xpose.msra.mxu0 %v374
    %381 = vmatprep.subr.bf16.mxu0 0
    %382 = vmatpush1.bf16.xpose.msra.mxu0 %v377
    %383 = vmatprep.subr.bf16.mxu0 0
    %384 = vmatpush1.bf16.xpose.msra.mxu0 0
    %385 = vmatprep.subr.bf16.mxu0 0
    %386 = vmatpush1.bf16.xpose.msra.mxu0 0
    %387 = vmatprep.subr.bf16.mxu0 0
    %388 = vmatpush1.bf16.xpose.msra.mxu0 0
    %389 = vmatprep.subr.bf16.mxu0 0
    %390 = vmatpush1.bf16.xpose.msra.mxu0 0
    %391 = vmatprep.subr.bf16.mxu0 0
    %392 = vmatpush1.bf16.xpose.msra.mxu0 0
    %393 = vmatprep.subr.bf16.mxu0 0
    %394 = vmatpush1.bf16.xpose.msra.mxu0 0
    %395 = vmatprep.subr.bf16.mxu0 0
    %396 = vmatpush1.bf16.xpose.msra.mxu0 0
    %397 = vmatprep.subr.bf16.mxu0 0
    %398 = vmatpush1.bf16.xpose.msra.mxu0 0
    %399 = vmatprep.subr.bf16.mxu0 0
    %400 = vmatpush1.bf16.xpose.msra.mxu0 0
    %401 = vmatprep.subr.bf16.mxu0 0
    %402 = vmatpush1.bf16.xpose.msra.mxu0 0
    %403 = vmatprep.subr.bf16.mxu0 0
    %404 = vmatpush1.bf16.xpose.msra.mxu0 0
    %405 = vmatprep.subr.bf16.mxu0 0
    %406 = vmatpush1.bf16.xpose.msra.mxu0 0
    %407 = vmatprep.subr.bf16.mxu0 0
    %408 = vmatpush1.bf16.xpose.msra.mxu0 0
    %409 = vmatprep.subr.bf16.mxu0 0
    %410 = vmatpush1.bf16.xpose.msra.mxu0 0
    %411 = vmatprep.mubr.bf16.mxu0 0
    %412 = vmatmul.mubr.bf16.gmra.mrb[0].mxu0 %v368
    %v413 = vpop.f32.mrb[0].mxu0
    %v414 = vadd.f32 0.0, %v413
    %v415 = vpop.f32.mrb[0].mxu0
    %v416 = vpop.f32.mrb[0].mxu0
    %v417 = vadd.f32 0.0, %v416
    %v418 = vpop.f32.mrb[0].mxu0
    %419 = vmatprep.mubr.bf16.mxu0 0
    %420 = vmatmul.mubr.bf16.gmra.mrb[0].mxu0 %v371
    %v421 = vpop.f32.mrb[0].mxu0
    %v422 = vadd.f32 0.0, %v421
    %v423 = vpop.f32.mrb[0].mxu0
    %v424 = vpop.f32.mrb[0].mxu0
    %v425 = vpop.f32.mrb[0].mxu0
    %426 = vdwg.mxu0
    %429 = vrot.lane.b32.xlu0 %v226, 96
    %v430 = vpop.permute.xlu0 %429
    %431 = vrot.lane.b32.xlu0 %v227, 96
    %v432 = vpop.permute.xlu0 %431
    %v434 = vsel %vm234, %v226, 0
    %v437 = vsel %vm234, %v227, 0
    %v440 = vsel %vm234, %v430, 0
    %v443 = vsel %vm234, %v432, 0
    %445 = vmatprep.subr.bf16.mxu0 0
    %446 = vmatpush1.bf16.xpose.msra.mxu0 %v440
    %447 = vmatprep.subr.bf16.mxu0 0
    %448 = vmatpush1.bf16.xpose.msra.mxu0 %v443
    %449 = vmatprep.subr.bf16.mxu0 0
    %450 = vmatpush1.bf16.xpose.msra.mxu0 0
    %451 = vmatprep.subr.bf16.mxu0 0
    %452 = vmatpush1.bf16.xpose.msra.mxu0 0
    %453 = vmatprep.subr.bf16.mxu0 0
    %454 = vmatpush1.bf16.xpose.msra.mxu0 0
    %455 = vmatprep.subr.bf16.mxu0 0
    %456 = vmatpush1.bf16.xpose.msra.mxu0 0
    %457 = vmatprep.subr.bf16.mxu0 0
    %458 = vmatpush1.bf16.xpose.msra.mxu0 0
    %459 = vmatprep.subr.bf16.mxu0 0
    %460 = vmatpush1.bf16.xpose.msra.mxu0 0
    %461 = vmatprep.subr.bf16.mxu0 0
    %462 = vmatpush1.bf16.xpose.msra.mxu0 0
    %463 = vmatprep.subr.bf16.mxu0 0
    %464 = vmatpush1.bf16.xpose.msra.mxu0 0
    %465 = vmatprep.subr.bf16.mxu0 0
    %466 = vmatpush1.bf16.xpose.msra.mxu0 0
    %467 = vmatprep.subr.bf16.mxu0 0
    %468 = vmatpush1.bf16.xpose.msra.mxu0 0
    %469 = vmatprep.subr.bf16.mxu0 0
    %470 = vmatpush1.bf16.xpose.msra.mxu0 0
    %471 = vmatprep.subr.bf16.mxu0 0
    %472 = vmatpush1.bf16.xpose.msra.mxu0 0
    %473 = vmatprep.subr.bf16.mxu0 0
    %474 = vmatpush1.bf16.xpose.msra.mxu0 0
    %475 = vmatprep.subr.bf16.mxu0 0
    %476 = vmatpush1.bf16.xpose.msra.mxu0 0
    %477 = vmatprep.mubr.bf16.mxu0 0
    %478 = vmatmul.mubr.bf16.gmra.mrb[0].mxu0 %v434
    %v479 = vpop.f32.mrb[0].mxu0
    %v480 = vadd.f32 0.0, %v479
    %v481 = vpop.f32.mrb[0].mxu0
    %v482 = vpop.f32.mrb[0].mxu0
    %v483 = vadd.f32 0.0, %v482
    %v484 = vpop.f32.mrb[0].mxu0
    %485 = vmatprep.mubr.bf16.mxu0 0
    %486 = vmatmul.mubr.bf16.gmra.mrb[0].mxu0 %v437
    %v487 = vpop.f32.mrb[0].mxu0
    %v488 = vadd.f32 0.0, %v487
    %v489 = vpop.f32.mrb[0].mxu0
    %v490 = vpop.f32.mrb[0].mxu0
    %v491 = vpop.f32.mrb[0].mxu0
    %492 = vdwg.mxu0
    %v493 = vmul.f32 %v282, 0.35355338
    %v494 = vmul.f32 %v285, 0.35355338
    %v495 = vmul.f32 %v290, 0.35355338
    %v496 = vmul.f32 %v348, 0.35355338
    %v497 = vmul.f32 %v351, 0.35355338
    %v498 = vmul.f32 %v356, 0.35355338
    %v499 = vmul.f32 %v414, 0.35355338
    %v500 = vmul.f32 %v417, 0.35355338
    %v501 = vmul.f32 %v422, 0.35355338
    %v502 = vmul.f32 %v480, 0.35355338
    %v503 = vmul.f32 %v483, 0.35355338
    %v504 = vmul.f32 %v488, 0.35355338
    %v505 = vadd.f32 %v493, %v78
    %v506 = vadd.f32 %v494, %v79
    %v507 = vadd.f32 %v495, %v80
    %v508 = vadd.f32 %v496, %v78
    %v509 = vadd.f32 %v497, %v79
    %v510 = vadd.f32 %v498, %v80
    %v511 = vadd.f32 %v499, %v78
    %v512 = vadd.f32 %v500, %v79
    %v513 = vadd.f32 %v501, %v80
    %v514 = vadd.f32 %v502, %v78
    %v515 = vadd.f32 %v503, %v79
    %v516 = vadd.f32 %v504, %v80
    %vm517 = vcmask 162816
    %v518 = vsel %vm517, %v505, -inf
    %519 = vmax.xlane.f32.xlu0 %v518
    %v520 = vpop.xlane.xlu0 %519
    %v521 = vsel %vm517, %v506, -inf
    %522 = vmax.xlane.f32.xlu0 %v521
    %v523 = vpop.xlane.xlu0 %522
    %vm524 = vcmask 158720
    %v525 = vsel %vm524, %v507, -inf
    %526 = vmax.xlane.f32.xlu0 %v525
    %v527 = vpop.xlane.xlu0 %526
    %v528 = vsel %vm517, %v508, -inf
    %529 = vmax.xlane.f32.xlu0 %v528
    %v530 = vpop.xlane.xlu0 %529
    %v531 = vsel %vm517, %v509, -inf
    %532 = vmax.xlane.f32.xlu0 %v531
    %v533 = vpop.xlane.xlu0 %532
    %v534 = vsel %vm524, %v510, -inf
    %535 = vmax.xlane.f32.xlu0 %v534
    %v536 = vpop.xlane.xlu0 %535
    %v537 = vsel %vm517, %v511, -inf
    %538 = vmax.xlane.f32.xlu0 %v537
    %v539 = vpop.xlane.xlu0 %538
    %v540 = vsel %vm517, %v512, -inf
    %541 = vmax.xlane.f32.xlu0 %v540
    %v542 = vpop.xlane.xlu0 %541
    %v543 = vsel %vm524, %v513, -inf
    %544 = vmax.xlane.f32.xlu0 %v543
    %v545 = vpop.xlane.xlu0 %544
    %v546 = vsel %vm517, %v514, -inf
    %547 = vmax.xlane.f32.xlu0 %v546
    %v548 = vpop.xlane.xlu0 %547
    %v549 = vsel %vm517, %v515, -inf
    %550 = vmax.xlane.f32.xlu0 %v549
    %v551 = vpop.xlane.xlu0 %550
    %v552 = vsel %vm524, %v516, -inf
    %553 = vmax.xlane.f32.xlu0 %v552
    %v554 = vpop.xlane.xlu0 %553
    %v555 = vsub.f32 %v505, %v520
    %v556 = vsub.f32 %v506, %v523
    %v557 = vsub.f32 %v507, %v527
    %v558 = vsub.f32 %v508, %v530
    %v559 = vsub.f32 %v509, %v533
    %v560 = vsub.f32 %v510, %v536
    %v561 = vsub.f32 %v511, %v539
    %v562 = vsub.f32 %v512, %v542
    %v563 = vsub.f32 %v513, %v545
    %v564 = vsub.f32 %v514, %v548
    %v565 = vsub.f32 %v515, %v551
    %v566 = vsub.f32 %v516, %v554
    %v567 = vmul.f32 %v555, 1.442695
    %v568 = vpow.pop %v567
    %v569 = vmul.f32 %v556, 1.442695
    %v570 = vpow.pop %v569
    %v571 = vmul.f32 %v557, 1.442695
    %v572 = vpow.pop %v571
    %v573 = vmul.f32 %v558, 1.442695
    %v574 = vpow.pop %v573
    %v575 = vmul.f32 %v559, 1.442695
    %v576 = vpow.pop %v575
    %v577 = vmul.f32 %v560, 1.442695
    %v578 = vpow.pop %v577
    %v579 = vmul.f32 %v561, 1.442695
    %v580 = vpow.pop %v579
    %v581 = vmul.f32 %v562, 1.442695
    %v582 = vpow.pop %v581
    %v583 = vmul.f32 %v563, 1.442695
    %v584 = vpow.pop %v583
    %v585 = vmul.f32 %v564, 1.442695
    %v586 = vpow.pop %v585
    %v587 = vmul.f32 %v565, 1.442695
    %v588 = vpow.pop %v587
    %v589 = vmul.f32 %v566, 1.442695
    %v590 = vpow.pop %v589
    %v591 = vsel %vm517, %v568, 0.0
    %592 = vadd.xlane.f32.xlu0 %v591
    %v593 = vpop.xlane.xlu0 %592
    %v594 = vsel %vm517, %v570, 0.0
    %595 = vadd.xlane.f32.xlu0 %v594
    %v596 = vpop.xlane.xlu0 %595
    %v597 = vsel %vm524, %v572, 0.0
    %598 = vadd.xlane.f32.xlu0 %v597
    %v599 = vpop.xlane.xlu0 %598
    %v600 = vsel %vm517, %v574, 0.0
    %601 = vadd.xlane.f32.xlu0 %v600
    %v602 = vpop.xlane.xlu0 %601
    %v603 = vsel %vm517, %v576, 0.0
    %604 = vadd.xlane.f32.xlu0 %v603
    %v605 = vpop.xlane.xlu0 %604
    %v606 = vsel %vm524, %v578, 0.0
    %607 = vadd.xlane.f32.xlu0 %v606
    %v608 = vpop.xlane.xlu0 %607
    %v609 = vsel %vm517, %v580, 0.0
    %610 = vadd.xlane.f32.xlu0 %v609
    %v611 = vpop.xlane.xlu0 %610
    %v612 = vsel %vm517, %v582, 0.0
    %613 = vadd.xlane.f32.xlu0 %v612
    %v614 = vpop.xlane.xlu0 %613
    %v615 = vsel %vm524, %v584, 0.0
    %616 = vadd.xlane.f32.xlu0 %v615
    %v617 = vpop.xlane.xlu0 %616
    %v618 = vsel %vm517, %v586, 0.0
    %619 = vadd.xlane.f32.xlu0 %v618
    %v620 = vpop.xlane.xlu0 %619
    %v621 = vsel %vm517, %v588, 0.0
    %622 = vadd.xlane.f32.xlu0 %v621
    %v623 = vpop.xlane.xlu0 %622
    %v624 = vsel %vm524, %v590, 0.0
    %625 = vadd.xlane.f32.xlu0 %v624
    %v626 = vpop.xlane.xlu0 %625
    %v627 = vrcp.pop %v593
    %v628 = vrcp.pop %v596
    %v629 = vrcp.pop %v599
    %v630 = vrcp.pop %v602
    %v631 = vrcp.pop %v605
    %v632 = vrcp.pop %v608
    %v633 = vrcp.pop %v611
    %v634 = vrcp.pop %v614
    %v635 = vrcp.pop %v617
    %v636 = vrcp.pop %v620
    %v637 = vrcp.pop %v623
    %v638 = vrcp.pop %v626
    %v639 = vmul.f32 %v568, %v627
    %v640 = vmul.f32 %v570, %v628
    %v641 = vmul.f32 %v572, %v629
    %v642 = vmul.f32 %v574, %v630
    %v643 = vmul.f32 %v576, %v631
    %v644 = vmul.f32 %v578, %v632
    %v645 = vmul.f32 %v580, %v633
    %v646 = vmul.f32 %v582, %v634
    %v647 = vmul.f32 %v584, %v635
    %v648 = vmul.f32 %v586, %v636
    %v649 = vmul.f32 %v588, %v637
    %v650 = vmul.f32 %v590, %v638
    %v651 = vpack.c.bf16 %v640, %v639
    %v652 = vpack.c.bf16 %v641, %v641
    %v653 = vpack.c.bf16 %v643, %v642
    %v654 = vpack.c.bf16 %v644, %v644
    %v655 = vpack.c.bf16 %v646, %v645
    %v656 = vpack.c.bf16 %v647, %v647
    %v657 = vpack.c.bf16 %v649, %v648
    %v658 = vpack.c.bf16 %v650, %v650
    %659 = vrot.lane.b32.xlu0 %v220, 64
    %v660 = vpop.permute.xlu0 %659
    %661 = vrot.lane.b32.xlu0 %v221, 64
    %v662 = vpop.permute.xlu0 %661
    %v665 = vsel %vm517, %v651, 0
    %v668 = vsel %vm517, %v652, 0
    %vm670 = vcmask 1041408
    %v672 = vsel %vm670, %v662, 0
    %674 = vmatprep.subr.bf16.mxu0 0
    %675 = vmatpush1.bf16.msra.mxu0 %v660
    %676 = vmatprep.subr.bf16.mxu0 0
    %677 = vmatpush1.bf16.msra.mxu0 %v672
    %678 = vmatprep.subr.bf16.mxu0 0
    %679 = vmatpush1.bf16.msra.mxu0 0
    %680 = vmatprep.subr.bf16.mxu0 0
    %681 = vmatpush1.bf16.msra.mxu0 0
    %682 = vmatprep.subr.bf16.mxu0 0
    %683 = vmatpush1.bf16.msra.mxu0 0
    %684 = vmatprep.subr.bf16.mxu0 0
    %685 = vmatpush1.bf16.msra.mxu0 0
    %686 = vmatprep.subr.bf16.mxu0 0
    %687 = vmatpush1.bf16.msra.mxu0 0
    %688 = vmatprep.subr.bf16.mxu0 0
    %689 = vmatpush1.bf16.msra.mxu0 0
    %690 = vmatprep.subr.bf16.mxu0 0
    %691 = vmatpush1.bf16.msra.mxu0 0
    %692 = vmatprep.subr.bf16.mxu0 0
    %693 = vmatpush1.bf16.msra.mxu0 0
    %694 = vmatprep.subr.bf16.mxu0 0
    %695 = vmatpush1.bf16.msra.mxu0 0
    %696 = vmatprep.subr.bf16.mxu0 0
    %697 = vmatpush1.bf16.msra.mxu0 0
    %698 = vmatprep.subr.bf16.mxu0 0
    %699 = vmatpush1.bf16.msra.mxu0 0
    %700 = vmatprep.subr.bf16.mxu0 0
    %701 = vmatpush1.bf16.msra.mxu0 0
    %702 = vmatprep.subr.bf16.mxu0 0
    %703 = vmatpush1.bf16.msra.mxu0 0
    %704 = vmatprep.subr.bf16.mxu0 0
    %705 = vmatpush1.bf16.msra.mxu0 0
    %706 = vmatprep.mubr.bf16.mxu0 0
    %707 = vmatmul.mubr.bf16.gmra.mrb[0].mxu0 %v665
    %v708 = vpop.f32.mrb[0].mxu0
    %v709 = vadd.f32 0.0, %v708
    %v710 = vpop.f32.mrb[0].mxu0
    %v711 = vpop.f32.mrb[0].mxu0
    %v712 = vadd.f32 0.0, %v711
    %v713 = vpop.f32.mrb[0].mxu0
    %714 = vmatprep.mubr.bf16.mxu0 0
    %715 = vmatmul.mubr.bf16.gmra.mrb[0].mxu0 %v668
    %v716 = vpop.f32.mrb[0].mxu0
    %v717 = vadd.f32 0.0, %v716
    %v718 = vpop.f32.mrb[0].mxu0
    %v719 = vpop.f32.mrb[0].mxu0
    %v720 = vpop.f32.mrb[0].mxu0
    %721 = vdwg.mxu0
    %722 = vrot.lane.b32.xlu0 %v222, 64
    %v723 = vpop.permute.xlu0 %722
    %724 = vrot.lane.b32.xlu0 %v223, 64
    %v725 = vpop.permute.xlu0 %724
    %v728 = vsel %vm517, %v653, 0
    %v731 = vsel %vm517, %v654, 0
    %v734 = vsel %vm670, %v725, 0
    %736 = vmatprep.subr.bf16.mxu0 0
    %737 = vmatpush1.bf16.msra.mxu0 %v723
    %738 = vmatprep.subr.bf16.mxu0 0
    %739 = vmatpush1.bf16.msra.mxu0 %v734
    %740 = vmatprep.subr.bf16.mxu0 0
    %741 = vmatpush1.bf16.msra.mxu0 0
    %742 = vmatprep.subr.bf16.mxu0 0
    %743 = vmatpush1.bf16.msra.mxu0 0
    %744 = vmatprep.subr.bf16.mxu0 0
    %745 = vmatpush1.bf16.msra.mxu0 0
    %746 = vmatprep.subr.bf16.mxu0 0
    %747 = vmatpush1.bf16.msra.mxu0 0
    %748 = vmatprep.subr.bf16.mxu0 0
    %749 = vmatpush1.bf16.msra.mxu0 0
    %750 = vmatprep.subr.bf16.mxu0 0
    %751 = vmatpush1.bf16.msra.mxu0 0
    %752 = vmatprep.subr.bf16.mxu0 0
    %753 = vmatpush1.bf16.msra.mxu0 0
    %754 = vmatprep.subr.bf16.mxu0 0
    %755 = vmatpush1.bf16.msra.mxu0 0
    %756 = vmatprep.subr.bf16.mxu0 0
    %757 = vmatpush1.bf16.msra.mxu0 0
    %758 = vmatprep.subr.bf16.mxu0 0
    %759 = vmatpush1.bf16.msra.mxu0 0
    %760 = vmatprep.subr.bf16.mxu0 0
    %761 = vmatpush1.bf16.msra.mxu0 0
    %762 = vmatprep.subr.bf16.mxu0 0
    %763 = vmatpush1.bf16.msra.mxu0 0
    %764 = vmatprep.subr.bf16.mxu0 0
    %765 = vmatpush1.bf16.msra.mxu0 0
    %766 = vmatprep.subr.bf16.mxu0 0
    %767 = vmatpush1.bf16.msra.mxu0 0
    %768 = vmatprep.mubr.bf16.mxu0 0
    %769 = vmatmul.mubr.bf16.gmra.mrb[0].mxu0 %v728
    %v770 = vpop.f32.mrb[0].mxu0
    %v771 = vadd.f32 0.0, %v770
    %v772 = vpop.f32.mrb[0].mxu0
    %v773 = vpop.f32.mrb[0].mxu0
    %v774 = vadd.f32 0.0, %v773
    %v775 = vpop.f32.mrb[0].mxu0
    %776 = vmatprep.mubr.bf16.mxu0 0
    %777 = vmatmul.mubr.bf16.gmra.mrb[0].mxu0 %v731
    %v778 = vpop.f32.mrb[0].mxu0
    %v779 = vadd.f32 0.0, %v778
    %v780 = vpop.f32.mrb[0].mxu0
    %v781 = vpop.f32.mrb[0].mxu0
    %v782 = vpop.f32.mrb[0].mxu0
    %783 = vdwg.mxu0
    %784 = vrot.lane.b32.xlu0 %v224, 64
    %v785 = vpop.permute.xlu0 %784
    %786 = vrot.lane.b32.xlu0 %v225, 64
    %v787 = vpop.permute.xlu0 %786
    %v790 = vsel %vm517, %v655, 0
    %v793 = vsel %vm517, %v656, 0
    %v796 = vsel %vm670, %v787, 0
    %798 = vmatprep.subr.bf16.mxu0 0
    %799 = vmatpush1.bf16.msra.mxu0 %v785
    %800 = vmatprep.subr.bf16.mxu0 0
    %801 = vmatpush1.bf16.msra.mxu0 %v796
    %802 = vmatprep.subr.bf16.mxu0 0
    %803 = vmatpush1.bf16.msra.mxu0 0
    %804 = vmatprep.subr.bf16.mxu0 0
    %805 = vmatpush1.bf16.msra.mxu0 0
    %806 = vmatprep.subr.bf16.mxu0 0
    %807 = vmatpush1.bf16.msra.mxu0 0
    %808 = vmatprep.subr.bf16.mxu0 0
    %809 = vmatpush1.bf16.msra.mxu0 0
    %810 = vmatprep.subr.bf16.mxu0 0
    %811 = vmatpush1.bf16.msra.mxu0 0
    %812 = vmatprep.subr.bf16.mxu0 0
    %813 = vmatpush1.bf16.msra.mxu0 0
    %814 = vmatprep.subr.bf16.mxu0 0
    %815 = vmatpush1.bf16.msra.mxu0 0
    %816 = vmatprep.subr.bf16.mxu0 0
    %817 = vmatpush1.bf16.msra.mxu0 0
    %818 = vmatprep.subr.bf16.mxu0 0
    %819 = vmatpush1.bf16.msra.mxu0 0
    %820 = vmatprep.subr.bf16.mxu0 0
    %821 = vmatpush1.bf16.msra.mxu0 0
    %822 = vmatprep.subr.bf16.mxu0 0
    %823 = vmatpush1.bf16.msra.mxu0 0
    %824 = vmatprep.subr.bf16.mxu0 0
    %825 = vmatpush1.bf16.msra.mxu0 0
    %826 = vmatprep.subr.bf16.mxu0 0
    %827 = vmatpush1.bf16.msra.mxu0 0
    %828 = vmatprep.subr.bf16.mxu0 0
    %829 = vmatpush1.bf16.msra.mxu0 0
    %830 = vmatprep.mubr.bf16.mxu0 0
    %831 = vmatmul.mubr.bf16.gmra.mrb[0].mxu0 %v790
    %v832 = vpop.f32.mrb[0].mxu0
    %v833 = vadd.f32 0.0, %v832
    %v834 = vpop.f32.mrb[0].mxu0
    %v835 = vpop.f32.mrb[0].mxu0
    %v836 = vadd.f32 0.0, %v835
    %v837 = vpop.f32.mrb[0].mxu0
    %838 = vmatprep.mubr.bf16.mxu0 0
    %839 = vmatmul.mubr.bf16.gmra.mrb[0].mxu0 %v793
    %v840 = vpop.f32.mrb[0].mxu0
    %v841 = vadd.f32 0.0, %v840
    %v842 = vpop.f32.mrb[0].mxu0
    %v843 = vpop.f32.mrb[0].mxu0
    %v844 = vpop.f32.mrb[0].mxu0
    %845 = vdwg.mxu0
    %846 = vrot.lane.b32.xlu0 %v226, 64
    %v847 = vpop.permute.xlu0 %846
    %848 = vrot.lane.b32.xlu0 %v227, 64
    %v849 = vpop.permute.xlu0 %848
    %v852 = vsel %vm517, %v657, 0
    %v855 = vsel %vm517, %v658, 0
    %v858 = vsel %vm670, %v849, 0
    %860 = vmatprep.subr.bf16.mxu0 0
    %861 = vmatpush1.bf16.msra.mxu0 %v847
    %862 = vmatprep.subr.bf16.mxu0 0
    %863 = vmatpush1.bf16.msra.mxu0 %v858
    %864 = vmatprep.subr.bf16.mxu0 0
    %865 = vmatpush1.bf16.msra.mxu0 0
    %866 = vmatprep.subr.bf16.mxu0 0
    %867 = vmatpush1.bf16.msra.mxu0 0
    %868 = vmatprep.subr.bf16.mxu0 0
    %869 = vmatpush1.bf16.msra.mxu0 0
    %870 = vmatprep.subr.bf16.mxu0 0
    %871 = vmatpush1.bf16.msra.mxu0 0
    %872 = vmatprep.subr.bf16.mxu0 0
    %873 = vmatpush1.bf16.msra.mxu0 0
    %874 = vmatprep.subr.bf16.mxu0 0
    %875 = vmatpush1.bf16.msra.mxu0 0
    %876 = vmatprep.subr.bf16.mxu0 0
    %877 = vmatpush1.bf16.msra.mxu0 0
    %878 = vmatprep.subr.bf16.mxu0 0
    %879 = vmatpush1.bf16.msra.mxu0 0
    %880 = vmatprep.subr.bf16.mxu0 0
    %881 = vmatpush1.bf16.msra.mxu0 0
    %882 = vmatprep.subr.bf16.mxu0 0
    %883 = vmatpush1.bf16.msra.mxu0 0
    %884 = vmatprep.subr.bf16.mxu0 0
    %885 = vmatpush1.bf16.msra.mxu0 0
    %886 = vmatprep.subr.bf16.mxu0 0
    %887 = vmatpush1.bf16.msra.mxu0 0
    %888 = vmatprep.subr.bf16.mxu0 0
    %889 = vmatpush1.bf16.msra.mxu0 0
    %890 = vmatprep.subr.bf16.mxu0 0
    %891 = vmatpush1.bf16.msra.mxu0 0
    %892 = vmatprep.mubr.bf16.mxu0 0
    %893 = vmatmul.mubr.bf16.gmra.mrb[0].mxu0 %v852
    %v894 = vpop.f32.mrb[0].mxu0
    %v895 = vadd.f32 0.0, %v894
    %v896 = vpop.f32.mrb[0].mxu0
    %v897 = vpop.f32.mrb[0].mxu0
    %v898 = vadd.f32 0.0, %v897
    %v899 = vpop.f32.mrb[0].mxu0
    %900 = vmatprep.mubr.bf16.mxu0 0
    %901 = vmatmul.mubr.bf16.gmra.mrb[0].mxu0 %v855
    %v902 = vpop.f32.mrb[0].mxu0
    %v903 = vadd.f32 0.0, %v902
    %v904 = vpop.f32.mrb[0].mxu0
    %v905 = vpop.f32.mrb[0].mxu0
    %v906 = vpop.f32.mrb[0].mxu0
    %907 = vdwg.mxu0
    %v908 = vpack.c.bf16 %v712, %v709
    %v909 = vpack.c.bf16 %v717, %v717
    %v910 = vpack.c.bf16 %v774, %v771
    %v911 = vpack.c.bf16 %v779, %v779
    %v912 = vpack.c.bf16 %v836, %v833
    %v913 = vpack.c.bf16 %v841, %v841
    %v914 = vpack.c.bf16 %v898, %v895
    %v915 = vpack.c.bf16 %v903, %v903
    %v916 = vld [vmem:[%s8] sm:$0xf]
    %v917 = vld [vmem:[%s8 + $0x4] sm:$0xf]
    %v918 = vld [vmem:[%s8 + $0x8] sm:$0xf]
    %v919 = vld [vmem:[%s8 + $0xc] sm:$0xf]
    %v921 = vsel %vm234, %v908, 0
    %v924 = vsel %vm234, %v909, 0
    %vm926 = vcmask 1043456
    %v928 = vsel %vm926, %v916, 0
    %930 = vmatprep.subr.bf16.mxu0 0
    %931 = vmatpush1.bf16.msra.mxu0 %v928
    %932 = vmatprep.subr.bf16.mxu0 0
    %933 = vmatpush1.bf16.msra.mxu0 0
    %934 = vmatprep.subr.bf16.mxu0 0
    %935 = vmatpush1.bf16.msra.mxu0 0
    %936 = vmatprep.subr.bf16.mxu0 0
    %937 = vmatpush1.bf16.msra.mxu0 0
    %938 = vmatprep.subr.bf16.mxu0 0
    %939 = vmatpush1.bf16.msra.mxu0 0
    %940 = vmatprep.subr.bf16.mxu0 0
    %941 = vmatpush1.bf16.msra.mxu0 0
    %942 = vmatprep.subr.bf16.mxu0 0
    %943 = vmatpush1.bf16.msra.mxu0 0
    %944 = vmatprep.subr.bf16.mxu0 0
    %945 = vmatpush1.bf16.msra.mxu0 0
    %946 = vmatprep.subr.bf16.mxu0 0
    %947 = vmatpush1.bf16.msra.mxu0 0
    %948 = vmatprep.subr.bf16.mxu0 0
    %949 = vmatpush1.bf16.msra.mxu0 0
    %950 = vmatprep.subr.bf16.mxu0 0
    %951 = vmatpush1.bf16.msra.mxu0 0
    %952 = vmatprep.subr.bf16.mxu0 0
    %953 = vmatpush1.bf16.msra.mxu0 0
    %954 = vmatprep.subr.bf16.mxu0 0
    %955 = vmatpush1.bf16.msra.mxu0 0
    %956 = vmatprep.subr.bf16.mxu0 0
    %957 = vmatpush1.bf16.msra.mxu0 0
    %958 = vmatprep.subr.bf16.mxu0 0
    %959 = vmatpush1.bf16.msra.mxu0 0
    %960 = vmatprep.subr.bf16.mxu0 0
    %961 = vmatpush1.bf16.msra.mxu0 0
    %962 = vmatprep.mubr.bf16.mxu0 0
    %963 = vmatmul.mubr.bf16.gmra.mrb[0].mxu0 %v921
    %v964 = vpop.f32.mrb[0].mxu0
    %v965 = vadd.f32 0.0, %v964
    %v966 = vpop.f32.mrb[0].mxu0
    %v967 = vpop.f32.mrb[0].mxu0
    %v968 = vadd.f32 0.0, %v967
    %v969 = vpop.f32.mrb[0].mxu0
    %970 = vmatprep.mubr.bf16.mxu0 0
    %971 = vmatmul.mubr.bf16.gmra.mrb[0].mxu0 %v924
    %v972 = vpop.f32.mrb[0].mxu0
    %v973 = vadd.f32 0.0, %v972
    %v974 = vpop.f32.mrb[0].mxu0
    %v975 = vpop.f32.mrb[0].mxu0
    %v976 = vpop.f32.mrb[0].mxu0
    %977 = vdwg.mxu0
    %v979 = vsel %vm234, %v910, 0
    %v982 = vsel %vm234, %v911, 0
    %v985 = vsel %vm926, %v917, 0
    %987 = vmatprep.subr.bf16.mxu0 0
    %988 = vmatpush1.bf16.msra.mxu0 %v985
    %989 = vmatprep.subr.bf16.mxu0 0
    %990 = vmatpush1.bf16.msra.mxu0 0
    %991 = vmatprep.subr.bf16.mxu0 0
    %992 = vmatpush1.bf16.msra.mxu0 0
    %993 = vmatprep.subr.bf16.mxu0 0
    %994 = vmatpush1.bf16.msra.mxu0 0
    %995 = vmatprep.subr.bf16.mxu0 0
    %996 = vmatpush1.bf16.msra.mxu0 0
    %997 = vmatprep.subr.bf16.mxu0 0
    %998 = vmatpush1.bf16.msra.mxu0 0
    %999 = vmatprep.subr.bf16.mxu0 0
    %1000 = vmatpush1.bf16.msra.mxu0 0
    %1001 = vmatprep.subr.bf16.mxu0 0
    %1002 = vmatpush1.bf16.msra.mxu0 0
    %1003 = vmatprep.subr.bf16.mxu0 0
    %1004 = vmatpush1.bf16.msra.mxu0 0
    %1005 = vmatprep.subr.bf16.mxu0 0
    %1006 = vmatpush1.bf16.msra.mxu0 0
    %1007 = vmatprep.subr.bf16.mxu0 0
    %1008 = vmatpush1.bf16.msra.mxu0 0
    %1009 = vmatprep.subr.bf16.mxu0 0
    %1010 = vmatpush1.bf16.msra.mxu0 0
    %1011 = vmatprep.subr.bf16.mxu0 0
    %1012 = vmatpush1.bf16.msra.mxu0 0
    %1013 = vmatprep.subr.bf16.mxu0 0
    %1014 = vmatpush1.bf16.msra.mxu0 0
    %1015 = vmatprep.subr.bf16.mxu0 0
    %1016 = vmatpush1.bf16.msra.mxu0 0
    %1017 = vmatprep.subr.bf16.mxu0 0
    %1018 = vmatpush1.bf16.msra.mxu0 0
    %1019 = vmatprep.mubr.bf16.mxu0 0
    %1020 = vmatmul.mubr.bf16.gmra.mrb[0].mxu0 %v979
    %v1021 = vpop.f32.mrb[0].mxu0
    %v1022 = vadd.f32 0.0, %v1021
    %v1023 = vpop.f32.mrb[0].mxu0
    %v1024 = vpop.f32.mrb[0].mxu0
    %v1025 = vadd.f32 0.0, %v1024
    %v1026 = vpop.f32.mrb[0].mxu0
    %1027 = vmatprep.mubr.bf16.mxu0 0
    %1028 = vmatmul.mubr.bf16.gmra.mrb[0].mxu0 %v982
    %v1029 = vpop.f32.mrb[0].mxu0
    %v1030 = vadd.f32 0.0, %v1029
    %v1031 = vpop.f32.mrb[0].mxu0
    %v1032 = vpop.f32.mrb[0].mxu0
    %v1033 = vpop.f32.mrb[0].mxu0
    %1034 = vdwg.mxu0
    %v1036 = vsel %vm234, %v912, 0
    %v1039 = vsel %vm234, %v913, 0
    %v1042 = vsel %vm926, %v918, 0
    %1044 = vmatprep.subr.bf16.mxu0 0
    %1045 = vmatpush1.bf16.msra.mxu0 %v1042
    %1046 = vmatprep.subr.bf16.mxu0 0
    %1047 = vmatpush1.bf16.msra.mxu0 0
    %1048 = vmatprep.subr.bf16.mxu0 0
    %1049 = vmatpush1.bf16.msra.mxu0 0
    %1050 = vmatprep.subr.bf16.mxu0 0
    %1051 = vmatpush1.bf16.msra.mxu0 0
    %1052 = vmatprep.subr.bf16.mxu0 0
    %1053 = vmatpush1.bf16.msra.mxu0 0
    %1054 = vmatprep.subr.bf16.mxu0 0
    %1055 = vmatpush1.bf16.msra.mxu0 0
    %1056 = vmatprep.subr.bf16.mxu0 0
    %1057 = vmatpush1.bf16.msra.mxu0 0
    %1058 = vmatprep.subr.bf16.mxu0 0
    %1059 = vmatpush1.bf16.msra.mxu0 0
    %1060 = vmatprep.subr.bf16.mxu0 0
    %1061 = vmatpush1.bf16.msra.mxu0 0
    %1062 = vmatprep.subr.bf16.mxu0 0
    %1063 = vmatpush1.bf16.msra.mxu0 0
    %1064 = vmatprep.subr.bf16.mxu0 0
    %1065 = vmatpush1.bf16.msra.mxu0 0
    %1066 = vmatprep.subr.bf16.mxu0 0
    %1067 = vmatpush1.bf16.msra.mxu0 0
    %1068 = vmatprep.subr.bf16.mxu0 0
    %1069 = vmatpush1.bf16.msra.mxu0 0
    %1070 = vmatprep.subr.bf16.mxu0 0
    %1071 = vmatpush1.bf16.msra.mxu0 0
    %1072 = vmatprep.subr.bf16.mxu0 0
    %1073 = vmatpush1.bf16.msra.mxu0 0
    %1074 = vmatprep.subr.bf16.mxu0 0
    %1075 = vmatpush1.bf16.msra.mxu0 0
    %1076 = vmatprep.mubr.bf16.mxu0 0
    %1077 = vmatmul.mubr.bf16.gmra.mrb[0].mxu0 %v1036
    %v1078 = vpop.f32.mrb[0].mxu0
    %v1079 = vadd.f32 0.0, %v1078
    %v1080 = vpop.f32.mrb[0].mxu0
    %v1081 = vpop.f32.mrb[0].mxu0
    %v1082 = vadd.f32 0.0, %v1081
    %v1083 = vpop.f32.mrb[0].mxu0
    %1084 = vmatprep.mubr.bf16.mxu0 0
    %1085 = vmatmul.mubr.bf16.gmra.mrb[0].mxu0 %v1039
    %v1086 = vpop.f32.mrb[0].mxu0
    %v1087 = vadd.f32 0.0, %v1086
    %v1088 = vpop.f32.mrb[0].mxu0
    %v1089 = vpop.f32.mrb[0].mxu0
    %v1090 = vpop.f32.mrb[0].mxu0
    %1091 = vdwg.mxu0
    %v1093 = vsel %vm234, %v914, 0
    %v1096 = vsel %vm234, %v915, 0
    %v1099 = vsel %vm926, %v919, 0
    %1101 = vmatprep.subr.bf16.mxu0 0
    %1102 = vmatpush1.bf16.msra.mxu0 %v1099
    %1103 = vmatprep.subr.bf16.mxu0 0
    %1104 = vmatpush1.bf16.msra.mxu0 0
    %1105 = vmatprep.subr.bf16.mxu0 0
    %1106 = vmatpush1.bf16.msra.mxu0 0
    %1107 = vmatprep.subr.bf16.mxu0 0
    %1108 = vmatpush1.bf16.msra.mxu0 0
    %1109 = vmatprep.subr.bf16.mxu0 0
    %1110 = vmatpush1.bf16.msra.mxu0 0
    %1111 = vmatprep.subr.bf16.mxu0 0
    %1112 = vmatpush1.bf16.msra.mxu0 0
    %1113 = vmatprep.subr.bf16.mxu0 0
    %1114 = vmatpush1.bf16.msra.mxu0 0
    %1115 = vmatprep.subr.bf16.mxu0 0
    %1116 = vmatpush1.bf16.msra.mxu0 0
    %1117 = vmatprep.subr.bf16.mxu0 0
    %1118 = vmatpush1.bf16.msra.mxu0 0
    %1119 = vmatprep.subr.bf16.mxu0 0
    %1120 = vmatpush1.bf16.msra.mxu0 0
    %1121 = vmatprep.subr.bf16.mxu0 0
    %1122 = vmatpush1.bf16.msra.mxu0 0
    %1123 = vmatprep.subr.bf16.mxu0 0
    %1124 = vmatpush1.bf16.msra.mxu0 0
    %1125 = vmatprep.subr.bf16.mxu0 0
    %1126 = vmatpush1.bf16.msra.mxu0 0
    %1127 = vmatprep.subr.bf16.mxu0 0
    %1128 = vmatpush1.bf16.msra.mxu0 0
    %1129 = vmatprep.subr.bf16.mxu0 0
    %1130 = vmatpush1.bf16.msra.mxu0 0
    %1131 = vmatprep.subr.bf16.mxu0 0
    %1132 = vmatpush1.bf16.msra.mxu0 0
    %1133 = vmatprep.mubr.bf16.mxu0 0
    %1134 = vmatmul.mubr.bf16.gmra.mrb[0].mxu0 %v1093
    %v1135 = vpop.f32.mrb[0].mxu0
    %v1136 = vadd.f32 0.0, %v1135
    %v1137 = vpop.f32.mrb[0].mxu0
    %v1138 = vpop.f32.mrb[0].mxu0
    %v1139 = vadd.f32 0.0, %v1138
    %v1140 = vpop.f32.mrb[0].mxu0
    %1141 = vmatprep.mubr.bf16.mxu0 0
    %1142 = vmatmul.mubr.bf16.gmra.mrb[0].mxu0 %v1096
    %v1143 = vpop.f32.mrb[0].mxu0
    %v1144 = vadd.f32 0.0, %v1143
    %v1145 = vpop.f32.mrb[0].mxu0
    %v1146 = vpop.f32.mrb[0].mxu0
    %v1147 = vpop.f32.mrb[0].mxu0
    %1148 = vdwg.mxu0
    %v1149 = vsel %vm85, %v965, 0.0
    %v1150 = vsel %vm85, %v1022, 0.0
    %v1151 = vadd.f32 %v1149, %v1150
    %v1152 = vsel %vm85, %v1079, 0.0
    %v1153 = vadd.f32 %v1151, %v1152
    %v1154 = vsel %vm85, %v1136, 0.0
    %v1155 = vadd.f32 %v1153, %v1154
    %v1156 = vsel %vm85, %v968, 0.0
    %v1157 = vsel %vm85, %v1025, 0.0
    %v1158 = vadd.f32 %v1156, %v1157
    %v1159 = vsel %vm85, %v1082, 0.0
    %v1160 = vadd.f32 %v1158, %v1159
    %v1161 = vsel %vm85, %v1139, 0.0
    %v1162 = vadd.f32 %v1160, %v1161
    %v1163 = vsel %vm92, %v973, 0.0
    %v1164 = vsel %vm92, %v1030, 0.0
    %v1165 = vadd.f32 %v1163, %v1164
    %v1166 = vsel %vm92, %v1087, 0.0
    %v1167 = vadd.f32 %v1165, %v1166
    %v1168 = vsel %vm92, %v1144, 0.0
    %v1169 = vadd.f32 %v1167, %v1168
    %v1170 = vadd.f32 %v75, %v1155
    %v1171 = vadd.f32 %v76, %v1162
    %v1172 = vadd.f32 %v77, %v1169
    %v1173 = vld [vmem:[%s9] sm:$0x1]
    %v1174 = vmul.f32 %v1170, %v1170
    %v1175 = vmul.f32 %v1171, %v1171
    %v1176 = vmul.f32 %v1172, %v1172
    %v1177 = vsel %vm85, %v1174, 0.0
    %1178 = vadd.xlane.f32.xlu0 %v1177
    %v1179 = vpop.xlane.xlu0 %1178
    %v1180 = vsel %vm85, %v1175, 0.0
    %1181 = vadd.xlane.f32.xlu0 %v1180
    %v1182 = vpop.xlane.xlu0 %1181
    %v1183 = vsel %vm92, %v1176, 0.0
    %1184 = vadd.xlane.f32.xlu0 %v1183
    %v1185 = vpop.xlane.xlu0 %1184
    %v1186 = vmul.f32 %v1179, %v96
    %v1187 = vmul.f32 %v1182, %v96
    %v1188 = vmul.f32 %v1185, %v96
    %v1189 = vadd.f32 %v1186, 1e-06
    %v1190 = vadd.f32 %v1187, 1e-06
    %v1191 = vadd.f32 %v1188, 1e-06
    %v1192 = vrsqrt.pop %v1189
    %v1193 = vrsqrt.pop %v1190
    %v1194 = vrsqrt.pop %v1191
    %v1195 = vmul.f32 %v1170, %v1192
    %v1196 = vmul.f32 %v1171, %v1193
    %v1197 = vmul.f32 %v1172, %v1194
    %v1199 = vlaneseq
    %v1200 = vshrl.u32 %v1199, 7
    %v1201 = vsub.s32 0, %v1200
    %v1202 = vrot.slane %v1173, %v1201
    %v1204 = vmul.f32 %v1195, %v1202
    %v1205 = vmul.f32 %v1196, %v1202
    %v1206 = vmul.f32 %v1197, %v1202
    %v1207 = vpack.c.bf16 %v1205, %v1204
    %v1208 = vpack.c.bf16 %v1206, %v1206
    %v1209 = vld [vmem:[%s10] sm:$0xf]
    %v1210 = vld [vmem:[%s10 + $0x4] sm:$0xf]
    %v1211 = vld [vmem:[%s10 + $0x8] sm:$0xf]
    %v1212 = vld [vmem:[%s10 + $0xc] sm:$0xf]
    %v1217 = vunpack.c.l.b16 %v1209
    %v1218 = vunpack.c.l.b16 %v1210
    %v1219 = vunpack.c.l.b16 %v1211
    %v1220 = vunpack.c.l.b16 %v1212
    %v1221 = vpack.c.b16 %v1218, %v1217
    %v1222 = vpack.c.b16 %v1220, %v1219
    %v1226 = vsel %vm85, %v1207, 0
    %v1229 = vsel %vm85, %v1208, 0
    %1231 = vmatprep.subr.bf16.mxu0 0
    %1232 = vmatpush1.bf16.msra.mxu0 %v1221
    %1233 = vmatprep.subr.bf16.mxu0 0
    %1234 = vmatpush1.bf16.msra.mxu0 %v1222
    %1235 = vmatprep.subr.bf16.mxu0 0
    %1236 = vmatpush1.bf16.msra.mxu0 0
    %1237 = vmatprep.subr.bf16.mxu0 0
    %1238 = vmatpush1.bf16.msra.mxu0 0
    %1239 = vmatprep.subr.bf16.mxu0 0
    %1240 = vmatpush1.bf16.msra.mxu0 0
    %1241 = vmatprep.subr.bf16.mxu0 0
    %1242 = vmatpush1.bf16.msra.mxu0 0
    %1243 = vmatprep.subr.bf16.mxu0 0
    %1244 = vmatpush1.bf16.msra.mxu0 0
    %1245 = vmatprep.subr.bf16.mxu0 0
    %1246 = vmatpush1.bf16.msra.mxu0 0
    %1247 = vmatprep.subr.bf16.mxu0 0
    %1248 = vmatpush1.bf16.msra.mxu0 0
    %1249 = vmatprep.subr.bf16.mxu0 0
    %1250 = vmatpush1.bf16.msra.mxu0 0
    %1251 = vmatprep.subr.bf16.mxu0 0
    %1252 = vmatpush1.bf16.msra.mxu0 0
    %1253 = vmatprep.subr.bf16.mxu0 0
    %1254 = vmatpush1.bf16.msra.mxu0 0
    %1255 = vmatprep.subr.bf16.mxu0 0
    %1256 = vmatpush1.bf16.msra.mxu0 0
    %1257 = vmatprep.subr.bf16.mxu0 0
    %1258 = vmatpush1.bf16.msra.mxu0 0
    %1259 = vmatprep.subr.bf16.mxu0 0
    %1260 = vmatpush1.bf16.msra.mxu0 0
    %1261 = vmatprep.subr.bf16.mxu0 0
    %1262 = vmatpush1.bf16.msra.mxu0 0
    %1263 = vmatprep.mubr.bf16.mxu0 0
    %1264 = vmatmul.mubr.bf16.gmra.mrb[0].mxu0 %v1226
    %v1265 = vpop.f32.mrb[0].mxu0
    %v1266 = vadd.f32 0.0, %v1265
    %v1267 = vpop.f32.mrb[0].mxu0
    %v1268 = vpop.f32.mrb[0].mxu0
    %v1269 = vadd.f32 0.0, %v1268
    %v1270 = vpop.f32.mrb[0].mxu0
    %1271 = vmatprep.mubr.bf16.mxu0 0
    %1272 = vmatmul.mubr.bf16.gmra.mrb[0].mxu0 %v1229
    %v1273 = vpop.f32.mrb[0].mxu0
    %v1274 = vadd.f32 0.0, %v1273
    %v1275 = vpop.f32.mrb[0].mxu0
    %v1276 = vpop.f32.mrb[0].mxu0
    %v1277 = vpop.f32.mrb[0].mxu0
    %1278 = vdwg.mxu0
    %v1279 = vxor.u32 %v1266, 2147483648
    %v1280 = vxor.u32 %v1269, 2147483648
    %v1281 = vxor.u32 %v1274, 2147483648
    %v1282 = vmul.f32 %v1279, 1.442695
    %v1283 = vpow.pop %v1282
    %v1284 = vmul.f32 %v1280, 1.442695
    %v1285 = vpow.pop %v1284
    %v1286 = vmul.f32 %v1281, 1.442695
    %v1287 = vpow.pop %v1286
    %v1288 = vadd.f32 %v1283, 1.0
    %v1289 = vadd.f32 %v1285, 1.0
    %v1290 = vadd.f32 %v1287, 1.0
    %v1291 = vrcp.pop %v1288
    %v1292 = vmul.f32 1.0, %v1291
    %v1293 = vrcp.pop %v1289
    %v1294 = vmul.f32 1.0, %v1293
    %v1295 = vrcp.pop %v1290
    %v1296 = vmul.f32 1.0, %v1295
    %v1297 = vmul.f32 %v1266, %v1292
    %v1298 = vmul.f32 %v1269, %v1294
    %v1299 = vmul.f32 %v1274, %v1296
    %1300 = vrot.lane.b32.xlu0 %v1266, 64
    %v1301 = vpop.permute.xlu0 %1300
    %1302 = vrot.lane.b32.xlu0 %v1269, 64
    %v1303 = vpop.permute.xlu0 %1302
    %1304 = vrot.lane.b32.xlu0 %v1274, 64
    %v1305 = vpop.permute.xlu0 %1304
    %v1306 = vmul.f32 %v1297, %v1301
    %v1307 = vmul.f32 %v1298, %v1303
    %v1308 = vmul.f32 %v1299, %v1305
    %v1309 = vpack.c.bf16 %v1307, %v1306
    %v1310 = vpack.c.bf16 %v1308, %v1308
    %v1311 = vld [vmem:[%s11] sm:$0xf]
    %v1312 = vld [vmem:[%s11 + $0x4] sm:$0xf]
    %v1313 = vld [vmem:[%s11 + $0x8] sm:$0xf]
    %v1314 = vld [vmem:[%s11 + $0xc] sm:$0xf]
    %v1315 = vld [vmem:[%s11 + $0x10] sm:$0xf]
    %v1316 = vld [vmem:[%s11 + $0x14] sm:$0xf]
    %v1317 = vld [vmem:[%s11 + $0x18] sm:$0xf]
    %v1318 = vld [vmem:[%s11 + $0x1c] sm:$0xf]
    %v1319 = vld [vmem:[%s11 + $0x20] sm:$0xf]
    %v1320 = vld [vmem:[%s11 + $0x24] sm:$0xf]
    %v1321 = vld [vmem:[%s11 + $0x28] sm:$0xf]
    %v1322 = vld [vmem:[%s11 + $0x2c] sm:$0xf]
    %v1323 = vld [vmem:[%s11 + $0x30] sm:$0xf]
    %v1324 = vld [vmem:[%s11 + $0x34] sm:$0xf]
    %v1325 = vld [vmem:[%s11 + $0x38] sm:$0xf]
    %v1326 = vld [vmem:[%s11 + $0x3c] sm:$0xf]
    %v1343 = vunpack.c.l.b16 %v1311
    %v1344 = vunpack.c.l.b16 %v1312
    %v1345 = vunpack.c.l.b16 %v1313
    %v1346 = vunpack.c.l.b16 %v1314
    %v1347 = vunpack.c.l.b16 %v1315
    %v1348 = vunpack.c.l.b16 %v1316
    %v1349 = vunpack.c.l.b16 %v1317
    %v1350 = vunpack.c.l.b16 %v1318
    %v1351 = vunpack.c.l.b16 %v1319
    %v1352 = vunpack.c.l.b16 %v1320
    %v1353 = vunpack.c.l.b16 %v1321
    %v1354 = vunpack.c.l.b16 %v1322
    %v1355 = vunpack.c.l.b16 %v1323
    %v1356 = vunpack.c.l.b16 %v1324
    %v1357 = vunpack.c.l.b16 %v1325
    %v1358 = vunpack.c.l.b16 %v1326
    %v1359 = vpack.c.b16 %v1344, %v1343
    %v1360 = vpack.c.b16 %v1346, %v1345
    %v1361 = vpack.c.b16 %v1348, %v1347
    %v1362 = vpack.c.b16 %v1350, %v1349
    %v1363 = vpack.c.b16 %v1352, %v1351
    %v1364 = vpack.c.b16 %v1354, %v1353
    %v1365 = vpack.c.b16 %v1356, %v1355
    %v1366 = vpack.c.b16 %v1358, %v1357
    %1375 = vmatprep.subr.bf16.mxu0 0
    %1376 = vmatpush1.bf16.msra.mxu0 %v1359
    %1377 = vmatprep.subr.bf16.mxu0 0
    %1378 = vmatpush1.bf16.msra.mxu0 %v1360
    %1379 = vmatprep.subr.bf16.mxu0 0
    %1380 = vmatpush1.bf16.msra.mxu0 %v1361
    %1381 = vmatprep.subr.bf16.mxu0 0
    %1382 = vmatpush1.bf16.msra.mxu0 %v1362
    %1383 = vmatprep.subr.bf16.mxu0 0
    %1384 = vmatpush1.bf16.msra.mxu0 %v1363
    %1385 = vmatprep.subr.bf16.mxu0 0
    %1386 = vmatpush1.bf16.msra.mxu0 %v1364
    %1387 = vmatprep.subr.bf16.mxu0 0
    %1388 = vmatpush1.bf16.msra.mxu0 %v1365
    %1389 = vmatprep.subr.bf16.mxu0 0
    %1390 = vmatpush1.bf16.msra.mxu0 %v1366
    %1391 = vmatprep.subr.bf16.mxu0 0
    %1392 = vmatpush1.bf16.msra.mxu0 0
    %1393 = vmatprep.subr.bf16.mxu0 0
    %1394 = vmatpush1.bf16.msra.mxu0 0
    %1395 = vmatprep.subr.bf16.mxu0 0
    %1396 = vmatpush1.bf16.msra.mxu0 0
    %1397 = vmatprep.subr.bf16.mxu0 0
    %1398 = vmatpush1.bf16.msra.mxu0 0
    %1399 = vmatprep.subr.bf16.mxu0 0
    %1400 = vmatpush1.bf16.msra.mxu0 0
    %1401 = vmatprep.subr.bf16.mxu0 0
    %1402 = vmatpush1.bf16.msra.mxu0 0
    %1403 = vmatprep.subr.bf16.mxu0 0
    %1404 = vmatpush1.bf16.msra.mxu0 0
    %1405 = vmatprep.subr.bf16.mxu0 0
    %1406 = vmatpush1.bf16.msra.mxu0 0
    %1407 = vmatprep.mubr.bf16.mxu0 0
    %1408 = vmatmul.mubr.bf16.gmra.mrb[0].mxu0 %v1309
    %v1409 = vpop.f32.mrb[0].mxu0
    %v1410 = vadd.f32 0.0, %v1409
    %v1411 = vpop.f32.mrb[0].mxu0
    %v1412 = vpop.f32.mrb[0].mxu0
    %v1413 = vadd.f32 0.0, %v1412
    %v1414 = vpop.f32.mrb[0].mxu0
    %1415 = vmatprep.mubr.bf16.mxu0 0
    %1416 = vmatmul.mubr.bf16.gmra.mrb[0].mxu0 %v1310
    %v1417 = vpop.f32.mrb[0].mxu0
    %v1418 = vadd.f32 0.0, %v1417
    %v1419 = vpop.f32.mrb[0].mxu0
    %v1420 = vpop.f32.mrb[0].mxu0
    %v1421 = vpop.f32.mrb[0].mxu0
    %1422 = vdwg.mxu0
    %v1423 = vadd.f32 %v1170, %v1410
    %v1424 = vadd.f32 %v1171, %v1413
    %v1425 = vadd.f32 %v1172, %v1418
    %s1426 = scalar_lea.vmem %s6, 1
    %v1427 = vld [vmem:[%s1426] sm:$0x1]
    %v1428 = vmul.f32 %v1423, %v1423
    %v1429 = vmul.f32 %v1424, %v1424
    %v1430 = vmul.f32 %v1425, %v1425
    %v1431 = vsel %vm85, %v1428, 0.0
    %1432 = vadd.xlane.f32.xlu0 %v1431
    %v1433 = vpop.xlane.xlu0 %1432
    %v1434 = vsel %vm85, %v1429, 0.0
    %1435 = vadd.xlane.f32.xlu0 %v1434
    %v1436 = vpop.xlane.xlu0 %1435
    %v1437 = vsel %vm92, %v1430, 0.0
    %1438 = vadd.xlane.f32.xlu0 %v1437
    %v1439 = vpop.xlane.xlu0 %1438
    %v1440 = vmul.f32 %v1433, %v96
    %v1441 = vmul.f32 %v1436, %v96
    %v1442 = vmul.f32 %v1439, %v96
    %v1443 = vadd.f32 %v1440, 1e-06
    %v1444 = vadd.f32 %v1441, 1e-06
    %v1445 = vadd.f32 %v1442, 1e-06
    %v1446 = vrsqrt.pop %v1443
    %v1447 = vrsqrt.pop %v1444
    %v1448 = vrsqrt.pop %v1445
    %v1449 = vmul.f32 %v1423, %v1446
    %v1450 = vmul.f32 %v1424, %v1447
    %v1451 = vmul.f32 %v1425, %v1448
    %v1453 = vlaneseq
    %v1454 = vshrl.u32 %v1453, 7
    %v1455 = vsub.s32 0, %v1454
    %v1456 = vrot.slane %v1427, %v1455
    %v1458 = vmul.f32 %v1449, %v1456
    %v1459 = vmul.f32 %v1450, %v1456
    %v1460 = vmul.f32 %v1451, %v1456
    %v1461 = vpack.c.bf16 %v1459, %v1458
    %v1462 = vpack.c.bf16 %v1460, %v1460
    %s1463 = scalar_lea.vmem %s7, 16
    %v1464 = vld [vmem:[%s1463] sm:$0xf]
    %v1465 = vld [vmem:[%s1463 + $0x4] sm:$0xf]
    %v1466 = vld [vmem:[%s1463 + $0x8] sm:$0xf]
    %v1467 = vld [vmem:[%s1463 + $0xc] sm:$0xf]
    %v1472 = vunpack.c.l.b16 %v1464
    %v1473 = vunpack.c.l.b16 %v1465
    %v1474 = vunpack.c.l.b16 %v1466
    %v1475 = vunpack.c.l.b16 %v1467
    %v1476 = vpack.c.b16 %v1473, %v1472
    %v1477 = vpack.c.b16 %v1475, %v1474
    %v1481 = vsel %vm85, %v1461, 0
    %v1484 = vsel %vm85, %v1462, 0
    %1486 = vmatprep.subr.bf16.mxu0 0
    %1487 = vmatpush1.bf16.msra.mxu0 %v1476
    %1488 = vmatprep.subr.bf16.mxu0 0
    %1489 = vmatpush1.bf16.msra.mxu0 %v1477
    %1490 = vmatprep.subr.bf16.mxu0 0
    %1491 = vmatpush1.bf16.msra.mxu0 0
    %1492 = vmatprep.subr.bf16.mxu0 0
    %1493 = vmatpush1.bf16.msra.mxu0 0
    %1494 = vmatprep.subr.bf16.mxu0 0
    %1495 = vmatpush1.bf16.msra.mxu0 0
    %1496 = vmatprep.subr.bf16.mxu0 0
    %1497 = vmatpush1.bf16.msra.mxu0 0
    %1498 = vmatprep.subr.bf16.mxu0 0
    %1499 = vmatpush1.bf16.msra.mxu0 0
    %1500 = vmatprep.subr.bf16.mxu0 0
    %1501 = vmatpush1.bf16.msra.mxu0 0
    %1502 = vmatprep.subr.bf16.mxu0 0
    %1503 = vmatpush1.bf16.msra.mxu0 0
    %1504 = vmatprep.subr.bf16.mxu0 0
    %1505 = vmatpush1.bf16.msra.mxu0 0
    %1506 = vmatprep.subr.bf16.mxu0 0
    %1507 = vmatpush1.bf16.msra.mxu0 0
    %1508 = vmatprep.subr.bf16.mxu0 0
    %1509 = vmatpush1.bf16.msra.mxu0 0
    %1510 = vmatprep.subr.bf16.mxu0 0
    %1511 = vmatpush1.bf16.msra.mxu0 0
    %1512 = vmatprep.subr.bf16.mxu0 0
    %1513 = vmatpush1.bf16.msra.mxu0 0
    %1514 = vmatprep.subr.bf16.mxu0 0
    %1515 = vmatpush1.bf16.msra.mxu0 0
    %1516 = vmatprep.subr.bf16.mxu0 0
    %1517 = vmatpush1.bf16.msra.mxu0 0
    %1518 = vmatprep.mubr.bf16.mxu0 0
    %1519 = vmatmul.mubr.bf16.gmra.mrb[0].mxu0 %v1481
    %v1520 = vpop.f32.mrb[0].mxu0
    %v1521 = vadd.f32 0.0, %v1520
    %v1522 = vpop.f32.mrb[0].mxu0
    %v1523 = vpop.f32.mrb[0].mxu0
    %v1524 = vadd.f32 0.0, %v1523
    %v1525 = vpop.f32.mrb[0].mxu0
    %1526 = vmatprep.mubr.bf16.mxu0 0
    %1527 = vmatmul.mubr.bf16.gmra.mrb[0].mxu0 %v1484
    %v1528 = vpop.f32.mrb[0].mxu0
    %v1529 = vadd.f32 0.0, %v1528
    %v1530 = vpop.f32.mrb[0].mxu0
    %v1531 = vpop.f32.mrb[0].mxu0
    %v1532 = vpop.f32.mrb[0].mxu0
    %1533 = vdwg.mxu0
    %1537 = vrot.lane.b32.xlu0 %v1521, 120
    %v1538 = vpop.permute.xlu0 %1537
    %1539 = vrot.lane.b32.xlu0 %v1524, 120
    %v1540 = vpop.permute.xlu0 %1539
    %1541 = vrot.lane.b32.xlu0 %v1529, 120
    %v1542 = vpop.permute.xlu0 %1541
    %1546 = vrot.lane.b32.xlu0 %v1521, 112
    %v1547 = vpop.permute.xlu0 %1546
    %1548 = vrot.lane.b32.xlu0 %v1524, 112
    %v1549 = vpop.permute.xlu0 %1548
    %1550 = vrot.lane.b32.xlu0 %v1529, 112
    %v1551 = vpop.permute.xlu0 %1550
    %1555 = vrot.lane.b32.xlu0 %v1521, 104
    %v1556 = vpop.permute.xlu0 %1555
    %1557 = vrot.lane.b32.xlu0 %v1524, 104
    %v1558 = vpop.permute.xlu0 %1557
    %1559 = vrot.lane.b32.xlu0 %v1529, 104
    %v1560 = vpop.permute.xlu0 %1559
    %v1564 = vpack.c.bf16 %v1524, %v1521
    %v1565 = vpack.c.bf16 %v1529, %v1529
    %v1566 = vpack.c.bf16 %v1540, %v1538
    %v1567 = vpack.c.bf16 %v1542, %v1542
    %v1568 = vpack.c.bf16 %v1549, %v1547
    %v1569 = vpack.c.bf16 %v1551, %v1551
    %v1570 = vpack.c.bf16 %v1558, %v1556
    %v1571 = vpack.c.bf16 %v1560, %v1560
    %1574 = vrot.lane.b32.xlu0 %v1564, 96
    %v1575 = vpop.permute.xlu0 %1574
    %1576 = vrot.lane.b32.xlu0 %v1565, 96
    %v1577 = vpop.permute.xlu0 %1576
    %v1579 = vsel %vm234, %v1564, 0
    %v1582 = vsel %vm234, %v1565, 0
    %v1585 = vsel %vm234, %v1575, 0
    %v1588 = vsel %vm234, %v1577, 0
    %1590 = vmatprep.subr.bf16.mxu0 0
    %1591 = vmatpush1.bf16.xpose.msra.mxu0 %v1585
    %1592 = vmatprep.subr.bf16.mxu0 0
    %1593 = vmatpush1.bf16.xpose.msra.mxu0 %v1588
    %1594 = vmatprep.subr.bf16.mxu0 0
    %1595 = vmatpush1.bf16.xpose.msra.mxu0 0
    %1596 = vmatprep.subr.bf16.mxu0 0
    %1597 = vmatpush1.bf16.xpose.msra.mxu0 0
    %1598 = vmatprep.subr.bf16.mxu0 0
    %1599 = vmatpush1.bf16.xpose.msra.mxu0 0
    %1600 = vmatprep.subr.bf16.mxu0 0
    %1601 = vmatpush1.bf16.xpose.msra.mxu0 0
    %1602 = vmatprep.subr.bf16.mxu0 0
    %1603 = vmatpush1.bf16.xpose.msra.mxu0 0
    %1604 = vmatprep.subr.bf16.mxu0 0
    %1605 = vmatpush1.bf16.xpose.msra.mxu0 0
    %1606 = vmatprep.subr.bf16.mxu0 0
    %1607 = vmatpush1.bf16.xpose.msra.mxu0 0
    %1608 = vmatprep.subr.bf16.mxu0 0
    %1609 = vmatpush1.bf16.xpose.msra.mxu0 0
    %1610 = vmatprep.subr.bf16.mxu0 0
    %1611 = vmatpush1.bf16.xpose.msra.mxu0 0
    %1612 = vmatprep.subr.bf16.mxu0 0
    %1613 = vmatpush1.bf16.xpose.msra.mxu0 0
    %1614 = vmatprep.subr.bf16.mxu0 0
    %1615 = vmatpush1.bf16.xpose.msra.mxu0 0
    %1616 = vmatprep.subr.bf16.mxu0 0
    %1617 = vmatpush1.bf16.xpose.msra.mxu0 0
    %1618 = vmatprep.subr.bf16.mxu0 0
    %1619 = vmatpush1.bf16.xpose.msra.mxu0 0
    %1620 = vmatprep.subr.bf16.mxu0 0
    %1621 = vmatpush1.bf16.xpose.msra.mxu0 0
    %1622 = vmatprep.mubr.bf16.mxu0 0
    %1623 = vmatmul.mubr.bf16.gmra.mrb[0].mxu0 %v1579
    %v1624 = vpop.f32.mrb[0].mxu0
    %v1625 = vadd.f32 0.0, %v1624
    %v1626 = vpop.f32.mrb[0].mxu0
    %v1627 = vpop.f32.mrb[0].mxu0
    %v1628 = vadd.f32 0.0, %v1627
    %v1629 = vpop.f32.mrb[0].mxu0
    %1630 = vmatprep.mubr.bf16.mxu0 0
    %1631 = vmatmul.mubr.bf16.gmra.mrb[0].mxu0 %v1582
    %v1632 = vpop.f32.mrb[0].mxu0
    %v1633 = vadd.f32 0.0, %v1632
    %v1634 = vpop.f32.mrb[0].mxu0
    %v1635 = vpop.f32.mrb[0].mxu0
    %v1636 = vpop.f32.mrb[0].mxu0
    %1637 = vdwg.mxu0
    %1640 = vrot.lane.b32.xlu0 %v1566, 96
    %v1641 = vpop.permute.xlu0 %1640
    %1642 = vrot.lane.b32.xlu0 %v1567, 96
    %v1643 = vpop.permute.xlu0 %1642
    %v1645 = vsel %vm234, %v1566, 0
    %v1648 = vsel %vm234, %v1567, 0
    %v1651 = vsel %vm234, %v1641, 0
    %v1654 = vsel %vm234, %v1643, 0
    %1656 = vmatprep.subr.bf16.mxu0 0
    %1657 = vmatpush1.bf16.xpose.msra.mxu0 %v1651
    %1658 = vmatprep.subr.bf16.mxu0 0
    %1659 = vmatpush1.bf16.xpose.msra.mxu0 %v1654
    %1660 = vmatprep.subr.bf16.mxu0 0
    %1661 = vmatpush1.bf16.xpose.msra.mxu0 0
    %1662 = vmatprep.subr.bf16.mxu0 0
    %1663 = vmatpush1.bf16.xpose.msra.mxu0 0
    %1664 = vmatprep.subr.bf16.mxu0 0
    %1665 = vmatpush1.bf16.xpose.msra.mxu0 0
    %1666 = vmatprep.subr.bf16.mxu0 0
    %1667 = vmatpush1.bf16.xpose.msra.mxu0 0
    %1668 = vmatprep.subr.bf16.mxu0 0
    %1669 = vmatpush1.bf16.xpose.msra.mxu0 0
    %1670 = vmatprep.subr.bf16.mxu0 0
    %1671 = vmatpush1.bf16.xpose.msra.mxu0 0
    %1672 = vmatprep.subr.bf16.mxu0 0
    %1673 = vmatpush1.bf16.xpose.msra.mxu0 0
    %1674 = vmatprep.subr.bf16.mxu0 0
    %1675 = vmatpush1.bf16.xpose.msra.mxu0 0
    %1676 = vmatprep.subr.bf16.mxu0 0
    %1677 = vmatpush1.bf16.xpose.msra.mxu0 0
    %1678 = vmatprep.subr.bf16.mxu0 0
    %1679 = vmatpush1.bf16.xpose.msra.mxu0 0
    %1680 = vmatprep.subr.bf16.mxu0 0
    %1681 = vmatpush1.bf16.xpose.msra.mxu0 0
    %1682 = vmatprep.subr.bf16.mxu0 0
    %1683 = vmatpush1.bf16.xpose.msra.mxu0 0
    %1684 = vmatprep.subr.bf16.mxu0 0
    %1685 = vmatpush1.bf16.xpose.msra.mxu0 0
    %1686 = vmatprep.subr.bf16.mxu0 0
    %1687 = vmatpush1.bf16.xpose.msra.mxu0 0
    %1688 = vmatprep.mubr.bf16.mxu0 0
    %1689 = vmatmul.mubr.bf16.gmra.mrb[0].mxu0 %v1645
    %v1690 = vpop.f32.mrb[0].mxu0
    %v1691 = vadd.f32 0.0, %v1690
    %v1692 = vpop.f32.mrb[0].mxu0
    %v1693 = vpop.f32.mrb[0].mxu0
    %v1694 = vadd.f32 0.0, %v1693
    %v1695 = vpop.f32.mrb[0].mxu0
    %1696 = vmatprep.mubr.bf16.mxu0 0
    %1697 = vmatmul.mubr.bf16.gmra.mrb[0].mxu0 %v1648
    %v1698 = vpop.f32.mrb[0].mxu0
    %v1699 = vadd.f32 0.0, %v1698
    %v1700 = vpop.f32.mrb[0].mxu0
    %v1701 = vpop.f32.mrb[0].mxu0
    %v1702 = vpop.f32.mrb[0].mxu0
    %1703 = vdwg.mxu0
    %1706 = vrot.lane.b32.xlu0 %v1568, 96
    %v1707 = vpop.permute.xlu0 %1706
    %1708 = vrot.lane.b32.xlu0 %v1569, 96
    %v1709 = vpop.permute.xlu0 %1708
    %v1711 = vsel %vm234, %v1568, 0
    %v1714 = vsel %vm234, %v1569, 0
    %v1717 = vsel %vm234, %v1707, 0
    %v1720 = vsel %vm234, %v1709, 0
    %1722 = vmatprep.subr.bf16.mxu0 0
    %1723 = vmatpush1.bf16.xpose.msra.mxu0 %v1717
    %1724 = vmatprep.subr.bf16.mxu0 0
    %1725 = vmatpush1.bf16.xpose.msra.mxu0 %v1720
    %1726 = vmatprep.subr.bf16.mxu0 0
    %1727 = vmatpush1.bf16.xpose.msra.mxu0 0
    %1728 = vmatprep.subr.bf16.mxu0 0
    %1729 = vmatpush1.bf16.xpose.msra.mxu0 0
    %1730 = vmatprep.subr.bf16.mxu0 0
    %1731 = vmatpush1.bf16.xpose.msra.mxu0 0
    %1732 = vmatprep.subr.bf16.mxu0 0
    %1733 = vmatpush1.bf16.xpose.msra.mxu0 0
    %1734 = vmatprep.subr.bf16.mxu0 0
    %1735 = vmatpush1.bf16.xpose.msra.mxu0 0
    %1736 = vmatprep.subr.bf16.mxu0 0
    %1737 = vmatpush1.bf16.xpose.msra.mxu0 0
    %1738 = vmatprep.subr.bf16.mxu0 0
    %1739 = vmatpush1.bf16.xpose.msra.mxu0 0
    %1740 = vmatprep.subr.bf16.mxu0 0
    %1741 = vmatpush1.bf16.xpose.msra.mxu0 0
    %1742 = vmatprep.subr.bf16.mxu0 0
    %1743 = vmatpush1.bf16.xpose.msra.mxu0 0
    %1744 = vmatprep.subr.bf16.mxu0 0
    %1745 = vmatpush1.bf16.xpose.msra.mxu0 0
    %1746 = vmatprep.subr.bf16.mxu0 0
    %1747 = vmatpush1.bf16.xpose.msra.mxu0 0
    %1748 = vmatprep.subr.bf16.mxu0 0
    %1749 = vmatpush1.bf16.xpose.msra.mxu0 0
    %1750 = vmatprep.subr.bf16.mxu0 0
    %1751 = vmatpush1.bf16.xpose.msra.mxu0 0
    %1752 = vmatprep.subr.bf16.mxu0 0
    %1753 = vmatpush1.bf16.xpose.msra.mxu0 0
    %1754 = vmatprep.mubr.bf16.mxu0 0
    %1755 = vmatmul.mubr.bf16.gmra.mrb[0].mxu0 %v1711
    %v1756 = vpop.f32.mrb[0].mxu0
    %v1757 = vadd.f32 0.0, %v1756
    %v1758 = vpop.f32.mrb[0].mxu0
    %v1759 = vpop.f32.mrb[0].mxu0
    %v1760 = vadd.f32 0.0, %v1759
    %v1761 = vpop.f32.mrb[0].mxu0
    %1762 = vmatprep.mubr.bf16.mxu0 0
    %1763 = vmatmul.mubr.bf16.gmra.mrb[0].mxu0 %v1714
    %v1764 = vpop.f32.mrb[0].mxu0
    %v1765 = vadd.f32 0.0, %v1764
    %v1766 = vpop.f32.mrb[0].mxu0
    %v1767 = vpop.f32.mrb[0].mxu0
    %v1768 = vpop.f32.mrb[0].mxu0
    %1769 = vdwg.mxu0
    %1772 = vrot.lane.b32.xlu0 %v1570, 96
    %v1773 = vpop.permute.xlu0 %1772
    %1774 = vrot.lane.b32.xlu0 %v1571, 96
    %v1775 = vpop.permute.xlu0 %1774
    %v1777 = vsel %vm234, %v1570, 0
    %v1780 = vsel %vm234, %v1571, 0
    %v1783 = vsel %vm234, %v1773, 0
    %v1786 = vsel %vm234, %v1775, 0
    %1788 = vmatprep.subr.bf16.mxu0 0
    %1789 = vmatpush1.bf16.xpose.msra.mxu0 %v1783
    %1790 = vmatprep.subr.bf16.mxu0 0
    %1791 = vmatpush1.bf16.xpose.msra.mxu0 %v1786
    %1792 = vmatprep.subr.bf16.mxu0 0
    %1793 = vmatpush1.bf16.xpose.msra.mxu0 0
    %1794 = vmatprep.subr.bf16.mxu0 0
    %1795 = vmatpush1.bf16.xpose.msra.mxu0 0
    %1796 = vmatprep.subr.bf16.mxu0 0
    %1797 = vmatpush1.bf16.xpose.msra.mxu0 0
    %1798 = vmatprep.subr.bf16.mxu0 0
    %1799 = vmatpush1.bf16.xpose.msra.mxu0 0
    %1800 = vmatprep.subr.bf16.mxu0 0
    %1801 = vmatpush1.bf16.xpose.msra.mxu0 0
    %1802 = vmatprep.subr.bf16.mxu0 0
    %1803 = vmatpush1.bf16.xpose.msra.mxu0 0
    %1804 = vmatprep.subr.bf16.mxu0 0
    %1805 = vmatpush1.bf16.xpose.msra.mxu0 0
    %1806 = vmatprep.subr.bf16.mxu0 0
    %1807 = vmatpush1.bf16.xpose.msra.mxu0 0
    %1808 = vmatprep.subr.bf16.mxu0 0
    %1809 = vmatpush1.bf16.xpose.msra.mxu0 0
    %1810 = vmatprep.subr.bf16.mxu0 0
    %1811 = vmatpush1.bf16.xpose.msra.mxu0 0
    %1812 = vmatprep.subr.bf16.mxu0 0
    %1813 = vmatpush1.bf16.xpose.msra.mxu0 0
    %1814 = vmatprep.subr.bf16.mxu0 0
    %1815 = vmatpush1.bf16.xpose.msra.mxu0 0
    %1816 = vmatprep.subr.bf16.mxu0 0
    %1817 = vmatpush1.bf16.xpose.msra.mxu0 0
    %1818 = vmatprep.subr.bf16.mxu0 0
    %1819 = vmatpush1.bf16.xpose.msra.mxu0 0
    %1820 = vmatprep.mubr.bf16.mxu0 0
    %1821 = vmatmul.mubr.bf16.gmra.mrb[0].mxu0 %v1777
    %v1822 = vpop.f32.mrb[0].mxu0
    %v1823 = vadd.f32 0.0, %v1822
    %v1824 = vpop.f32.mrb[0].mxu0
    %v1825 = vpop.f32.mrb[0].mxu0
    %v1826 = vadd.f32 0.0, %v1825
    %v1827 = vpop.f32.mrb[0].mxu0
    %1828 = vmatprep.mubr.bf16.mxu0 0
    %1829 = vmatmul.mubr.bf16.gmra.mrb[0].mxu0 %v1780
    %v1830 = vpop.f32.mrb[0].mxu0
    %v1831 = vadd.f32 0.0, %v1830
    %v1832 = vpop.f32.mrb[0].mxu0
    %v1833 = vpop.f32.mrb[0].mxu0
    %v1834 = vpop.f32.mrb[0].mxu0
    %1835 = vdwg.mxu0
    %v1836 = vmul.f32 %v1625, 0.35355338
    %v1837 = vmul.f32 %v1628, 0.35355338
    %v1838 = vmul.f32 %v1633, 0.35355338
    %v1839 = vmul.f32 %v1691, 0.35355338
    %v1840 = vmul.f32 %v1694, 0.35355338
    %v1841 = vmul.f32 %v1699, 0.35355338
    %v1842 = vmul.f32 %v1757, 0.35355338
    %v1843 = vmul.f32 %v1760, 0.35355338
    %v1844 = vmul.f32 %v1765, 0.35355338
    %v1845 = vmul.f32 %v1823, 0.35355338
    %v1846 = vmul.f32 %v1826, 0.35355338
    %v1847 = vmul.f32 %v1831, 0.35355338
    %v1848 = vadd.f32 %v1836, %v78
    %v1849 = vadd.f32 %v1837, %v79
    %v1850 = vadd.f32 %v1838, %v80
    %v1851 = vadd.f32 %v1839, %v78
    %v1852 = vadd.f32 %v1840, %v79
    %v1853 = vadd.f32 %v1841, %v80
    %v1854 = vadd.f32 %v1842, %v78
    %v1855 = vadd.f32 %v1843, %v79
    %v1856 = vadd.f32 %v1844, %v80
    %v1857 = vadd.f32 %v1845, %v78
    %v1858 = vadd.f32 %v1846, %v79
    %v1859 = vadd.f32 %v1847, %v80
    %v1860 = vsel %vm517, %v1848, -inf
    %1861 = vmax.xlane.f32.xlu0 %v1860
    %v1862 = vpop.xlane.xlu0 %1861
    %v1863 = vsel %vm517, %v1849, -inf
    %1864 = vmax.xlane.f32.xlu0 %v1863
    %v1865 = vpop.xlane.xlu0 %1864
    %v1866 = vsel %vm524, %v1850, -inf
    %1867 = vmax.xlane.f32.xlu0 %v1866
    %v1868 = vpop.xlane.xlu0 %1867
    %v1869 = vsel %vm517, %v1851, -inf
    %1870 = vmax.xlane.f32.xlu0 %v1869
    %v1871 = vpop.xlane.xlu0 %1870
    %v1872 = vsel %vm517, %v1852, -inf
    %1873 = vmax.xlane.f32.xlu0 %v1872
    %v1874 = vpop.xlane.xlu0 %1873
    %v1875 = vsel %vm524, %v1853, -inf
    %1876 = vmax.xlane.f32.xlu0 %v1875
    %v1877 = vpop.xlane.xlu0 %1876
    %v1878 = vsel %vm517, %v1854, -inf
    %1879 = vmax.xlane.f32.xlu0 %v1878
    %v1880 = vpop.xlane.xlu0 %1879
    %v1881 = vsel %vm517, %v1855, -inf
    %1882 = vmax.xlane.f32.xlu0 %v1881
    %v1883 = vpop.xlane.xlu0 %1882
    %v1884 = vsel %vm524, %v1856, -inf
    %1885 = vmax.xlane.f32.xlu0 %v1884
    %v1886 = vpop.xlane.xlu0 %1885
    %v1887 = vsel %vm517, %v1857, -inf
    %1888 = vmax.xlane.f32.xlu0 %v1887
    %v1889 = vpop.xlane.xlu0 %1888
    %v1890 = vsel %vm517, %v1858, -inf
    %1891 = vmax.xlane.f32.xlu0 %v1890
    %v1892 = vpop.xlane.xlu0 %1891
    %v1893 = vsel %vm524, %v1859, -inf
    %1894 = vmax.xlane.f32.xlu0 %v1893
    %v1895 = vpop.xlane.xlu0 %1894
    %v1896 = vsub.f32 %v1848, %v1862
    %v1897 = vsub.f32 %v1849, %v1865
    %v1898 = vsub.f32 %v1850, %v1868
    %v1899 = vsub.f32 %v1851, %v1871
    %v1900 = vsub.f32 %v1852, %v1874
    %v1901 = vsub.f32 %v1853, %v1877
    %v1902 = vsub.f32 %v1854, %v1880
    %v1903 = vsub.f32 %v1855, %v1883
    %v1904 = vsub.f32 %v1856, %v1886
    %v1905 = vsub.f32 %v1857, %v1889
    %v1906 = vsub.f32 %v1858, %v1892
    %v1907 = vsub.f32 %v1859, %v1895
    %v1908 = vmul.f32 %v1896, 1.442695
    %v1909 = vpow.pop %v1908
    %v1910 = vmul.f32 %v1897, 1.442695
    %v1911 = vpow.pop %v1910
    %v1912 = vmul.f32 %v1898, 1.442695
    %v1913 = vpow.pop %v1912
    %v1914 = vmul.f32 %v1899, 1.442695
    %v1915 = vpow.pop %v1914
    %v1916 = vmul.f32 %v1900, 1.442695
    %v1917 = vpow.pop %v1916
    %v1918 = vmul.f32 %v1901, 1.442695
    %v1919 = vpow.pop %v1918
    %v1920 = vmul.f32 %v1902, 1.442695
    %v1921 = vpow.pop %v1920
    %v1922 = vmul.f32 %v1903, 1.442695
    %v1923 = vpow.pop %v1922
    %v1924 = vmul.f32 %v1904, 1.442695
    %v1925 = vpow.pop %v1924
    %v1926 = vmul.f32 %v1905, 1.442695
    %v1927 = vpow.pop %v1926
    %v1928 = vmul.f32 %v1906, 1.442695
    %v1929 = vpow.pop %v1928
    %v1930 = vmul.f32 %v1907, 1.442695
    %v1931 = vpow.pop %v1930
    %v1932 = vsel %vm517, %v1909, 0.0
    %1933 = vadd.xlane.f32.xlu0 %v1932
    %v1934 = vpop.xlane.xlu0 %1933
    %v1935 = vsel %vm517, %v1911, 0.0
    %1936 = vadd.xlane.f32.xlu0 %v1935
    %v1937 = vpop.xlane.xlu0 %1936
    %v1938 = vsel %vm524, %v1913, 0.0
    %1939 = vadd.xlane.f32.xlu0 %v1938
    %v1940 = vpop.xlane.xlu0 %1939
    %v1941 = vsel %vm517, %v1915, 0.0
    %1942 = vadd.xlane.f32.xlu0 %v1941
    %v1943 = vpop.xlane.xlu0 %1942
    %v1944 = vsel %vm517, %v1917, 0.0
    %1945 = vadd.xlane.f32.xlu0 %v1944
    %v1946 = vpop.xlane.xlu0 %1945
    %v1947 = vsel %vm524, %v1919, 0.0
    %1948 = vadd.xlane.f32.xlu0 %v1947
    %v1949 = vpop.xlane.xlu0 %1948
    %v1950 = vsel %vm517, %v1921, 0.0
    %1951 = vadd.xlane.f32.xlu0 %v1950
    %v1952 = vpop.xlane.xlu0 %1951
    %v1953 = vsel %vm517, %v1923, 0.0
    %1954 = vadd.xlane.f32.xlu0 %v1953
    %v1955 = vpop.xlane.xlu0 %1954
    %v1956 = vsel %vm524, %v1925, 0.0
    %1957 = vadd.xlane.f32.xlu0 %v1956
    %v1958 = vpop.xlane.xlu0 %1957
    %v1959 = vsel %vm517, %v1927, 0.0
    %1960 = vadd.xlane.f32.xlu0 %v1959
    %v1961 = vpop.xlane.xlu0 %1960
    %v1962 = vsel %vm517, %v1929, 0.0
    %1963 = vadd.xlane.f32.xlu0 %v1962
    %v1964 = vpop.xlane.xlu0 %1963
    %v1965 = vsel %vm524, %v1931, 0.0
    %1966 = vadd.xlane.f32.xlu0 %v1965
    %v1967 = vpop.xlane.xlu0 %1966
    %v1968 = vrcp.pop %v1934
    %v1969 = vrcp.pop %v1937
    %v1970 = vrcp.pop %v1940
    %v1971 = vrcp.pop %v1943
    %v1972 = vrcp.pop %v1946
    %v1973 = vrcp.pop %v1949
    %v1974 = vrcp.pop %v1952
    %v1975 = vrcp.pop %v1955
    %v1976 = vrcp.pop %v1958
    %v1977 = vrcp.pop %v1961
    %v1978 = vrcp.pop %v1964
    %v1979 = vrcp.pop %v1967
    %v1980 = vmul.f32 %v1909, %v1968
    %v1981 = vmul.f32 %v1911, %v1969
    %v1982 = vmul.f32 %v1913, %v1970
    %v1983 = vmul.f32 %v1915, %v1971
    %v1984 = vmul.f32 %v1917, %v1972
    %v1985 = vmul.f32 %v1919, %v1973
    %v1986 = vmul.f32 %v1921, %v1974
    %v1987 = vmul.f32 %v1923, %v1975
    %v1988 = vmul.f32 %v1925, %v1976
    %v1989 = vmul.f32 %v1927, %v1977
    %v1990 = vmul.f32 %v1929, %v1978
    %v1991 = vmul.f32 %v1931, %v1979
    %v1992 = vpack.c.bf16 %v1981, %v1980
    %v1993 = vpack.c.bf16 %v1982, %v1982
    %v1994 = vpack.c.bf16 %v1984, %v1983
    %v1995 = vpack.c.bf16 %v1985, %v1985
    %v1996 = vpack.c.bf16 %v1987, %v1986
    %v1997 = vpack.c.bf16 %v1988, %v1988
    %v1998 = vpack.c.bf16 %v1990, %v1989
    %v1999 = vpack.c.bf16 %v1991, %v1991
    %2000 = vrot.lane.b32.xlu0 %v1564, 64
    %v2001 = vpop.permute.xlu0 %2000
    %2002 = vrot.lane.b32.xlu0 %v1565, 64
    %v2003 = vpop.permute.xlu0 %2002
    %v2006 = vsel %vm517, %v1992, 0
    %v2009 = vsel %vm517, %v1993, 0
    %v2012 = vsel %vm670, %v2003, 0
    %2014 = vmatprep.subr.bf16.mxu0 0
    %2015 = vmatpush1.bf16.msra.mxu0 %v2001
    %2016 = vmatprep.subr.bf16.mxu0 0
    %2017 = vmatpush1.bf16.msra.mxu0 %v2012
    %2018 = vmatprep.subr.bf16.mxu0 0
    %2019 = vmatpush1.bf16.msra.mxu0 0
    %2020 = vmatprep.subr.bf16.mxu0 0
    %2021 = vmatpush1.bf16.msra.mxu0 0
    %2022 = vmatprep.subr.bf16.mxu0 0
    %2023 = vmatpush1.bf16.msra.mxu0 0
    %2024 = vmatprep.subr.bf16.mxu0 0
    %2025 = vmatpush1.bf16.msra.mxu0 0
    %2026 = vmatprep.subr.bf16.mxu0 0
    %2027 = vmatpush1.bf16.msra.mxu0 0
    %2028 = vmatprep.subr.bf16.mxu0 0
    %2029 = vmatpush1.bf16.msra.mxu0 0
    %2030 = vmatprep.subr.bf16.mxu0 0
    %2031 = vmatpush1.bf16.msra.mxu0 0
    %2032 = vmatprep.subr.bf16.mxu0 0
    %2033 = vmatpush1.bf16.msra.mxu0 0
    %2034 = vmatprep.subr.bf16.mxu0 0
    %2035 = vmatpush1.bf16.msra.mxu0 0
    %2036 = vmatprep.subr.bf16.mxu0 0
    %2037 = vmatpush1.bf16.msra.mxu0 0
    %2038 = vmatprep.subr.bf16.mxu0 0
    %2039 = vmatpush1.bf16.msra.mxu0 0
    %2040 = vmatprep.subr.bf16.mxu0 0
    %2041 = vmatpush1.bf16.msra.mxu0 0
    %2042 = vmatprep.subr.bf16.mxu0 0
    %2043 = vmatpush1.bf16.msra.mxu0 0
    %2044 = vmatprep.subr.bf16.mxu0 0
    %2045 = vmatpush1.bf16.msra.mxu0 0
    %2046 = vmatprep.mubr.bf16.mxu0 0
    %2047 = vmatmul.mubr.bf16.gmra.mrb[0].mxu0 %v2006
    %v2048 = vpop.f32.mrb[0].mxu0
    %v2049 = vadd.f32 0.0, %v2048
    %v2050 = vpop.f32.mrb[0].mxu0
    %v2051 = vpop.f32.mrb[0].mxu0
    %v2052 = vadd.f32 0.0, %v2051
    %v2053 = vpop.f32.mrb[0].mxu0
    %2054 = vmatprep.mubr.bf16.mxu0 0
    %2055 = vmatmul.mubr.bf16.gmra.mrb[0].mxu0 %v2009
    %v2056 = vpop.f32.mrb[0].mxu0
    %v2057 = vadd.f32 0.0, %v2056
    %v2058 = vpop.f32.mrb[0].mxu0
    %v2059 = vpop.f32.mrb[0].mxu0
    %v2060 = vpop.f32.mrb[0].mxu0
    %2061 = vdwg.mxu0
    %2062 = vrot.lane.b32.xlu0 %v1566, 64
    %v2063 = vpop.permute.xlu0 %2062
    %2064 = vrot.lane.b32.xlu0 %v1567, 64
    %v2065 = vpop.permute.xlu0 %2064
    %v2068 = vsel %vm517, %v1994, 0
    %v2071 = vsel %vm517, %v1995, 0
    %v2074 = vsel %vm670, %v2065, 0
    %2076 = vmatprep.subr.bf16.mxu0 0
    %2077 = vmatpush1.bf16.msra.mxu0 %v2063
    %2078 = vmatprep.subr.bf16.mxu0 0
    %2079 = vmatpush1.bf16.msra.mxu0 %v2074
    %2080 = vmatprep.subr.bf16.mxu0 0
    %2081 = vmatpush1.bf16.msra.mxu0 0
    %2082 = vmatprep.subr.bf16.mxu0 0
    %2083 = vmatpush1.bf16.msra.mxu0 0
    %2084 = vmatprep.subr.bf16.mxu0 0
    %2085 = vmatpush1.bf16.msra.mxu0 0
    %2086 = vmatprep.subr.bf16.mxu0 0
    %2087 = vmatpush1.bf16.msra.mxu0 0
    %2088 = vmatprep.subr.bf16.mxu0 0
    %2089 = vmatpush1.bf16.msra.mxu0 0
    %2090 = vmatprep.subr.bf16.mxu0 0
    %2091 = vmatpush1.bf16.msra.mxu0 0
    %2092 = vmatprep.subr.bf16.mxu0 0
    %2093 = vmatpush1.bf16.msra.mxu0 0
    %2094 = vmatprep.subr.bf16.mxu0 0
    %2095 = vmatpush1.bf16.msra.mxu0 0
    %2096 = vmatprep.subr.bf16.mxu0 0
    %2097 = vmatpush1.bf16.msra.mxu0 0
    %2098 = vmatprep.subr.bf16.mxu0 0
    %2099 = vmatpush1.bf16.msra.mxu0 0
    %2100 = vmatprep.subr.bf16.mxu0 0
    %2101 = vmatpush1.bf16.msra.mxu0 0
    %2102 = vmatprep.subr.bf16.mxu0 0
    %2103 = vmatpush1.bf16.msra.mxu0 0
    %2104 = vmatprep.subr.bf16.mxu0 0
    %2105 = vmatpush1.bf16.msra.mxu0 0
    %2106 = vmatprep.subr.bf16.mxu0 0
    %2107 = vmatpush1.bf16.msra.mxu0 0
    %2108 = vmatprep.mubr.bf16.mxu0 0
    %2109 = vmatmul.mubr.bf16.gmra.mrb[0].mxu0 %v2068
    %v2110 = vpop.f32.mrb[0].mxu0
    %v2111 = vadd.f32 0.0, %v2110
    %v2112 = vpop.f32.mrb[0].mxu0
    %v2113 = vpop.f32.mrb[0].mxu0
    %v2114 = vadd.f32 0.0, %v2113
    %v2115 = vpop.f32.mrb[0].mxu0
    %2116 = vmatprep.mubr.bf16.mxu0 0
    %2117 = vmatmul.mubr.bf16.gmra.mrb[0].mxu0 %v2071
    %v2118 = vpop.f32.mrb[0].mxu0
    %v2119 = vadd.f32 0.0, %v2118
    %v2120 = vpop.f32.mrb[0].mxu0
    %v2121 = vpop.f32.mrb[0].mxu0
    %v2122 = vpop.f32.mrb[0].mxu0
    %2123 = vdwg.mxu0
    %2124 = vrot.lane.b32.xlu0 %v1568, 64
    %v2125 = vpop.permute.xlu0 %2124
    %2126 = vrot.lane.b32.xlu0 %v1569, 64
    %v2127 = vpop.permute.xlu0 %2126
    %v2130 = vsel %vm517, %v1996, 0
    %v2133 = vsel %vm517, %v1997, 0
    %v2136 = vsel %vm670, %v2127, 0
    %2138 = vmatprep.subr.bf16.mxu0 0
    %2139 = vmatpush1.bf16.msra.mxu0 %v2125
    %2140 = vmatprep.subr.bf16.mxu0 0
    %2141 = vmatpush1.bf16.msra.mxu0 %v2136
    %2142 = vmatprep.subr.bf16.mxu0 0
    %2143 = vmatpush1.bf16.msra.mxu0 0
    %2144 = vmatprep.subr.bf16.mxu0 0
    %2145 = vmatpush1.bf16.msra.mxu0 0
    %2146 = vmatprep.subr.bf16.mxu0 0
    %2147 = vmatpush1.bf16.msra.mxu0 0
    %2148 = vmatprep.subr.bf16.mxu0 0
    %2149 = vmatpush1.bf16.msra.mxu0 0
    %2150 = vmatprep.subr.bf16.mxu0 0
    %2151 = vmatpush1.bf16.msra.mxu0 0
    %2152 = vmatprep.subr.bf16.mxu0 0
    %2153 = vmatpush1.bf16.msra.mxu0 0
    %2154 = vmatprep.subr.bf16.mxu0 0
    %2155 = vmatpush1.bf16.msra.mxu0 0
    %2156 = vmatprep.subr.bf16.mxu0 0
    %2157 = vmatpush1.bf16.msra.mxu0 0
    %2158 = vmatprep.subr.bf16.mxu0 0
    %2159 = vmatpush1.bf16.msra.mxu0 0
    %2160 = vmatprep.subr.bf16.mxu0 0
    %2161 = vmatpush1.bf16.msra.mxu0 0
    %2162 = vmatprep.subr.bf16.mxu0 0
    %2163 = vmatpush1.bf16.msra.mxu0 0
    %2164 = vmatprep.subr.bf16.mxu0 0
    %2165 = vmatpush1.bf16.msra.mxu0 0
    %2166 = vmatprep.subr.bf16.mxu0 0
    %2167 = vmatpush1.bf16.msra.mxu0 0
    %2168 = vmatprep.subr.bf16.mxu0 0
    %2169 = vmatpush1.bf16.msra.mxu0 0
    %2170 = vmatprep.mubr.bf16.mxu0 0
    %2171 = vmatmul.mubr.bf16.gmra.mrb[0].mxu0 %v2130
    %v2172 = vpop.f32.mrb[0].mxu0
    %v2173 = vadd.f32 0.0, %v2172
    %v2174 = vpop.f32.mrb[0].mxu0
    %v2175 = vpop.f32.mrb[0].mxu0
    %v2176 = vadd.f32 0.0, %v2175
    %v2177 = vpop.f32.mrb[0].mxu0
    %2178 = vmatprep.mubr.bf16.mxu0 0
    %2179 = vmatmul.mubr.bf16.gmra.mrb[0].mxu0 %v2133
    %v2180 = vpop.f32.mrb[0].mxu0
    %v2181 = vadd.f32 0.0, %v2180
    %v2182 = vpop.f32.mrb[0].mxu0
    %v2183 = vpop.f32.mrb[0].mxu0
    %v2184 = vpop.f32.mrb[0].mxu0
    %2185 = vdwg.mxu0
    %2186 = vrot.lane.b32.xlu0 %v1570, 64
    %v2187 = vpop.permute.xlu0 %2186
    %2188 = vrot.lane.b32.xlu0 %v1571, 64
    %v2189 = vpop.permute.xlu0 %2188
    %v2192 = vsel %vm517, %v1998, 0
    %v2195 = vsel %vm517, %v1999, 0
    %v2198 = vsel %vm670, %v2189, 0
    %2200 = vmatprep.subr.bf16.mxu0 0
    %2201 = vmatpush1.bf16.msra.mxu0 %v2187
    %2202 = vmatprep.subr.bf16.mxu0 0
    %2203 = vmatpush1.bf16.msra.mxu0 %v2198
    %2204 = vmatprep.subr.bf16.mxu0 0
    %2205 = vmatpush1.bf16.msra.mxu0 0
    %2206 = vmatprep.subr.bf16.mxu0 0
    %2207 = vmatpush1.bf16.msra.mxu0 0
    %2208 = vmatprep.subr.bf16.mxu0 0
    %2209 = vmatpush1.bf16.msra.mxu0 0
    %2210 = vmatprep.subr.bf16.mxu0 0
    %2211 = vmatpush1.bf16.msra.mxu0 0
    %2212 = vmatprep.subr.bf16.mxu0 0
    %2213 = vmatpush1.bf16.msra.mxu0 0
    %2214 = vmatprep.subr.bf16.mxu0 0
    %2215 = vmatpush1.bf16.msra.mxu0 0
    %2216 = vmatprep.subr.bf16.mxu0 0
    %2217 = vmatpush1.bf16.msra.mxu0 0
    %2218 = vmatprep.subr.bf16.mxu0 0
    %2219 = vmatpush1.bf16.msra.mxu0 0
    %2220 = vmatprep.subr.bf16.mxu0 0
    %2221 = vmatpush1.bf16.msra.mxu0 0
    %2222 = vmatprep.subr.bf16.mxu0 0
    %2223 = vmatpush1.bf16.msra.mxu0 0
    %2224 = vmatprep.subr.bf16.mxu0 0
    %2225 = vmatpush1.bf16.msra.mxu0 0
    %2226 = vmatprep.subr.bf16.mxu0 0
    %2227 = vmatpush1.bf16.msra.mxu0 0
    %2228 = vmatprep.subr.bf16.mxu0 0
    %2229 = vmatpush1.bf16.msra.mxu0 0
    %2230 = vmatprep.subr.bf16.mxu0 0
    %2231 = vmatpush1.bf16.msra.mxu0 0
    %2232 = vmatprep.mubr.bf16.mxu0 0
    %2233 = vmatmul.mubr.bf16.gmra.mrb[0].mxu0 %v2192
    %v2234 = vpop.f32.mrb[0].mxu0
    %v2235 = vadd.f32 0.0, %v2234
    %v2236 = vpop.f32.mrb[0].mxu0
    %v2237 = vpop.f32.mrb[0].mxu0
    %v2238 = vadd.f32 0.0, %v2237
    %v2239 = vpop.f32.mrb[0].mxu0
    %2240 = vmatprep.mubr.bf16.mxu0 0
    %2241 = vmatmul.mubr.bf16.gmra.mrb[0].mxu0 %v2195
    %v2242 = vpop.f32.mrb[0].mxu0
    %v2243 = vadd.f32 0.0, %v2242
    %v2244 = vpop.f32.mrb[0].mxu0
    %v2245 = vpop.f32.mrb[0].mxu0
    %v2246 = vpop.f32.mrb[0].mxu0
    %2247 = vdwg.mxu0
    %v2248 = vpack.c.bf16 %v2052, %v2049
    %v2249 = vpack.c.bf16 %v2057, %v2057
    %v2250 = vpack.c.bf16 %v2114, %v2111
    %v2251 = vpack.c.bf16 %v2119, %v2119
    %v2252 = vpack.c.bf16 %v2176, %v2173
    %v2253 = vpack.c.bf16 %v2181, %v2181
    %v2254 = vpack.c.bf16 %v2238, %v2235
    %v2255 = vpack.c.bf16 %v2243, %v2243
    %s2256 = scalar_lea.vmem %s8, 16
    %v2257 = vld [vmem:[%s2256] sm:$0xf]
    %v2258 = vld [vmem:[%s2256 + $0x4] sm:$0xf]
    %v2259 = vld [vmem:[%s2256 + $0x8] sm:$0xf]
    %v2260 = vld [vmem:[%s2256 + $0xc] sm:$0xf]
    %v2262 = vsel %vm234, %v2248, 0
    %v2265 = vsel %vm234, %v2249, 0
    %v2268 = vsel %vm926, %v2257, 0
    %2270 = vmatprep.subr.bf16.mxu0 0
    %2271 = vmatpush1.bf16.msra.mxu0 %v2268
    %2272 = vmatprep.subr.bf16.mxu0 0
    %2273 = vmatpush1.bf16.msra.mxu0 0
    %2274 = vmatprep.subr.bf16.mxu0 0
    %2275 = vmatpush1.bf16.msra.mxu0 0
    %2276 = vmatprep.subr.bf16.mxu0 0
    %2277 = vmatpush1.bf16.msra.mxu0 0
    %2278 = vmatprep.subr.bf16.mxu0 0
    %2279 = vmatpush1.bf16.msra.mxu0 0
    %2280 = vmatprep.subr.bf16.mxu0 0
    %2281 = vmatpush1.bf16.msra.mxu0 0
    %2282 = vmatprep.subr.bf16.mxu0 0
    %2283 = vmatpush1.bf16.msra.mxu0 0
    %2284 = vmatprep.subr.bf16.mxu0 0
    %2285 = vmatpush1.bf16.msra.mxu0 0
    %2286 = vmatprep.subr.bf16.mxu0 0
    %2287 = vmatpush1.bf16.msra.mxu0 0
    %2288 = vmatprep.subr.bf16.mxu0 0
    %2289 = vmatpush1.bf16.msra.mxu0 0
    %2290 = vmatprep.subr.bf16.mxu0 0
    %2291 = vmatpush1.bf16.msra.mxu0 0
    %2292 = vmatprep.subr.bf16.mxu0 0
    %2293 = vmatpush1.bf16.msra.mxu0 0
    %2294 = vmatprep.subr.bf16.mxu0 0
    %2295 = vmatpush1.bf16.msra.mxu0 0
    %2296 = vmatprep.subr.bf16.mxu0 0
    %2297 = vmatpush1.bf16.msra.mxu0 0
    %2298 = vmatprep.subr.bf16.mxu0 0
    %2299 = vmatpush1.bf16.msra.mxu0 0
    %2300 = vmatprep.subr.bf16.mxu0 0
    %2301 = vmatpush1.bf16.msra.mxu0 0
    %2302 = vmatprep.mubr.bf16.mxu0 0
    %2303 = vmatmul.mubr.bf16.gmra.mrb[0].mxu0 %v2262
    %v2304 = vpop.f32.mrb[0].mxu0
    %v2305 = vadd.f32 0.0, %v2304
    %v2306 = vpop.f32.mrb[0].mxu0
    %v2307 = vpop.f32.mrb[0].mxu0
    %v2308 = vadd.f32 0.0, %v2307
    %v2309 = vpop.f32.mrb[0].mxu0
    %2310 = vmatprep.mubr.bf16.mxu0 0
    %2311 = vmatmul.mubr.bf16.gmra.mrb[0].mxu0 %v2265
    %v2312 = vpop.f32.mrb[0].mxu0
    %v2313 = vadd.f32 0.0, %v2312
    %v2314 = vpop.f32.mrb[0].mxu0
    %v2315 = vpop.f32.mrb[0].mxu0
    %v2316 = vpop.f32.mrb[0].mxu0
    %2317 = vdwg.mxu0
    %v2319 = vsel %vm234, %v2250, 0
    %v2322 = vsel %vm234, %v2251, 0
    %v2325 = vsel %vm926, %v2258, 0
    %2327 = vmatprep.subr.bf16.mxu0 0
    %2328 = vmatpush1.bf16.msra.mxu0 %v2325
    %2329 = vmatprep.subr.bf16.mxu0 0
    %2330 = vmatpush1.bf16.msra.mxu0 0
    %2331 = vmatprep.subr.bf16.mxu0 0
    %2332 = vmatpush1.bf16.msra.mxu0 0
    %2333 = vmatprep.subr.bf16.mxu0 0
    %2334 = vmatpush1.bf16.msra.mxu0 0
    %2335 = vmatprep.subr.bf16.mxu0 0
    %2336 = vmatpush1.bf16.msra.mxu0 0
    %2337 = vmatprep.subr.bf16.mxu0 0
    %2338 = vmatpush1.bf16.msra.mxu0 0
    %2339 = vmatprep.subr.bf16.mxu0 0
    %2340 = vmatpush1.bf16.msra.mxu0 0
    %2341 = vmatprep.subr.bf16.mxu0 0
    %2342 = vmatpush1.bf16.msra.mxu0 0
    %2343 = vmatprep.subr.bf16.mxu0 0
    %2344 = vmatpush1.bf16.msra.mxu0 0
    %2345 = vmatprep.subr.bf16.mxu0 0
    %2346 = vmatpush1.bf16.msra.mxu0 0
    %2347 = vmatprep.subr.bf16.mxu0 0
    %2348 = vmatpush1.bf16.msra.mxu0 0
    %2349 = vmatprep.subr.bf16.mxu0 0
    %2350 = vmatpush1.bf16.msra.mxu0 0
    %2351 = vmatprep.subr.bf16.mxu0 0
    %2352 = vmatpush1.bf16.msra.mxu0 0
    %2353 = vmatprep.subr.bf16.mxu0 0
    %2354 = vmatpush1.bf16.msra.mxu0 0
    %2355 = vmatprep.subr.bf16.mxu0 0
    %2356 = vmatpush1.bf16.msra.mxu0 0
    %2357 = vmatprep.subr.bf16.mxu0 0
    %2358 = vmatpush1.bf16.msra.mxu0 0
    %2359 = vmatprep.mubr.bf16.mxu0 0
    %2360 = vmatmul.mubr.bf16.gmra.mrb[0].mxu0 %v2319
    %v2361 = vpop.f32.mrb[0].mxu0
    %v2362 = vadd.f32 0.0, %v2361
    %v2363 = vpop.f32.mrb[0].mxu0
    %v2364 = vpop.f32.mrb[0].mxu0
    %v2365 = vadd.f32 0.0, %v2364
    %v2366 = vpop.f32.mrb[0].mxu0
    %2367 = vmatprep.mubr.bf16.mxu0 0
    %2368 = vmatmul.mubr.bf16.gmra.mrb[0].mxu0 %v2322
    %v2369 = vpop.f32.mrb[0].mxu0
    %v2370 = vadd.f32 0.0, %v2369
    %v2371 = vpop.f32.mrb[0].mxu0
    %v2372 = vpop.f32.mrb[0].mxu0
    %v2373 = vpop.f32.mrb[0].mxu0
    %2374 = vdwg.mxu0
    %v2376 = vsel %vm234, %v2252, 0
    %v2379 = vsel %vm234, %v2253, 0
    %v2382 = vsel %vm926, %v2259, 0
    %2384 = vmatprep.subr.bf16.mxu0 0
    %2385 = vmatpush1.bf16.msra.mxu0 %v2382
    %2386 = vmatprep.subr.bf16.mxu0 0
    %2387 = vmatpush1.bf16.msra.mxu0 0
    %2388 = vmatprep.subr.bf16.mxu0 0
    %2389 = vmatpush1.bf16.msra.mxu0 0
    %2390 = vmatprep.subr.bf16.mxu0 0
    %2391 = vmatpush1.bf16.msra.mxu0 0
    %2392 = vmatprep.subr.bf16.mxu0 0
    %2393 = vmatpush1.bf16.msra.mxu0 0
    %2394 = vmatprep.subr.bf16.mxu0 0
    %2395 = vmatpush1.bf16.msra.mxu0 0
    %2396 = vmatprep.subr.bf16.mxu0 0
    %2397 = vmatpush1.bf16.msra.mxu0 0
    %2398 = vmatprep.subr.bf16.mxu0 0
    %2399 = vmatpush1.bf16.msra.mxu0 0
    %2400 = vmatprep.subr.bf16.mxu0 0
    %2401 = vmatpush1.bf16.msra.mxu0 0
    %2402 = vmatprep.subr.bf16.mxu0 0
    %2403 = vmatpush1.bf16.msra.mxu0 0
    %2404 = vmatprep.subr.bf16.mxu0 0
    %2405 = vmatpush1.bf16.msra.mxu0 0
    %2406 = vmatprep.subr.bf16.mxu0 0
    %2407 = vmatpush1.bf16.msra.mxu0 0
    %2408 = vmatprep.subr.bf16.mxu0 0
    %2409 = vmatpush1.bf16.msra.mxu0 0
    %2410 = vmatprep.subr.bf16.mxu0 0
    %2411 = vmatpush1.bf16.msra.mxu0 0
    %2412 = vmatprep.subr.bf16.mxu0 0
    %2413 = vmatpush1.bf16.msra.mxu0 0
    %2414 = vmatprep.subr.bf16.mxu0 0
    %2415 = vmatpush1.bf16.msra.mxu0 0
    %2416 = vmatprep.mubr.bf16.mxu0 0
    %2417 = vmatmul.mubr.bf16.gmra.mrb[0].mxu0 %v2376
    %v2418 = vpop.f32.mrb[0].mxu0
    %v2419 = vadd.f32 0.0, %v2418
    %v2420 = vpop.f32.mrb[0].mxu0
    %v2421 = vpop.f32.mrb[0].mxu0
    %v2422 = vadd.f32 0.0, %v2421
    %v2423 = vpop.f32.mrb[0].mxu0
    %2424 = vmatprep.mubr.bf16.mxu0 0
    %2425 = vmatmul.mubr.bf16.gmra.mrb[0].mxu0 %v2379
    %v2426 = vpop.f32.mrb[0].mxu0
    %v2427 = vadd.f32 0.0, %v2426
    %v2428 = vpop.f32.mrb[0].mxu0
    %v2429 = vpop.f32.mrb[0].mxu0
    %v2430 = vpop.f32.mrb[0].mxu0
    %2431 = vdwg.mxu0
    %v2433 = vsel %vm234, %v2254, 0
    %v2436 = vsel %vm234, %v2255, 0
    %v2439 = vsel %vm926, %v2260, 0
    %2441 = vmatprep.subr.bf16.mxu0 0
    %2442 = vmatpush1.bf16.msra.mxu0 %v2439
    %2443 = vmatprep.subr.bf16.mxu0 0
    %2444 = vmatpush1.bf16.msra.mxu0 0
    %2445 = vmatprep.subr.bf16.mxu0 0
    %2446 = vmatpush1.bf16.msra.mxu0 0
    %2447 = vmatprep.subr.bf16.mxu0 0
    %2448 = vmatpush1.bf16.msra.mxu0 0
    %2449 = vmatprep.subr.bf16.mxu0 0
    %2450 = vmatpush1.bf16.msra.mxu0 0
    %2451 = vmatprep.subr.bf16.mxu0 0
    %2452 = vmatpush1.bf16.msra.mxu0 0
    %2453 = vmatprep.subr.bf16.mxu0 0
    %2454 = vmatpush1.bf16.msra.mxu0 0
    %2455 = vmatprep.subr.bf16.mxu0 0
    %2456 = vmatpush1.bf16.msra.mxu0 0
    %2457 = vmatprep.subr.bf16.mxu0 0
    %2458 = vmatpush1.bf16.msra.mxu0 0
    %2459 = vmatprep.subr.bf16.mxu0 0
    %2460 = vmatpush1.bf16.msra.mxu0 0
    %2461 = vmatprep.subr.bf16.mxu0 0
    %2462 = vmatpush1.bf16.msra.mxu0 0
    %2463 = vmatprep.subr.bf16.mxu0 0
    %2464 = vmatpush1.bf16.msra.mxu0 0
    %2465 = vmatprep.subr.bf16.mxu0 0
    %2466 = vmatpush1.bf16.msra.mxu0 0
    %2467 = vmatprep.subr.bf16.mxu0 0
    %2468 = vmatpush1.bf16.msra.mxu0 0
    %2469 = vmatprep.subr.bf16.mxu0 0
    %2470 = vmatpush1.bf16.msra.mxu0 0
    %2471 = vmatprep.subr.bf16.mxu0 0
    %2472 = vmatpush1.bf16.msra.mxu0 0
    %2473 = vmatprep.mubr.bf16.mxu0 0
    %2474 = vmatmul.mubr.bf16.gmra.mrb[0].mxu0 %v2433
    %v2475 = vpop.f32.mrb[0].mxu0
    %v2476 = vadd.f32 0.0, %v2475
    %v2477 = vpop.f32.mrb[0].mxu0
    %v2478 = vpop.f32.mrb[0].mxu0
    %v2479 = vadd.f32 0.0, %v2478
    %v2480 = vpop.f32.mrb[0].mxu0
    %2481 = vmatprep.mubr.bf16.mxu0 0
    %2482 = vmatmul.mubr.bf16.gmra.mrb[0].mxu0 %v2436
    %v2483 = vpop.f32.mrb[0].mxu0
    %v2484 = vadd.f32 0.0, %v2483
    %v2485 = vpop.f32.mrb[0].mxu0
    %v2486 = vpop.f32.mrb[0].mxu0
    %v2487 = vpop.f32.mrb[0].mxu0
    %2488 = vdwg.mxu0
    %v2489 = vsel %vm85, %v2305, 0.0
    %v2490 = vsel %vm85, %v2362, 0.0
    %v2491 = vadd.f32 %v2489, %v2490
    %v2492 = vsel %vm85, %v2419, 0.0
    %v2493 = vadd.f32 %v2491, %v2492
    %v2494 = vsel %vm85, %v2476, 0.0
    %v2495 = vadd.f32 %v2493, %v2494
    %v2496 = vsel %vm85, %v2308, 0.0
    %v2497 = vsel %vm85, %v2365, 0.0
    %v2498 = vadd.f32 %v2496, %v2497
    %v2499 = vsel %vm85, %v2422, 0.0
    %v2500 = vadd.f32 %v2498, %v2499
    %v2501 = vsel %vm85, %v2479, 0.0
    %v2502 = vadd.f32 %v2500, %v2501
    %v2503 = vsel %vm92, %v2313, 0.0
    %v2504 = vsel %vm92, %v2370, 0.0
    %v2505 = vadd.f32 %v2503, %v2504
    %v2506 = vsel %vm92, %v2427, 0.0
    %v2507 = vadd.f32 %v2505, %v2506
    %v2508 = vsel %vm92, %v2484, 0.0
    %v2509 = vadd.f32 %v2507, %v2508
    %v2510 = vadd.f32 %v1423, %v2495
    %v2511 = vadd.f32 %v1424, %v2502
    %v2512 = vadd.f32 %v1425, %v2509
    %s2513 = scalar_lea.vmem %s9, 1
    %v2514 = vld [vmem:[%s2513] sm:$0x1]
    %v2515 = vmul.f32 %v2510, %v2510
    %v2516 = vmul.f32 %v2511, %v2511
    %v2517 = vmul.f32 %v2512, %v2512
    %v2518 = vsel %vm85, %v2515, 0.0
    %2519 = vadd.xlane.f32.xlu0 %v2518
    %v2520 = vpop.xlane.xlu0 %2519
    %v2521 = vsel %vm85, %v2516, 0.0
    %2522 = vadd.xlane.f32.xlu0 %v2521
    %v2523 = vpop.xlane.xlu0 %2522
    %v2524 = vsel %vm92, %v2517, 0.0
    %2525 = vadd.xlane.f32.xlu0 %v2524
    %v2526 = vpop.xlane.xlu0 %2525
    %v2527 = vmul.f32 %v2520, %v96
    %v2528 = vmul.f32 %v2523, %v96
    %v2529 = vmul.f32 %v2526, %v96
    %v2530 = vadd.f32 %v2527, 1e-06
    %v2531 = vadd.f32 %v2528, 1e-06
    %v2532 = vadd.f32 %v2529, 1e-06
    %v2533 = vrsqrt.pop %v2530
    %v2534 = vrsqrt.pop %v2531
    %v2535 = vrsqrt.pop %v2532
    %v2536 = vmul.f32 %v2510, %v2533
    %v2537 = vmul.f32 %v2511, %v2534
    %v2538 = vmul.f32 %v2512, %v2535
    %v2540 = vlaneseq
    %v2541 = vshrl.u32 %v2540, 7
    %v2542 = vsub.s32 0, %v2541
    %v2543 = vrot.slane %v2514, %v2542
    %v2545 = vmul.f32 %v2536, %v2543
    %v2546 = vmul.f32 %v2537, %v2543
    %v2547 = vmul.f32 %v2538, %v2543
    %v2548 = vpack.c.bf16 %v2546, %v2545
    %v2549 = vpack.c.bf16 %v2547, %v2547
    %s2550 = scalar_lea.vmem %s10, 16
    %v2551 = vld [vmem:[%s2550] sm:$0xf]
    %v2552 = vld [vmem:[%s2550 + $0x4] sm:$0xf]
    %v2553 = vld [vmem:[%s2550 + $0x8] sm:$0xf]
    %v2554 = vld [vmem:[%s2550 + $0xc] sm:$0xf]
    %v2559 = vunpack.c.l.b16 %v2551
    %v2560 = vunpack.c.l.b16 %v2552
    %v2561 = vunpack.c.l.b16 %v2553
    %v2562 = vunpack.c.l.b16 %v2554
    %v2563 = vpack.c.b16 %v2560, %v2559
    %v2564 = vpack.c.b16 %v2562, %v2561
    %v2568 = vsel %vm85, %v2548, 0
    %v2571 = vsel %vm85, %v2549, 0
    %2573 = vmatprep.subr.bf16.mxu0 0
    %2574 = vmatpush1.bf16.msra.mxu0 %v2563
    %2575 = vmatprep.subr.bf16.mxu0 0
    %2576 = vmatpush1.bf16.msra.mxu0 %v2564
    %2577 = vmatprep.subr.bf16.mxu0 0
    %2578 = vmatpush1.bf16.msra.mxu0 0
    %2579 = vmatprep.subr.bf16.mxu0 0
    %2580 = vmatpush1.bf16.msra.mxu0 0
    %2581 = vmatprep.subr.bf16.mxu0 0
    %2582 = vmatpush1.bf16.msra.mxu0 0
    %2583 = vmatprep.subr.bf16.mxu0 0
    %2584 = vmatpush1.bf16.msra.mxu0 0
    %2585 = vmatprep.subr.bf16.mxu0 0
    %2586 = vmatpush1.bf16.msra.mxu0 0
    %2587 = vmatprep.subr.bf16.mxu0 0
    %2588 = vmatpush1.bf16.msra.mxu0 0
    %2589 = vmatprep.subr.bf16.mxu0 0
    %2590 = vmatpush1.bf16.msra.mxu0 0
    %2591 = vmatprep.subr.bf16.mxu0 0
    %2592 = vmatpush1.bf16.msra.mxu0 0
    %2593 = vmatprep.subr.bf16.mxu0 0
    %2594 = vmatpush1.bf16.msra.mxu0 0
    %2595 = vmatprep.subr.bf16.mxu0 0
    %2596 = vmatpush1.bf16.msra.mxu0 0
    %2597 = vmatprep.subr.bf16.mxu0 0
    %2598 = vmatpush1.bf16.msra.mxu0 0
    %2599 = vmatprep.subr.bf16.mxu0 0
    %2600 = vmatpush1.bf16.msra.mxu0 0
    %2601 = vmatprep.subr.bf16.mxu0 0
    %2602 = vmatpush1.bf16.msra.mxu0 0
    %2603 = vmatprep.subr.bf16.mxu0 0
    %2604 = vmatpush1.bf16.msra.mxu0 0
    %2605 = vmatprep.mubr.bf16.mxu0 0
    %2606 = vmatmul.mubr.bf16.gmra.mrb[0].mxu0 %v2568
    %v2607 = vpop.f32.mrb[0].mxu0
    %v2608 = vadd.f32 0.0, %v2607
    %v2609 = vpop.f32.mrb[0].mxu0
    %v2610 = vpop.f32.mrb[0].mxu0
    %v2611 = vadd.f32 0.0, %v2610
    %v2612 = vpop.f32.mrb[0].mxu0
    %2613 = vmatprep.mubr.bf16.mxu0 0
    %2614 = vmatmul.mubr.bf16.gmra.mrb[0].mxu0 %v2571
    %v2615 = vpop.f32.mrb[0].mxu0
    %v2616 = vadd.f32 0.0, %v2615
    %v2617 = vpop.f32.mrb[0].mxu0
    %v2618 = vpop.f32.mrb[0].mxu0
    %v2619 = vpop.f32.mrb[0].mxu0
    %2620 = vdwg.mxu0
    %v2621 = vxor.u32 %v2608, 2147483648
    %v2622 = vxor.u32 %v2611, 2147483648
    %v2623 = vxor.u32 %v2616, 2147483648
    %v2624 = vmul.f32 %v2621, 1.442695
    %v2625 = vpow.pop %v2624
    %v2626 = vmul.f32 %v2622, 1.442695
    %v2627 = vpow.pop %v2626
    %v2628 = vmul.f32 %v2623, 1.442695
    %v2629 = vpow.pop %v2628
    %v2630 = vadd.f32 %v2625, 1.0
    %v2631 = vadd.f32 %v2627, 1.0
    %v2632 = vadd.f32 %v2629, 1.0
    %v2633 = vrcp.pop %v2630
    %v2634 = vmul.f32 1.0, %v2633
    %v2635 = vrcp.pop %v2631
    %v2636 = vmul.f32 1.0, %v2635
    %v2637 = vrcp.pop %v2632
    %v2638 = vmul.f32 1.0, %v2637
    %v2639 = vmul.f32 %v2608, %v2634
    %v2640 = vmul.f32 %v2611, %v2636
    %v2641 = vmul.f32 %v2616, %v2638
    %2642 = vrot.lane.b32.xlu0 %v2608, 64
    %v2643 = vpop.permute.xlu0 %2642
    %2644 = vrot.lane.b32.xlu0 %v2611, 64
    %v2645 = vpop.permute.xlu0 %2644
    %2646 = vrot.lane.b32.xlu0 %v2616, 64
    %v2647 = vpop.permute.xlu0 %2646
    %v2648 = vmul.f32 %v2639, %v2643
    %v2649 = vmul.f32 %v2640, %v2645
    %v2650 = vmul.f32 %v2641, %v2647
    %v2651 = vpack.c.bf16 %v2649, %v2648
    %v2652 = vpack.c.bf16 %v2650, %v2650
    %s2653 = scalar_lea.vmem %s11, 64
    %v2654 = vld [vmem:[%s2653] sm:$0xf]
    %v2655 = vld [vmem:[%s2653 + $0x4] sm:$0xf]
    %v2656 = vld [vmem:[%s2653 + $0x8] sm:$0xf]
    %v2657 = vld [vmem:[%s2653 + $0xc] sm:$0xf]
    %v2658 = vld [vmem:[%s2653 + $0x10] sm:$0xf]
    %v2659 = vld [vmem:[%s2653 + $0x14] sm:$0xf]
    %v2660 = vld [vmem:[%s2653 + $0x18] sm:$0xf]
    %v2661 = vld [vmem:[%s2653 + $0x1c] sm:$0xf]
    %v2662 = vld [vmem:[%s2653 + $0x20] sm:$0xf]
    %v2663 = vld [vmem:[%s2653 + $0x24] sm:$0xf]
    %v2664 = vld [vmem:[%s2653 + $0x28] sm:$0xf]
    %v2665 = vld [vmem:[%s2653 + $0x2c] sm:$0xf]
    %v2666 = vld [vmem:[%s2653 + $0x30] sm:$0xf]
    %v2667 = vld [vmem:[%s2653 + $0x34] sm:$0xf]
    %v2668 = vld [vmem:[%s2653 + $0x38] sm:$0xf]
    %v2669 = vld [vmem:[%s2653 + $0x3c] sm:$0xf]
    %v2686 = vunpack.c.l.b16 %v2654
    %v2687 = vunpack.c.l.b16 %v2655
    %v2688 = vunpack.c.l.b16 %v2656
    %v2689 = vunpack.c.l.b16 %v2657
    %v2690 = vunpack.c.l.b16 %v2658
    %v2691 = vunpack.c.l.b16 %v2659
    %v2692 = vunpack.c.l.b16 %v2660
    %v2693 = vunpack.c.l.b16 %v2661
    %v2694 = vunpack.c.l.b16 %v2662
    %v2695 = vunpack.c.l.b16 %v2663
    %v2696 = vunpack.c.l.b16 %v2664
    %v2697 = vunpack.c.l.b16 %v2665
    %v2698 = vunpack.c.l.b16 %v2666
    %v2699 = vunpack.c.l.b16 %v2667
    %v2700 = vunpack.c.l.b16 %v2668
    %v2701 = vunpack.c.l.b16 %v2669
    %v2702 = vpack.c.b16 %v2687, %v2686
    %v2703 = vpack.c.b16 %v2689, %v2688
    %v2704 = vpack.c.b16 %v2691, %v2690
    %v2705 = vpack.c.b16 %v2693, %v2692
    %v2706 = vpack.c.b16 %v2695, %v2694
    %v2707 = vpack.c.b16 %v2697, %v2696
    %v2708 = vpack.c.b16 %v2699, %v2698
    %v2709 = vpack.c.b16 %v2701, %v2700
    %2718 = vmatprep.subr.bf16.mxu0 0
    %2719 = vmatpush1.bf16.msra.mxu0 %v2702
    %2720 = vmatprep.subr.bf16.mxu0 0
    %2721 = vmatpush1.bf16.msra.mxu0 %v2703
    %2722 = vmatprep.subr.bf16.mxu0 0
    %2723 = vmatpush1.bf16.msra.mxu0 %v2704
    %2724 = vmatprep.subr.bf16.mxu0 0
    %2725 = vmatpush1.bf16.msra.mxu0 %v2705
    %2726 = vmatprep.subr.bf16.mxu0 0
    %2727 = vmatpush1.bf16.msra.mxu0 %v2706
    %2728 = vmatprep.subr.bf16.mxu0 0
    %2729 = vmatpush1.bf16.msra.mxu0 %v2707
    %2730 = vmatprep.subr.bf16.mxu0 0
    %2731 = vmatpush1.bf16.msra.mxu0 %v2708
    %2732 = vmatprep.subr.bf16.mxu0 0
    %2733 = vmatpush1.bf16.msra.mxu0 %v2709
    %2734 = vmatprep.subr.bf16.mxu0 0
    %2735 = vmatpush1.bf16.msra.mxu0 0
    %2736 = vmatprep.subr.bf16.mxu0 0
    %2737 = vmatpush1.bf16.msra.mxu0 0
    %2738 = vmatprep.subr.bf16.mxu0 0
    %2739 = vmatpush1.bf16.msra.mxu0 0
    %2740 = vmatprep.subr.bf16.mxu0 0
    %2741 = vmatpush1.bf16.msra.mxu0 0
    %2742 = vmatprep.subr.bf16.mxu0 0
    %2743 = vmatpush1.bf16.msra.mxu0 0
    %2744 = vmatprep.subr.bf16.mxu0 0
    %2745 = vmatpush1.bf16.msra.mxu0 0
    %2746 = vmatprep.subr.bf16.mxu0 0
    %2747 = vmatpush1.bf16.msra.mxu0 0
    %2748 = vmatprep.subr.bf16.mxu0 0
    %2749 = vmatpush1.bf16.msra.mxu0 0
    %2750 = vmatprep.mubr.bf16.mxu0 0
    %2751 = vmatmul.mubr.bf16.gmra.mrb[0].mxu0 %v2651
    %v2752 = vpop.f32.mrb[0].mxu0
    %v2753 = vadd.f32 0.0, %v2752
    %v2754 = vpop.f32.mrb[0].mxu0
    %v2755 = vpop.f32.mrb[0].mxu0
    %v2756 = vadd.f32 0.0, %v2755
    %v2757 = vpop.f32.mrb[0].mxu0
    %2758 = vmatprep.mubr.bf16.mxu0 0
    %2759 = vmatmul.mubr.bf16.gmra.mrb[0].mxu0 %v2652
    %v2760 = vpop.f32.mrb[0].mxu0
    %v2761 = vadd.f32 0.0, %v2760
    %v2762 = vpop.f32.mrb[0].mxu0
    %v2763 = vpop.f32.mrb[0].mxu0
    %v2764 = vpop.f32.mrb[0].mxu0
    %2765 = vdwg.mxu0
    %v2766 = vadd.f32 %v2510, %v2753
    %v2767 = vadd.f32 %v2511, %v2756
    %v2768 = vadd.f32 %v2512, %v2761
    %v2769 = vld [vmem:[%s12] sm:$0x1]
    %v2770 = vmul.f32 %v2766, %v2766
    %v2771 = vmul.f32 %v2767, %v2767
    %v2772 = vmul.f32 %v2768, %v2768
    %v2773 = vsel %vm85, %v2770, 0.0
    %2774 = vadd.xlane.f32.xlu0 %v2773
    %v2775 = vpop.xlane.xlu0 %2774
    %v2776 = vsel %vm85, %v2771, 0.0
    %2777 = vadd.xlane.f32.xlu0 %v2776
    %v2778 = vpop.xlane.xlu0 %2777
    %v2779 = vsel %vm92, %v2772, 0.0
    %2780 = vadd.xlane.f32.xlu0 %v2779
    %v2781 = vpop.xlane.xlu0 %2780
    %v2782 = vmul.f32 %v2775, %v96
    %v2783 = vmul.f32 %v2778, %v96
    %v2784 = vmul.f32 %v2781, %v96
    %v2785 = vadd.f32 %v2782, 1e-06
    %v2786 = vadd.f32 %v2783, 1e-06
    %v2787 = vadd.f32 %v2784, 1e-06
    %v2788 = vrsqrt.pop %v2785
    %v2789 = vrsqrt.pop %v2786
    %v2790 = vrsqrt.pop %v2787
    %v2791 = vmul.f32 %v2766, %v2788
    %v2792 = vmul.f32 %v2767, %v2789
    %v2793 = vmul.f32 %v2768, %v2790
    %v2795 = vlaneseq
    %v2796 = vshrl.u32 %v2795, 7
    %v2797 = vsub.s32 0, %v2796
    %v2798 = vrot.slane %v2769, %v2797
    %v2800 = vmul.f32 %v2791, %v2798
    %v2801 = vmul.f32 %v2792, %v2798
    %v2802 = vmul.f32 %v2793, %v2798
    %v2803 = vlaneseq
    %v2804 = vand.u32 %v2803, 127
    %v2805 = vld [vmem:[%s2] sm:$0xf]
    %2806 = vset.pattern.permute.xlu0 0
    %2807 = vperm.xlu0 %2806, %v2805
    %v2808 = vpop.permute.xlu0 %2807
    %vm2809 = vcmp.eq.s32.totalorder %v2804, %v2808
    %v2810 = vsel %vm2809, 1, 0
    %v2811 = vcvt.s32.f32 %v2810
    %v2813 = vsel %vm517, %v2811, 0
    %v2816 = vsel %vm926, %v2802, 0
    %2818 = vmatprep.subr.mxu0 0.0
    %2819 = vmatpush1.msra.mxu0 %v2800
    %2820 = vmatprep.subr.mxu0 0.0
    %2821 = vmatpush1.msra.mxu0 %v2801
    %2822 = vmatprep.subr.mxu0 0.0
    %2823 = vmatpush1.msra.mxu0 %v2816
    %2824 = vmatprep.subr.mxu0 0.0
    %2825 = vmatpush1.msra.mxu0 0.0
    %2826 = vmatprep.subr.mxu0 0.0
    %2827 = vmatpush1.msra.mxu0 0.0
    %2828 = vmatprep.subr.mxu0 0.0
    %2829 = vmatpush1.msra.mxu0 0.0
    %2830 = vmatprep.subr.mxu0 0.0
    %2831 = vmatpush1.msra.mxu0 0.0
    %2832 = vmatprep.subr.mxu0 0.0
    %2833 = vmatpush1.msra.mxu0 0.0
    %2834 = vmatprep.subr.mxu0 0.0
    %2835 = vmatpush1.msra.mxu0 0.0
    %2836 = vmatprep.subr.mxu0 0.0
    %2837 = vmatpush1.msra.mxu0 0.0
    %2838 = vmatprep.subr.mxu0 0.0
    %2839 = vmatpush1.msra.mxu0 0.0
    %2840 = vmatprep.subr.mxu0 0.0
    %2841 = vmatpush1.msra.mxu0 0.0
    %2842 = vmatprep.subr.mxu0 0.0
    %2843 = vmatpush1.msra.mxu0 0.0
    %2844 = vmatprep.subr.mxu0 0.0
    %2845 = vmatpush1.msra.mxu0 0.0
    %2846 = vmatprep.subr.mxu0 0.0
    %2847 = vmatpush1.msra.mxu0 0.0
    %2848 = vmatprep.subr.mxu0 0.0
    %2849 = vmatpush1.msra.mxu0 0.0
    %2850 = vmatprep.subr.mxu0 0.0
    %2851 = vmatpush1.msra.mxu0 0.0
    %2852 = vmatprep.subr.mxu0 0.0
    %2853 = vmatpush1.msra.mxu0 0.0
    %2854 = vmatprep.subr.mxu0 0.0
    %2855 = vmatpush1.msra.mxu0 0.0
    %2856 = vmatprep.subr.mxu0 0.0
    %2857 = vmatpush1.msra.mxu0 0.0
    %2858 = vmatprep.subr.mxu0 0.0
    %2859 = vmatpush1.msra.mxu0 0.0
    %2860 = vmatprep.subr.mxu0 0.0
    %2861 = vmatpush1.msra.mxu0 0.0
    %2862 = vmatprep.subr.mxu0 0.0
    %2863 = vmatpush1.msra.mxu0 0.0
    %2864 = vmatprep.subr.mxu0 0.0
    %2865 = vmatpush1.msra.mxu0 0.0
    %2866 = vmatprep.subr.mxu0 0.0
    %2867 = vmatpush1.msra.mxu0 0.0
    %2868 = vmatprep.subr.mxu0 0.0
    %2869 = vmatpush1.msra.mxu0 0.0
    %2870 = vmatprep.subr.mxu0 0.0
    %2871 = vmatpush1.msra.mxu0 0.0
    %2872 = vmatprep.subr.mxu0 0.0
    %2873 = vmatpush1.msra.mxu0 0.0
    %2874 = vmatprep.subr.mxu0 0.0
    %2875 = vmatpush1.msra.mxu0 0.0
    %2876 = vmatprep.subr.mxu0 0.0
    %2877 = vmatpush1.msra.mxu0 0.0
    %2878 = vmatprep.subr.mxu0 0.0
    %2879 = vmatpush1.msra.mxu0 0.0
    %2880 = vmatprep.subr.mxu0 0.0
    %2881 = vmatpush1.msra.mxu0 0.0
    %2882 = vmatprep.mubr.f32.mxu0 0.0
    %2883 = vmatmul.mubr.f32.gmra.mrb[0].mxu0 %v2813
    %v2884 = vpop.f32.mrb[0].mxu0
    %v2885 = vadd.f32 0.0, %v2884
    %v2886 = vpop.f32.mrb[0].mxu0
    %2887 = vdwg.mxu0
    %v2888 = vld [vmem:[%s4] sm:$0xf]
    %v2889 = vld [vmem:[%s4 + $0x4] sm:$0xf]
    %v2890 = vunpack.c.l.bf16 %v2888
    %v2891 = vunpack.c.l.bf16 %v2889
    %v2893 = vrot.slane %v2890, 6
    %v2896 = vrot.slane %v2891, 4
    %v2898 = vsel %vm670, %v2885, %v2893
    %v2899 = vsel %vm670, %v2893, %v2885
    %v2900 = vsel %vm926, %v2899, %v2896
    %v2901 = vld [vmem:[%s3] sm:$0xff]
    %v2902 = vld [vmem:[%s3 + $0x8] sm:$0xff]
    %v2903 = vld [vmem:[%s3 + $0x10] sm:$0xf]
    %v2904 = vld [vmem:[%s13] sm:$0x1]
    %v2905 = vmul.f32 %v2898, %v2898
    %v2906 = vmul.f32 %v2900, %v2900
    %v2907 = vmul.f32 %v2896, %v2896
    %v2908 = vsel %vm85, %v2905, 0.0
    %2909 = vadd.xlane.f32.xlu0 %v2908
    %v2910 = vpop.xlane.xlu0 %2909
    %v2911 = vsel %vm85, %v2906, 0.0
    %2912 = vadd.xlane.f32.xlu0 %v2911
    %v2913 = vpop.xlane.xlu0 %2912
    %v2914 = vsel %vm92, %v2907, 0.0
    %2915 = vadd.xlane.f32.xlu0 %v2914
    %v2916 = vpop.xlane.xlu0 %2915
    %v2917 = vmul.f32 %v2910, %v96
    %v2918 = vmul.f32 %v2913, %v96
    %v2919 = vmul.f32 %v2916, %v96
    %v2920 = vadd.f32 %v2917, 1e-06
    %v2921 = vadd.f32 %v2918, 1e-06
    %v2922 = vadd.f32 %v2919, 1e-06
    %v2923 = vrsqrt.pop %v2920
    %v2924 = vrsqrt.pop %v2921
    %v2925 = vrsqrt.pop %v2922
    %v2926 = vmul.f32 %v2898, %v2923
    %v2927 = vmul.f32 %v2900, %v2924
    %v2928 = vmul.f32 %v2896, %v2925
    %v2930 = vlaneseq
    %v2931 = vshrl.u32 %v2930, 7
    %v2932 = vsub.s32 0, %v2931
    %v2933 = vrot.slane %v2904, %v2932
    %v2935 = vmul.f32 %v2926, %v2933
    %v2936 = vmul.f32 %v2927, %v2933
    %v2937 = vmul.f32 %v2928, %v2933
    %v2938 = vpack.c.bf16 %v2936, %v2935
    %v2939 = vpack.c.bf16 %v2937, %v2937
    %v2940 = vld [vmem:[%s14] sm:$0xf]
    %v2941 = vld [vmem:[%s14 + $0x4] sm:$0xf]
    %v2942 = vld [vmem:[%s14 + $0x8] sm:$0xf]
    %v2943 = vld [vmem:[%s14 + $0xc] sm:$0xf]
    %v2948 = vunpack.c.l.b16 %v2940
    %v2949 = vunpack.c.l.b16 %v2941
    %v2950 = vunpack.c.l.b16 %v2942
    %v2951 = vunpack.c.l.b16 %v2943
    %v2952 = vpack.c.b16 %v2949, %v2948
    %v2953 = vpack.c.b16 %v2951, %v2950
    %v2957 = vsel %vm85, %v2938, 0
    %v2960 = vsel %vm85, %v2939, 0
    %2962 = vmatprep.subr.bf16.mxu0 0
    %2963 = vmatpush1.bf16.msra.mxu0 %v2952
    %2964 = vmatprep.subr.bf16.mxu0 0
    %2965 = vmatpush1.bf16.msra.mxu0 %v2953
    %2966 = vmatprep.subr.bf16.mxu0 0
    %2967 = vmatpush1.bf16.msra.mxu0 0
    %2968 = vmatprep.subr.bf16.mxu0 0
    %2969 = vmatpush1.bf16.msra.mxu0 0
    %2970 = vmatprep.subr.bf16.mxu0 0
    %2971 = vmatpush1.bf16.msra.mxu0 0
    %2972 = vmatprep.subr.bf16.mxu0 0
    %2973 = vmatpush1.bf16.msra.mxu0 0
    %2974 = vmatprep.subr.bf16.mxu0 0
    %2975 = vmatpush1.bf16.msra.mxu0 0
    %2976 = vmatprep.subr.bf16.mxu0 0
    %2977 = vmatpush1.bf16.msra.mxu0 0
    %2978 = vmatprep.subr.bf16.mxu0 0
    %2979 = vmatpush1.bf16.msra.mxu0 0
    %2980 = vmatprep.subr.bf16.mxu0 0
    %2981 = vmatpush1.bf16.msra.mxu0 0
    %2982 = vmatprep.subr.bf16.mxu0 0
    %2983 = vmatpush1.bf16.msra.mxu0 0
    %2984 = vmatprep.subr.bf16.mxu0 0
    %2985 = vmatpush1.bf16.msra.mxu0 0
    %2986 = vmatprep.subr.bf16.mxu0 0
    %2987 = vmatpush1.bf16.msra.mxu0 0
    %2988 = vmatprep.subr.bf16.mxu0 0
    %2989 = vmatpush1.bf16.msra.mxu0 0
    %2990 = vmatprep.subr.bf16.mxu0 0
    %2991 = vmatpush1.bf16.msra.mxu0 0
    %2992 = vmatprep.subr.bf16.mxu0 0
    %2993 = vmatpush1.bf16.msra.mxu0 0
    %2994 = vmatprep.mubr.bf16.mxu0 0
    %2995 = vmatmul.mubr.bf16.gmra.mrb[0].mxu0 %v2957
    %v2996 = vpop.f32.mrb[0].mxu0
    %v2997 = vadd.f32 0.0, %v2996
    %v2998 = vpop.f32.mrb[0].mxu0
    %v2999 = vpop.f32.mrb[0].mxu0
    %v3000 = vadd.f32 0.0, %v2999
    %v3001 = vpop.f32.mrb[0].mxu0
    %3002 = vmatprep.mubr.bf16.mxu0 0
    %3003 = vmatmul.mubr.bf16.gmra.mrb[0].mxu0 %v2960
    %v3004 = vpop.f32.mrb[0].mxu0
    %v3005 = vadd.f32 0.0, %v3004
    %v3006 = vpop.f32.mrb[0].mxu0
    %v3007 = vpop.f32.mrb[0].mxu0
    %v3008 = vpop.f32.mrb[0].mxu0
    %3009 = vdwg.mxu0
    %3013 = vrot.lane.b32.xlu0 %v2997, 120
    %v3014 = vpop.permute.xlu0 %3013
    %3015 = vrot.lane.b32.xlu0 %v3000, 120
    %v3016 = vpop.permute.xlu0 %3015
    %3017 = vrot.lane.b32.xlu0 %v3005, 120
    %v3018 = vpop.permute.xlu0 %3017
    %3022 = vrot.lane.b32.xlu0 %v2997, 112
    %v3023 = vpop.permute.xlu0 %3022
    %3024 = vrot.lane.b32.xlu0 %v3000, 112
    %v3025 = vpop.permute.xlu0 %3024
    %3026 = vrot.lane.b32.xlu0 %v3005, 112
    %v3027 = vpop.permute.xlu0 %3026
    %3031 = vrot.lane.b32.xlu0 %v2997, 104
    %v3032 = vpop.permute.xlu0 %3031
    %3033 = vrot.lane.b32.xlu0 %v3000, 104
    %v3034 = vpop.permute.xlu0 %3033
    %3035 = vrot.lane.b32.xlu0 %v3005, 104
    %v3036 = vpop.permute.xlu0 %3035
    %v3040 = vpack.c.bf16 %v3000, %v2997
    %v3041 = vpack.c.bf16 %v3005, %v3005
    %v3042 = vpack.c.bf16 %v3016, %v3014
    %v3043 = vpack.c.bf16 %v3018, %v3018
    %v3044 = vpack.c.bf16 %v3025, %v3023
    %v3045 = vpack.c.bf16 %v3027, %v3027
    %v3046 = vpack.c.bf16 %v3034, %v3032
    %v3047 = vpack.c.bf16 %v3036, %v3036
    %3050 = vrot.lane.b32.xlu0 %v3040, 96
    %v3051 = vpop.permute.xlu0 %3050
    %3052 = vrot.lane.b32.xlu0 %v3041, 96
    %v3053 = vpop.permute.xlu0 %3052
    %v3055 = vsel %vm234, %v3040, 0
    %v3058 = vsel %vm234, %v3041, 0
    %v3061 = vsel %vm234, %v3051, 0
    %v3064 = vsel %vm234, %v3053, 0
    %3066 = vmatprep.subr.bf16.mxu0 0
    %3067 = vmatpush1.bf16.xpose.msra.mxu0 %v3061
    %3068 = vmatprep.subr.bf16.mxu0 0
    %3069 = vmatpush1.bf16.xpose.msra.mxu0 %v3064
    %3070 = vmatprep.subr.bf16.mxu0 0
    %3071 = vmatpush1.bf16.xpose.msra.mxu0 0
    %3072 = vmatprep.subr.bf16.mxu0 0
    %3073 = vmatpush1.bf16.xpose.msra.mxu0 0
    %3074 = vmatprep.subr.bf16.mxu0 0
    %3075 = vmatpush1.bf16.xpose.msra.mxu0 0
    %3076 = vmatprep.subr.bf16.mxu0 0
    %3077 = vmatpush1.bf16.xpose.msra.mxu0 0
    %3078 = vmatprep.subr.bf16.mxu0 0
    %3079 = vmatpush1.bf16.xpose.msra.mxu0 0
    %3080 = vmatprep.subr.bf16.mxu0 0
    %3081 = vmatpush1.bf16.xpose.msra.mxu0 0
    %3082 = vmatprep.subr.bf16.mxu0 0
    %3083 = vmatpush1.bf16.xpose.msra.mxu0 0
    %3084 = vmatprep.subr.bf16.mxu0 0
    %3085 = vmatpush1.bf16.xpose.msra.mxu0 0
    %3086 = vmatprep.subr.bf16.mxu0 0
    %3087 = vmatpush1.bf16.xpose.msra.mxu0 0
    %3088 = vmatprep.subr.bf16.mxu0 0
    %3089 = vmatpush1.bf16.xpose.msra.mxu0 0
    %3090 = vmatprep.subr.bf16.mxu0 0
    %3091 = vmatpush1.bf16.xpose.msra.mxu0 0
    %3092 = vmatprep.subr.bf16.mxu0 0
    %3093 = vmatpush1.bf16.xpose.msra.mxu0 0
    %3094 = vmatprep.subr.bf16.mxu0 0
    %3095 = vmatpush1.bf16.xpose.msra.mxu0 0
    %3096 = vmatprep.subr.bf16.mxu0 0
    %3097 = vmatpush1.bf16.xpose.msra.mxu0 0
    %3098 = vmatprep.mubr.bf16.mxu0 0
    %3099 = vmatmul.mubr.bf16.gmra.mrb[0].mxu0 %v3055
    %v3100 = vpop.f32.mrb[0].mxu0
    %v3101 = vadd.f32 0.0, %v3100
    %v3102 = vpop.f32.mrb[0].mxu0
    %v3103 = vpop.f32.mrb[0].mxu0
    %v3104 = vadd.f32 0.0, %v3103
    %v3105 = vpop.f32.mrb[0].mxu0
    %3106 = vmatprep.mubr.bf16.mxu0 0
    %3107 = vmatmul.mubr.bf16.gmra.mrb[0].mxu0 %v3058
    %v3108 = vpop.f32.mrb[0].mxu0
    %v3109 = vadd.f32 0.0, %v3108
    %v3110 = vpop.f32.mrb[0].mxu0
    %v3111 = vpop.f32.mrb[0].mxu0
    %v3112 = vpop.f32.mrb[0].mxu0
    %3113 = vdwg.mxu0
    %3116 = vrot.lane.b32.xlu0 %v3042, 96
    %v3117 = vpop.permute.xlu0 %3116
    %3118 = vrot.lane.b32.xlu0 %v3043, 96
    %v3119 = vpop.permute.xlu0 %3118
    %v3121 = vsel %vm234, %v3042, 0
    %v3124 = vsel %vm234, %v3043, 0
    %v3127 = vsel %vm234, %v3117, 0
    %v3130 = vsel %vm234, %v3119, 0
    %3132 = vmatprep.subr.bf16.mxu0 0
    %3133 = vmatpush1.bf16.xpose.msra.mxu0 %v3127
    %3134 = vmatprep.subr.bf16.mxu0 0
    %3135 = vmatpush1.bf16.xpose.msra.mxu0 %v3130
    %3136 = vmatprep.subr.bf16.mxu0 0
    %3137 = vmatpush1.bf16.xpose.msra.mxu0 0
    %3138 = vmatprep.subr.bf16.mxu0 0
    %3139 = vmatpush1.bf16.xpose.msra.mxu0 0
    %3140 = vmatprep.subr.bf16.mxu0 0
    %3141 = vmatpush1.bf16.xpose.msra.mxu0 0
    %3142 = vmatprep.subr.bf16.mxu0 0
    %3143 = vmatpush1.bf16.xpose.msra.mxu0 0
    %3144 = vmatprep.subr.bf16.mxu0 0
    %3145 = vmatpush1.bf16.xpose.msra.mxu0 0
    %3146 = vmatprep.subr.bf16.mxu0 0
    %3147 = vmatpush1.bf16.xpose.msra.mxu0 0
    %3148 = vmatprep.subr.bf16.mxu0 0
    %3149 = vmatpush1.bf16.xpose.msra.mxu0 0
    %3150 = vmatprep.subr.bf16.mxu0 0
    %3151 = vmatpush1.bf16.xpose.msra.mxu0 0
    %3152 = vmatprep.subr.bf16.mxu0 0
    %3153 = vmatpush1.bf16.xpose.msra.mxu0 0
    %3154 = vmatprep.subr.bf16.mxu0 0
    %3155 = vmatpush1.bf16.xpose.msra.mxu0 0
    %3156 = vmatprep.subr.bf16.mxu0 0
    %3157 = vmatpush1.bf16.xpose.msra.mxu0 0
    %3158 = vmatprep.subr.bf16.mxu0 0
    %3159 = vmatpush1.bf16.xpose.msra.mxu0 0
    %3160 = vmatprep.subr.bf16.mxu0 0
    %3161 = vmatpush1.bf16.xpose.msra.mxu0 0
    %3162 = vmatprep.subr.bf16.mxu0 0
    %3163 = vmatpush1.bf16.xpose.msra.mxu0 0
    %3164 = vmatprep.mubr.bf16.mxu0 0
    %3165 = vmatmul.mubr.bf16.gmra.mrb[0].mxu0 %v3121
    %v3166 = vpop.f32.mrb[0].mxu0
    %v3167 = vadd.f32 0.0, %v3166
    %v3168 = vpop.f32.mrb[0].mxu0
    %v3169 = vpop.f32.mrb[0].mxu0
    %v3170 = vadd.f32 0.0, %v3169
    %v3171 = vpop.f32.mrb[0].mxu0
    %3172 = vmatprep.mubr.bf16.mxu0 0
    %3173 = vmatmul.mubr.bf16.gmra.mrb[0].mxu0 %v3124
    %v3174 = vpop.f32.mrb[0].mxu0
    %v3175 = vadd.f32 0.0, %v3174
    %v3176 = vpop.f32.mrb[0].mxu0
    %v3177 = vpop.f32.mrb[0].mxu0
    %v3178 = vpop.f32.mrb[0].mxu0
    %3179 = vdwg.mxu0
    %3182 = vrot.lane.b32.xlu0 %v3044, 96
    %v3183 = vpop.permute.xlu0 %3182
    %3184 = vrot.lane.b32.xlu0 %v3045, 96
    %v3185 = vpop.permute.xlu0 %3184
    %v3187 = vsel %vm234, %v3044, 0
    %v3190 = vsel %vm234, %v3045, 0
    %v3193 = vsel %vm234, %v3183, 0
    %v3196 = vsel %vm234, %v3185, 0
    %3198 = vmatprep.subr.bf16.mxu0 0
    %3199 = vmatpush1.bf16.xpose.msra.mxu0 %v3193
    %3200 = vmatprep.subr.bf16.mxu0 0
    %3201 = vmatpush1.bf16.xpose.msra.mxu0 %v3196
    %3202 = vmatprep.subr.bf16.mxu0 0
    %3203 = vmatpush1.bf16.xpose.msra.mxu0 0
    %3204 = vmatprep.subr.bf16.mxu0 0
    %3205 = vmatpush1.bf16.xpose.msra.mxu0 0
    %3206 = vmatprep.subr.bf16.mxu0 0
    %3207 = vmatpush1.bf16.xpose.msra.mxu0 0
    %3208 = vmatprep.subr.bf16.mxu0 0
    %3209 = vmatpush1.bf16.xpose.msra.mxu0 0
    %3210 = vmatprep.subr.bf16.mxu0 0
    %3211 = vmatpush1.bf16.xpose.msra.mxu0 0
    %3212 = vmatprep.subr.bf16.mxu0 0
    %3213 = vmatpush1.bf16.xpose.msra.mxu0 0
    %3214 = vmatprep.subr.bf16.mxu0 0
    %3215 = vmatpush1.bf16.xpose.msra.mxu0 0
    %3216 = vmatprep.subr.bf16.mxu0 0
    %3217 = vmatpush1.bf16.xpose.msra.mxu0 0
    %3218 = vmatprep.subr.bf16.mxu0 0
    %3219 = vmatpush1.bf16.xpose.msra.mxu0 0
    %3220 = vmatprep.subr.bf16.mxu0 0
    %3221 = vmatpush1.bf16.xpose.msra.mxu0 0
    %3222 = vmatprep.subr.bf16.mxu0 0
    %3223 = vmatpush1.bf16.xpose.msra.mxu0 0
    %3224 = vmatprep.subr.bf16.mxu0 0
    %3225 = vmatpush1.bf16.xpose.msra.mxu0 0
    %3226 = vmatprep.subr.bf16.mxu0 0
    %3227 = vmatpush1.bf16.xpose.msra.mxu0 0
    %3228 = vmatprep.subr.bf16.mxu0 0
    %3229 = vmatpush1.bf16.xpose.msra.mxu0 0
    %3230 = vmatprep.mubr.bf16.mxu0 0
    %3231 = vmatmul.mubr.bf16.gmra.mrb[0].mxu0 %v3187
    %v3232 = vpop.f32.mrb[0].mxu0
    %v3233 = vadd.f32 0.0, %v3232
    %v3234 = vpop.f32.mrb[0].mxu0
    %v3235 = vpop.f32.mrb[0].mxu0
    %v3236 = vadd.f32 0.0, %v3235
    %v3237 = vpop.f32.mrb[0].mxu0
    %3238 = vmatprep.mubr.bf16.mxu0 0
    %3239 = vmatmul.mubr.bf16.gmra.mrb[0].mxu0 %v3190
    %v3240 = vpop.f32.mrb[0].mxu0
    %v3241 = vadd.f32 0.0, %v3240
    %v3242 = vpop.f32.mrb[0].mxu0
    %v3243 = vpop.f32.mrb[0].mxu0
    %v3244 = vpop.f32.mrb[0].mxu0
    %3245 = vdwg.mxu0
    %3248 = vrot.lane.b32.xlu0 %v3046, 96
    %v3249 = vpop.permute.xlu0 %3248
    %3250 = vrot.lane.b32.xlu0 %v3047, 96
    %v3251 = vpop.permute.xlu0 %3250
    %v3253 = vsel %vm234, %v3046, 0
    %v3256 = vsel %vm234, %v3047, 0
    %v3259 = vsel %vm234, %v3249, 0
    %v3262 = vsel %vm234, %v3251, 0
    %3264 = vmatprep.subr.bf16.mxu0 0
    %3265 = vmatpush1.bf16.xpose.msra.mxu0 %v3259
    %3266 = vmatprep.subr.bf16.mxu0 0
    %3267 = vmatpush1.bf16.xpose.msra.mxu0 %v3262
    %3268 = vmatprep.subr.bf16.mxu0 0
    %3269 = vmatpush1.bf16.xpose.msra.mxu0 0
    %3270 = vmatprep.subr.bf16.mxu0 0
    %3271 = vmatpush1.bf16.xpose.msra.mxu0 0
    %3272 = vmatprep.subr.bf16.mxu0 0
    %3273 = vmatpush1.bf16.xpose.msra.mxu0 0
    %3274 = vmatprep.subr.bf16.mxu0 0
    %3275 = vmatpush1.bf16.xpose.msra.mxu0 0
    %3276 = vmatprep.subr.bf16.mxu0 0
    %3277 = vmatpush1.bf16.xpose.msra.mxu0 0
    %3278 = vmatprep.subr.bf16.mxu0 0
    %3279 = vmatpush1.bf16.xpose.msra.mxu0 0
    %3280 = vmatprep.subr.bf16.mxu0 0
    %3281 = vmatpush1.bf16.xpose.msra.mxu0 0
    %3282 = vmatprep.subr.bf16.mxu0 0
    %3283 = vmatpush1.bf16.xpose.msra.mxu0 0
    %3284 = vmatprep.subr.bf16.mxu0 0
    %3285 = vmatpush1.bf16.xpose.msra.mxu0 0
    %3286 = vmatprep.subr.bf16.mxu0 0
    %3287 = vmatpush1.bf16.xpose.msra.mxu0 0
    %3288 = vmatprep.subr.bf16.mxu0 0
    %3289 = vmatpush1.bf16.xpose.msra.mxu0 0
    %3290 = vmatprep.subr.bf16.mxu0 0
    %3291 = vmatpush1.bf16.xpose.msra.mxu0 0
    %3292 = vmatprep.subr.bf16.mxu0 0
    %3293 = vmatpush1.bf16.xpose.msra.mxu0 0
    %3294 = vmatprep.subr.bf16.mxu0 0
    %3295 = vmatpush1.bf16.xpose.msra.mxu0 0
    %3296 = vmatprep.mubr.bf16.mxu0 0
    %3297 = vmatmul.mubr.bf16.gmra.mrb[0].mxu0 %v3253
    %v3298 = vpop.f32.mrb[0].mxu0
    %v3299 = vadd.f32 0.0, %v3298
    %v3300 = vpop.f32.mrb[0].mxu0
    %v3301 = vpop.f32.mrb[0].mxu0
    %v3302 = vadd.f32 0.0, %v3301
    %v3303 = vpop.f32.mrb[0].mxu0
    %3304 = vmatprep.mubr.bf16.mxu0 0
    %3305 = vmatmul.mubr.bf16.gmra.mrb[0].mxu0 %v3256
    %v3306 = vpop.f32.mrb[0].mxu0
    %v3307 = vadd.f32 0.0, %v3306
    %v3308 = vpop.f32.mrb[0].mxu0
    %v3309 = vpop.f32.mrb[0].mxu0
    %v3310 = vpop.f32.mrb[0].mxu0
    %3311 = vdwg.mxu0
    %v3312 = vmul.f32 %v3101, 0.35355338
    %v3313 = vmul.f32 %v3104, 0.35355338
    %v3314 = vmul.f32 %v3109, 0.35355338
    %v3315 = vmul.f32 %v3167, 0.35355338
    %v3316 = vmul.f32 %v3170, 0.35355338
    %v3317 = vmul.f32 %v3175, 0.35355338
    %v3318 = vmul.f32 %v3233, 0.35355338
    %v3319 = vmul.f32 %v3236, 0.35355338
    %v3320 = vmul.f32 %v3241, 0.35355338
    %v3321 = vmul.f32 %v3299, 0.35355338
    %v3322 = vmul.f32 %v3302, 0.35355338
    %v3323 = vmul.f32 %v3307, 0.35355338
    %v3324 = vadd.f32 %v3312, %v2901
    %v3325 = vadd.f32 %v3313, %v2902
    %v3326 = vadd.f32 %v3314, %v2903
    %v3327 = vadd.f32 %v3315, %v2901
    %v3328 = vadd.f32 %v3316, %v2902
    %v3329 = vadd.f32 %v3317, %v2903
    %v3330 = vadd.f32 %v3318, %v2901
    %v3331 = vadd.f32 %v3319, %v2902
    %v3332 = vadd.f32 %v3320, %v2903
    %v3333 = vadd.f32 %v3321, %v2901
    %v3334 = vadd.f32 %v3322, %v2902
    %v3335 = vadd.f32 %v3323, %v2903
    %v3336 = vsel %vm517, %v3324, -inf
    %3337 = vmax.xlane.f32.xlu0 %v3336
    %v3338 = vpop.xlane.xlu0 %3337
    %v3339 = vsel %vm517, %v3325, -inf
    %3340 = vmax.xlane.f32.xlu0 %v3339
    %v3341 = vpop.xlane.xlu0 %3340
    %v3342 = vsel %vm524, %v3326, -inf
    %3343 = vmax.xlane.f32.xlu0 %v3342
    %v3344 = vpop.xlane.xlu0 %3343
    %v3345 = vsel %vm517, %v3327, -inf
    %3346 = vmax.xlane.f32.xlu0 %v3345
    %v3347 = vpop.xlane.xlu0 %3346
    %v3348 = vsel %vm517, %v3328, -inf
    %3349 = vmax.xlane.f32.xlu0 %v3348
    %v3350 = vpop.xlane.xlu0 %3349
    %v3351 = vsel %vm524, %v3329, -inf
    %3352 = vmax.xlane.f32.xlu0 %v3351
    %v3353 = vpop.xlane.xlu0 %3352
    %v3354 = vsel %vm517, %v3330, -inf
    %3355 = vmax.xlane.f32.xlu0 %v3354
    %v3356 = vpop.xlane.xlu0 %3355
    %v3357 = vsel %vm517, %v3331, -inf
    %3358 = vmax.xlane.f32.xlu0 %v3357
    %v3359 = vpop.xlane.xlu0 %3358
    %v3360 = vsel %vm524, %v3332, -inf
    %3361 = vmax.xlane.f32.xlu0 %v3360
    %v3362 = vpop.xlane.xlu0 %3361
    %v3363 = vsel %vm517, %v3333, -inf
    %3364 = vmax.xlane.f32.xlu0 %v3363
    %v3365 = vpop.xlane.xlu0 %3364
    %v3366 = vsel %vm517, %v3334, -inf
    %3367 = vmax.xlane.f32.xlu0 %v3366
    %v3368 = vpop.xlane.xlu0 %3367
    %v3369 = vsel %vm524, %v3335, -inf
    %3370 = vmax.xlane.f32.xlu0 %v3369
    %v3371 = vpop.xlane.xlu0 %3370
    %v3372 = vsub.f32 %v3324, %v3338
    %v3373 = vsub.f32 %v3325, %v3341
    %v3374 = vsub.f32 %v3326, %v3344
    %v3375 = vsub.f32 %v3327, %v3347
    %v3376 = vsub.f32 %v3328, %v3350
    %v3377 = vsub.f32 %v3329, %v3353
    %v3378 = vsub.f32 %v3330, %v3356
    %v3379 = vsub.f32 %v3331, %v3359
    %v3380 = vsub.f32 %v3332, %v3362
    %v3381 = vsub.f32 %v3333, %v3365
    %v3382 = vsub.f32 %v3334, %v3368
    %v3383 = vsub.f32 %v3335, %v3371
    %v3384 = vmul.f32 %v3372, 1.442695
    %v3385 = vpow.pop %v3384
    %v3386 = vmul.f32 %v3373, 1.442695
    %v3387 = vpow.pop %v3386
    %v3388 = vmul.f32 %v3374, 1.442695
    %v3389 = vpow.pop %v3388
    %v3390 = vmul.f32 %v3375, 1.442695
    %v3391 = vpow.pop %v3390
    %v3392 = vmul.f32 %v3376, 1.442695
    %v3393 = vpow.pop %v3392
    %v3394 = vmul.f32 %v3377, 1.442695
    %v3395 = vpow.pop %v3394
    %v3396 = vmul.f32 %v3378, 1.442695
    %v3397 = vpow.pop %v3396
    %v3398 = vmul.f32 %v3379, 1.442695
    %v3399 = vpow.pop %v3398
    %v3400 = vmul.f32 %v3380, 1.442695
    %v3401 = vpow.pop %v3400
    %v3402 = vmul.f32 %v3381, 1.442695
    %v3403 = vpow.pop %v3402
    %v3404 = vmul.f32 %v3382, 1.442695
    %v3405 = vpow.pop %v3404
    %v3406 = vmul.f32 %v3383, 1.442695
    %v3407 = vpow.pop %v3406
    %v3408 = vsel %vm517, %v3385, 0.0
    %3409 = vadd.xlane.f32.xlu0 %v3408
    %v3410 = vpop.xlane.xlu0 %3409
    %v3411 = vsel %vm517, %v3387, 0.0
    %3412 = vadd.xlane.f32.xlu0 %v3411
    %v3413 = vpop.xlane.xlu0 %3412
    %v3414 = vsel %vm524, %v3389, 0.0
    %3415 = vadd.xlane.f32.xlu0 %v3414
    %v3416 = vpop.xlane.xlu0 %3415
    %v3417 = vsel %vm517, %v3391, 0.0
    %3418 = vadd.xlane.f32.xlu0 %v3417
    %v3419 = vpop.xlane.xlu0 %3418
    %v3420 = vsel %vm517, %v3393, 0.0
    %3421 = vadd.xlane.f32.xlu0 %v3420
    %v3422 = vpop.xlane.xlu0 %3421
    %v3423 = vsel %vm524, %v3395, 0.0
    %3424 = vadd.xlane.f32.xlu0 %v3423
    %v3425 = vpop.xlane.xlu0 %3424
    %v3426 = vsel %vm517, %v3397, 0.0
    %3427 = vadd.xlane.f32.xlu0 %v3426
    %v3428 = vpop.xlane.xlu0 %3427
    %v3429 = vsel %vm517, %v3399, 0.0
    %3430 = vadd.xlane.f32.xlu0 %v3429
    %v3431 = vpop.xlane.xlu0 %3430
    %v3432 = vsel %vm524, %v3401, 0.0
    %3433 = vadd.xlane.f32.xlu0 %v3432
    %v3434 = vpop.xlane.xlu0 %3433
    %v3435 = vsel %vm517, %v3403, 0.0
    %3436 = vadd.xlane.f32.xlu0 %v3435
    %v3437 = vpop.xlane.xlu0 %3436
    %v3438 = vsel %vm517, %v3405, 0.0
    %3439 = vadd.xlane.f32.xlu0 %v3438
    %v3440 = vpop.xlane.xlu0 %3439
    %v3441 = vsel %vm524, %v3407, 0.0
    %3442 = vadd.xlane.f32.xlu0 %v3441
    %v3443 = vpop.xlane.xlu0 %3442
    %v3444 = vrcp.pop %v3410
    %v3445 = vrcp.pop %v3413
    %v3446 = vrcp.pop %v3416
    %v3447 = vrcp.pop %v3419
    %v3448 = vrcp.pop %v3422
    %v3449 = vrcp.pop %v3425
    %v3450 = vrcp.pop %v3428
    %v3451 = vrcp.pop %v3431
    %v3452 = vrcp.pop %v3434
    %v3453 = vrcp.pop %v3437
    %v3454 = vrcp.pop %v3440
    %v3455 = vrcp.pop %v3443
    %v3456 = vmul.f32 %v3385, %v3444
    %v3457 = vmul.f32 %v3387, %v3445
    %v3458 = vmul.f32 %v3389, %v3446
    %v3459 = vmul.f32 %v3391, %v3447
    %v3460 = vmul.f32 %v3393, %v3448
    %v3461 = vmul.f32 %v3395, %v3449
    %v3462 = vmul.f32 %v3397, %v3450
    %v3463 = vmul.f32 %v3399, %v3451
    %v3464 = vmul.f32 %v3401, %v3452
    %v3465 = vmul.f32 %v3403, %v3453
    %v3466 = vmul.f32 %v3405, %v3454
    %v3467 = vmul.f32 %v3407, %v3455
    %v3468 = vpack.c.bf16 %v3457, %v3456
    %v3469 = vpack.c.bf16 %v3458, %v3458
    %v3470 = vpack.c.bf16 %v3460, %v3459
    %v3471 = vpack.c.bf16 %v3461, %v3461
    %v3472 = vpack.c.bf16 %v3463, %v3462
    %v3473 = vpack.c.bf16 %v3464, %v3464
    %v3474 = vpack.c.bf16 %v3466, %v3465
    %v3475 = vpack.c.bf16 %v3467, %v3467
    %3476 = vrot.lane.b32.xlu0 %v3040, 64
    %v3477 = vpop.permute.xlu0 %3476
    %3478 = vrot.lane.b32.xlu0 %v3041, 64
    %v3479 = vpop.permute.xlu0 %3478
    %v3482 = vsel %vm517, %v3468, 0
    %v3485 = vsel %vm517, %v3469, 0
    %v3488 = vsel %vm670, %v3479, 0
    %3490 = vmatprep.subr.bf16.mxu0 0
    %3491 = vmatpush1.bf16.msra.mxu0 %v3477
    %3492 = vmatprep.subr.bf16.mxu0 0
    %3493 = vmatpush1.bf16.msra.mxu0 %v3488
    %3494 = vmatprep.subr.bf16.mxu0 0
    %3495 = vmatpush1.bf16.msra.mxu0 0
    %3496 = vmatprep.subr.bf16.mxu0 0
    %3497 = vmatpush1.bf16.msra.mxu0 0
    %3498 = vmatprep.subr.bf16.mxu0 0
    %3499 = vmatpush1.bf16.msra.mxu0 0
    %3500 = vmatprep.subr.bf16.mxu0 0
    %3501 = vmatpush1.bf16.msra.mxu0 0
    %3502 = vmatprep.subr.bf16.mxu0 0
    %3503 = vmatpush1.bf16.msra.mxu0 0
    %3504 = vmatprep.subr.bf16.mxu0 0
    %3505 = vmatpush1.bf16.msra.mxu0 0
    %3506 = vmatprep.subr.bf16.mxu0 0
    %3507 = vmatpush1.bf16.msra.mxu0 0
    %3508 = vmatprep.subr.bf16.mxu0 0
    %3509 = vmatpush1.bf16.msra.mxu0 0
    %3510 = vmatprep.subr.bf16.mxu0 0
    %3511 = vmatpush1.bf16.msra.mxu0 0
    %3512 = vmatprep.subr.bf16.mxu0 0
    %3513 = vmatpush1.bf16.msra.mxu0 0
    %3514 = vmatprep.subr.bf16.mxu0 0
    %3515 = vmatpush1.bf16.msra.mxu0 0
    %3516 = vmatprep.subr.bf16.mxu0 0
    %3517 = vmatpush1.bf16.msra.mxu0 0
    %3518 = vmatprep.subr.bf16.mxu0 0
    %3519 = vmatpush1.bf16.msra.mxu0 0
    %3520 = vmatprep.subr.bf16.mxu0 0
    %3521 = vmatpush1.bf16.msra.mxu0 0
    %3522 = vmatprep.mubr.bf16.mxu0 0
    %3523 = vmatmul.mubr.bf16.gmra.mrb[0].mxu0 %v3482
    %v3524 = vpop.f32.mrb[0].mxu0
    %v3525 = vadd.f32 0.0, %v3524
    %v3526 = vpop.f32.mrb[0].mxu0
    %v3527 = vpop.f32.mrb[0].mxu0
    %v3528 = vadd.f32 0.0, %v3527
    %v3529 = vpop.f32.mrb[0].mxu0
    %3530 = vmatprep.mubr.bf16.mxu0 0
    %3531 = vmatmul.mubr.bf16.gmra.mrb[0].mxu0 %v3485
    %v3532 = vpop.f32.mrb[0].mxu0
    %v3533 = vadd.f32 0.0, %v3532
    %v3534 = vpop.f32.mrb[0].mxu0
    %v3535 = vpop.f32.mrb[0].mxu0
    %v3536 = vpop.f32.mrb[0].mxu0
    %3537 = vdwg.mxu0
    %3538 = vrot.lane.b32.xlu0 %v3042, 64
    %v3539 = vpop.permute.xlu0 %3538
    %3540 = vrot.lane.b32.xlu0 %v3043, 64
    %v3541 = vpop.permute.xlu0 %3540
    %v3544 = vsel %vm517, %v3470, 0
    %v3547 = vsel %vm517, %v3471, 0
    %v3550 = vsel %vm670, %v3541, 0
    %3552 = vmatprep.subr.bf16.mxu0 0
    %3553 = vmatpush1.bf16.msra.mxu0 %v3539
    %3554 = vmatprep.subr.bf16.mxu0 0
    %3555 = vmatpush1.bf16.msra.mxu0 %v3550
    %3556 = vmatprep.subr.bf16.mxu0 0
    %3557 = vmatpush1.bf16.msra.mxu0 0
    %3558 = vmatprep.subr.bf16.mxu0 0
    %3559 = vmatpush1.bf16.msra.mxu0 0
    %3560 = vmatprep.subr.bf16.mxu0 0
    %3561 = vmatpush1.bf16.msra.mxu0 0
    %3562 = vmatprep.subr.bf16.mxu0 0
    %3563 = vmatpush1.bf16.msra.mxu0 0
    %3564 = vmatprep.subr.bf16.mxu0 0
    %3565 = vmatpush1.bf16.msra.mxu0 0
    %3566 = vmatprep.subr.bf16.mxu0 0
    %3567 = vmatpush1.bf16.msra.mxu0 0
    %3568 = vmatprep.subr.bf16.mxu0 0
    %3569 = vmatpush1.bf16.msra.mxu0 0
    %3570 = vmatprep.subr.bf16.mxu0 0
    %3571 = vmatpush1.bf16.msra.mxu0 0
    %3572 = vmatprep.subr.bf16.mxu0 0
    %3573 = vmatpush1.bf16.msra.mxu0 0
    %3574 = vmatprep.subr.bf16.mxu0 0
    %3575 = vmatpush1.bf16.msra.mxu0 0
    %3576 = vmatprep.subr.bf16.mxu0 0
    %3577 = vmatpush1.bf16.msra.mxu0 0
    %3578 = vmatprep.subr.bf16.mxu0 0
    %3579 = vmatpush1.bf16.msra.mxu0 0
    %3580 = vmatprep.subr.bf16.mxu0 0
    %3581 = vmatpush1.bf16.msra.mxu0 0
    %3582 = vmatprep.subr.bf16.mxu0 0
    %3583 = vmatpush1.bf16.msra.mxu0 0
    %3584 = vmatprep.mubr.bf16.mxu0 0
    %3585 = vmatmul.mubr.bf16.gmra.mrb[0].mxu0 %v3544
    %v3586 = vpop.f32.mrb[0].mxu0
    %v3587 = vadd.f32 0.0, %v3586
    %v3588 = vpop.f32.mrb[0].mxu0
    %v3589 = vpop.f32.mrb[0].mxu0
    %v3590 = vadd.f32 0.0, %v3589
    %v3591 = vpop.f32.mrb[0].mxu0
    %3592 = vmatprep.mubr.bf16.mxu0 0
    %3593 = vmatmul.mubr.bf16.gmra.mrb[0].mxu0 %v3547
    %v3594 = vpop.f32.mrb[0].mxu0
    %v3595 = vadd.f32 0.0, %v3594
    %v3596 = vpop.f32.mrb[0].mxu0
    %v3597 = vpop.f32.mrb[0].mxu0
    %v3598 = vpop.f32.mrb[0].mxu0
    %3599 = vdwg.mxu0
    %3600 = vrot.lane.b32.xlu0 %v3044, 64
    %v3601 = vpop.permute.xlu0 %3600
    %3602 = vrot.lane.b32.xlu0 %v3045, 64
    %v3603 = vpop.permute.xlu0 %3602
    %v3606 = vsel %vm517, %v3472, 0
    %v3609 = vsel %vm517, %v3473, 0
    %v3612 = vsel %vm670, %v3603, 0
    %3614 = vmatprep.subr.bf16.mxu0 0
    %3615 = vmatpush1.bf16.msra.mxu0 %v3601
    %3616 = vmatprep.subr.bf16.mxu0 0
    %3617 = vmatpush1.bf16.msra.mxu0 %v3612
    %3618 = vmatprep.subr.bf16.mxu0 0
    %3619 = vmatpush1.bf16.msra.mxu0 0
    %3620 = vmatprep.subr.bf16.mxu0 0
    %3621 = vmatpush1.bf16.msra.mxu0 0
    %3622 = vmatprep.subr.bf16.mxu0 0
    %3623 = vmatpush1.bf16.msra.mxu0 0
    %3624 = vmatprep.subr.bf16.mxu0 0
    %3625 = vmatpush1.bf16.msra.mxu0 0
    %3626 = vmatprep.subr.bf16.mxu0 0
    %3627 = vmatpush1.bf16.msra.mxu0 0
    %3628 = vmatprep.subr.bf16.mxu0 0
    %3629 = vmatpush1.bf16.msra.mxu0 0
    %3630 = vmatprep.subr.bf16.mxu0 0
    %3631 = vmatpush1.bf16.msra.mxu0 0
    %3632 = vmatprep.subr.bf16.mxu0 0
    %3633 = vmatpush1.bf16.msra.mxu0 0
    %3634 = vmatprep.subr.bf16.mxu0 0
    %3635 = vmatpush1.bf16.msra.mxu0 0
    %3636 = vmatprep.subr.bf16.mxu0 0
    %3637 = vmatpush1.bf16.msra.mxu0 0
    %3638 = vmatprep.subr.bf16.mxu0 0
    %3639 = vmatpush1.bf16.msra.mxu0 0
    %3640 = vmatprep.subr.bf16.mxu0 0
    %3641 = vmatpush1.bf16.msra.mxu0 0
    %3642 = vmatprep.subr.bf16.mxu0 0
    %3643 = vmatpush1.bf16.msra.mxu0 0
    %3644 = vmatprep.subr.bf16.mxu0 0
    %3645 = vmatpush1.bf16.msra.mxu0 0
    %3646 = vmatprep.mubr.bf16.mxu0 0
    %3647 = vmatmul.mubr.bf16.gmra.mrb[0].mxu0 %v3606
    %v3648 = vpop.f32.mrb[0].mxu0
    %v3649 = vadd.f32 0.0, %v3648
    %v3650 = vpop.f32.mrb[0].mxu0
    %v3651 = vpop.f32.mrb[0].mxu0
    %v3652 = vadd.f32 0.0, %v3651
    %v3653 = vpop.f32.mrb[0].mxu0
    %3654 = vmatprep.mubr.bf16.mxu0 0
    %3655 = vmatmul.mubr.bf16.gmra.mrb[0].mxu0 %v3609
    %v3656 = vpop.f32.mrb[0].mxu0
    %v3657 = vadd.f32 0.0, %v3656
    %v3658 = vpop.f32.mrb[0].mxu0
    %v3659 = vpop.f32.mrb[0].mxu0
    %v3660 = vpop.f32.mrb[0].mxu0
    %3661 = vdwg.mxu0
    %3662 = vrot.lane.b32.xlu0 %v3046, 64
    %v3663 = vpop.permute.xlu0 %3662
    %3664 = vrot.lane.b32.xlu0 %v3047, 64
    %v3665 = vpop.permute.xlu0 %3664
    %v3668 = vsel %vm517, %v3474, 0
    %v3671 = vsel %vm517, %v3475, 0
    %v3674 = vsel %vm670, %v3665, 0
    %3676 = vmatprep.subr.bf16.mxu0 0
    %3677 = vmatpush1.bf16.msra.mxu0 %v3663
    %3678 = vmatprep.subr.bf16.mxu0 0
    %3679 = vmatpush1.bf16.msra.mxu0 %v3674
    %3680 = vmatprep.subr.bf16.mxu0 0
    %3681 = vmatpush1.bf16.msra.mxu0 0
    %3682 = vmatprep.subr.bf16.mxu0 0
    %3683 = vmatpush1.bf16.msra.mxu0 0
    %3684 = vmatprep.subr.bf16.mxu0 0
    %3685 = vmatpush1.bf16.msra.mxu0 0
    %3686 = vmatprep.subr.bf16.mxu0 0
    %3687 = vmatpush1.bf16.msra.mxu0 0
    %3688 = vmatprep.subr.bf16.mxu0 0
    %3689 = vmatpush1.bf16.msra.mxu0 0
    %3690 = vmatprep.subr.bf16.mxu0 0
    %3691 = vmatpush1.bf16.msra.mxu0 0
    %3692 = vmatprep.subr.bf16.mxu0 0
    %3693 = vmatpush1.bf16.msra.mxu0 0
    %3694 = vmatprep.subr.bf16.mxu0 0
    %3695 = vmatpush1.bf16.msra.mxu0 0
    %3696 = vmatprep.subr.bf16.mxu0 0
    %3697 = vmatpush1.bf16.msra.mxu0 0
    %3698 = vmatprep.subr.bf16.mxu0 0
    %3699 = vmatpush1.bf16.msra.mxu0 0
    %3700 = vmatprep.subr.bf16.mxu0 0
    %3701 = vmatpush1.bf16.msra.mxu0 0
    %3702 = vmatprep.subr.bf16.mxu0 0
    %3703 = vmatpush1.bf16.msra.mxu0 0
    %3704 = vmatprep.subr.bf16.mxu0 0
    %3705 = vmatpush1.bf16.msra.mxu0 0
    %3706 = vmatprep.subr.bf16.mxu0 0
    %3707 = vmatpush1.bf16.msra.mxu0 0
    %3708 = vmatprep.mubr.bf16.mxu0 0
    %3709 = vmatmul.mubr.bf16.gmra.mrb[0].mxu0 %v3668
    %v3710 = vpop.f32.mrb[0].mxu0
    %v3711 = vadd.f32 0.0, %v3710
    %v3712 = vpop.f32.mrb[0].mxu0
    %v3713 = vpop.f32.mrb[0].mxu0
    %v3714 = vadd.f32 0.0, %v3713
    %v3715 = vpop.f32.mrb[0].mxu0
    %3716 = vmatprep.mubr.bf16.mxu0 0
    %3717 = vmatmul.mubr.bf16.gmra.mrb[0].mxu0 %v3671
    %v3718 = vpop.f32.mrb[0].mxu0
    %v3719 = vadd.f32 0.0, %v3718
    %v3720 = vpop.f32.mrb[0].mxu0
    %v3721 = vpop.f32.mrb[0].mxu0
    %v3722 = vpop.f32.mrb[0].mxu0
    %3723 = vdwg.mxu0
    %v3724 = vpack.c.bf16 %v3528, %v3525
    %v3725 = vpack.c.bf16 %v3533, %v3533
    %v3726 = vpack.c.bf16 %v3590, %v3587
    %v3727 = vpack.c.bf16 %v3595, %v3595
    %v3728 = vpack.c.bf16 %v3652, %v3649
    %v3729 = vpack.c.bf16 %v3657, %v3657
    %v3730 = vpack.c.bf16 %v3714, %v3711
    %v3731 = vpack.c.bf16 %v3719, %v3719
    %v3732 = vld [vmem:[%s15] sm:$0xf]
    %v3733 = vld [vmem:[%s15 + $0x4] sm:$0xf]
    %v3734 = vld [vmem:[%s15 + $0x8] sm:$0xf]
    %v3735 = vld [vmem:[%s15 + $0xc] sm:$0xf]
    %v3737 = vsel %vm234, %v3724, 0
    %v3740 = vsel %vm234, %v3725, 0
    %v3743 = vsel %vm926, %v3732, 0
    %3745 = vmatprep.subr.bf16.mxu0 0
    %3746 = vmatpush1.bf16.msra.mxu0 %v3743
    %3747 = vmatprep.subr.bf16.mxu0 0
    %3748 = vmatpush1.bf16.msra.mxu0 0
    %3749 = vmatprep.subr.bf16.mxu0 0
    %3750 = vmatpush1.bf16.msra.mxu0 0
    %3751 = vmatprep.subr.bf16.mxu0 0
    %3752 = vmatpush1.bf16.msra.mxu0 0
    %3753 = vmatprep.subr.bf16.mxu0 0
    %3754 = vmatpush1.bf16.msra.mxu0 0
    %3755 = vmatprep.subr.bf16.mxu0 0
    %3756 = vmatpush1.bf16.msra.mxu0 0
    %3757 = vmatprep.subr.bf16.mxu0 0
    %3758 = vmatpush1.bf16.msra.mxu0 0
    %3759 = vmatprep.subr.bf16.mxu0 0
    %3760 = vmatpush1.bf16.msra.mxu0 0
    %3761 = vmatprep.subr.bf16.mxu0 0
    %3762 = vmatpush1.bf16.msra.mxu0 0
    %3763 = vmatprep.subr.bf16.mxu0 0
    %3764 = vmatpush1.bf16.msra.mxu0 0
    %3765 = vmatprep.subr.bf16.mxu0 0
    %3766 = vmatpush1.bf16.msra.mxu0 0
    %3767 = vmatprep.subr.bf16.mxu0 0
    %3768 = vmatpush1.bf16.msra.mxu0 0
    %3769 = vmatprep.subr.bf16.mxu0 0
    %3770 = vmatpush1.bf16.msra.mxu0 0
    %3771 = vmatprep.subr.bf16.mxu0 0
    %3772 = vmatpush1.bf16.msra.mxu0 0
    %3773 = vmatprep.subr.bf16.mxu0 0
    %3774 = vmatpush1.bf16.msra.mxu0 0
    %3775 = vmatprep.subr.bf16.mxu0 0
    %3776 = vmatpush1.bf16.msra.mxu0 0
    %3777 = vmatprep.mubr.bf16.mxu0 0
    %3778 = vmatmul.mubr.bf16.gmra.mrb[0].mxu0 %v3737
    %v3779 = vpop.f32.mrb[0].mxu0
    %v3780 = vadd.f32 0.0, %v3779
    %v3781 = vpop.f32.mrb[0].mxu0
    %v3782 = vpop.f32.mrb[0].mxu0
    %v3783 = vadd.f32 0.0, %v3782
    %v3784 = vpop.f32.mrb[0].mxu0
    %3785 = vmatprep.mubr.bf16.mxu0 0
    %3786 = vmatmul.mubr.bf16.gmra.mrb[0].mxu0 %v3740
    %v3787 = vpop.f32.mrb[0].mxu0
    %v3788 = vadd.f32 0.0, %v3787
    %v3789 = vpop.f32.mrb[0].mxu0
    %v3790 = vpop.f32.mrb[0].mxu0
    %v3791 = vpop.f32.mrb[0].mxu0
    %3792 = vdwg.mxu0
    %v3794 = vsel %vm234, %v3726, 0
    %v3797 = vsel %vm234, %v3727, 0
    %v3800 = vsel %vm926, %v3733, 0
    %3802 = vmatprep.subr.bf16.mxu0 0
    %3803 = vmatpush1.bf16.msra.mxu0 %v3800
    %3804 = vmatprep.subr.bf16.mxu0 0
    %3805 = vmatpush1.bf16.msra.mxu0 0
    %3806 = vmatprep.subr.bf16.mxu0 0
    %3807 = vmatpush1.bf16.msra.mxu0 0
    %3808 = vmatprep.subr.bf16.mxu0 0
    %3809 = vmatpush1.bf16.msra.mxu0 0
    %3810 = vmatprep.subr.bf16.mxu0 0
    %3811 = vmatpush1.bf16.msra.mxu0 0
    %3812 = vmatprep.subr.bf16.mxu0 0
    %3813 = vmatpush1.bf16.msra.mxu0 0
    %3814 = vmatprep.subr.bf16.mxu0 0
    %3815 = vmatpush1.bf16.msra.mxu0 0
    %3816 = vmatprep.subr.bf16.mxu0 0
    %3817 = vmatpush1.bf16.msra.mxu0 0
    %3818 = vmatprep.subr.bf16.mxu0 0
    %3819 = vmatpush1.bf16.msra.mxu0 0
    %3820 = vmatprep.subr.bf16.mxu0 0
    %3821 = vmatpush1.bf16.msra.mxu0 0
    %3822 = vmatprep.subr.bf16.mxu0 0
    %3823 = vmatpush1.bf16.msra.mxu0 0
    %3824 = vmatprep.subr.bf16.mxu0 0
    %3825 = vmatpush1.bf16.msra.mxu0 0
    %3826 = vmatprep.subr.bf16.mxu0 0
    %3827 = vmatpush1.bf16.msra.mxu0 0
    %3828 = vmatprep.subr.bf16.mxu0 0
    %3829 = vmatpush1.bf16.msra.mxu0 0
    %3830 = vmatprep.subr.bf16.mxu0 0
    %3831 = vmatpush1.bf16.msra.mxu0 0
    %3832 = vmatprep.subr.bf16.mxu0 0
    %3833 = vmatpush1.bf16.msra.mxu0 0
    %3834 = vmatprep.mubr.bf16.mxu0 0
    %3835 = vmatmul.mubr.bf16.gmra.mrb[0].mxu0 %v3794
    %v3836 = vpop.f32.mrb[0].mxu0
    %v3837 = vadd.f32 0.0, %v3836
    %v3838 = vpop.f32.mrb[0].mxu0
    %v3839 = vpop.f32.mrb[0].mxu0
    %v3840 = vadd.f32 0.0, %v3839
    %v3841 = vpop.f32.mrb[0].mxu0
    %3842 = vmatprep.mubr.bf16.mxu0 0
    %3843 = vmatmul.mubr.bf16.gmra.mrb[0].mxu0 %v3797
    %v3844 = vpop.f32.mrb[0].mxu0
    %v3845 = vadd.f32 0.0, %v3844
    %v3846 = vpop.f32.mrb[0].mxu0
    %v3847 = vpop.f32.mrb[0].mxu0
    %v3848 = vpop.f32.mrb[0].mxu0
    %3849 = vdwg.mxu0
    %v3851 = vsel %vm234, %v3728, 0
    %v3854 = vsel %vm234, %v3729, 0
    %v3857 = vsel %vm926, %v3734, 0
    %3859 = vmatprep.subr.bf16.mxu0 0
    %3860 = vmatpush1.bf16.msra.mxu0 %v3857
    %3861 = vmatprep.subr.bf16.mxu0 0
    %3862 = vmatpush1.bf16.msra.mxu0 0
    %3863 = vmatprep.subr.bf16.mxu0 0
    %3864 = vmatpush1.bf16.msra.mxu0 0
    %3865 = vmatprep.subr.bf16.mxu0 0
    %3866 = vmatpush1.bf16.msra.mxu0 0
    %3867 = vmatprep.subr.bf16.mxu0 0
    %3868 = vmatpush1.bf16.msra.mxu0 0
    %3869 = vmatprep.subr.bf16.mxu0 0
    %3870 = vmatpush1.bf16.msra.mxu0 0
    %3871 = vmatprep.subr.bf16.mxu0 0
    %3872 = vmatpush1.bf16.msra.mxu0 0
    %3873 = vmatprep.subr.bf16.mxu0 0
    %3874 = vmatpush1.bf16.msra.mxu0 0
    %3875 = vmatprep.subr.bf16.mxu0 0
    %3876 = vmatpush1.bf16.msra.mxu0 0
    %3877 = vmatprep.subr.bf16.mxu0 0
    %3878 = vmatpush1.bf16.msra.mxu0 0
    %3879 = vmatprep.subr.bf16.mxu0 0
    %3880 = vmatpush1.bf16.msra.mxu0 0
    %3881 = vmatprep.subr.bf16.mxu0 0
    %3882 = vmatpush1.bf16.msra.mxu0 0
    %3883 = vmatprep.subr.bf16.mxu0 0
    %3884 = vmatpush1.bf16.msra.mxu0 0
    %3885 = vmatprep.subr.bf16.mxu0 0
    %3886 = vmatpush1.bf16.msra.mxu0 0
    %3887 = vmatprep.subr.bf16.mxu0 0
    %3888 = vmatpush1.bf16.msra.mxu0 0
    %3889 = vmatprep.subr.bf16.mxu0 0
    %3890 = vmatpush1.bf16.msra.mxu0 0
    %3891 = vmatprep.mubr.bf16.mxu0 0
    %3892 = vmatmul.mubr.bf16.gmra.mrb[0].mxu0 %v3851
    %v3893 = vpop.f32.mrb[0].mxu0
    %v3894 = vadd.f32 0.0, %v3893
    %v3895 = vpop.f32.mrb[0].mxu0
    %v3896 = vpop.f32.mrb[0].mxu0
    %v3897 = vadd.f32 0.0, %v3896
    %v3898 = vpop.f32.mrb[0].mxu0
    %3899 = vmatprep.mubr.bf16.mxu0 0
    %3900 = vmatmul.mubr.bf16.gmra.mrb[0].mxu0 %v3854
    %v3901 = vpop.f32.mrb[0].mxu0
    %v3902 = vadd.f32 0.0, %v3901
    %v3903 = vpop.f32.mrb[0].mxu0
    %v3904 = vpop.f32.mrb[0].mxu0
    %v3905 = vpop.f32.mrb[0].mxu0
    %3906 = vdwg.mxu0
    %v3908 = vsel %vm234, %v3730, 0
    %v3911 = vsel %vm234, %v3731, 0
    %v3914 = vsel %vm926, %v3735, 0
    %3916 = vmatprep.subr.bf16.mxu0 0
    %3917 = vmatpush1.bf16.msra.mxu0 %v3914
    %3918 = vmatprep.subr.bf16.mxu0 0
    %3919 = vmatpush1.bf16.msra.mxu0 0
    %3920 = vmatprep.subr.bf16.mxu0 0
    %3921 = vmatpush1.bf16.msra.mxu0 0
    %3922 = vmatprep.subr.bf16.mxu0 0
    %3923 = vmatpush1.bf16.msra.mxu0 0
    %3924 = vmatprep.subr.bf16.mxu0 0
    %3925 = vmatpush1.bf16.msra.mxu0 0
    %3926 = vmatprep.subr.bf16.mxu0 0
    %3927 = vmatpush1.bf16.msra.mxu0 0
    %3928 = vmatprep.subr.bf16.mxu0 0
    %3929 = vmatpush1.bf16.msra.mxu0 0
    %3930 = vmatprep.subr.bf16.mxu0 0
    %3931 = vmatpush1.bf16.msra.mxu0 0
    %3932 = vmatprep.subr.bf16.mxu0 0
    %3933 = vmatpush1.bf16.msra.mxu0 0
    %3934 = vmatprep.subr.bf16.mxu0 0
    %3935 = vmatpush1.bf16.msra.mxu0 0
    %3936 = vmatprep.subr.bf16.mxu0 0
    %3937 = vmatpush1.bf16.msra.mxu0 0
    %3938 = vmatprep.subr.bf16.mxu0 0
    %3939 = vmatpush1.bf16.msra.mxu0 0
    %3940 = vmatprep.subr.bf16.mxu0 0
    %3941 = vmatpush1.bf16.msra.mxu0 0
    %3942 = vmatprep.subr.bf16.mxu0 0
    %3943 = vmatpush1.bf16.msra.mxu0 0
    %3944 = vmatprep.subr.bf16.mxu0 0
    %3945 = vmatpush1.bf16.msra.mxu0 0
    %3946 = vmatprep.subr.bf16.mxu0 0
    %3947 = vmatpush1.bf16.msra.mxu0 0
    %3948 = vmatprep.mubr.bf16.mxu0 0
    %3949 = vmatmul.mubr.bf16.gmra.mrb[0].mxu0 %v3908
    %v3950 = vpop.f32.mrb[0].mxu0
    %v3951 = vadd.f32 0.0, %v3950
    %v3952 = vpop.f32.mrb[0].mxu0
    %v3953 = vpop.f32.mrb[0].mxu0
    %v3954 = vadd.f32 0.0, %v3953
    %v3955 = vpop.f32.mrb[0].mxu0
    %3956 = vmatprep.mubr.bf16.mxu0 0
    %3957 = vmatmul.mubr.bf16.gmra.mrb[0].mxu0 %v3911
    %v3958 = vpop.f32.mrb[0].mxu0
    %v3959 = vadd.f32 0.0, %v3958
    %v3960 = vpop.f32.mrb[0].mxu0
    %v3961 = vpop.f32.mrb[0].mxu0
    %v3962 = vpop.f32.mrb[0].mxu0
    %3963 = vdwg.mxu0
    %v3964 = vsel %vm85, %v3780, 0.0
    %v3965 = vsel %vm85, %v3837, 0.0
    %v3966 = vadd.f32 %v3964, %v3965
    %v3967 = vsel %vm85, %v3894, 0.0
    %v3968 = vadd.f32 %v3966, %v3967
    %v3969 = vsel %vm85, %v3951, 0.0
    %v3970 = vadd.f32 %v3968, %v3969
    %v3971 = vsel %vm85, %v3783, 0.0
    %v3972 = vsel %vm85, %v3840, 0.0
    %v3973 = vadd.f32 %v3971, %v3972
    %v3974 = vsel %vm85, %v3897, 0.0
    %v3975 = vadd.f32 %v3973, %v3974
    %v3976 = vsel %vm85, %v3954, 0.0
    %v3977 = vadd.f32 %v3975, %v3976
    %v3978 = vsel %vm92, %v3788, 0.0
    %v3979 = vsel %vm92, %v3845, 0.0
    %v3980 = vadd.f32 %v3978, %v3979
    %v3981 = vsel %vm92, %v3902, 0.0
    %v3982 = vadd.f32 %v3980, %v3981
    %v3983 = vsel %vm92, %v3959, 0.0
    %v3984 = vadd.f32 %v3982, %v3983
    %v3985 = vadd.f32 %v2898, %v3970
    %v3986 = vadd.f32 %v2900, %v3977
    %v3987 = vadd.f32 %v2896, %v3984
    %v3988 = vld [vmem:[%s16] sm:$0x1]
    %v3989 = vmul.f32 %v3985, %v3985
    %v3990 = vmul.f32 %v3986, %v3986
    %v3991 = vmul.f32 %v3987, %v3987
    %v3992 = vsel %vm85, %v3989, 0.0
    %3993 = vadd.xlane.f32.xlu0 %v3992
    %v3994 = vpop.xlane.xlu0 %3993
    %v3995 = vsel %vm85, %v3990, 0.0
    %3996 = vadd.xlane.f32.xlu0 %v3995
    %v3997 = vpop.xlane.xlu0 %3996
    %v3998 = vsel %vm92, %v3991, 0.0
    %3999 = vadd.xlane.f32.xlu0 %v3998
    %v4000 = vpop.xlane.xlu0 %3999
    %v4001 = vmul.f32 %v3994, %v96
    %v4002 = vmul.f32 %v3997, %v96
    %v4003 = vmul.f32 %v4000, %v96
    %v4004 = vadd.f32 %v4001, 1e-06
    %v4005 = vadd.f32 %v4002, 1e-06
    %v4006 = vadd.f32 %v4003, 1e-06
    %v4007 = vrsqrt.pop %v4004
    %v4008 = vrsqrt.pop %v4005
    %v4009 = vrsqrt.pop %v4006
    %v4010 = vmul.f32 %v3985, %v4007
    %v4011 = vmul.f32 %v3986, %v4008
    %v4012 = vmul.f32 %v3987, %v4009
    %v4014 = vlaneseq
    %v4015 = vshrl.u32 %v4014, 7
    %v4016 = vsub.s32 0, %v4015
    %v4017 = vrot.slane %v3988, %v4016
    %v4019 = vmul.f32 %v4010, %v4017
    %v4020 = vmul.f32 %v4011, %v4017
    %v4021 = vmul.f32 %v4012, %v4017
    %v4022 = vpack.c.bf16 %v4020, %v4019
    %v4023 = vpack.c.bf16 %v4021, %v4021
    %v4024 = vld [vmem:[%s17] sm:$0xf]
    %v4025 = vld [vmem:[%s17 + $0x4] sm:$0xf]
    %v4026 = vld [vmem:[%s17 + $0x8] sm:$0xf]
    %v4027 = vld [vmem:[%s17 + $0xc] sm:$0xf]
    %v4032 = vunpack.c.l.b16 %v4024
    %v4033 = vunpack.c.l.b16 %v4025
    %v4034 = vunpack.c.l.b16 %v4026
    %v4035 = vunpack.c.l.b16 %v4027
    %v4036 = vpack.c.b16 %v4033, %v4032
    %v4037 = vpack.c.b16 %v4035, %v4034
    %v4041 = vsel %vm85, %v4022, 0
    %v4044 = vsel %vm85, %v4023, 0
    %4046 = vmatprep.subr.bf16.mxu0 0
    %4047 = vmatpush1.bf16.msra.mxu0 %v4036
    %4048 = vmatprep.subr.bf16.mxu0 0
    %4049 = vmatpush1.bf16.msra.mxu0 %v4037
    %4050 = vmatprep.subr.bf16.mxu0 0
    %4051 = vmatpush1.bf16.msra.mxu0 0
    %4052 = vmatprep.subr.bf16.mxu0 0
    %4053 = vmatpush1.bf16.msra.mxu0 0
    %4054 = vmatprep.subr.bf16.mxu0 0
    %4055 = vmatpush1.bf16.msra.mxu0 0
    %4056 = vmatprep.subr.bf16.mxu0 0
    %4057 = vmatpush1.bf16.msra.mxu0 0
    %4058 = vmatprep.subr.bf16.mxu0 0
    %4059 = vmatpush1.bf16.msra.mxu0 0
    %4060 = vmatprep.subr.bf16.mxu0 0
    %4061 = vmatpush1.bf16.msra.mxu0 0
    %4062 = vmatprep.subr.bf16.mxu0 0
    %4063 = vmatpush1.bf16.msra.mxu0 0
    %4064 = vmatprep.subr.bf16.mxu0 0
    %4065 = vmatpush1.bf16.msra.mxu0 0
    %4066 = vmatprep.subr.bf16.mxu0 0
    %4067 = vmatpush1.bf16.msra.mxu0 0
    %4068 = vmatprep.subr.bf16.mxu0 0
    %4069 = vmatpush1.bf16.msra.mxu0 0
    %4070 = vmatprep.subr.bf16.mxu0 0
    %4071 = vmatpush1.bf16.msra.mxu0 0
    %4072 = vmatprep.subr.bf16.mxu0 0
    %4073 = vmatpush1.bf16.msra.mxu0 0
    %4074 = vmatprep.subr.bf16.mxu0 0
    %4075 = vmatpush1.bf16.msra.mxu0 0
    %4076 = vmatprep.subr.bf16.mxu0 0
    %4077 = vmatpush1.bf16.msra.mxu0 0
    %4078 = vmatprep.mubr.bf16.mxu0 0
    %4079 = vmatmul.mubr.bf16.gmra.mrb[0].mxu0 %v4041
    %v4080 = vpop.f32.mrb[0].mxu0
    %v4081 = vadd.f32 0.0, %v4080
    %v4082 = vpop.f32.mrb[0].mxu0
    %v4083 = vpop.f32.mrb[0].mxu0
    %v4084 = vadd.f32 0.0, %v4083
    %v4085 = vpop.f32.mrb[0].mxu0
    %4086 = vmatprep.mubr.bf16.mxu0 0
    %4087 = vmatmul.mubr.bf16.gmra.mrb[0].mxu0 %v4044
    %v4088 = vpop.f32.mrb[0].mxu0
    %v4089 = vadd.f32 0.0, %v4088
    %v4090 = vpop.f32.mrb[0].mxu0
    %v4091 = vpop.f32.mrb[0].mxu0
    %v4092 = vpop.f32.mrb[0].mxu0
    %4093 = vdwg.mxu0
    %v4094 = vxor.u32 %v4081, 2147483648
    %v4095 = vxor.u32 %v4084, 2147483648
    %v4096 = vxor.u32 %v4089, 2147483648
    %v4097 = vmul.f32 %v4094, 1.442695
    %v4098 = vpow.pop %v4097
    %v4099 = vmul.f32 %v4095, 1.442695
    %v4100 = vpow.pop %v4099
    %v4101 = vmul.f32 %v4096, 1.442695
    %v4102 = vpow.pop %v4101
    %v4103 = vadd.f32 %v4098, 1.0
    %v4104 = vadd.f32 %v4100, 1.0
    %v4105 = vadd.f32 %v4102, 1.0
    %v4106 = vrcp.pop %v4103
    %v4107 = vmul.f32 1.0, %v4106
    %v4108 = vrcp.pop %v4104
    %v4109 = vmul.f32 1.0, %v4108
    %v4110 = vrcp.pop %v4105
    %v4111 = vmul.f32 1.0, %v4110
    %v4112 = vmul.f32 %v4081, %v4107
    %v4113 = vmul.f32 %v4084, %v4109
    %v4114 = vmul.f32 %v4089, %v4111
    %4115 = vrot.lane.b32.xlu0 %v4081, 64
    %v4116 = vpop.permute.xlu0 %4115
    %4117 = vrot.lane.b32.xlu0 %v4084, 64
    %v4118 = vpop.permute.xlu0 %4117
    %4119 = vrot.lane.b32.xlu0 %v4089, 64
    %v4120 = vpop.permute.xlu0 %4119
    %v4121 = vmul.f32 %v4112, %v4116
    %v4122 = vmul.f32 %v4113, %v4118
    %v4123 = vmul.f32 %v4114, %v4120
    %v4124 = vpack.c.bf16 %v4122, %v4121
    %v4125 = vpack.c.bf16 %v4123, %v4123
    %v4126 = vld [vmem:[%s18] sm:$0xf]
    %v4127 = vld [vmem:[%s18 + $0x4] sm:$0xf]
    %v4128 = vld [vmem:[%s18 + $0x8] sm:$0xf]
    %v4129 = vld [vmem:[%s18 + $0xc] sm:$0xf]
    %v4130 = vld [vmem:[%s18 + $0x10] sm:$0xf]
    %v4131 = vld [vmem:[%s18 + $0x14] sm:$0xf]
    %v4132 = vld [vmem:[%s18 + $0x18] sm:$0xf]
    %v4133 = vld [vmem:[%s18 + $0x1c] sm:$0xf]
    %v4134 = vld [vmem:[%s18 + $0x20] sm:$0xf]
    %v4135 = vld [vmem:[%s18 + $0x24] sm:$0xf]
    %v4136 = vld [vmem:[%s18 + $0x28] sm:$0xf]
    %v4137 = vld [vmem:[%s18 + $0x2c] sm:$0xf]
    %v4138 = vld [vmem:[%s18 + $0x30] sm:$0xf]
    %v4139 = vld [vmem:[%s18 + $0x34] sm:$0xf]
    %v4140 = vld [vmem:[%s18 + $0x38] sm:$0xf]
    %v4141 = vld [vmem:[%s18 + $0x3c] sm:$0xf]
    %v4158 = vunpack.c.l.b16 %v4126
    %v4159 = vunpack.c.l.b16 %v4127
    %v4160 = vunpack.c.l.b16 %v4128
    %v4161 = vunpack.c.l.b16 %v4129
    %v4162 = vunpack.c.l.b16 %v4130
    %v4163 = vunpack.c.l.b16 %v4131
    %v4164 = vunpack.c.l.b16 %v4132
    %v4165 = vunpack.c.l.b16 %v4133
    %v4166 = vunpack.c.l.b16 %v4134
    %v4167 = vunpack.c.l.b16 %v4135
    %v4168 = vunpack.c.l.b16 %v4136
    %v4169 = vunpack.c.l.b16 %v4137
    %v4170 = vunpack.c.l.b16 %v4138
    %v4171 = vunpack.c.l.b16 %v4139
    %v4172 = vunpack.c.l.b16 %v4140
    %v4173 = vunpack.c.l.b16 %v4141
    %v4174 = vpack.c.b16 %v4159, %v4158
    %v4175 = vpack.c.b16 %v4161, %v4160
    %v4176 = vpack.c.b16 %v4163, %v4162
    %v4177 = vpack.c.b16 %v4165, %v4164
    %v4178 = vpack.c.b16 %v4167, %v4166
    %v4179 = vpack.c.b16 %v4169, %v4168
    %v4180 = vpack.c.b16 %v4171, %v4170
    %v4181 = vpack.c.b16 %v4173, %v4172
    %4190 = vmatprep.subr.bf16.mxu0 0
    %4191 = vmatpush1.bf16.msra.mxu0 %v4174
    %4192 = vmatprep.subr.bf16.mxu0 0
    %4193 = vmatpush1.bf16.msra.mxu0 %v4175
    %4194 = vmatprep.subr.bf16.mxu0 0
    %4195 = vmatpush1.bf16.msra.mxu0 %v4176
    %4196 = vmatprep.subr.bf16.mxu0 0
    %4197 = vmatpush1.bf16.msra.mxu0 %v4177
    %4198 = vmatprep.subr.bf16.mxu0 0
    %4199 = vmatpush1.bf16.msra.mxu0 %v4178
    %4200 = vmatprep.subr.bf16.mxu0 0
    %4201 = vmatpush1.bf16.msra.mxu0 %v4179
    %4202 = vmatprep.subr.bf16.mxu0 0
    %4203 = vmatpush1.bf16.msra.mxu0 %v4180
    %4204 = vmatprep.subr.bf16.mxu0 0
    %4205 = vmatpush1.bf16.msra.mxu0 %v4181
    %4206 = vmatprep.subr.bf16.mxu0 0
    %4207 = vmatpush1.bf16.msra.mxu0 0
    %4208 = vmatprep.subr.bf16.mxu0 0
    %4209 = vmatpush1.bf16.msra.mxu0 0
    %4210 = vmatprep.subr.bf16.mxu0 0
    %4211 = vmatpush1.bf16.msra.mxu0 0
    %4212 = vmatprep.subr.bf16.mxu0 0
    %4213 = vmatpush1.bf16.msra.mxu0 0
    %4214 = vmatprep.subr.bf16.mxu0 0
    %4215 = vmatpush1.bf16.msra.mxu0 0
    %4216 = vmatprep.subr.bf16.mxu0 0
    %4217 = vmatpush1.bf16.msra.mxu0 0
    %4218 = vmatprep.subr.bf16.mxu0 0
    %4219 = vmatpush1.bf16.msra.mxu0 0
    %4220 = vmatprep.subr.bf16.mxu0 0
    %4221 = vmatpush1.bf16.msra.mxu0 0
    %4222 = vmatprep.mubr.bf16.mxu0 0
    %4223 = vmatmul.mubr.bf16.gmra.mrb[0].mxu0 %v4124
    %v4224 = vpop.f32.mrb[0].mxu0
    %v4225 = vadd.f32 0.0, %v4224
    %v4226 = vpop.f32.mrb[0].mxu0
    %v4227 = vpop.f32.mrb[0].mxu0
    %v4228 = vadd.f32 0.0, %v4227
    %v4229 = vpop.f32.mrb[0].mxu0
    %4230 = vmatprep.mubr.bf16.mxu0 0
    %4231 = vmatmul.mubr.bf16.gmra.mrb[0].mxu0 %v4125
    %v4232 = vpop.f32.mrb[0].mxu0
    %v4233 = vadd.f32 0.0, %v4232
    %v4234 = vpop.f32.mrb[0].mxu0
    %v4235 = vpop.f32.mrb[0].mxu0
    %v4236 = vpop.f32.mrb[0].mxu0
    %4237 = vdwg.mxu0
    %v4238 = vadd.f32 %v3985, %v4225
    %v4239 = vadd.f32 %v3986, %v4228
    %v4240 = vadd.f32 %v3987, %v4233
    %s4241 = scalar_lea.vmem %s13, 1
    %v4242 = vld [vmem:[%s4241] sm:$0x1]
    %v4243 = vmul.f32 %v4238, %v4238
    %v4244 = vmul.f32 %v4239, %v4239
    %v4245 = vmul.f32 %v4240, %v4240
    %v4246 = vsel %vm85, %v4243, 0.0
    %4247 = vadd.xlane.f32.xlu0 %v4246
    %v4248 = vpop.xlane.xlu0 %4247
    %v4249 = vsel %vm85, %v4244, 0.0
    %4250 = vadd.xlane.f32.xlu0 %v4249
    %v4251 = vpop.xlane.xlu0 %4250
    %v4252 = vsel %vm92, %v4245, 0.0
    %4253 = vadd.xlane.f32.xlu0 %v4252
    %v4254 = vpop.xlane.xlu0 %4253
    %v4255 = vmul.f32 %v4248, %v96
    %v4256 = vmul.f32 %v4251, %v96
    %v4257 = vmul.f32 %v4254, %v96
    %v4258 = vadd.f32 %v4255, 1e-06
    %v4259 = vadd.f32 %v4256, 1e-06
    %v4260 = vadd.f32 %v4257, 1e-06
    %v4261 = vrsqrt.pop %v4258
    %v4262 = vrsqrt.pop %v4259
    %v4263 = vrsqrt.pop %v4260
    %v4264 = vmul.f32 %v4238, %v4261
    %v4265 = vmul.f32 %v4239, %v4262
    %v4266 = vmul.f32 %v4240, %v4263
    %v4268 = vlaneseq
    %v4269 = vshrl.u32 %v4268, 7
    %v4270 = vsub.s32 0, %v4269
    %v4271 = vrot.slane %v4242, %v4270
    %v4273 = vmul.f32 %v4264, %v4271
    %v4274 = vmul.f32 %v4265, %v4271
    %v4275 = vmul.f32 %v4266, %v4271
    %v4276 = vpack.c.bf16 %v4274, %v4273
    %v4277 = vpack.c.bf16 %v4275, %v4275
    %s4278 = scalar_lea.vmem %s14, 16
    %v4279 = vld [vmem:[%s4278] sm:$0xf]
    %v4280 = vld [vmem:[%s4278 + $0x4] sm:$0xf]
    %v4281 = vld [vmem:[%s4278 + $0x8] sm:$0xf]
    %v4282 = vld [vmem:[%s4278 + $0xc] sm:$0xf]
    %v4287 = vunpack.c.l.b16 %v4279
    %v4288 = vunpack.c.l.b16 %v4280
    %v4289 = vunpack.c.l.b16 %v4281
    %v4290 = vunpack.c.l.b16 %v4282
    %v4291 = vpack.c.b16 %v4288, %v4287
    %v4292 = vpack.c.b16 %v4290, %v4289
    %v4296 = vsel %vm85, %v4276, 0
    %v4299 = vsel %vm85, %v4277, 0
    %4301 = vmatprep.subr.bf16.mxu0 0
    %4302 = vmatpush1.bf16.msra.mxu0 %v4291
    %4303 = vmatprep.subr.bf16.mxu0 0
    %4304 = vmatpush1.bf16.msra.mxu0 %v4292
    %4305 = vmatprep.subr.bf16.mxu0 0
    %4306 = vmatpush1.bf16.msra.mxu0 0
    %4307 = vmatprep.subr.bf16.mxu0 0
    %4308 = vmatpush1.bf16.msra.mxu0 0
    %4309 = vmatprep.subr.bf16.mxu0 0
    %4310 = vmatpush1.bf16.msra.mxu0 0
    %4311 = vmatprep.subr.bf16.mxu0 0
    %4312 = vmatpush1.bf16.msra.mxu0 0
    %4313 = vmatprep.subr.bf16.mxu0 0
    %4314 = vmatpush1.bf16.msra.mxu0 0
    %4315 = vmatprep.subr.bf16.mxu0 0
    %4316 = vmatpush1.bf16.msra.mxu0 0
    %4317 = vmatprep.subr.bf16.mxu0 0
    %4318 = vmatpush1.bf16.msra.mxu0 0
    %4319 = vmatprep.subr.bf16.mxu0 0
    %4320 = vmatpush1.bf16.msra.mxu0 0
    %4321 = vmatprep.subr.bf16.mxu0 0
    %4322 = vmatpush1.bf16.msra.mxu0 0
    %4323 = vmatprep.subr.bf16.mxu0 0
    %4324 = vmatpush1.bf16.msra.mxu0 0
    %4325 = vmatprep.subr.bf16.mxu0 0
    %4326 = vmatpush1.bf16.msra.mxu0 0
    %4327 = vmatprep.subr.bf16.mxu0 0
    %4328 = vmatpush1.bf16.msra.mxu0 0
    %4329 = vmatprep.subr.bf16.mxu0 0
    %4330 = vmatpush1.bf16.msra.mxu0 0
    %4331 = vmatprep.subr.bf16.mxu0 0
    %4332 = vmatpush1.bf16.msra.mxu0 0
    %4333 = vmatprep.mubr.bf16.mxu0 0
    %4334 = vmatmul.mubr.bf16.gmra.mrb[0].mxu0 %v4296
    %v4335 = vpop.f32.mrb[0].mxu0
    %v4336 = vadd.f32 0.0, %v4335
    %v4337 = vpop.f32.mrb[0].mxu0
    %v4338 = vpop.f32.mrb[0].mxu0
    %v4339 = vadd.f32 0.0, %v4338
    %v4340 = vpop.f32.mrb[0].mxu0
    %4341 = vmatprep.mubr.bf16.mxu0 0
    %4342 = vmatmul.mubr.bf16.gmra.mrb[0].mxu0 %v4299
    %v4343 = vpop.f32.mrb[0].mxu0
    %v4344 = vadd.f32 0.0, %v4343
    %v4345 = vpop.f32.mrb[0].mxu0
    %v4346 = vpop.f32.mrb[0].mxu0
    %v4347 = vpop.f32.mrb[0].mxu0
    %4348 = vdwg.mxu0
    %4352 = vrot.lane.b32.xlu0 %v4336, 120
    %v4353 = vpop.permute.xlu0 %4352
    %4354 = vrot.lane.b32.xlu0 %v4339, 120
    %v4355 = vpop.permute.xlu0 %4354
    %4356 = vrot.lane.b32.xlu0 %v4344, 120
    %v4357 = vpop.permute.xlu0 %4356
    %4361 = vrot.lane.b32.xlu0 %v4336, 112
    %v4362 = vpop.permute.xlu0 %4361
    %4363 = vrot.lane.b32.xlu0 %v4339, 112
    %v4364 = vpop.permute.xlu0 %4363
    %4365 = vrot.lane.b32.xlu0 %v4344, 112
    %v4366 = vpop.permute.xlu0 %4365
    %4370 = vrot.lane.b32.xlu0 %v4336, 104
    %v4371 = vpop.permute.xlu0 %4370
    %4372 = vrot.lane.b32.xlu0 %v4339, 104
    %v4373 = vpop.permute.xlu0 %4372
    %4374 = vrot.lane.b32.xlu0 %v4344, 104
    %v4375 = vpop.permute.xlu0 %4374
    %v4379 = vpack.c.bf16 %v4339, %v4336
    %v4380 = vpack.c.bf16 %v4344, %v4344
    %v4381 = vpack.c.bf16 %v4355, %v4353
    %v4382 = vpack.c.bf16 %v4357, %v4357
    %v4383 = vpack.c.bf16 %v4364, %v4362
    %v4384 = vpack.c.bf16 %v4366, %v4366
    %v4385 = vpack.c.bf16 %v4373, %v4371
    %v4386 = vpack.c.bf16 %v4375, %v4375
    %4389 = vrot.lane.b32.xlu0 %v4379, 96
    %v4390 = vpop.permute.xlu0 %4389
    %4391 = vrot.lane.b32.xlu0 %v4380, 96
    %v4392 = vpop.permute.xlu0 %4391
    %v4394 = vsel %vm234, %v4379, 0
    %v4397 = vsel %vm234, %v4380, 0
    %v4400 = vsel %vm234, %v4390, 0
    %v4403 = vsel %vm234, %v4392, 0
    %4405 = vmatprep.subr.bf16.mxu0 0
    %4406 = vmatpush1.bf16.xpose.msra.mxu0 %v4400
    %4407 = vmatprep.subr.bf16.mxu0 0
    %4408 = vmatpush1.bf16.xpose.msra.mxu0 %v4403
    %4409 = vmatprep.subr.bf16.mxu0 0
    %4410 = vmatpush1.bf16.xpose.msra.mxu0 0
    %4411 = vmatprep.subr.bf16.mxu0 0
    %4412 = vmatpush1.bf16.xpose.msra.mxu0 0
    %4413 = vmatprep.subr.bf16.mxu0 0
    %4414 = vmatpush1.bf16.xpose.msra.mxu0 0
    %4415 = vmatprep.subr.bf16.mxu0 0
    %4416 = vmatpush1.bf16.xpose.msra.mxu0 0
    %4417 = vmatprep.subr.bf16.mxu0 0
    %4418 = vmatpush1.bf16.xpose.msra.mxu0 0
    %4419 = vmatprep.subr.bf16.mxu0 0
    %4420 = vmatpush1.bf16.xpose.msra.mxu0 0
    %4421 = vmatprep.subr.bf16.mxu0 0
    %4422 = vmatpush1.bf16.xpose.msra.mxu0 0
    %4423 = vmatprep.subr.bf16.mxu0 0
    %4424 = vmatpush1.bf16.xpose.msra.mxu0 0
    %4425 = vmatprep.subr.bf16.mxu0 0
    %4426 = vmatpush1.bf16.xpose.msra.mxu0 0
    %4427 = vmatprep.subr.bf16.mxu0 0
    %4428 = vmatpush1.bf16.xpose.msra.mxu0 0
    %4429 = vmatprep.subr.bf16.mxu0 0
    %4430 = vmatpush1.bf16.xpose.msra.mxu0 0
    %4431 = vmatprep.subr.bf16.mxu0 0
    %4432 = vmatpush1.bf16.xpose.msra.mxu0 0
    %4433 = vmatprep.subr.bf16.mxu0 0
    %4434 = vmatpush1.bf16.xpose.msra.mxu0 0
    %4435 = vmatprep.subr.bf16.mxu0 0
    %4436 = vmatpush1.bf16.xpose.msra.mxu0 0
    %4437 = vmatprep.mubr.bf16.mxu0 0
    %4438 = vmatmul.mubr.bf16.gmra.mrb[0].mxu0 %v4394
    %v4439 = vpop.f32.mrb[0].mxu0
    %v4440 = vadd.f32 0.0, %v4439
    %v4441 = vpop.f32.mrb[0].mxu0
    %v4442 = vpop.f32.mrb[0].mxu0
    %v4443 = vadd.f32 0.0, %v4442
    %v4444 = vpop.f32.mrb[0].mxu0
    %4445 = vmatprep.mubr.bf16.mxu0 0
    %4446 = vmatmul.mubr.bf16.gmra.mrb[0].mxu0 %v4397
    %v4447 = vpop.f32.mrb[0].mxu0
    %v4448 = vadd.f32 0.0, %v4447
    %v4449 = vpop.f32.mrb[0].mxu0
    %v4450 = vpop.f32.mrb[0].mxu0
    %v4451 = vpop.f32.mrb[0].mxu0
    %4452 = vdwg.mxu0
    %4455 = vrot.lane.b32.xlu0 %v4381, 96
    %v4456 = vpop.permute.xlu0 %4455
    %4457 = vrot.lane.b32.xlu0 %v4382, 96
    %v4458 = vpop.permute.xlu0 %4457
    %v4460 = vsel %vm234, %v4381, 0
    %v4463 = vsel %vm234, %v4382, 0
    %v4466 = vsel %vm234, %v4456, 0
    %v4469 = vsel %vm234, %v4458, 0
    %4471 = vmatprep.subr.bf16.mxu0 0
    %4472 = vmatpush1.bf16.xpose.msra.mxu0 %v4466
    %4473 = vmatprep.subr.bf16.mxu0 0
    %4474 = vmatpush1.bf16.xpose.msra.mxu0 %v4469
    %4475 = vmatprep.subr.bf16.mxu0 0
    %4476 = vmatpush1.bf16.xpose.msra.mxu0 0
    %4477 = vmatprep.subr.bf16.mxu0 0
    %4478 = vmatpush1.bf16.xpose.msra.mxu0 0
    %4479 = vmatprep.subr.bf16.mxu0 0
    %4480 = vmatpush1.bf16.xpose.msra.mxu0 0
    %4481 = vmatprep.subr.bf16.mxu0 0
    %4482 = vmatpush1.bf16.xpose.msra.mxu0 0
    %4483 = vmatprep.subr.bf16.mxu0 0
    %4484 = vmatpush1.bf16.xpose.msra.mxu0 0
    %4485 = vmatprep.subr.bf16.mxu0 0
    %4486 = vmatpush1.bf16.xpose.msra.mxu0 0
    %4487 = vmatprep.subr.bf16.mxu0 0
    %4488 = vmatpush1.bf16.xpose.msra.mxu0 0
    %4489 = vmatprep.subr.bf16.mxu0 0
    %4490 = vmatpush1.bf16.xpose.msra.mxu0 0
    %4491 = vmatprep.subr.bf16.mxu0 0
    %4492 = vmatpush1.bf16.xpose.msra.mxu0 0
    %4493 = vmatprep.subr.bf16.mxu0 0
    %4494 = vmatpush1.bf16.xpose.msra.mxu0 0
    %4495 = vmatprep.subr.bf16.mxu0 0
    %4496 = vmatpush1.bf16.xpose.msra.mxu0 0
    %4497 = vmatprep.subr.bf16.mxu0 0
    %4498 = vmatpush1.bf16.xpose.msra.mxu0 0
    %4499 = vmatprep.subr.bf16.mxu0 0
    %4500 = vmatpush1.bf16.xpose.msra.mxu0 0
    %4501 = vmatprep.subr.bf16.mxu0 0
    %4502 = vmatpush1.bf16.xpose.msra.mxu0 0
    %4503 = vmatprep.mubr.bf16.mxu0 0
    %4504 = vmatmul.mubr.bf16.gmra.mrb[0].mxu0 %v4460
    %v4505 = vpop.f32.mrb[0].mxu0
    %v4506 = vadd.f32 0.0, %v4505
    %v4507 = vpop.f32.mrb[0].mxu0
    %v4508 = vpop.f32.mrb[0].mxu0
    %v4509 = vadd.f32 0.0, %v4508
    %v4510 = vpop.f32.mrb[0].mxu0
    %4511 = vmatprep.mubr.bf16.mxu0 0
    %4512 = vmatmul.mubr.bf16.gmra.mrb[0].mxu0 %v4463
    %v4513 = vpop.f32.mrb[0].mxu0
    %v4514 = vadd.f32 0.0, %v4513
    %v4515 = vpop.f32.mrb[0].mxu0
    %v4516 = vpop.f32.mrb[0].mxu0
    %v4517 = vpop.f32.mrb[0].mxu0
    %4518 = vdwg.mxu0
    %4521 = vrot.lane.b32.xlu0 %v4383, 96
    %v4522 = vpop.permute.xlu0 %4521
    %4523 = vrot.lane.b32.xlu0 %v4384, 96
    %v4524 = vpop.permute.xlu0 %4523
    %v4526 = vsel %vm234, %v4383, 0
    %v4529 = vsel %vm234, %v4384, 0
    %v4532 = vsel %vm234, %v4522, 0
    %v4535 = vsel %vm234, %v4524, 0
    %4537 = vmatprep.subr.bf16.mxu0 0
    %4538 = vmatpush1.bf16.xpose.msra.mxu0 %v4532
    %4539 = vmatprep.subr.bf16.mxu0 0
    %4540 = vmatpush1.bf16.xpose.msra.mxu0 %v4535
    %4541 = vmatprep.subr.bf16.mxu0 0
    %4542 = vmatpush1.bf16.xpose.msra.mxu0 0
    %4543 = vmatprep.subr.bf16.mxu0 0
    %4544 = vmatpush1.bf16.xpose.msra.mxu0 0
    %4545 = vmatprep.subr.bf16.mxu0 0
    %4546 = vmatpush1.bf16.xpose.msra.mxu0 0
    %4547 = vmatprep.subr.bf16.mxu0 0
    %4548 = vmatpush1.bf16.xpose.msra.mxu0 0
    %4549 = vmatprep.subr.bf16.mxu0 0
    %4550 = vmatpush1.bf16.xpose.msra.mxu0 0
    %4551 = vmatprep.subr.bf16.mxu0 0
    %4552 = vmatpush1.bf16.xpose.msra.mxu0 0
    %4553 = vmatprep.subr.bf16.mxu0 0
    %4554 = vmatpush1.bf16.xpose.msra.mxu0 0
    %4555 = vmatprep.subr.bf16.mxu0 0
    %4556 = vmatpush1.bf16.xpose.msra.mxu0 0
    %4557 = vmatprep.subr.bf16.mxu0 0
    %4558 = vmatpush1.bf16.xpose.msra.mxu0 0
    %4559 = vmatprep.subr.bf16.mxu0 0
    %4560 = vmatpush1.bf16.xpose.msra.mxu0 0
    %4561 = vmatprep.subr.bf16.mxu0 0
    %4562 = vmatpush1.bf16.xpose.msra.mxu0 0
    %4563 = vmatprep.subr.bf16.mxu0 0
    %4564 = vmatpush1.bf16.xpose.msra.mxu0 0
    %4565 = vmatprep.subr.bf16.mxu0 0
    %4566 = vmatpush1.bf16.xpose.msra.mxu0 0
    %4567 = vmatprep.subr.bf16.mxu0 0
    %4568 = vmatpush1.bf16.xpose.msra.mxu0 0
    %4569 = vmatprep.mubr.bf16.mxu0 0
    %4570 = vmatmul.mubr.bf16.gmra.mrb[0].mxu0 %v4526
    %v4571 = vpop.f32.mrb[0].mxu0
    %v4572 = vadd.f32 0.0, %v4571
    %v4573 = vpop.f32.mrb[0].mxu0
    %v4574 = vpop.f32.mrb[0].mxu0
    %v4575 = vadd.f32 0.0, %v4574
    %v4576 = vpop.f32.mrb[0].mxu0
    %4577 = vmatprep.mubr.bf16.mxu0 0
    %4578 = vmatmul.mubr.bf16.gmra.mrb[0].mxu0 %v4529
    %v4579 = vpop.f32.mrb[0].mxu0
    %v4580 = vadd.f32 0.0, %v4579
    %v4581 = vpop.f32.mrb[0].mxu0
    %v4582 = vpop.f32.mrb[0].mxu0
    %v4583 = vpop.f32.mrb[0].mxu0
    %4584 = vdwg.mxu0
    %4587 = vrot.lane.b32.xlu0 %v4385, 96
    %v4588 = vpop.permute.xlu0 %4587
    %4589 = vrot.lane.b32.xlu0 %v4386, 96
    %v4590 = vpop.permute.xlu0 %4589
    %v4592 = vsel %vm234, %v4385, 0
    %v4595 = vsel %vm234, %v4386, 0
    %v4598 = vsel %vm234, %v4588, 0
    %v4601 = vsel %vm234, %v4590, 0
    %4603 = vmatprep.subr.bf16.mxu0 0
    %4604 = vmatpush1.bf16.xpose.msra.mxu0 %v4598
    %4605 = vmatprep.subr.bf16.mxu0 0
    %4606 = vmatpush1.bf16.xpose.msra.mxu0 %v4601
    %4607 = vmatprep.subr.bf16.mxu0 0
    %4608 = vmatpush1.bf16.xpose.msra.mxu0 0
    %4609 = vmatprep.subr.bf16.mxu0 0
    %4610 = vmatpush1.bf16.xpose.msra.mxu0 0
    %4611 = vmatprep.subr.bf16.mxu0 0
    %4612 = vmatpush1.bf16.xpose.msra.mxu0 0
    %4613 = vmatprep.subr.bf16.mxu0 0
    %4614 = vmatpush1.bf16.xpose.msra.mxu0 0
    %4615 = vmatprep.subr.bf16.mxu0 0
    %4616 = vmatpush1.bf16.xpose.msra.mxu0 0
    %4617 = vmatprep.subr.bf16.mxu0 0
    %4618 = vmatpush1.bf16.xpose.msra.mxu0 0
    %4619 = vmatprep.subr.bf16.mxu0 0
    %4620 = vmatpush1.bf16.xpose.msra.mxu0 0
    %4621 = vmatprep.subr.bf16.mxu0 0
    %4622 = vmatpush1.bf16.xpose.msra.mxu0 0
    %4623 = vmatprep.subr.bf16.mxu0 0
    %4624 = vmatpush1.bf16.xpose.msra.mxu0 0
    %4625 = vmatprep.subr.bf16.mxu0 0
    %4626 = vmatpush1.bf16.xpose.msra.mxu0 0
    %4627 = vmatprep.subr.bf16.mxu0 0
    %4628 = vmatpush1.bf16.xpose.msra.mxu0 0
    %4629 = vmatprep.subr.bf16.mxu0 0
    %4630 = vmatpush1.bf16.xpose.msra.mxu0 0
    %4631 = vmatprep.subr.bf16.mxu0 0
    %4632 = vmatpush1.bf16.xpose.msra.mxu0 0
    %4633 = vmatprep.subr.bf16.mxu0 0
    %4634 = vmatpush1.bf16.xpose.msra.mxu0 0
    %4635 = vmatprep.mubr.bf16.mxu0 0
    %4636 = vmatmul.mubr.bf16.gmra.mrb[0].mxu0 %v4592
    %v4637 = vpop.f32.mrb[0].mxu0
    %v4638 = vadd.f32 0.0, %v4637
    %v4639 = vpop.f32.mrb[0].mxu0
    %v4640 = vpop.f32.mrb[0].mxu0
    %v4641 = vadd.f32 0.0, %v4640
    %v4642 = vpop.f32.mrb[0].mxu0
    %4643 = vmatprep.mubr.bf16.mxu0 0
    %4644 = vmatmul.mubr.bf16.gmra.mrb[0].mxu0 %v4595
    %v4645 = vpop.f32.mrb[0].mxu0
    %v4646 = vadd.f32 0.0, %v4645
    %v4647 = vpop.f32.mrb[0].mxu0
    %v4648 = vpop.f32.mrb[0].mxu0
    %v4649 = vpop.f32.mrb[0].mxu0
    %4650 = vdwg.mxu0
    %v4651 = vmul.f32 %v4440, 0.35355338
    %v4652 = vmul.f32 %v4443, 0.35355338
    %v4653 = vmul.f32 %v4448, 0.35355338
    %v4654 = vmul.f32 %v4506, 0.35355338
    %v4655 = vmul.f32 %v4509, 0.35355338
    %v4656 = vmul.f32 %v4514, 0.35355338
    %v4657 = vmul.f32 %v4572, 0.35355338
    %v4658 = vmul.f32 %v4575, 0.35355338
    %v4659 = vmul.f32 %v4580, 0.35355338
    %v4660 = vmul.f32 %v4638, 0.35355338
    %v4661 = vmul.f32 %v4641, 0.35355338
    %v4662 = vmul.f32 %v4646, 0.35355338
    %v4663 = vadd.f32 %v4651, %v2901
    %v4664 = vadd.f32 %v4652, %v2902
    %v4665 = vadd.f32 %v4653, %v2903
    %v4666 = vadd.f32 %v4654, %v2901
    %v4667 = vadd.f32 %v4655, %v2902
    %v4668 = vadd.f32 %v4656, %v2903
    %v4669 = vadd.f32 %v4657, %v2901
    %v4670 = vadd.f32 %v4658, %v2902
    %v4671 = vadd.f32 %v4659, %v2903
    %v4672 = vadd.f32 %v4660, %v2901
    %v4673 = vadd.f32 %v4661, %v2902
    %v4674 = vadd.f32 %v4662, %v2903
    %v4675 = vsel %vm517, %v4663, -inf
    %4676 = vmax.xlane.f32.xlu0 %v4675
    %v4677 = vpop.xlane.xlu0 %4676
    %v4678 = vsel %vm517, %v4664, -inf
    %4679 = vmax.xlane.f32.xlu0 %v4678
    %v4680 = vpop.xlane.xlu0 %4679
    %v4681 = vsel %vm524, %v4665, -inf
    %4682 = vmax.xlane.f32.xlu0 %v4681
    %v4683 = vpop.xlane.xlu0 %4682
    %v4684 = vsel %vm517, %v4666, -inf
    %4685 = vmax.xlane.f32.xlu0 %v4684
    %v4686 = vpop.xlane.xlu0 %4685
    %v4687 = vsel %vm517, %v4667, -inf
    %4688 = vmax.xlane.f32.xlu0 %v4687
    %v4689 = vpop.xlane.xlu0 %4688
    %v4690 = vsel %vm524, %v4668, -inf
    %4691 = vmax.xlane.f32.xlu0 %v4690
    %v4692 = vpop.xlane.xlu0 %4691
    %v4693 = vsel %vm517, %v4669, -inf
    %4694 = vmax.xlane.f32.xlu0 %v4693
    %v4695 = vpop.xlane.xlu0 %4694
    %v4696 = vsel %vm517, %v4670, -inf
    %4697 = vmax.xlane.f32.xlu0 %v4696
    %v4698 = vpop.xlane.xlu0 %4697
    %v4699 = vsel %vm524, %v4671, -inf
    %4700 = vmax.xlane.f32.xlu0 %v4699
    %v4701 = vpop.xlane.xlu0 %4700
    %v4702 = vsel %vm517, %v4672, -inf
    %4703 = vmax.xlane.f32.xlu0 %v4702
    %v4704 = vpop.xlane.xlu0 %4703
    %v4705 = vsel %vm517, %v4673, -inf
    %4706 = vmax.xlane.f32.xlu0 %v4705
    %v4707 = vpop.xlane.xlu0 %4706
    %v4708 = vsel %vm524, %v4674, -inf
    %4709 = vmax.xlane.f32.xlu0 %v4708
    %v4710 = vpop.xlane.xlu0 %4709
    %v4711 = vsub.f32 %v4663, %v4677
    %v4712 = vsub.f32 %v4664, %v4680
    %v4713 = vsub.f32 %v4665, %v4683
    %v4714 = vsub.f32 %v4666, %v4686
    %v4715 = vsub.f32 %v4667, %v4689
    %v4716 = vsub.f32 %v4668, %v4692
    %v4717 = vsub.f32 %v4669, %v4695
    %v4718 = vsub.f32 %v4670, %v4698
    %v4719 = vsub.f32 %v4671, %v4701
    %v4720 = vsub.f32 %v4672, %v4704
    %v4721 = vsub.f32 %v4673, %v4707
    %v4722 = vsub.f32 %v4674, %v4710
    %v4723 = vmul.f32 %v4711, 1.442695
    %v4724 = vpow.pop %v4723
    %v4725 = vmul.f32 %v4712, 1.442695
    %v4726 = vpow.pop %v4725
    %v4727 = vmul.f32 %v4713, 1.442695
    %v4728 = vpow.pop %v4727
    %v4729 = vmul.f32 %v4714, 1.442695
    %v4730 = vpow.pop %v4729
    %v4731 = vmul.f32 %v4715, 1.442695
    %v4732 = vpow.pop %v4731
    %v4733 = vmul.f32 %v4716, 1.442695
    %v4734 = vpow.pop %v4733
    %v4735 = vmul.f32 %v4717, 1.442695
    %v4736 = vpow.pop %v4735
    %v4737 = vmul.f32 %v4718, 1.442695
    %v4738 = vpow.pop %v4737
    %v4739 = vmul.f32 %v4719, 1.442695
    %v4740 = vpow.pop %v4739
    %v4741 = vmul.f32 %v4720, 1.442695
    %v4742 = vpow.pop %v4741
    %v4743 = vmul.f32 %v4721, 1.442695
    %v4744 = vpow.pop %v4743
    %v4745 = vmul.f32 %v4722, 1.442695
    %v4746 = vpow.pop %v4745
    %v4747 = vsel %vm517, %v4724, 0.0
    %4748 = vadd.xlane.f32.xlu0 %v4747
    %v4749 = vpop.xlane.xlu0 %4748
    %v4750 = vsel %vm517, %v4726, 0.0
    %4751 = vadd.xlane.f32.xlu0 %v4750
    %v4752 = vpop.xlane.xlu0 %4751
    %v4753 = vsel %vm524, %v4728, 0.0
    %4754 = vadd.xlane.f32.xlu0 %v4753
    %v4755 = vpop.xlane.xlu0 %4754
    %v4756 = vsel %vm517, %v4730, 0.0
    %4757 = vadd.xlane.f32.xlu0 %v4756
    %v4758 = vpop.xlane.xlu0 %4757
    %v4759 = vsel %vm517, %v4732, 0.0
    %4760 = vadd.xlane.f32.xlu0 %v4759
    %v4761 = vpop.xlane.xlu0 %4760
    %v4762 = vsel %vm524, %v4734, 0.0
    %4763 = vadd.xlane.f32.xlu0 %v4762
    %v4764 = vpop.xlane.xlu0 %4763
    %v4765 = vsel %vm517, %v4736, 0.0
    %4766 = vadd.xlane.f32.xlu0 %v4765
    %v4767 = vpop.xlane.xlu0 %4766
    %v4768 = vsel %vm517, %v4738, 0.0
    %4769 = vadd.xlane.f32.xlu0 %v4768
    %v4770 = vpop.xlane.xlu0 %4769
    %v4771 = vsel %vm524, %v4740, 0.0
    %4772 = vadd.xlane.f32.xlu0 %v4771
    %v4773 = vpop.xlane.xlu0 %4772
    %v4774 = vsel %vm517, %v4742, 0.0
    %4775 = vadd.xlane.f32.xlu0 %v4774
    %v4776 = vpop.xlane.xlu0 %4775
    %v4777 = vsel %vm517, %v4744, 0.0
    %4778 = vadd.xlane.f32.xlu0 %v4777
    %v4779 = vpop.xlane.xlu0 %4778
    %v4780 = vsel %vm524, %v4746, 0.0
    %4781 = vadd.xlane.f32.xlu0 %v4780
    %v4782 = vpop.xlane.xlu0 %4781
    %v4783 = vrcp.pop %v4749
    %v4784 = vrcp.pop %v4752
    %v4785 = vrcp.pop %v4755
    %v4786 = vrcp.pop %v4758
    %v4787 = vrcp.pop %v4761
    %v4788 = vrcp.pop %v4764
    %v4789 = vrcp.pop %v4767
    %v4790 = vrcp.pop %v4770
    %v4791 = vrcp.pop %v4773
    %v4792 = vrcp.pop %v4776
    %v4793 = vrcp.pop %v4779
    %v4794 = vrcp.pop %v4782
    %v4795 = vmul.f32 %v4724, %v4783
    %v4796 = vmul.f32 %v4726, %v4784
    %v4797 = vmul.f32 %v4728, %v4785
    %v4798 = vmul.f32 %v4730, %v4786
    %v4799 = vmul.f32 %v4732, %v4787
    %v4800 = vmul.f32 %v4734, %v4788
    %v4801 = vmul.f32 %v4736, %v4789
    %v4802 = vmul.f32 %v4738, %v4790
    %v4803 = vmul.f32 %v4740, %v4791
    %v4804 = vmul.f32 %v4742, %v4792
    %v4805 = vmul.f32 %v4744, %v4793
    %v4806 = vmul.f32 %v4746, %v4794
    %v4807 = vpack.c.bf16 %v4796, %v4795
    %v4808 = vpack.c.bf16 %v4797, %v4797
    %v4809 = vpack.c.bf16 %v4799, %v4798
    %v4810 = vpack.c.bf16 %v4800, %v4800
    %v4811 = vpack.c.bf16 %v4802, %v4801
    %v4812 = vpack.c.bf16 %v4803, %v4803
    %v4813 = vpack.c.bf16 %v4805, %v4804
    %v4814 = vpack.c.bf16 %v4806, %v4806
    %4815 = vrot.lane.b32.xlu0 %v4379, 64
    %v4816 = vpop.permute.xlu0 %4815
    %4817 = vrot.lane.b32.xlu0 %v4380, 64
    %v4818 = vpop.permute.xlu0 %4817
    %v4821 = vsel %vm517, %v4807, 0
    %v4824 = vsel %vm517, %v4808, 0
    %v4827 = vsel %vm670, %v4818, 0
    %4829 = vmatprep.subr.bf16.mxu0 0
    %4830 = vmatpush1.bf16.msra.mxu0 %v4816
    %4831 = vmatprep.subr.bf16.mxu0 0
    %4832 = vmatpush1.bf16.msra.mxu0 %v4827
    %4833 = vmatprep.subr.bf16.mxu0 0
    %4834 = vmatpush1.bf16.msra.mxu0 0
    %4835 = vmatprep.subr.bf16.mxu0 0
    %4836 = vmatpush1.bf16.msra.mxu0 0
    %4837 = vmatprep.subr.bf16.mxu0 0
    %4838 = vmatpush1.bf16.msra.mxu0 0
    %4839 = vmatprep.subr.bf16.mxu0 0
    %4840 = vmatpush1.bf16.msra.mxu0 0
    %4841 = vmatprep.subr.bf16.mxu0 0
    %4842 = vmatpush1.bf16.msra.mxu0 0
    %4843 = vmatprep.subr.bf16.mxu0 0
    %4844 = vmatpush1.bf16.msra.mxu0 0
    %4845 = vmatprep.subr.bf16.mxu0 0
    %4846 = vmatpush1.bf16.msra.mxu0 0
    %4847 = vmatprep.subr.bf16.mxu0 0
    %4848 = vmatpush1.bf16.msra.mxu0 0
    %4849 = vmatprep.subr.bf16.mxu0 0
    %4850 = vmatpush1.bf16.msra.mxu0 0
    %4851 = vmatprep.subr.bf16.mxu0 0
    %4852 = vmatpush1.bf16.msra.mxu0 0
    %4853 = vmatprep.subr.bf16.mxu0 0
    %4854 = vmatpush1.bf16.msra.mxu0 0
    %4855 = vmatprep.subr.bf16.mxu0 0
    %4856 = vmatpush1.bf16.msra.mxu0 0
    %4857 = vmatprep.subr.bf16.mxu0 0
    %4858 = vmatpush1.bf16.msra.mxu0 0
    %4859 = vmatprep.subr.bf16.mxu0 0
    %4860 = vmatpush1.bf16.msra.mxu0 0
    %4861 = vmatprep.mubr.bf16.mxu0 0
    %4862 = vmatmul.mubr.bf16.gmra.mrb[0].mxu0 %v4821
    %v4863 = vpop.f32.mrb[0].mxu0
    %v4864 = vadd.f32 0.0, %v4863
    %v4865 = vpop.f32.mrb[0].mxu0
    %v4866 = vpop.f32.mrb[0].mxu0
    %v4867 = vadd.f32 0.0, %v4866
    %v4868 = vpop.f32.mrb[0].mxu0
    %4869 = vmatprep.mubr.bf16.mxu0 0
    %4870 = vmatmul.mubr.bf16.gmra.mrb[0].mxu0 %v4824
    %v4871 = vpop.f32.mrb[0].mxu0
    %v4872 = vadd.f32 0.0, %v4871
    %v4873 = vpop.f32.mrb[0].mxu0
    %v4874 = vpop.f32.mrb[0].mxu0
    %v4875 = vpop.f32.mrb[0].mxu0
    %4876 = vdwg.mxu0
    %4877 = vrot.lane.b32.xlu0 %v4381, 64
    %v4878 = vpop.permute.xlu0 %4877
    %4879 = vrot.lane.b32.xlu0 %v4382, 64
    %v4880 = vpop.permute.xlu0 %4879
    %v4883 = vsel %vm517, %v4809, 0
    %v4886 = vsel %vm517, %v4810, 0
    %v4889 = vsel %vm670, %v4880, 0
    %4891 = vmatprep.subr.bf16.mxu0 0
    %4892 = vmatpush1.bf16.msra.mxu0 %v4878
    %4893 = vmatprep.subr.bf16.mxu0 0
    %4894 = vmatpush1.bf16.msra.mxu0 %v4889
    %4895 = vmatprep.subr.bf16.mxu0 0
    %4896 = vmatpush1.bf16.msra.mxu0 0
    %4897 = vmatprep.subr.bf16.mxu0 0
    %4898 = vmatpush1.bf16.msra.mxu0 0
    %4899 = vmatprep.subr.bf16.mxu0 0
    %4900 = vmatpush1.bf16.msra.mxu0 0
    %4901 = vmatprep.subr.bf16.mxu0 0
    %4902 = vmatpush1.bf16.msra.mxu0 0
    %4903 = vmatprep.subr.bf16.mxu0 0
    %4904 = vmatpush1.bf16.msra.mxu0 0
    %4905 = vmatprep.subr.bf16.mxu0 0
    %4906 = vmatpush1.bf16.msra.mxu0 0
    %4907 = vmatprep.subr.bf16.mxu0 0
    %4908 = vmatpush1.bf16.msra.mxu0 0
    %4909 = vmatprep.subr.bf16.mxu0 0
    %4910 = vmatpush1.bf16.msra.mxu0 0
    %4911 = vmatprep.subr.bf16.mxu0 0
    %4912 = vmatpush1.bf16.msra.mxu0 0
    %4913 = vmatprep.subr.bf16.mxu0 0
    %4914 = vmatpush1.bf16.msra.mxu0 0
    %4915 = vmatprep.subr.bf16.mxu0 0
    %4916 = vmatpush1.bf16.msra.mxu0 0
    %4917 = vmatprep.subr.bf16.mxu0 0
    %4918 = vmatpush1.bf16.msra.mxu0 0
    %4919 = vmatprep.subr.bf16.mxu0 0
    %4920 = vmatpush1.bf16.msra.mxu0 0
    %4921 = vmatprep.subr.bf16.mxu0 0
    %4922 = vmatpush1.bf16.msra.mxu0 0
    %4923 = vmatprep.mubr.bf16.mxu0 0
    %4924 = vmatmul.mubr.bf16.gmra.mrb[0].mxu0 %v4883
    %v4925 = vpop.f32.mrb[0].mxu0
    %v4926 = vadd.f32 0.0, %v4925
    %v4927 = vpop.f32.mrb[0].mxu0
    %v4928 = vpop.f32.mrb[0].mxu0
    %v4929 = vadd.f32 0.0, %v4928
    %v4930 = vpop.f32.mrb[0].mxu0
    %4931 = vmatprep.mubr.bf16.mxu0 0
    %4932 = vmatmul.mubr.bf16.gmra.mrb[0].mxu0 %v4886
    %v4933 = vpop.f32.mrb[0].mxu0
    %v4934 = vadd.f32 0.0, %v4933
    %v4935 = vpop.f32.mrb[0].mxu0
    %v4936 = vpop.f32.mrb[0].mxu0
    %v4937 = vpop.f32.mrb[0].mxu0
    %4938 = vdwg.mxu0
    %4939 = vrot.lane.b32.xlu0 %v4383, 64
    %v4940 = vpop.permute.xlu0 %4939
    %4941 = vrot.lane.b32.xlu0 %v4384, 64
    %v4942 = vpop.permute.xlu0 %4941
    %v4945 = vsel %vm517, %v4811, 0
    %v4948 = vsel %vm517, %v4812, 0
    %v4951 = vsel %vm670, %v4942, 0
    %4953 = vmatprep.subr.bf16.mxu0 0
    %4954 = vmatpush1.bf16.msra.mxu0 %v4940
    %4955 = vmatprep.subr.bf16.mxu0 0
    %4956 = vmatpush1.bf16.msra.mxu0 %v4951
    %4957 = vmatprep.subr.bf16.mxu0 0
    %4958 = vmatpush1.bf16.msra.mxu0 0
    %4959 = vmatprep.subr.bf16.mxu0 0
    %4960 = vmatpush1.bf16.msra.mxu0 0
    %4961 = vmatprep.subr.bf16.mxu0 0
    %4962 = vmatpush1.bf16.msra.mxu0 0
    %4963 = vmatprep.subr.bf16.mxu0 0
    %4964 = vmatpush1.bf16.msra.mxu0 0
    %4965 = vmatprep.subr.bf16.mxu0 0
    %4966 = vmatpush1.bf16.msra.mxu0 0
    %4967 = vmatprep.subr.bf16.mxu0 0
    %4968 = vmatpush1.bf16.msra.mxu0 0
    %4969 = vmatprep.subr.bf16.mxu0 0
    %4970 = vmatpush1.bf16.msra.mxu0 0
    %4971 = vmatprep.subr.bf16.mxu0 0
    %4972 = vmatpush1.bf16.msra.mxu0 0
    %4973 = vmatprep.subr.bf16.mxu0 0
    %4974 = vmatpush1.bf16.msra.mxu0 0
    %4975 = vmatprep.subr.bf16.mxu0 0
    %4976 = vmatpush1.bf16.msra.mxu0 0
    %4977 = vmatprep.subr.bf16.mxu0 0
    %4978 = vmatpush1.bf16.msra.mxu0 0
    %4979 = vmatprep.subr.bf16.mxu0 0
    %4980 = vmatpush1.bf16.msra.mxu0 0
    %4981 = vmatprep.subr.bf16.mxu0 0
    %4982 = vmatpush1.bf16.msra.mxu0 0
    %4983 = vmatprep.subr.bf16.mxu0 0
    %4984 = vmatpush1.bf16.msra.mxu0 0
    %4985 = vmatprep.mubr.bf16.mxu0 0
    %4986 = vmatmul.mubr.bf16.gmra.mrb[0].mxu0 %v4945
    %v4987 = vpop.f32.mrb[0].mxu0
    %v4988 = vadd.f32 0.0, %v4987
    %v4989 = vpop.f32.mrb[0].mxu0
    %v4990 = vpop.f32.mrb[0].mxu0
    %v4991 = vadd.f32 0.0, %v4990
    %v4992 = vpop.f32.mrb[0].mxu0
    %4993 = vmatprep.mubr.bf16.mxu0 0
    %4994 = vmatmul.mubr.bf16.gmra.mrb[0].mxu0 %v4948
    %v4995 = vpop.f32.mrb[0].mxu0
    %v4996 = vadd.f32 0.0, %v4995
    %v4997 = vpop.f32.mrb[0].mxu0
    %v4998 = vpop.f32.mrb[0].mxu0
    %v4999 = vpop.f32.mrb[0].mxu0
    %5000 = vdwg.mxu0
    %5001 = vrot.lane.b32.xlu0 %v4385, 64
    %v5002 = vpop.permute.xlu0 %5001
    %5003 = vrot.lane.b32.xlu0 %v4386, 64
    %v5004 = vpop.permute.xlu0 %5003
    %v5007 = vsel %vm517, %v4813, 0
    %v5010 = vsel %vm517, %v4814, 0
    %v5013 = vsel %vm670, %v5004, 0
    %5015 = vmatprep.subr.bf16.mxu0 0
    %5016 = vmatpush1.bf16.msra.mxu0 %v5002
    %5017 = vmatprep.subr.bf16.mxu0 0
    %5018 = vmatpush1.bf16.msra.mxu0 %v5013
    %5019 = vmatprep.subr.bf16.mxu0 0
    %5020 = vmatpush1.bf16.msra.mxu0 0
    %5021 = vmatprep.subr.bf16.mxu0 0
    %5022 = vmatpush1.bf16.msra.mxu0 0
    %5023 = vmatprep.subr.bf16.mxu0 0
    %5024 = vmatpush1.bf16.msra.mxu0 0
    %5025 = vmatprep.subr.bf16.mxu0 0
    %5026 = vmatpush1.bf16.msra.mxu0 0
    %5027 = vmatprep.subr.bf16.mxu0 0
    %5028 = vmatpush1.bf16.msra.mxu0 0
    %5029 = vmatprep.subr.bf16.mxu0 0
    %5030 = vmatpush1.bf16.msra.mxu0 0
    %5031 = vmatprep.subr.bf16.mxu0 0
    %5032 = vmatpush1.bf16.msra.mxu0 0
    %5033 = vmatprep.subr.bf16.mxu0 0
    %5034 = vmatpush1.bf16.msra.mxu0 0
    %5035 = vmatprep.subr.bf16.mxu0 0
    %5036 = vmatpush1.bf16.msra.mxu0 0
    %5037 = vmatprep.subr.bf16.mxu0 0
    %5038 = vmatpush1.bf16.msra.mxu0 0
    %5039 = vmatprep.subr.bf16.mxu0 0
    %5040 = vmatpush1.bf16.msra.mxu0 0
    %5041 = vmatprep.subr.bf16.mxu0 0
    %5042 = vmatpush1.bf16.msra.mxu0 0
    %5043 = vmatprep.subr.bf16.mxu0 0
    %5044 = vmatpush1.bf16.msra.mxu0 0
    %5045 = vmatprep.subr.bf16.mxu0 0
    %5046 = vmatpush1.bf16.msra.mxu0 0
    %5047 = vmatprep.mubr.bf16.mxu0 0
    %5048 = vmatmul.mubr.bf16.gmra.mrb[0].mxu0 %v5007
    %v5049 = vpop.f32.mrb[0].mxu0
    %v5050 = vadd.f32 0.0, %v5049
    %v5051 = vpop.f32.mrb[0].mxu0
    %v5052 = vpop.f32.mrb[0].mxu0
    %v5053 = vadd.f32 0.0, %v5052
    %v5054 = vpop.f32.mrb[0].mxu0
    %5055 = vmatprep.mubr.bf16.mxu0 0
    %5056 = vmatmul.mubr.bf16.gmra.mrb[0].mxu0 %v5010
    %v5057 = vpop.f32.mrb[0].mxu0
    %v5058 = vadd.f32 0.0, %v5057
    %v5059 = vpop.f32.mrb[0].mxu0
    %v5060 = vpop.f32.mrb[0].mxu0
    %v5061 = vpop.f32.mrb[0].mxu0
    %5062 = vdwg.mxu0
    %v5063 = vpack.c.bf16 %v4867, %v4864
    %v5064 = vpack.c.bf16 %v4872, %v4872
    %v5065 = vpack.c.bf16 %v4929, %v4926
    %v5066 = vpack.c.bf16 %v4934, %v4934
    %v5067 = vpack.c.bf16 %v4991, %v4988
    %v5068 = vpack.c.bf16 %v4996, %v4996
    %v5069 = vpack.c.bf16 %v5053, %v5050
    %v5070 = vpack.c.bf16 %v5058, %v5058
    %s5071 = scalar_lea.vmem %s15, 16
    %v5072 = vld [vmem:[%s5071] sm:$0xf]
    %v5073 = vld [vmem:[%s5071 + $0x4] sm:$0xf]
    %v5074 = vld [vmem:[%s5071 + $0x8] sm:$0xf]
    %v5075 = vld [vmem:[%s5071 + $0xc] sm:$0xf]
    %v5077 = vsel %vm234, %v5063, 0
    %v5080 = vsel %vm234, %v5064, 0
    %v5083 = vsel %vm926, %v5072, 0
    %5085 = vmatprep.subr.bf16.mxu0 0
    %5086 = vmatpush1.bf16.msra.mxu0 %v5083
    %5087 = vmatprep.subr.bf16.mxu0 0
    %5088 = vmatpush1.bf16.msra.mxu0 0
    %5089 = vmatprep.subr.bf16.mxu0 0
    %5090 = vmatpush1.bf16.msra.mxu0 0
    %5091 = vmatprep.subr.bf16.mxu0 0
    %5092 = vmatpush1.bf16.msra.mxu0 0
    %5093 = vmatprep.subr.bf16.mxu0 0
    %5094 = vmatpush1.bf16.msra.mxu0 0
    %5095 = vmatprep.subr.bf16.mxu0 0
    %5096 = vmatpush1.bf16.msra.mxu0 0
    %5097 = vmatprep.subr.bf16.mxu0 0
    %5098 = vmatpush1.bf16.msra.mxu0 0
    %5099 = vmatprep.subr.bf16.mxu0 0
    %5100 = vmatpush1.bf16.msra.mxu0 0
    %5101 = vmatprep.subr.bf16.mxu0 0
    %5102 = vmatpush1.bf16.msra.mxu0 0
    %5103 = vmatprep.subr.bf16.mxu0 0
    %5104 = vmatpush1.bf16.msra.mxu0 0
    %5105 = vmatprep.subr.bf16.mxu0 0
    %5106 = vmatpush1.bf16.msra.mxu0 0
    %5107 = vmatprep.subr.bf16.mxu0 0
    %5108 = vmatpush1.bf16.msra.mxu0 0
    %5109 = vmatprep.subr.bf16.mxu0 0
    %5110 = vmatpush1.bf16.msra.mxu0 0
    %5111 = vmatprep.subr.bf16.mxu0 0
    %5112 = vmatpush1.bf16.msra.mxu0 0
    %5113 = vmatprep.subr.bf16.mxu0 0
    %5114 = vmatpush1.bf16.msra.mxu0 0
    %5115 = vmatprep.subr.bf16.mxu0 0
    %5116 = vmatpush1.bf16.msra.mxu0 0
    %5117 = vmatprep.mubr.bf16.mxu0 0
    %5118 = vmatmul.mubr.bf16.gmra.mrb[0].mxu0 %v5077
    %v5119 = vpop.f32.mrb[0].mxu0
    %v5120 = vadd.f32 0.0, %v5119
    %v5121 = vpop.f32.mrb[0].mxu0
    %v5122 = vpop.f32.mrb[0].mxu0
    %v5123 = vadd.f32 0.0, %v5122
    %v5124 = vpop.f32.mrb[0].mxu0
    %5125 = vmatprep.mubr.bf16.mxu0 0
    %5126 = vmatmul.mubr.bf16.gmra.mrb[0].mxu0 %v5080
    %v5127 = vpop.f32.mrb[0].mxu0
    %v5128 = vadd.f32 0.0, %v5127
    %v5129 = vpop.f32.mrb[0].mxu0
    %v5130 = vpop.f32.mrb[0].mxu0
    %v5131 = vpop.f32.mrb[0].mxu0
    %5132 = vdwg.mxu0
    %v5134 = vsel %vm234, %v5065, 0
    %v5137 = vsel %vm234, %v5066, 0
    %v5140 = vsel %vm926, %v5073, 0
    %5142 = vmatprep.subr.bf16.mxu0 0
    %5143 = vmatpush1.bf16.msra.mxu0 %v5140
    %5144 = vmatprep.subr.bf16.mxu0 0
    %5145 = vmatpush1.bf16.msra.mxu0 0
    %5146 = vmatprep.subr.bf16.mxu0 0
    %5147 = vmatpush1.bf16.msra.mxu0 0
    %5148 = vmatprep.subr.bf16.mxu0 0
    %5149 = vmatpush1.bf16.msra.mxu0 0
    %5150 = vmatprep.subr.bf16.mxu0 0
    %5151 = vmatpush1.bf16.msra.mxu0 0
    %5152 = vmatprep.subr.bf16.mxu0 0
    %5153 = vmatpush1.bf16.msra.mxu0 0
    %5154 = vmatprep.subr.bf16.mxu0 0
    %5155 = vmatpush1.bf16.msra.mxu0 0
    %5156 = vmatprep.subr.bf16.mxu0 0
    %5157 = vmatpush1.bf16.msra.mxu0 0
    %5158 = vmatprep.subr.bf16.mxu0 0
    %5159 = vmatpush1.bf16.msra.mxu0 0
    %5160 = vmatprep.subr.bf16.mxu0 0
    %5161 = vmatpush1.bf16.msra.mxu0 0
    %5162 = vmatprep.subr.bf16.mxu0 0
    %5163 = vmatpush1.bf16.msra.mxu0 0
    %5164 = vmatprep.subr.bf16.mxu0 0
    %5165 = vmatpush1.bf16.msra.mxu0 0
    %5166 = vmatprep.subr.bf16.mxu0 0
    %5167 = vmatpush1.bf16.msra.mxu0 0
    %5168 = vmatprep.subr.bf16.mxu0 0
    %5169 = vmatpush1.bf16.msra.mxu0 0
    %5170 = vmatprep.subr.bf16.mxu0 0
    %5171 = vmatpush1.bf16.msra.mxu0 0
    %5172 = vmatprep.subr.bf16.mxu0 0
    %5173 = vmatpush1.bf16.msra.mxu0 0
    %5174 = vmatprep.mubr.bf16.mxu0 0
    %5175 = vmatmul.mubr.bf16.gmra.mrb[0].mxu0 %v5134
    %v5176 = vpop.f32.mrb[0].mxu0
    %v5177 = vadd.f32 0.0, %v5176
    %v5178 = vpop.f32.mrb[0].mxu0
    %v5179 = vpop.f32.mrb[0].mxu0
    %v5180 = vadd.f32 0.0, %v5179
    %v5181 = vpop.f32.mrb[0].mxu0
    %5182 = vmatprep.mubr.bf16.mxu0 0
    %5183 = vmatmul.mubr.bf16.gmra.mrb[0].mxu0 %v5137
    %v5184 = vpop.f32.mrb[0].mxu0
    %v5185 = vadd.f32 0.0, %v5184
    %v5186 = vpop.f32.mrb[0].mxu0
    %v5187 = vpop.f32.mrb[0].mxu0
    %v5188 = vpop.f32.mrb[0].mxu0
    %5189 = vdwg.mxu0
    %v5191 = vsel %vm234, %v5067, 0
    %v5194 = vsel %vm234, %v5068, 0
    %v5197 = vsel %vm926, %v5074, 0
    %5199 = vmatprep.subr.bf16.mxu0 0
    %5200 = vmatpush1.bf16.msra.mxu0 %v5197
    %5201 = vmatprep.subr.bf16.mxu0 0
    %5202 = vmatpush1.bf16.msra.mxu0 0
    %5203 = vmatprep.subr.bf16.mxu0 0
    %5204 = vmatpush1.bf16.msra.mxu0 0
    %5205 = vmatprep.subr.bf16.mxu0 0
    %5206 = vmatpush1.bf16.msra.mxu0 0
    %5207 = vmatprep.subr.bf16.mxu0 0
    %5208 = vmatpush1.bf16.msra.mxu0 0
    %5209 = vmatprep.subr.bf16.mxu0 0
    %5210 = vmatpush1.bf16.msra.mxu0 0
    %5211 = vmatprep.subr.bf16.mxu0 0
    %5212 = vmatpush1.bf16.msra.mxu0 0
    %5213 = vmatprep.subr.bf16.mxu0 0
    %5214 = vmatpush1.bf16.msra.mxu0 0
    %5215 = vmatprep.subr.bf16.mxu0 0
    %5216 = vmatpush1.bf16.msra.mxu0 0
    %5217 = vmatprep.subr.bf16.mxu0 0
    %5218 = vmatpush1.bf16.msra.mxu0 0
    %5219 = vmatprep.subr.bf16.mxu0 0
    %5220 = vmatpush1.bf16.msra.mxu0 0
    %5221 = vmatprep.subr.bf16.mxu0 0
    %5222 = vmatpush1.bf16.msra.mxu0 0
    %5223 = vmatprep.subr.bf16.mxu0 0
    %5224 = vmatpush1.bf16.msra.mxu0 0
    %5225 = vmatprep.subr.bf16.mxu0 0
    %5226 = vmatpush1.bf16.msra.mxu0 0
    %5227 = vmatprep.subr.bf16.mxu0 0
    %5228 = vmatpush1.bf16.msra.mxu0 0
    %5229 = vmatprep.subr.bf16.mxu0 0
    %5230 = vmatpush1.bf16.msra.mxu0 0
    %5231 = vmatprep.mubr.bf16.mxu0 0
    %5232 = vmatmul.mubr.bf16.gmra.mrb[0].mxu0 %v5191
    %v5233 = vpop.f32.mrb[0].mxu0
    %v5234 = vadd.f32 0.0, %v5233
    %v5235 = vpop.f32.mrb[0].mxu0
    %v5236 = vpop.f32.mrb[0].mxu0
    %v5237 = vadd.f32 0.0, %v5236
    %v5238 = vpop.f32.mrb[0].mxu0
    %5239 = vmatprep.mubr.bf16.mxu0 0
    %5240 = vmatmul.mubr.bf16.gmra.mrb[0].mxu0 %v5194
    %v5241 = vpop.f32.mrb[0].mxu0
    %v5242 = vadd.f32 0.0, %v5241
    %v5243 = vpop.f32.mrb[0].mxu0
    %v5244 = vpop.f32.mrb[0].mxu0
    %v5245 = vpop.f32.mrb[0].mxu0
    %5246 = vdwg.mxu0
    %v5248 = vsel %vm234, %v5069, 0
    %v5251 = vsel %vm234, %v5070, 0
    %v5254 = vsel %vm926, %v5075, 0
    %5256 = vmatprep.subr.bf16.mxu0 0
    %5257 = vmatpush1.bf16.msra.mxu0 %v5254
    %5258 = vmatprep.subr.bf16.mxu0 0
    %5259 = vmatpush1.bf16.msra.mxu0 0
    %5260 = vmatprep.subr.bf16.mxu0 0
    %5261 = vmatpush1.bf16.msra.mxu0 0
    %5262 = vmatprep.subr.bf16.mxu0 0
    %5263 = vmatpush1.bf16.msra.mxu0 0
    %5264 = vmatprep.subr.bf16.mxu0 0
    %5265 = vmatpush1.bf16.msra.mxu0 0
    %5266 = vmatprep.subr.bf16.mxu0 0
    %5267 = vmatpush1.bf16.msra.mxu0 0
    %5268 = vmatprep.subr.bf16.mxu0 0
    %5269 = vmatpush1.bf16.msra.mxu0 0
    %5270 = vmatprep.subr.bf16.mxu0 0
    %5271 = vmatpush1.bf16.msra.mxu0 0
    %5272 = vmatprep.subr.bf16.mxu0 0
    %5273 = vmatpush1.bf16.msra.mxu0 0
    %5274 = vmatprep.subr.bf16.mxu0 0
    %5275 = vmatpush1.bf16.msra.mxu0 0
    %5276 = vmatprep.subr.bf16.mxu0 0
    %5277 = vmatpush1.bf16.msra.mxu0 0
    %5278 = vmatprep.subr.bf16.mxu0 0
    %5279 = vmatpush1.bf16.msra.mxu0 0
    %5280 = vmatprep.subr.bf16.mxu0 0
    %5281 = vmatpush1.bf16.msra.mxu0 0
    %5282 = vmatprep.subr.bf16.mxu0 0
    %5283 = vmatpush1.bf16.msra.mxu0 0
    %5284 = vmatprep.subr.bf16.mxu0 0
    %5285 = vmatpush1.bf16.msra.mxu0 0
    %5286 = vmatprep.subr.bf16.mxu0 0
    %5287 = vmatpush1.bf16.msra.mxu0 0
    %5288 = vmatprep.mubr.bf16.mxu0 0
    %5289 = vmatmul.mubr.bf16.gmra.mrb[0].mxu0 %v5248
    %v5290 = vpop.f32.mrb[0].mxu0
    %v5291 = vadd.f32 0.0, %v5290
    %v5292 = vpop.f32.mrb[0].mxu0
    %v5293 = vpop.f32.mrb[0].mxu0
    %v5294 = vadd.f32 0.0, %v5293
    %v5295 = vpop.f32.mrb[0].mxu0
    %5296 = vmatprep.mubr.bf16.mxu0 0
    %5297 = vmatmul.mubr.bf16.gmra.mrb[0].mxu0 %v5251
    %v5298 = vpop.f32.mrb[0].mxu0
    %v5299 = vadd.f32 0.0, %v5298
    %v5300 = vpop.f32.mrb[0].mxu0
    %v5301 = vpop.f32.mrb[0].mxu0
    %v5302 = vpop.f32.mrb[0].mxu0
    %5303 = vdwg.mxu0
    %v5304 = vsel %vm85, %v5120, 0.0
    %v5305 = vsel %vm85, %v5177, 0.0
    %v5306 = vadd.f32 %v5304, %v5305
    %v5307 = vsel %vm85, %v5234, 0.0
    %v5308 = vadd.f32 %v5306, %v5307
    %v5309 = vsel %vm85, %v5291, 0.0
    %v5310 = vadd.f32 %v5308, %v5309
    %v5311 = vsel %vm85, %v5123, 0.0
    %v5312 = vsel %vm85, %v5180, 0.0
    %v5313 = vadd.f32 %v5311, %v5312
    %v5314 = vsel %vm85, %v5237, 0.0
    %v5315 = vadd.f32 %v5313, %v5314
    %v5316 = vsel %vm85, %v5294, 0.0
    %v5317 = vadd.f32 %v5315, %v5316
    %v5318 = vsel %vm92, %v5128, 0.0
    %v5319 = vsel %vm92, %v5185, 0.0
    %v5320 = vadd.f32 %v5318, %v5319
    %v5321 = vsel %vm92, %v5242, 0.0
    %v5322 = vadd.f32 %v5320, %v5321
    %v5323 = vsel %vm92, %v5299, 0.0
    %v5324 = vadd.f32 %v5322, %v5323
    %v5325 = vadd.f32 %v4238, %v5310
    %v5326 = vadd.f32 %v4239, %v5317
    %v5327 = vadd.f32 %v4240, %v5324
    %s5328 = scalar_lea.vmem %s16, 1
    %v5329 = vld [vmem:[%s5328] sm:$0x1]
    %v5330 = vmul.f32 %v5325, %v5325
    %v5331 = vmul.f32 %v5326, %v5326
    %v5332 = vmul.f32 %v5327, %v5327
    %v5333 = vsel %vm85, %v5330, 0.0
    %5334 = vadd.xlane.f32.xlu0 %v5333
    %v5335 = vpop.xlane.xlu0 %5334
    %v5336 = vsel %vm85, %v5331, 0.0
    %5337 = vadd.xlane.f32.xlu0 %v5336
    %v5338 = vpop.xlane.xlu0 %5337
    %v5339 = vsel %vm92, %v5332, 0.0
    %5340 = vadd.xlane.f32.xlu0 %v5339
    %v5341 = vpop.xlane.xlu0 %5340
    %v5342 = vmul.f32 %v5335, %v96
    %v5343 = vmul.f32 %v5338, %v96
    %v5344 = vmul.f32 %v5341, %v96
    %v5345 = vadd.f32 %v5342, 1e-06
    %v5346 = vadd.f32 %v5343, 1e-06
    %v5347 = vadd.f32 %v5344, 1e-06
    %v5348 = vrsqrt.pop %v5345
    %v5349 = vrsqrt.pop %v5346
    %v5350 = vrsqrt.pop %v5347
    %v5351 = vmul.f32 %v5325, %v5348
    %v5352 = vmul.f32 %v5326, %v5349
    %v5353 = vmul.f32 %v5327, %v5350
    %v5355 = vlaneseq
    %v5356 = vshrl.u32 %v5355, 7
    %v5357 = vsub.s32 0, %v5356
    %v5358 = vrot.slane %v5329, %v5357
    %v5360 = vmul.f32 %v5351, %v5358
    %v5361 = vmul.f32 %v5352, %v5358
    %v5362 = vmul.f32 %v5353, %v5358
    %v5363 = vpack.c.bf16 %v5361, %v5360
    %v5364 = vpack.c.bf16 %v5362, %v5362
    %s5365 = scalar_lea.vmem %s17, 16
    %v5366 = vld [vmem:[%s5365] sm:$0xf]
    %v5367 = vld [vmem:[%s5365 + $0x4] sm:$0xf]
    %v5368 = vld [vmem:[%s5365 + $0x8] sm:$0xf]
    %v5369 = vld [vmem:[%s5365 + $0xc] sm:$0xf]
    %v5374 = vunpack.c.l.b16 %v5366
    %v5375 = vunpack.c.l.b16 %v5367
    %v5376 = vunpack.c.l.b16 %v5368
    %v5377 = vunpack.c.l.b16 %v5369
    %v5378 = vpack.c.b16 %v5375, %v5374
    %v5379 = vpack.c.b16 %v5377, %v5376
    %v5383 = vsel %vm85, %v5363, 0
    %v5386 = vsel %vm85, %v5364, 0
    %5388 = vmatprep.subr.bf16.mxu0 0
    %5389 = vmatpush1.bf16.msra.mxu0 %v5378
    %5390 = vmatprep.subr.bf16.mxu0 0
    %5391 = vmatpush1.bf16.msra.mxu0 %v5379
    %5392 = vmatprep.subr.bf16.mxu0 0
    %5393 = vmatpush1.bf16.msra.mxu0 0
    %5394 = vmatprep.subr.bf16.mxu0 0
    %5395 = vmatpush1.bf16.msra.mxu0 0
    %5396 = vmatprep.subr.bf16.mxu0 0
    %5397 = vmatpush1.bf16.msra.mxu0 0
    %5398 = vmatprep.subr.bf16.mxu0 0
    %5399 = vmatpush1.bf16.msra.mxu0 0
    %5400 = vmatprep.subr.bf16.mxu0 0
    %5401 = vmatpush1.bf16.msra.mxu0 0
    %5402 = vmatprep.subr.bf16.mxu0 0
    %5403 = vmatpush1.bf16.msra.mxu0 0
    %5404 = vmatprep.subr.bf16.mxu0 0
    %5405 = vmatpush1.bf16.msra.mxu0 0
    %5406 = vmatprep.subr.bf16.mxu0 0
    %5407 = vmatpush1.bf16.msra.mxu0 0
    %5408 = vmatprep.subr.bf16.mxu0 0
    %5409 = vmatpush1.bf16.msra.mxu0 0
    %5410 = vmatprep.subr.bf16.mxu0 0
    %5411 = vmatpush1.bf16.msra.mxu0 0
    %5412 = vmatprep.subr.bf16.mxu0 0
    %5413 = vmatpush1.bf16.msra.mxu0 0
    %5414 = vmatprep.subr.bf16.mxu0 0
    %5415 = vmatpush1.bf16.msra.mxu0 0
    %5416 = vmatprep.subr.bf16.mxu0 0
    %5417 = vmatpush1.bf16.msra.mxu0 0
    %5418 = vmatprep.subr.bf16.mxu0 0
    %5419 = vmatpush1.bf16.msra.mxu0 0
    %5420 = vmatprep.mubr.bf16.mxu0 0
    %5421 = vmatmul.mubr.bf16.gmra.mrb[0].mxu0 %v5383
    %v5422 = vpop.f32.mrb[0].mxu0
    %v5423 = vadd.f32 0.0, %v5422
    %v5424 = vpop.f32.mrb[0].mxu0
    %v5425 = vpop.f32.mrb[0].mxu0
    %v5426 = vadd.f32 0.0, %v5425
    %v5427 = vpop.f32.mrb[0].mxu0
    %5428 = vmatprep.mubr.bf16.mxu0 0
    %5429 = vmatmul.mubr.bf16.gmra.mrb[0].mxu0 %v5386
    %v5430 = vpop.f32.mrb[0].mxu0
    %v5431 = vadd.f32 0.0, %v5430
    %v5432 = vpop.f32.mrb[0].mxu0
    %v5433 = vpop.f32.mrb[0].mxu0
    %v5434 = vpop.f32.mrb[0].mxu0
    %5435 = vdwg.mxu0
    %v5436 = vxor.u32 %v5423, 2147483648
    %v5437 = vxor.u32 %v5426, 2147483648
    %v5438 = vxor.u32 %v5431, 2147483648
    %v5439 = vmul.f32 %v5436, 1.442695
    %v5440 = vpow.pop %v5439
    %v5441 = vmul.f32 %v5437, 1.442695
    %v5442 = vpow.pop %v5441
    %v5443 = vmul.f32 %v5438, 1.442695
    %v5444 = vpow.pop %v5443
    %v5445 = vadd.f32 %v5440, 1.0
    %v5446 = vadd.f32 %v5442, 1.0
    %v5447 = vadd.f32 %v5444, 1.0
    %v5448 = vrcp.pop %v5445
    %v5449 = vmul.f32 1.0, %v5448
    %v5450 = vrcp.pop %v5446
    %v5451 = vmul.f32 1.0, %v5450
    %v5452 = vrcp.pop %v5447
    %v5453 = vmul.f32 1.0, %v5452
    %v5454 = vmul.f32 %v5423, %v5449
    %v5455 = vmul.f32 %v5426, %v5451
    %v5456 = vmul.f32 %v5431, %v5453
    %5457 = vrot.lane.b32.xlu0 %v5423, 64
    %v5458 = vpop.permute.xlu0 %5457
    %5459 = vrot.lane.b32.xlu0 %v5426, 64
    %v5460 = vpop.permute.xlu0 %5459
    %5461 = vrot.lane.b32.xlu0 %v5431, 64
    %v5462 = vpop.permute.xlu0 %5461
    %v5463 = vmul.f32 %v5454, %v5458
    %v5464 = vmul.f32 %v5455, %v5460
    %v5465 = vmul.f32 %v5456, %v5462
    %v5466 = vpack.c.bf16 %v5464, %v5463
    %v5467 = vpack.c.bf16 %v5465, %v5465
    %s5468 = scalar_lea.vmem %s18, 64
    %v5469 = vld [vmem:[%s5468] sm:$0xf]
    %v5470 = vld [vmem:[%s5468 + $0x4] sm:$0xf]
    %v5471 = vld [vmem:[%s5468 + $0x8] sm:$0xf]
    %v5472 = vld [vmem:[%s5468 + $0xc] sm:$0xf]
    %v5473 = vld [vmem:[%s5468 + $0x10] sm:$0xf]
    %v5474 = vld [vmem:[%s5468 + $0x14] sm:$0xf]
    %v5475 = vld [vmem:[%s5468 + $0x18] sm:$0xf]
    %v5476 = vld [vmem:[%s5468 + $0x1c] sm:$0xf]
    %v5477 = vld [vmem:[%s5468 + $0x20] sm:$0xf]
    %v5478 = vld [vmem:[%s5468 + $0x24] sm:$0xf]
    %v5479 = vld [vmem:[%s5468 + $0x28] sm:$0xf]
    %v5480 = vld [vmem:[%s5468 + $0x2c] sm:$0xf]
    %v5481 = vld [vmem:[%s5468 + $0x30] sm:$0xf]
    %v5482 = vld [vmem:[%s5468 + $0x34] sm:$0xf]
    %v5483 = vld [vmem:[%s5468 + $0x38] sm:$0xf]
    %v5484 = vld [vmem:[%s5468 + $0x3c] sm:$0xf]
    %v5501 = vunpack.c.l.b16 %v5469
    %v5502 = vunpack.c.l.b16 %v5470
    %v5503 = vunpack.c.l.b16 %v5471
    %v5504 = vunpack.c.l.b16 %v5472
    %v5505 = vunpack.c.l.b16 %v5473
    %v5506 = vunpack.c.l.b16 %v5474
    %v5507 = vunpack.c.l.b16 %v5475
    %v5508 = vunpack.c.l.b16 %v5476
    %v5509 = vunpack.c.l.b16 %v5477
    %v5510 = vunpack.c.l.b16 %v5478
    %v5511 = vunpack.c.l.b16 %v5479
    %v5512 = vunpack.c.l.b16 %v5480
    %v5513 = vunpack.c.l.b16 %v5481
    %v5514 = vunpack.c.l.b16 %v5482
    %v5515 = vunpack.c.l.b16 %v5483
    %v5516 = vunpack.c.l.b16 %v5484
    %v5517 = vpack.c.b16 %v5502, %v5501
    %v5518 = vpack.c.b16 %v5504, %v5503
    %v5519 = vpack.c.b16 %v5506, %v5505
    %v5520 = vpack.c.b16 %v5508, %v5507
    %v5521 = vpack.c.b16 %v5510, %v5509
    %v5522 = vpack.c.b16 %v5512, %v5511
    %v5523 = vpack.c.b16 %v5514, %v5513
    %v5524 = vpack.c.b16 %v5516, %v5515
    %5533 = vmatprep.subr.bf16.mxu0 0
    %5534 = vmatpush1.bf16.msra.mxu0 %v5517
    %5535 = vmatprep.subr.bf16.mxu0 0
    %5536 = vmatpush1.bf16.msra.mxu0 %v5518
    %5537 = vmatprep.subr.bf16.mxu0 0
    %5538 = vmatpush1.bf16.msra.mxu0 %v5519
    %5539 = vmatprep.subr.bf16.mxu0 0
    %5540 = vmatpush1.bf16.msra.mxu0 %v5520
    %5541 = vmatprep.subr.bf16.mxu0 0
    %5542 = vmatpush1.bf16.msra.mxu0 %v5521
    %5543 = vmatprep.subr.bf16.mxu0 0
    %5544 = vmatpush1.bf16.msra.mxu0 %v5522
    %5545 = vmatprep.subr.bf16.mxu0 0
    %5546 = vmatpush1.bf16.msra.mxu0 %v5523
    %5547 = vmatprep.subr.bf16.mxu0 0
    %5548 = vmatpush1.bf16.msra.mxu0 %v5524
    %5549 = vmatprep.subr.bf16.mxu0 0
    %5550 = vmatpush1.bf16.msra.mxu0 0
    %5551 = vmatprep.subr.bf16.mxu0 0
    %5552 = vmatpush1.bf16.msra.mxu0 0
    %5553 = vmatprep.subr.bf16.mxu0 0
    %5554 = vmatpush1.bf16.msra.mxu0 0
    %5555 = vmatprep.subr.bf16.mxu0 0
    %5556 = vmatpush1.bf16.msra.mxu0 0
    %5557 = vmatprep.subr.bf16.mxu0 0
    %5558 = vmatpush1.bf16.msra.mxu0 0
    %5559 = vmatprep.subr.bf16.mxu0 0
    %5560 = vmatpush1.bf16.msra.mxu0 0
    %5561 = vmatprep.subr.bf16.mxu0 0
    %5562 = vmatpush1.bf16.msra.mxu0 0
    %5563 = vmatprep.subr.bf16.mxu0 0
    %5564 = vmatpush1.bf16.msra.mxu0 0
    %5565 = vmatprep.mubr.bf16.mxu0 0
    %5566 = vmatmul.mubr.bf16.gmra.mrb[0].mxu0 %v5466
    %v5567 = vpop.f32.mrb[0].mxu0
    %v5568 = vadd.f32 0.0, %v5567
    %v5569 = vpop.f32.mrb[0].mxu0
    %v5570 = vpop.f32.mrb[0].mxu0
    %v5571 = vadd.f32 0.0, %v5570
    %v5572 = vpop.f32.mrb[0].mxu0
    %5573 = vmatprep.mubr.bf16.mxu0 0
    %5574 = vmatmul.mubr.bf16.gmra.mrb[0].mxu0 %v5467
    %v5575 = vpop.f32.mrb[0].mxu0
    %v5576 = vadd.f32 0.0, %v5575
    %v5577 = vpop.f32.mrb[0].mxu0
    %v5578 = vpop.f32.mrb[0].mxu0
    %v5579 = vpop.f32.mrb[0].mxu0
    %5580 = vdwg.mxu0
    %v5581 = vadd.f32 %v5325, %v5568
    %v5582 = vadd.f32 %v5326, %v5571
    %v5583 = vadd.f32 %v5327, %v5576
    %v5584 = vld [vmem:[%s19] sm:$0x1]
    %v5585 = vmul.f32 %v5581, %v5581
    %v5586 = vmul.f32 %v5582, %v5582
    %v5587 = vmul.f32 %v5583, %v5583
    %v5588 = vsel %vm85, %v5585, 0.0
    %5589 = vadd.xlane.f32.xlu0 %v5588
    %v5590 = vpop.xlane.xlu0 %5589
    %v5591 = vsel %vm85, %v5586, 0.0
    %5592 = vadd.xlane.f32.xlu0 %v5591
    %v5593 = vpop.xlane.xlu0 %5592
    %v5594 = vsel %vm92, %v5587, 0.0
    %5595 = vadd.xlane.f32.xlu0 %v5594
    %v5596 = vpop.xlane.xlu0 %5595
    %v5597 = vmul.f32 %v5590, %v96
    %v5598 = vmul.f32 %v5593, %v96
    %v5599 = vmul.f32 %v5596, %v96
    %v5600 = vadd.f32 %v5597, 1e-06
    %v5601 = vadd.f32 %v5598, 1e-06
    %v5602 = vadd.f32 %v5599, 1e-06
    %v5603 = vrsqrt.pop %v5600
    %v5604 = vrsqrt.pop %v5601
    %v5605 = vrsqrt.pop %v5602
    %v5606 = vmul.f32 %v5581, %v5603
    %v5607 = vmul.f32 %v5582, %v5604
    %v5608 = vmul.f32 %v5583, %v5605
    %v5610 = vlaneseq
    %v5611 = vshrl.u32 %v5610, 7
    %v5612 = vsub.s32 0, %v5611
    %v5613 = vrot.slane %v5584, %v5612
    %v5615 = vmul.f32 %v5606, %v5613
    %v5616 = vmul.f32 %v5607, %v5613
    %v5617 = vmul.f32 %v5608, %v5613
    %v5618 = vpack.c.bf16 %v5616, %v5615
    %v5619 = vpack.c.bf16 %v5617, %v5617
    %v5620 = vld [vmem:[%s20] sm:$0xf]
    %v5621 = vld [vmem:[%s20 + $0x4] sm:$0xf]
    %v5622 = vld [vmem:[%s20 + $0x8] sm:$0xf]
    %v5623 = vld [vmem:[%s20 + $0xc] sm:$0xf]
    %v5628 = vunpack.c.l.b16 %v5620
    %v5629 = vunpack.c.l.b16 %v5621
    %v5630 = vunpack.c.l.b16 %v5622
    %v5631 = vunpack.c.l.b16 %v5623
    %v5632 = vpack.c.b16 %v5629, %v5628
    %v5633 = vpack.c.b16 %v5631, %v5630
    %v5637 = vsel %vm85, %v5618, 0
    %v5640 = vsel %vm85, %v5619, 0
    %5642 = vmatprep.subr.bf16.mxu0 0
    %5643 = vmatpush1.bf16.msra.mxu0 %v5632
    %5644 = vmatprep.subr.bf16.mxu0 0
    %5645 = vmatpush1.bf16.msra.mxu0 %v5633
    %5646 = vmatprep.subr.bf16.mxu0 0
    %5647 = vmatpush1.bf16.msra.mxu0 0
    %5648 = vmatprep.subr.bf16.mxu0 0
    %5649 = vmatpush1.bf16.msra.mxu0 0
    %5650 = vmatprep.subr.bf16.mxu0 0
    %5651 = vmatpush1.bf16.msra.mxu0 0
    %5652 = vmatprep.subr.bf16.mxu0 0
    %5653 = vmatpush1.bf16.msra.mxu0 0
    %5654 = vmatprep.subr.bf16.mxu0 0
    %5655 = vmatpush1.bf16.msra.mxu0 0
    %5656 = vmatprep.subr.bf16.mxu0 0
    %5657 = vmatpush1.bf16.msra.mxu0 0
    %5658 = vmatprep.subr.bf16.mxu0 0
    %5659 = vmatpush1.bf16.msra.mxu0 0
    %5660 = vmatprep.subr.bf16.mxu0 0
    %5661 = vmatpush1.bf16.msra.mxu0 0
    %5662 = vmatprep.subr.bf16.mxu0 0
    %5663 = vmatpush1.bf16.msra.mxu0 0
    %5664 = vmatprep.subr.bf16.mxu0 0
    %5665 = vmatpush1.bf16.msra.mxu0 0
    %5666 = vmatprep.subr.bf16.mxu0 0
    %5667 = vmatpush1.bf16.msra.mxu0 0
    %5668 = vmatprep.subr.bf16.mxu0 0
    %5669 = vmatpush1.bf16.msra.mxu0 0
    %5670 = vmatprep.subr.bf16.mxu0 0
    %5671 = vmatpush1.bf16.msra.mxu0 0
    %5672 = vmatprep.subr.bf16.mxu0 0
    %5673 = vmatpush1.bf16.msra.mxu0 0
    %5674 = vmatprep.mubr.bf16.mxu0 0
    %5675 = vmatmul.mubr.bf16.gmra.mrb[0].mxu0 %v5637
    %v5676 = vpop.f32.mrb[0].mxu0
    %v5677 = vadd.f32 0.0, %v5676
    %v5678 = vpop.f32.mrb[0].mxu0
    %v5679 = vpop.f32.mrb[0].mxu0
    %v5680 = vadd.f32 0.0, %v5679
    %v5681 = vpop.f32.mrb[0].mxu0
    %5682 = vmatprep.mubr.bf16.mxu0 0
    %5683 = vmatmul.mubr.bf16.gmra.mrb[0].mxu0 %v5640
    %v5684 = vpop.f32.mrb[0].mxu0
    %v5685 = vadd.f32 0.0, %v5684
    %v5686 = vpop.f32.mrb[0].mxu0
    %v5687 = vpop.f32.mrb[0].mxu0
    %v5688 = vpop.f32.mrb[0].mxu0
    %5689 = vdwg.mxu0
    %5690 = vst [vmem:[%s21] sm:$0xff] %v5677
    %5691 = vst [vmem:[%s21 + $0x8] sm:$0xff] %v5680
    %5692 = vst [vmem:[%s21 + $0x10] sm:$0xf] %v5685
    %v5693 = vld [vmem:[%s5] sm:$0xff]
    %v5694 = vld [vmem:[%s5 + $0x8] sm:$0xff]
    %v5695 = vld [vmem:[%s5 + $0x10] sm:$0xf]
    %5696 = vmax.xlane.f32.xlu0 %v5677
    %v5697 = vpop.xlane.xlu0 %5696
    %5698 = vmax.xlane.f32.xlu0 %v5680
    %v5699 = vpop.xlane.xlu0 %5698
    %v5700 = vsel %vm926, %v5685, -inf
    %5701 = vmax.xlane.f32.xlu0 %v5700
    %v5702 = vpop.xlane.xlu0 %5701
    %v5703 = vsub.f32 %v5677, %v5697
    %v5704 = vsub.f32 %v5680, %v5699
    %v5705 = vsub.f32 %v5685, %v5702
    %v5706 = vmul.f32 %v5703, 1.442695
    %v5707 = vpow.pop %v5706
    %v5708 = vmul.f32 %v5704, 1.442695
    %v5709 = vpow.pop %v5708
    %v5710 = vmul.f32 %v5705, 1.442695
    %v5711 = vpow.pop %v5710
    %5712 = vadd.xlane.f32.xlu0 %v5707
    %v5713 = vpop.xlane.xlu0 %5712
    %5714 = vadd.xlane.f32.xlu0 %v5709
    %v5715 = vpop.xlane.xlu0 %5714
    %v5716 = vsel %vm926, %v5711, 0.0
    %5717 = vadd.xlane.f32.xlu0 %v5716
    %v5718 = vpop.xlane.xlu0 %5717
    %v5719 = vlog2.pop %v5713
    %v5720 = vmul.f32 %v5719, 0.6931472
    %v5721 = vlog2.pop %v5715
    %v5722 = vmul.f32 %v5721, 0.6931472
    %v5723 = vlog2.pop %v5718
    %v5724 = vmul.f32 %v5723, 0.6931472
    %v5725 = vadd.f32 %v5720, %v5697
    %v5726 = vadd.f32 %v5722, %v5699
    %v5727 = vadd.f32 %v5724, %v5702
    %5728 = vset.pattern.permute.xlu0 0
    %5729 = vperm.xlu0 %5728, %v5693
    %v5730 = vpop.permute.xlu0 %5729
    %5731 = vset.pattern.permute.xlu0 0
    %5732 = vperm.xlu0 %5731, %v5694
    %v5733 = vpop.permute.xlu0 %5732
    %5734 = vset.pattern.permute.xlu0 0
    %5735 = vperm.xlu0 %5734, %v5695
    %v5736 = vpop.permute.xlu0 %5735
    %vm5737 = vcmp.eq.s32.totalorder %v2804, %v5730
    %vm5738 = vcmp.eq.s32.totalorder %v2804, %v5733
    %vm5739 = vcmp.eq.s32.totalorder %v2804, %v5736
    %v5740 = vsel %vm5737, %v5677, 0.0
    %v5741 = vsel %vm5738, %v5680, 0.0
    %v5742 = vsel %vm5739, %v5685, 0.0
    %5743 = vadd.xlane.f32.xlu0 %v5740
    %v5744 = vpop.xlane.xlu0 %5743
    %5745 = vadd.xlane.f32.xlu0 %v5741
    %v5746 = vpop.xlane.xlu0 %5745
    %v5747 = vsel %vm926, %v5742, 0.0
    %5748 = vadd.xlane.f32.xlu0 %v5747
    %v5749 = vpop.xlane.xlu0 %5748
    %vm5750 = vcmp.ne.s32.totalorder %v5693, 4294967196
    %vm5751 = vcmp.ne.s32.totalorder %v5694, 4294967196
    %vm5752 = vcmp.ne.s32.totalorder %v5695, 4294967196
    %v5753 = vsel %vm5750, 1, 0
    %v5754 = vsel %vm5751, 1, 0
    %v5755 = vsel %vm5752, 1, 0
    %v5756 = vcvt.s32.f32 %v5753
    %v5757 = vcvt.s32.f32 %v5754
    %v5758 = vcvt.s32.f32 %v5755
    %v5759 = vsub.f32 %v5725, %v5744
    %v5760 = vsub.f32 %v5726, %v5746
    %v5761 = vsub.f32 %v5727, %v5749
    %v5762 = vmul.f32 %v5759, %v5756
    %v5763 = vmul.f32 %v5760, %v5757
    %v5764 = vmul.f32 %v5761, %v5758
    %vm5765 = vcmask 7168
    %v5766 = vsel %vm5765, %v5762, 0.0
    %v5767 = vsel %vm5765, %v5763, 0.0
    %v5768 = vadd.f32 %v5766, %v5767
    %vm5769 = vcmask 3072
    %v5770 = vsel %vm5769, %v5764, 0.0
    %v5771 = vadd.f32 %v5768, %v5770
    %5772 = vadd.xlane.f32.xlu0 %v5771
    %v5773 = vpop.xlane.xlu0 %5772
    %v5774 = vrot.slane %v5773, 4
    %v5775 = vadd.f32 %v5773, %v5774
    %v5776 = vrot.slane %v5775, 2
    %v5777 = vadd.f32 %v5775, %v5776
    %v5778 = vrot.slane %v5777, 1
    %v5779 = vadd.f32 %v5777, %v5778
    %s5780 = vtos %v5779
    %v5781 = vsel %vm5765, %v5756, 0.0
    %v5782 = vsel %vm5765, %v5757, 0.0
    %v5783 = vadd.f32 %v5781, %v5782
    %v5784 = vsel %vm5769, %v5758, 0.0
    %v5785 = vadd.f32 %v5783, %v5784
    %5786 = vadd.xlane.f32.xlu0 %v5785
    %v5787 = vpop.xlane.xlu0 %5786
    %v5788 = vrot.slane %v5787, 4
    %v5789 = vadd.f32 %v5787, %v5788
    %v5790 = vrot.slane %v5789, 2
    %v5791 = vadd.f32 %v5789, %v5790
    %v5792 = vrot.slane %v5791, 1
    %v5793 = vadd.f32 %v5791, %v5792
    %s5794 = vtos %v5793
    %s5795 = smax.f32 %s5794, 1.0
    %v5796 = vstv %s5795
    %v5797 = vrcp.pop %v5796
    %s5798 = vtos %v5797
    %s5799 = smul.f32 %s5780, %s5798
    %s5800 = scalar_lea.smem [#allocation2], 0
    %5801 = sst [smem:[%s5800]] %s5799
    // Predicated region
    $region86: #{compress_with_diff_token_forward.1} parent=1 // pred_check
      _
    $region87: #{compress_with_diff_token_forward.1} parent=1 // pred_check_branch
      %5803 = sbr.rel (0) target = $region89
    $region88: #{compress_with_diff_token_forward.1} parent=1 // pred_region
      _
    $region89: #{compress_with_diff_token_forward.1} parent=1 // pred_fallthru
      _
    // Predicated region
    $region90: #{compress_with_diff_token_forward.1} parent=1 // pred_check
      _
    $region91: #{compress_with_diff_token_forward.1} parent=1 // pred_check_branch
      %5805 = sbr.rel (0) target = $region93
    $region92: #{compress_with_diff_token_forward.1} parent=1 // pred_region
      %s5807 = ssub.s32 16, 16
      %5808 = vsyncadd [#allocation3], %s5807
      %5811 = dma.smem_to_hbm [#allocation2], 16, %s22, [#allocation3]
    $region93: #{compress_with_diff_token_forward.1} parent=1 // pred_fallthru
      _
    // Predicated region
    $region94: #{compress_with_diff_token_forward.1} parent=1 // pred_check
      _
    $region95: #{compress_with_diff_token_forward.1} parent=1 // pred_check_branch
      %5813 = sbr.rel (0) target = $region97
    $region96: #{compress_with_diff_token_forward.1} parent=1 // pred_region
      _
    $region97: #{compress_with_diff_token_forward.1} parent=1 // pred_fallthru
      _
    // Predicated region
    $region98: #{compress_with_diff_token_forward.1} parent=1 // pred_check
      _
    $region99: #{compress_with_diff_token_forward.1} parent=1 // pred_check_branch
      %5815 = sbr.rel (0) target = $region101
    $region100: #{compress_with_diff_token_forward.1} parent=1 // pred_region
      %5816 = dma.done [#allocation3], 16
    $region101: #{compress_with_diff_token_forward.1} parent=1 // pred_fallthru
      _
    %5817 = sfence
    %5818 = vsyncpa [#allocation3], 1

</llo_original>
